<compile_context>
chip_gen: v5e
topology: v5e:2x2
jax: 0.10.0
libtpu: 0.0.40
codegen_flags: <defaults>
</compile_context>

<pallas_src>
import functools
import math

import jax
import jax.numpy as jnp
from jax.experimental import pallas as pl
from jax.experimental.pallas import tpu as pltpu

_MM_DTYPE = jnp.bfloat16          # MXU operand dtype (f32 accumulate)
_LN_EPS = 1e-5                    # PyTorch nn.LayerNorm default
_NEG_INF = float(jnp.finfo(jnp.float32).min)

_COMPILER_PARAMS = pltpu.CompilerParams(dimension_semantics=("parallel",))


# ----------------------------------------------------------------------------
# In-kernel helpers (operate on [S, D] slabs for one batch element)
# ----------------------------------------------------------------------------
def _mm(x, w_ref, b_ref, act=None):
    """act(x @ w + b): bf16 operands, f32 MXU accumulation."""
    acc = jnp.dot(x.astype(w_ref.dtype), w_ref[...],
                  preferred_element_type=jnp.float32)
    acc = acc + b_ref[...]
    if act == "relu":
        acc = jnp.maximum(acc, 0.0)
    return acc


def _layernorm(h, g_ref, b_ref):
    """f32 LayerNorm (biased variance, eps=1e-5 -> PyTorch semantics)."""
    mu = jnp.mean(h, axis=-1, keepdims=True)
    var = jnp.mean(jnp.square(h - mu), axis=-1, keepdims=True)
    return (h - mu) * jax.lax.rsqrt(var + _LN_EPS) * g_ref[...] + b_ref[...]


def _mha(q, k, v, *, n_heads, causal):
    """Multi-head attention on [S, D] slabs; heads split/merged in-register."""
    s_q, d = q.shape
    s_k = k.shape[0]
    dh = d // n_heads
    scale = 1.0 / math.sqrt(dh)
    if causal:
        row = jax.lax.broadcasted_iota(jnp.int32, (s_q, s_k), 0)
        col = jax.lax.broadcasted_iota(jnp.int32, (s_q, s_k), 1)
        keep = col <= row
    outs = []
    for h in range(n_heads):                    # static unroll, static lane slices
        qh = q[:, h * dh:(h + 1) * dh]
        kh = k[:, h * dh:(h + 1) * dh]
        vh = v[:, h * dh:(h + 1) * dh]
        s = jax.lax.dot_general(qh, kh, (((1,), (1,)), ((), ())),
                                preferred_element_type=jnp.float32) * scale
        if causal:
            s = jnp.where(keep, s, _NEG_INF)
        s = s - jnp.max(s, axis=-1, keepdims=True)     # softmax kept in f32
        p = jnp.exp(s)
        p = p / jnp.sum(p, axis=-1, keepdims=True)
        outs.append(jnp.dot(p, vh, preferred_element_type=jnp.float32))
    return jnp.concatenate(outs, axis=-1)              # merge heads in-kernel


# ----------------------------------------------------------------------------
# Kernels (one grid step == one batch element)
# ----------------------------------------------------------------------------
def _embed_kernel(tok_ref, word_ref, pos_ref, o_ref, *, vocab_size):
    tok = tok_ref[...]                                   # [S, 1] int32
    s_len = tok.shape[0]
    cols = jax.lax.broadcasted_iota(jnp.int32, (s_len, vocab_size), 1)
    onehot = (tok == cols).astype(jnp.float32)           # in-kernel one-hot "gather"
    o_ref[...] = (
        jnp.dot(onehot, word_ref[...], preferred_element_type=jnp.float32)
        + pos_ref[...]
    ).astype(o_ref.dtype)


def _encoder_block_kernel(x_ref, wqkv_ref, bqkv_ref, wo_ref, bo_ref,
                          g1_ref, be1_ref, w1_ref, b1_ref, w2_ref, b2_ref,
                          g2_ref, be2_ref, o_ref, *, n_heads, d_model):
    x = x_ref[...]                                       # [S, D] f32
    # ---- self attention (fused QKV) ----
    qkv = _mm(x, wqkv_ref, bqkv_ref)                     # [S, 3D]
    q = qkv[:, :d_model]
    k = qkv[:, d_model:2 * d_model]
    v = qkv[:, 2 * d_model:]
    attn = _mha(q, k, v, n_heads=n_heads, causal=False)
    x1 = _layernorm(x + _mm(attn, wo_ref, bo_ref), g1_ref, be1_ref)
    # ---- feed forward (fused w1+relu+w2) ----
    hid = _mm(x1, w1_ref, b1_ref, act="relu")
    x2 = _layernorm(x1 + _mm(hid, w2_ref, b2_ref), g2_ref, be2_ref)
    o_ref[...] = x2.astype(o_ref.dtype)


def _decoder_block_kernel(x_ref, enc_ref,
                          swqkv_ref, sbqkv_ref, swo_ref, sbo_ref, g1_ref, be1_ref,
                          cwq_ref, cbq_ref, cwkv_ref, cbkv_ref, cwo_ref, cbo_ref,
                          g2_ref, be2_ref,
                          w1_ref, b1_ref, w2_ref, b2_ref, g3_ref, be3_ref,
                          o_ref, *, n_heads, d_model):
    x = x_ref[...]                                       # [S, D] decoder stream
    enc = enc_ref[...]                                   # [S, D] encoder memory
    # ---- causal self attention (fused QKV) ----
    qkv = _mm(x, swqkv_ref, sbqkv_ref)
    q = qkv[:, :d_model]
    k = qkv[:, d_model:2 * d_model]
    v = qkv[:, 2 * d_model:]
    attn = _mha(q, k, v, n_heads=n_heads, causal=True)
    x1 = _layernorm(x + _mm(attn, swo_ref, sbo_ref), g1_ref, be1_ref)
    # ---- cross attention over the encoder output (fused K/V) ----
    cq = _mm(x1, cwq_ref, cbq_ref)
    ckv = _mm(enc, cwkv_ref, cbkv_ref)                   # [S, 2D]
    ck = ckv[:, :d_model]
    cv = ckv[:, d_model:]
    cattn = _mha(cq, ck, cv, n_heads=n_heads, causal=False)
    x2 = _layernorm(x1 + _mm(cattn, cwo_ref, cbo_ref), g2_ref, be2_ref)
    # ---- feed forward ----
    hid = _mm(x2, w1_ref, b1_ref, act="relu")
    x3 = _layernorm(x2 + _mm(hid, w2_ref, b2_ref), g3_ref, be3_ref)
    o_ref[...] = x3.astype(o_ref.dtype)


# ----------------------------------------------------------------------------
# pallas_call wrappers
# ----------------------------------------------------------------------------
def _const_spec(arr):
    # full-array block, same block every grid step (weights / tables / biases)
    return pl.BlockSpec(arr.shape, lambda i, _n=arr.ndim: (0,) * _n)


def _batched_spec(s, d):
    # per-batch-element [S, D] slab, batch dim squeezed
    return pl.BlockSpec((None, s, d), lambda i: (i, 0, 0))


def embed(tokens, word_tab, pos_tab):
    b, s = tokens.shape
    v, d = word_tab.shape
    tok3 = tokens.astype(jnp.int32).reshape(b, s, 1)
    pos = pos_tab[:s]
    return pl.pallas_call(
        functools.partial(_embed_kernel, vocab_size=v),
        out_shape=jax.ShapeDtypeStruct((b, s, d), jnp.float32),
        grid=(b,),
        in_specs=[
            pl.BlockSpec((None, s, 1), lambda i: (i, 0, 0)),
            _const_spec(word_tab),
            _const_spec(pos),
        ],
        out_specs=_batched_spec(s, d),
        compiler_params=_COMPILER_PARAMS,
    )(tok3, word_tab, pos)


def encoder_block(x, p, n_heads):
    b, s, d = x.shape
    args = (x, p["wqkv"], p["bqkv"], p["wo"], p["bo"],
            p["ln1_g"], p["ln1_b"], p["w1"], p["b1"], p["w2"], p["b2"],
            p["ln2_g"], p["ln2_b"])
    in_specs = [_batched_spec(s, d)] + [_const_spec(a) for a in args[1:]]
    return pl.pallas_call(
        functools.partial(_encoder_block_kernel, n_heads=n_heads, d_model=d),
        out_shape=jax.ShapeDtypeStruct((b, s, d), jnp.float32),
        grid=(b,),
        in_specs=in_specs,
        out_specs=_batched_spec(s, d),
        compiler_params=_COMPILER_PARAMS,
    )(*args)


def decoder_block(x, enc, p, n_heads):
    b, s, d = x.shape
    args = (x, enc,
            p["s_wqkv"], p["s_bqkv"], p["s_wo"], p["s_bo"], p["ln1_g"], p["ln1_b"],
            p["c_wq"], p["c_bq"], p["c_wkv"], p["c_bkv"], p["c_wo"], p["c_bo"],
            p["ln2_g"], p["ln2_b"],
            p["w1"], p["b1"], p["w2"], p["b2"], p["ln3_g"], p["ln3_b"])
    in_specs = ([_batched_spec(s, d), _batched_spec(s, d)]
                + [_const_spec(a) for a in args[2:]])
    return pl.pallas_call(
        functools.partial(_decoder_block_kernel, n_heads=n_heads, d_model=d),
        out_shape=jax.ShapeDtypeStruct((b, s, d), jnp.float32),
        grid=(b,),
        in_specs=in_specs,
        out_specs=_batched_spec(s, d),
        compiler_params=_COMPILER_PARAMS,
    )(*args)


def transformer_forward(tokens, params, n_heads=4):
    g = embed(tokens, params["emb"]["word"], params["emb"]["pos"])
    encoded = g
    for blk in params["encoder"]:
        encoded = encoder_block(encoded, blk, n_heads)
    y = embed(tokens, params["dec_emb"]["word"], params["dec_emb"]["pos"])
    for blk in params["decoder"]:
        y = decoder_block(y, encoded, blk, n_heads)
    return y


# ----------------------------------------------------------------------------
# Deterministic synthetic parameters (fused layouts, bf16 weight matrices)
# ----------------------------------------------------------------------------
def _init_lin(key, din, dout):
    w = jax.random.normal(key, (din, dout), jnp.float32) * 0.02
    b = jnp.zeros((1, dout), jnp.float32)
    return w, b


def _wcast(w):
    return w.astype(_MM_DTYPE)


def _init_self_mha(key, d):
    kq, kk, kv, ko = jax.random.split(key, 4)
    wq, bq = _init_lin(kq, d, d)
    wk, bk = _init_lin(kk, d, d)
    wv, bv = _init_lin(kv, d, d)
    wo, bo = _init_lin(ko, d, d)
    return dict(
        wqkv=_wcast(jnp.concatenate([wq, wk, wv], axis=1)),   # [D, 3D]
        bqkv=jnp.concatenate([bq, bk, bv], axis=1),
        wo=_wcast(wo), bo=bo,
    )


def _init_cross_mha(key, d):
    kq, kk, kv, ko = jax.random.split(key, 4)
    wq, bq = _init_lin(kq, d, d)
    wk, bk = _init_lin(kk, d, d)
    wv, bv = _init_lin(kv, d, d)
    wo, bo = _init_lin(ko, d, d)
    return dict(
        c_wq=_wcast(wq), c_bq=bq,
        c_wkv=_wcast(jnp.concatenate([wk, wv], axis=1)),      # [D, 2D]
        c_bkv=jnp.concatenate([bk, bv], axis=1),
        c_wo=_wcast(wo), c_bo=bo,
    )


def _init_ffn(key, d, d_ff):
    k1, k2 = jax.random.split(key)
    w1, b1 = _init_lin(k1, d, d_ff)
    w2, b2 = _init_lin(k2, d_ff, d)
    return dict(w1=_wcast(w1), b1=b1, w2=_wcast(w2), b2=b2)


def _init_emb(key, vocab, d, max_len):
    k1, k2 = jax.random.split(key)
    return dict(
        word=jax.random.normal(k1, (vocab, d), jnp.float32) * 0.02,
        pos=jax.random.normal(k2, (max_len, d), jnp.float32) * 0.02,
    )


def _ln_pair(d):
    return jnp.ones((1, d), jnp.float32), jnp.zeros((1, d), jnp.float32)


def init_transformer(key, n_blocks=2, d_model=64, n_heads=4, d_ff=256,
                     vocab_size=28, max_len=64):
    del n_heads  # head count is a static arg of transformer_forward
    keys = jax.random.split(key, 2 + 2 * n_blocks)
    params = dict(
        emb=_init_emb(keys[0], vocab_size, d_model, max_len),
        dec_emb=_init_emb(keys[1], vocab_size, d_model, max_len),
        encoder=[], decoder=[],
    )
    for i in range(n_blocks):
        ka, kf = jax.random.split(keys[2 + i], 2)
        g1, b1 = _ln_pair(d_model)
        g2, b2 = _ln_pair(d_model)
        blk = dict(ln1_g=g1, ln1_b=b1, ln2_g=g2, ln2_b=b2)
        blk.update(_init_self_mha(ka, d_model))
        blk.update(_init_ffn(kf, d_model, d_ff))
        params["encoder"].append(blk)
    for i in range(n_blocks):
        ks, kc, kf = jax.random.split(keys[2 + n_blocks + i], 3)
        g1, b1 = _ln_pair(d_model)
        g2, b2 = _ln_pair(d_model)
        g3, b3 = _ln_pair(d_model)
        sa = _init_self_mha(ks, d_model)
        blk = dict(
            s_wqkv=sa["wqkv"], s_bqkv=sa["bqkv"], s_wo=sa["wo"], s_bo=sa["bo"],
            ln1_g=g1, ln1_b=b1, ln2_g=g2, ln2_b=b2, ln3_g=g3, ln3_b=b3,
        )
        blk.update(_init_cross_mha(kc, d_model))
        blk.update(_init_ffn(kf, d_model, d_ff))
        params["decoder"].append(blk)
    return params


# ----------------------------------------------------------------------------
if __name__ == "__main__":
    B, S, VOCAB, D, H = 2, 8, 28, 64, 4
    root = jax.random.PRNGKey(0)
    k_tok, k_par = jax.random.split(root)
    tokens = jax.random.randint(k_tok, (B, S), 0, VOCAB, dtype=jnp.int32)
    params = init_transformer(k_par, n_blocks=2, d_model=D, n_heads=H,
                              d_ff=256, vocab_size=VOCAB, max_len=64)

    fwd = jax.jit(transformer_forward, static_argnames="n_heads")
    y = jax.block_until_ready(fwd(tokens, params, n_heads=H))

    assert y.shape == (B, S, D) and y.dtype == jnp.float32
    assert bool(jnp.all(jnp.isfinite(y)))
    print("KERNEL_OK")
</pallas_src>

<mosaic_0001>
module attributes {stable_mosaic.version = 11 : i64} {
  func.func @_embed_kernel(%arg0: i32, %arg1: memref<1x8x1xi32, #tpu.memory_space<vmem>>, %arg2: memref<28x64xf32, #tpu.memory_space<vmem>>, %arg3: memref<8x64xf32, #tpu.memory_space<vmem>>, %arg4: memref<1x8x64xf32, #tpu.memory_space<vmem>>) attributes {dimension_semantics = [#tpu.dimension_semantics<parallel>], iteration_bounds = array<i64: 2>, scalar_prefetch = 0 : i64, scratch_operands = 0 : i64, tpu.core_type = #tpu.core_type<tc>, window_params = [{transform_indices = @transform_0, window_bounds = array<i64: 1, 8, 1>}, {pipeline_mode = #tpu.pipeline_mode<synchronous>, transform_indices = @transform_1, window_bounds = array<i64: 28, 64>}, {pipeline_mode = #tpu.pipeline_mode<synchronous>, transform_indices = @transform_2, window_bounds = array<i64: 8, 64>}, {transform_indices = @transform_3, window_bounds = array<i64: 1, 8, 64>}]} {
    %c0 = arith.constant 0 : index
    %c0_0 = arith.constant 0 : index
    %c0_1 = arith.constant 0 : index
    %0 = vector.load %arg1[%c0, %c0_0, %c0_1] : memref<1x8x1xi32, #tpu.memory_space<vmem>>, vector<1x8x1xi32>
    %1 = vector.shape_cast %0 : vector<1x8x1xi32> to vector<8x1xi32>
    %2 = tpu.iota {dimensions = array<i32: 1>} : vector<8x28xi32>
    %3 = vector.broadcast %1 : vector<8x1xi32> to vector<8x28xi32>
    %4 = arith.cmpi eq, %3, %2 : vector<8x28xi32>
    %5 = arith.extui %4 : vector<8x28xi1> to vector<8x28xi32>
    %6 = arith.sitofp %5 : vector<8x28xi32> to vector<8x28xf32>
    %c0_2 = arith.constant 0 : index
    %c0_3 = arith.constant 0 : index
    %7 = vector.load %arg2[%c0_2, %c0_3] : memref<28x64xf32, #tpu.memory_space<vmem>>, vector<28x64xf32>
    %cst = arith.constant dense<0.000000e+00> : vector<8x64xf32>
    %8 = tpu.matmul %6, %7, %cst {dimension_numbers = #tpu.dot_dimension_numbers<[1], [0], [0], [1], [0, 0, 1, 1], [], []>} : vector<8x28xf32>, vector<28x64xf32>, vector<8x64xf32> -> vector<8x64xf32>
    %c0_4 = arith.constant 0 : index
    %c0_5 = arith.constant 0 : index
    %9 = vector.load %arg3[%c0_4, %c0_5] : memref<8x64xf32, #tpu.memory_space<vmem>>, vector<8x64xf32>
    %10 = arith.addf %8, %9 : vector<8x64xf32>
    %c0_6 = arith.constant 0 : index
    %c0_7 = arith.constant 0 : index
    %c0_8 = arith.constant 0 : index
    %11 = vector.load %arg4[%c0_6, %c0_7, %c0_8] : memref<1x8x64xf32, #tpu.memory_space<vmem>>, vector<1x8x64xf32>
    %12 = vector.shape_cast %11 : vector<1x8x64xf32> to vector<8x64xf32>
    %13 = vector.shape_cast %10 : vector<8x64xf32> to vector<1x8x64xf32>
    tpu.vector_store %arg4[%c0_6, %c0_7, %c0_8], %13 {strides = array<i32>} : memref<1x8x64xf32, #tpu.memory_space<vmem>>, vector<1x8x64xf32>,
    return
  }
  func.func @transform_0(%arg0: i32) -> (i32, i32, i32) {
    %c0_i32 = arith.constant 0 : i32
    %c0_i32_0 = arith.constant 0 : i32
    %c0_i32_1 = arith.constant 0 : i32
    return %arg0, %c0_i32, %c0_i32_0 : i32, i32, i32
  }
  func.func @transform_1(%arg0: i32) -> (i32, i32) {
    %c0_i32 = arith.constant 0 : i32
    %c0_i32_0 = arith.constant 0 : i32
    %c0_i32_1 = arith.constant 0 : i32
    return %c0_i32, %c0_i32_0 : i32, i32
  }
  func.func @transform_2(%arg0: i32) -> (i32, i32) {
    %c0_i32 = arith.constant 0 : i32
    %c0_i32_0 = arith.constant 0 : i32
    %c0_i32_1 = arith.constant 0 : i32
    return %c0_i32, %c0_i32_0 : i32, i32
  }
  func.func @transform_3(%arg0: i32) -> (i32, i32, i32) {
    %c0_i32 = arith.constant 0 : i32
    %c0_i32_0 = arith.constant 0 : i32
    %c0_i32_1 = arith.constant 0 : i32
    return %arg0, %c0_i32, %c0_i32_0 : i32, i32, i32
  }
}

module attributes {stable_mosaic.version = 11 : i64} {
  func.func @_encoder_block_kernel(%arg0: i32, %arg1: memref<1x8x64xf32, #tpu.memory_space<vmem>>, %arg2: memref<64x192xbf16, #tpu.memory_space<vmem>>, %arg3: memref<1x192xf32, #tpu.memory_space<vmem>>, %arg4: memref<64x64xbf16, #tpu.memory_space<vmem>>, %arg5: memref<1x64xf32, #tpu.memory_space<vmem>>, %arg6: memref<1x64xf32, #tpu.memory_space<vmem>>, %arg7: memref<1x64xf32, #tpu.memory_space<vmem>>, %arg8: memref<64x256xbf16, #tpu.memory_space<vmem>>, %arg9: memref<1x256xf32, #tpu.memory_space<vmem>>, %arg10: memref<256x64xbf16, #tpu.memory_space<vmem>>, %arg11: memref<1x64xf32, #tpu.memory_space<vmem>>, %arg12: memref<1x64xf32, #tpu.memory_space<vmem>>, %arg13: memref<1x64xf32, #tpu.memory_space<vmem>>, %arg14: memref<1x8x64xf32, #tpu.memory_space<vmem>>) attributes {dimension_semantics = [#tpu.dimension_semantics<parallel>], iteration_bounds = array<i64: 2>, scalar_prefetch = 0 : i64, scratch_operands = 0 : i64, tpu.core_type = #tpu.core_type<tc>, window_params = [{transform_indices = @transform_0, window_bounds = array<i64: 1, 8, 64>}, {pipeline_mode = #tpu.pipeline_mode<synchronous>, transform_indices = @transform_1, window_bounds = array<i64: 64, 192>}, {pipeline_mode = #tpu.pipeline_mode<synchronous>, transform_indices = @transform_2, window_bounds = array<i64: 1, 192>}, {pipeline_mode = #tpu.pipeline_mode<synchronous>, transform_indices = @transform_3, window_bounds = array<i64: 64, 64>}, {pipeline_mode = #tpu.pipeline_mode<synchronous>, transform_indices = @transform_4, window_bounds = array<i64: 1, 64>}, {pipeline_mode = #tpu.pipeline_mode<synchronous>, transform_indices = @transform_5, window_bounds = array<i64: 1, 64>}, {pipeline_mode = #tpu.pipeline_mode<synchronous>, transform_indices = @transform_6, window_bounds = array<i64: 1, 64>}, {pipeline_mode = #tpu.pipeline_mode<synchronous>, transform_indices = @transform_7, window_bounds = array<i64: 64, 256>}, {pipeline_mode = #tpu.pipeline_mode<synchronous>, transform_indices = @transform_8, window_bounds = array<i64: 1, 256>}, {pipeline_mode = #tpu.pipeline_mode<synchronous>, transform_indices = @transform_9, window_bounds = array<i64: 256, 64>}, {pipeline_mode = #tpu.pipeline_mode<synchronous>, transform_indices = @transform_10, window_bounds = array<i64: 1, 64>}, {pipeline_mode = #tpu.pipeline_mode<synchronous>, transform_indices = @transform_11, window_bounds = array<i64: 1, 64>}, {pipeline_mode = #tpu.pipeline_mode<synchronous>, transform_indices = @transform_12, window_bounds = array<i64: 1, 64>}, {transform_indices = @transform_13, window_bounds = array<i64: 1, 8, 64>}]} {
    %c0 = arith.constant 0 : index
    %c0_0 = arith.constant 0 : index
    %c0_1 = arith.constant 0 : index
    %0 = vector.load %arg1[%c0, %c0_0, %c0_1] : memref<1x8x64xf32, #tpu.memory_space<vmem>>, vector<1x8x64xf32>
    %1 = vector.shape_cast %0 : vector<1x8x64xf32> to vector<8x64xf32>
    %2 = arith.truncf %1 : vector<8x64xf32> to vector<8x64xbf16>
    %c0_2 = arith.constant 0 : index
    %c0_3 = arith.constant 0 : index
    %3 = vector.load %arg2[%c0_2, %c0_3] : memref<64x192xbf16, #tpu.memory_space<vmem>>, vector<64x192xbf16>
    %cst = arith.constant dense<0.000000e+00> : vector<8x192xf32>
    %4 = tpu.matmul %2, %3, %cst {dimension_numbers = #tpu.dot_dimension_numbers<[1], [0], [0], [1], [0, 0, 1, 1], [], []>} : vector<8x64xbf16>, vector<64x192xbf16>, vector<8x192xf32> -> vector<8x192xf32>
    %c0_4 = arith.constant 0 : index
    %c0_5 = arith.constant 0 : index
    %5 = vector.load %arg3[%c0_4, %c0_5] : memref<1x192xf32, #tpu.memory_space<vmem>>, vector<1x192xf32>
    %6 = vector.broadcast %5 : vector<1x192xf32> to vector<8x192xf32>
    %7 = arith.addf %4, %6 : vector<8x192xf32>
    %8 = vector.extract_strided_slice %7 {offsets = [0, 0], sizes = [8, 64], strides = [1, 1]} : vector<8x192xf32> to vector<8x64xf32>
    %9 = vector.extract_strided_slice %7 {offsets = [0, 64], sizes = [8, 64], strides = [1, 1]} : vector<8x192xf32> to vector<8x64xf32>
    %10 = vector.extract_strided_slice %7 {offsets = [0, 128], sizes = [8, 64], strides = [1, 1]} : vector<8x192xf32> to vector<8x64xf32>
    %11 = vector.extract_strided_slice %8 {offsets = [0, 0], sizes = [8, 16], strides = [1, 1]} : vector<8x64xf32> to vector<8x16xf32>
    %12 = vector.extract_strided_slice %9 {offsets = [0, 0], sizes = [8, 16], strides = [1, 1]} : vector<8x64xf32> to vector<8x16xf32>
    %13 = vector.extract_strided_slice %10 {offsets = [0, 0], sizes = [8, 16], strides = [1, 1]} : vector<8x64xf32> to vector<8x16xf32>
    %cst_6 = arith.constant dense<0.000000e+00> : vector<8x8xf32>
    %14 = tpu.matmul %11, %12, %cst_6 {dimension_numbers = #tpu.dot_dimension_numbers<[1], [1], [0], [0], [0, 0, 1, 0], [], []>} : vector<8x16xf32>, vector<8x16xf32>, vector<8x8xf32> -> vector<8x8xf32>
    %cst_7 = arith.constant 2.500000e-01 : f32
    %15 = vector.broadcast %cst_7 : f32 to vector<8x8xf32>
    %16 = arith.mulf %14, %15 : vector<8x8xf32>
    %cst_8 = arith.constant dense<0xFF800000> : vector<8xf32>
    %17 = vector.multi_reduction <maximumf>, %16, %cst_8 [1] : vector<8x8xf32> to vector<8xf32>
    %18 = vector.shape_cast %17 : vector<8xf32> to vector<8x1xf32>
    %19 = vector.broadcast %18 : vector<8x1xf32> to vector<8x8xf32>
    %20 = arith.subf %16, %19 : vector<8x8xf32>
    %21 = math.exp %20 : vector<8x8xf32>
    %cst_9 = arith.constant dense<0.000000e+00> : vector<8xf32>
    %22 = vector.multi_reduction <add>, %21, %cst_9 [1] : vector<8x8xf32> to vector<8xf32>
    %23 = vector.shape_cast %22 : vector<8xf32> to vector<8x1xf32>
    %24 = vector.broadcast %23 : vector<8x1xf32> to vector<8x8xf32>
    %25 = arith.divf %21, %24 : vector<8x8xf32>
    %cst_10 = arith.constant dense<0.000000e+00> : vector<8x16xf32>
    %26 = tpu.matmul %25, %13, %cst_10 {dimension_numbers = #tpu.dot_dimension_numbers<[1], [0], [0], [1], [0, 0, 1, 1], [], []>} : vector<8x8xf32>, vector<8x16xf32>, vector<8x16xf32> -> vector<8x16xf32>
    %27 = vector.extract_strided_slice %8 {offsets = [0, 16], sizes = [8, 16], strides = [1, 1]} : vector<8x64xf32> to vector<8x16xf32>
    %28 = vector.extract_strided_slice %9 {offsets = [0, 16], sizes = [8, 16], strides = [1, 1]} : vector<8x64xf32> to vector<8x16xf32>
    %29 = vector.extract_strided_slice %10 {offsets = [0, 16], sizes = [8, 16], strides = [1, 1]} : vector<8x64xf32> to vector<8x16xf32>
    %cst_11 = arith.constant dense<0.000000e+00> : vector<8x8xf32>
    %30 = tpu.matmul %27, %28, %cst_11 {dimension_numbers = #tpu.dot_dimension_numbers<[1], [1], [0], [0], [0, 0, 1, 0], [], []>} : vector<8x16xf32>, vector<8x16xf32>, vector<8x8xf32> -> vector<8x8xf32>
    %cst_12 = arith.constant 2.500000e-01 : f32
    %31 = vector.broadcast %cst_12 : f32 to vector<8x8xf32>
    %32 = arith.mulf %30, %31 : vector<8x8xf32>
    %cst_13 = arith.constant dense<0xFF800000> : vector<8xf32>
    %33 = vector.multi_reduction <maximumf>, %32, %cst_13 [1] : vector<8x8xf32> to vector<8xf32>
    %34 = vector.shape_cast %33 : vector<8xf32> to vector<8x1xf32>
    %35 = vector.broadcast %34 : vector<8x1xf32> to vector<8x8xf32>
    %36 = arith.subf %32, %35 : vector<8x8xf32>
    %37 = math.exp %36 : vector<8x8xf32>
    %cst_14 = arith.constant dense<0.000000e+00> : vector<8xf32>
    %38 = vector.multi_reduction <add>, %37, %cst_14 [1] : vector<8x8xf32> to vector<8xf32>
    %39 = vector.shape_cast %38 : vector<8xf32> to vector<8x1xf32>
    %40 = vector.broadcast %39 : vector<8x1xf32> to vector<8x8xf32>
    %41 = arith.divf %37, %40 : vector<8x8xf32>
    %cst_15 = arith.constant dense<0.000000e+00> : vector<8x16xf32>
    %42 = tpu.matmul %41, %29, %cst_15 {dimension_numbers = #tpu.dot_dimension_numbers<[1], [0], [0], [1], [0, 0, 1, 1], [], []>} : vector<8x8xf32>, vector<8x16xf32>, vector<8x16xf32> -> vector<8x16xf32>
    %43 = vector.extract_strided_slice %8 {offsets = [0, 32], sizes = [8, 16], strides = [1, 1]} : vector<8x64xf32> to vector<8x16xf32>
    %44 = vector.extract_strided_slice %9 {offsets = [0, 32], sizes = [8, 16], strides = [1, 1]} : vector<8x64xf32> to vector<8x16xf32>
    %45 = vector.extract_strided_slice %10 {offsets = [0, 32], sizes = [8, 16], strides = [1, 1]} : vector<8x64xf32> to vector<8x16xf32>
    %cst_16 = arith.constant dense<0.000000e+00> : vector<8x8xf32>
    %46 = tpu.matmul %43, %44, %cst_16 {dimension_numbers = #tpu.dot_dimension_numbers<[1], [1], [0], [0], [0, 0, 1, 0], [], []>} : vector<8x16xf32>, vector<8x16xf32>, vector<8x8xf32> -> vector<8x8xf32>
    %cst_17 = arith.constant 2.500000e-01 : f32
    %47 = vector.broadcast %cst_17 : f32 to vector<8x8xf32>
    %48 = arith.mulf %46, %47 : vector<8x8xf32>
    %cst_18 = arith.constant dense<0xFF800000> : vector<8xf32>
    %49 = vector.multi_reduction <maximumf>, %48, %cst_18 [1] : vector<8x8xf32> to vector<8xf32>
    %50 = vector.shape_cast %49 : vector<8xf32> to vector<8x1xf32>
    %51 = vector.broadcast %50 : vector<8x1xf32> to vector<8x8xf32>
    %52 = arith.subf %48, %51 : vector<8x8xf32>
    %53 = math.exp %52 : vector<8x8xf32>
    %cst_19 = arith.constant dense<0.000000e+00> : vector<8xf32>
    %54 = vector.multi_reduction <add>, %53, %cst_19 [1] : vector<8x8xf32> to vector<8xf32>
    %55 = vector.shape_cast %54 : vector<8xf32> to vector<8x1xf32>
    %56 = vector.broadcast %55 : vector<8x1xf32> to vector<8x8xf32>
    %57 = arith.divf %53, %56 : vector<8x8xf32>
    %cst_20 = arith.constant dense<0.000000e+00> : vector<8x16xf32>
    %58 = tpu.matmul %57, %45, %cst_20 {dimension_numbers = #tpu.dot_dimension_numbers<[1], [0], [0], [1], [0, 0, 1, 1], [], []>} : vector<8x8xf32>, vector<8x16xf32>, vector<8x16xf32> -> vector<8x16xf32>
    %59 = vector.extract_strided_slice %8 {offsets = [0, 48], sizes = [8, 16], strides = [1, 1]} : vector<8x64xf32> to vector<8x16xf32>
    %60 = vector.extract_strided_slice %9 {offsets = [0, 48], sizes = [8, 16], strides = [1, 1]} : vector<8x64xf32> to vector<8x16xf32>
    %61 = vector.extract_strided_slice %10 {offsets = [0, 48], sizes = [8, 16], strides = [1, 1]} : vector<8x64xf32> to vector<8x16xf32>
    %cst_21 = arith.constant dense<0.000000e+00> : vector<8x8xf32>
    %62 = tpu.matmul %59, %60, %cst_21 {dimension_numbers = #tpu.dot_dimension_numbers<[1], [1], [0], [0], [0, 0, 1, 0], [], []>} : vector<8x16xf32>, vector<8x16xf32>, vector<8x8xf32> -> vector<8x8xf32>
    %cst_22 = arith.constant 2.500000e-01 : f32
    %63 = vector.broadcast %cst_22 : f32 to vector<8x8xf32>
    %64 = arith.mulf %62, %63 : vector<8x8xf32>
    %cst_23 = arith.constant dense<0xFF800000> : vector<8xf32>
    %65 = vector.multi_reduction <maximumf>, %64, %cst_23 [1] : vector<8x8xf32> to vector<8xf32>
    %66 = vector.shape_cast %65 : vector<8xf32> to vector<8x1xf32>
    %67 = vector.broadcast %66 : vector<8x1xf32> to vector<8x8xf32>
    %68 = arith.subf %64, %67 : vector<8x8xf32>
    %69 = math.exp %68 : vector<8x8xf32>
    %cst_24 = arith.constant dense<0.000000e+00> : vector<8xf32>
    %70 = vector.multi_reduction <add>, %69, %cst_24 [1] : vector<8x8xf32> to vector<8xf32>
    %71 = vector.shape_cast %70 : vector<8xf32> to vector<8x1xf32>
    %72 = vector.broadcast %71 : vector<8x1xf32> to vector<8x8xf32>
    %73 = arith.divf %69, %72 : vector<8x8xf32>
    %cst_25 = arith.constant dense<0.000000e+00> : vector<8x16xf32>
    %74 = tpu.matmul %73, %61, %cst_25 {dimension_numbers = #tpu.dot_dimension_numbers<[1], [0], [0], [1], [0, 0, 1, 1], [], []>} : vector<8x8xf32>, vector<8x16xf32>, vector<8x16xf32> -> vector<8x16xf32>
    %75 = tpu.concatenate %26, %42, %58, %74 in 1 : vector<8x16xf32>, vector<8x16xf32>, vector<8x16xf32>, vector<8x16xf32> -> vector<8x64xf32>
    %76 = arith.truncf %75 : vector<8x64xf32> to vector<8x64xbf16>
    %c0_26 = arith.constant 0 : index
    %c0_27 = arith.constant 0 : index
    %77 = vector.load %arg4[%c0_26, %c0_27] : memref<64x64xbf16, #tpu.memory_space<vmem>>, vector<64x64xbf16>
    %cst_28 = arith.constant dense<0.000000e+00> : vector<8x64xf32>
    %78 = tpu.matmul %76, %77, %cst_28 {dimension_numbers = #tpu.dot_dimension_numbers<[1], [0], [0], [1], [0, 0, 1, 1], [], []>} : vector<8x64xbf16>, vector<64x64xbf16>, vector<8x64xf32> -> vector<8x64xf32>
    %c0_29 = arith.constant 0 : index
    %c0_30 = arith.constant 0 : index
    %79 = vector.load %arg5[%c0_29, %c0_30] : memref<1x64xf32, #tpu.memory_space<vmem>>, vector<1x64xf32>
    %80 = vector.broadcast %79 : vector<1x64xf32> to vector<8x64xf32>
    %81 = arith.addf %78, %80 : vector<8x64xf32>
    %82 = arith.addf %1, %81 : vector<8x64xf32>
    %cst_31 = arith.constant dense<0.000000e+00> : vector<8xf32>
    %83 = vector.multi_reduction <add>, %82, %cst_31 [1] : vector<8x64xf32> to vector<8xf32>
    %84 = vector.shape_cast %83 : vector<8xf32> to vector<8x1xf32>
    %cst_32 = arith.constant 6.400000e+01 : f32
    %85 = vector.broadcast %cst_32 : f32 to vector<8x1xf32>
    %86 = arith.divf %84, %85 : vector<8x1xf32>
    %87 = vector.broadcast %86 : vector<8x1xf32> to vector<8x64xf32>
    %88 = arith.subf %82, %87 : vector<8x64xf32>
    %89 = arith.mulf %88, %88 : vector<8x64xf32>
    %cst_33 = arith.constant dense<0.000000e+00> : vector<8xf32>
    %90 = vector.multi_reduction <add>, %89, %cst_33 [1] : vector<8x64xf32> to vector<8xf32>
    %91 = vector.shape_cast %90 : vector<8xf32> to vector<8x1xf32>
    %cst_34 = arith.constant 6.400000e+01 : f32
    %92 = vector.broadcast %cst_34 : f32 to vector<8x1xf32>
    %93 = arith.divf %91, %92 : vector<8x1xf32>
    %94 = vector.broadcast %86 : vector<8x1xf32> to vector<8x64xf32>
    %95 = arith.subf %82, %94 : vector<8x64xf32>
    %cst_35 = arith.constant 9.99999974E-6 : f32
    %96 = vector.broadcast %cst_35 : f32 to vector<8x1xf32>
    %97 = arith.addf %93, %96 : vector<8x1xf32>
    %98 = math.rsqrt %97 : vector<8x1xf32>
    %99 = vector.broadcast %98 : vector<8x1xf32> to vector<8x64xf32>
    %100 = arith.mulf %95, %99 : vector<8x64xf32>
    %c0_36 = arith.constant 0 : index
    %c0_37 = arith.constant 0 : index
    %101 = vector.load %arg6[%c0_36, %c0_37] : memref<1x64xf32, #tpu.memory_space<vmem>>, vector<1x64xf32>
    %102 = vector.broadcast %101 : vector<1x64xf32> to vector<8x64xf32>
    %103 = arith.mulf %100, %102 : vector<8x64xf32>
    %c0_38 = arith.constant 0 : index
    %c0_39 = arith.constant 0 : index
    %104 = vector.load %arg7[%c0_38, %c0_39] : memref<1x64xf32, #tpu.memory_space<vmem>>, vector<1x64xf32>
    %105 = vector.broadcast %104 : vector<1x64xf32> to vector<8x64xf32>
    %106 = arith.addf %103, %105 : vector<8x64xf32>
    %107 = arith.truncf %106 : vector<8x64xf32> to vector<8x64xbf16>
    %c0_40 = arith.constant 0 : index
    %c0_41 = arith.constant 0 : index
    %108 = vector.load %arg8[%c0_40, %c0_41] : memref<64x256xbf16, #tpu.memory_space<vmem>>, vector<64x256xbf16>
    %cst_42 = arith.constant dense<0.000000e+00> : vector<8x256xf32>
    %109 = tpu.matmul %107, %108, %cst_42 {dimension_numbers = #tpu.dot_dimension_numbers<[1], [0], [0], [1], [0, 0, 1, 1], [], []>} : vector<8x64xbf16>, vector<64x256xbf16>, vector<8x256xf32> -> vector<8x256xf32>
    %c0_43 = arith.constant 0 : index
    %c0_44 = arith.constant 0 : index
    %110 = vector.load %arg9[%c0_43, %c0_44] : memref<1x256xf32, #tpu.memory_space<vmem>>, vector<1x256xf32>
    %111 = vector.broadcast %110 : vector<1x256xf32> to vector<8x256xf32>
    %112 = arith.addf %109, %111 : vector<8x256xf32>
    %cst_45 = arith.constant 0.000000e+00 : f32
    %113 = vector.broadcast %cst_45 : f32 to vector<8x256xf32>
    %114 = arith.maximumf %112, %113 : vector<8x256xf32>
    %115 = arith.truncf %114 : vector<8x256xf32> to vector<8x256xbf16>
    %c0_46 = arith.constant 0 : index
    %c0_47 = arith.constant 0 : index
    %116 = vector.load %arg10[%c0_46, %c0_47] : memref<256x64xbf16, #tpu.memory_space<vmem>>, vector<256x64xbf16>
    %cst_48 = arith.constant dense<0.000000e+00> : vector<8x64xf32>
    %117 = tpu.matmul %115, %116, %cst_48 {dimension_numbers = #tpu.dot_dimension_numbers<[1], [0], [0], [1], [0, 0, 1, 1], [], []>} : vector<8x256xbf16>, vector<256x64xbf16>, vector<8x64xf32> -> vector<8x64xf32>
    %c0_49 = arith.constant 0 : index
    %c0_50 = arith.constant 0 : index
    %118 = vector.load %arg11[%c0_49, %c0_50] : memref<1x64xf32, #tpu.memory_space<vmem>>, vector<1x64xf32>
    %119 = vector.broadcast %118 : vector<1x64xf32> to vector<8x64xf32>
    %120 = arith.addf %117, %119 : vector<8x64xf32>
    %121 = arith.addf %106, %120 : vector<8x64xf32>
    %cst_51 = arith.constant dense<0.000000e+00> : vector<8xf32>
    %122 = vector.multi_reduction <add>, %121, %cst_51 [1] : vector<8x64xf32> to vector<8xf32>
    %123 = vector.shape_cast %122 : vector<8xf32> to vector<8x1xf32>
    %cst_52 = arith.constant 6.400000e+01 : f32
    %124 = vector.broadcast %cst_52 : f32 to vector<8x1xf32>
    %125 = arith.divf %123, %124 : vector<8x1xf32>
    %126 = vector.broadcast %125 : vector<8x1xf32> to vector<8x64xf32>
    %127 = arith.subf %121, %126 : vector<8x64xf32>
    %128 = arith.mulf %127, %127 : vector<8x64xf32>
    %cst_53 = arith.constant dense<0.000000e+00> : vector<8xf32>
    %129 = vector.multi_reduction <add>, %128, %cst_53 [1] : vector<8x64xf32> to vector<8xf32>
    %130 = vector.shape_cast %129 : vector<8xf32> to vector<8x1xf32>
    %cst_54 = arith.constant 6.400000e+01 : f32
    %131 = vector.broadcast %cst_54 : f32 to vector<8x1xf32>
    %132 = arith.divf %130, %131 : vector<8x1xf32>
    %133 = vector.broadcast %125 : vector<8x1xf32> to vector<8x64xf32>
    %134 = arith.subf %121, %133 : vector<8x64xf32>
    %cst_55 = arith.constant 9.99999974E-6 : f32
    %135 = vector.broadcast %cst_55 : f32 to vector<8x1xf32>
    %136 = arith.addf %132, %135 : vector<8x1xf32>
    %137 = math.rsqrt %136 : vector<8x1xf32>
    %138 = vector.broadcast %137 : vector<8x1xf32> to vector<8x64xf32>
    %139 = arith.mulf %134, %138 : vector<8x64xf32>
    %c0_56 = arith.constant 0 : index
    %c0_57 = arith.constant 0 : index
    %140 = vector.load %arg12[%c0_56, %c0_57] : memref<1x64xf32, #tpu.memory_space<vmem>>, vector<1x64xf32>
    %141 = vector.broadcast %140 : vector<1x64xf32> to vector<8x64xf32>
    %142 = arith.mulf %139, %141 : vector<8x64xf32>
    %c0_58 = arith.constant 0 : index
    %c0_59 = arith.constant 0 : index
    %143 = vector.load %arg13[%c0_58, %c0_59] : memref<1x64xf32, #tpu.memory_space<vmem>>, vector<1x64xf32>
    %144 = vector.broadcast %143 : vector<1x64xf32> to vector<8x64xf32>
    %145 = arith.addf %142, %144 : vector<8x64xf32>
    %c0_60 = arith.constant 0 : index
    %c0_61 = arith.constant 0 : index
    %c0_62 = arith.constant 0 : index
    %146 = vector.load %arg14[%c0_60, %c0_61, %c0_62] : memref<1x8x64xf32, #tpu.memory_space<vmem>>, vector<1x8x64xf32>
    %147 = vector.shape_cast %146 : vector<1x8x64xf32> to vector<8x64xf32>
    %148 = vector.shape_cast %145 : vector<8x64xf32> to vector<1x8x64xf32>
    tpu.vector_store %arg14[%c0_60, %c0_61, %c0_62], %148 {strides = array<i32>} : memref<1x8x64xf32, #tpu.memory_space<vmem>>, vector<1x8x64xf32>,
    return
  }
  func.func @transform_0(%arg0: i32) -> (i32, i32, i32) {
    %c0_i32 = arith.constant 0 : i32
    %c0_i32_0 = arith.constant 0 : i32
    %c0_i32_1 = arith.constant 0 : i32
    return %arg0, %c0_i32, %c0_i32_0 : i32, i32, i32
  }
  func.func @transform_1(%arg0: i32) -> (i32, i32) {
    %c0_i32 = arith.constant 0 : i32
    %c0_i32_0 = arith.constant 0 : i32
    %c0_i32_1 = arith.constant 0 : i32
    return %c0_i32, %c0_i32_0 : i32, i32
  }
  func.func @transform_2(%arg0: i32) -> (i32, i32) {
    %c0_i32 = arith.constant 0 : i32
    %c0_i32_0 = arith.constant 0 : i32
    %c0_i32_1 = arith.constant 0 : i32
    return %c0_i32, %c0_i32_0 : i32, i32
  }
  func.func @transform_3(%arg0: i32) -> (i32, i32) {
    %c0_i32 = arith.constant 0 : i32
    %c0_i32_0 = arith.constant 0 : i32
    %c0_i32_1 = arith.constant 0 : i32
    return %c0_i32, %c0_i32_0 : i32, i32
  }
  func.func @transform_4(%arg0: i32) -> (i32, i32) {
    %c0_i32 = arith.constant 0 : i32
    %c0_i32_0 = arith.constant 0 : i32
    %c0_i32_1 = arith.constant 0 : i32
    return %c0_i32, %c0_i32_0 : i32, i32
  }
  func.func @transform_5(%arg0: i32) -> (i32, i32) {
    %c0_i32 = arith.constant 0 : i32
    %c0_i32_0 = arith.constant 0 : i32
    %c0_i32_1 = arith.constant 0 : i32
    return %c0_i32, %c0_i32_0 : i32, i32
  }
  func.func @transform_6(%arg0: i32) -> (i32, i32) {
    %c0_i32 = arith.constant 0 : i32
    %c0_i32_0 = arith.constant 0 : i32
    %c0_i32_1 = arith.constant 0 : i32
    return %c0_i32, %c0_i32_0 : i32, i32
  }
  func.func @transform_7(%arg0: i32) -> (i32, i32) {
    %c0_i32 = arith.constant 0 : i32
    %c0_i32_0 = arith.constant 0 : i32
    %c0_i32_1 = arith.constant 0 : i32
    return %c0_i32, %c0_i32_0 : i32, i32
  }
  func.func @transform_8(%arg0: i32) -> (i32, i32) {
    %c0_i32 = arith.constant 0 : i32
    %c0_i32_0 = arith.constant 0 : i32
    %c0_i32_1 = arith.constant 0 : i32
    return %c0_i32, %c0_i32_0 : i32, i32
  }
  func.func @transform_9(%arg0: i32) -> (i32, i32) {
    %c0_i32 = arith.constant 0 : i32
    %c0_i32_0 = arith.constant 0 : i32
    %c0_i32_1 = arith.constant 0 : i32
    return %c0_i32, %c0_i32_0 : i32, i32
  }
  func.func @transform_10(%arg0: i32) -> (i32, i32) {
    %c0_i32 = arith.constant 0 : i32
    %c0_i32_0 = arith.constant 0 : i32
    %c0_i32_1 = arith.constant 0 : i32
    return %c0_i32, %c0_i32_0 : i32, i32
  }
  func.func @transform_11(%arg0: i32) -> (i32, i32) {
    %c0_i32 = arith.constant 0 : i32
    %c0_i32_0 = arith.constant 0 : i32
    %c0_i32_1 = arith.constant 0 : i32
    return %c0_i32, %c0_i32_0 : i32, i32
  }
  func.func @transform_12(%arg0: i32) -> (i32, i32) {
    %c0_i32 = arith.constant 0 : i32
    %c0_i32_0 = arith.constant 0 : i32
    %c0_i32_1 = arith.constant 0 : i32
    return %c0_i32, %c0_i32_0 : i32, i32
  }
  func.func @transform_13(%arg0: i32) -> (i32, i32, i32) {
    %c0_i32 = arith.constant 0 : i32
    %c0_i32_0 = arith.constant 0 : i32
    %c0_i32_1 = arith.constant 0 : i32
    return %arg0, %c0_i32, %c0_i32_0 : i32, i32, i32
  }
}

module attributes {stable_mosaic.version = 11 : i64} {
  func.func @_decoder_block_kernel(%arg0: i32, %arg1: memref<1x8x64xf32, #tpu.memory_space<vmem>>, %arg2: memref<1x8x64xf32, #tpu.memory_space<vmem>>, %arg3: memref<64x192xbf16, #tpu.memory_space<vmem>>, %arg4: memref<1x192xf32, #tpu.memory_space<vmem>>, %arg5: memref<64x64xbf16, #tpu.memory_space<vmem>>, %arg6: memref<1x64xf32, #tpu.memory_space<vmem>>, %arg7: memref<1x64xf32, #tpu.memory_space<vmem>>, %arg8: memref<1x64xf32, #tpu.memory_space<vmem>>, %arg9: memref<64x64xbf16, #tpu.memory_space<vmem>>, %arg10: memref<1x64xf32, #tpu.memory_space<vmem>>, %arg11: memref<64x128xbf16, #tpu.memory_space<vmem>>, %arg12: memref<1x128xf32, #tpu.memory_space<vmem>>, %arg13: memref<64x64xbf16, #tpu.memory_space<vmem>>, %arg14: memref<1x64xf32, #tpu.memory_space<vmem>>, %arg15: memref<1x64xf32, #tpu.memory_space<vmem>>, %arg16: memref<1x64xf32, #tpu.memory_space<vmem>>, %arg17: memref<64x256xbf16, #tpu.memory_space<vmem>>, %arg18: memref<1x256xf32, #tpu.memory_space<vmem>>, %arg19: memref<256x64xbf16, #tpu.memory_space<vmem>>, %arg20: memref<1x64xf32, #tpu.memory_space<vmem>>, %arg21: memref<1x64xf32, #tpu.memory_space<vmem>>, %arg22: memref<1x64xf32, #tpu.memory_space<vmem>>, %arg23: memref<1x8x64xf32, #tpu.memory_space<vmem>>) attributes {dimension_semantics = [#tpu.dimension_semantics<parallel>], iteration_bounds = array<i64: 2>, scalar_prefetch = 0 : i64, scratch_operands = 0 : i64, tpu.core_type = #tpu.core_type<tc>, window_params = [{transform_indices = @transform_0, window_bounds = array<i64: 1, 8, 64>}, {transform_indices = @transform_1, window_bounds = array<i64: 1, 8, 64>}, {pipeline_mode = #tpu.pipeline_mode<synchronous>, transform_indices = @transform_2, window_bounds = array<i64: 64, 192>}, {pipeline_mode = #tpu.pipeline_mode<synchronous>, transform_indices = @transform_3, window_bounds = array<i64: 1, 192>}, {pipeline_mode = #tpu.pipeline_mode<synchronous>, transform_indices = @transform_4, window_bounds = array<i64: 64, 64>}, {pipeline_mode = #tpu.pipeline_mode<synchronous>, transform_indices = @transform_5, window_bounds = array<i64: 1, 64>}, {pipeline_mode = #tpu.pipeline_mode<synchronous>, transform_indices = @transform_6, window_bounds = array<i64: 1, 64>}, {pipeline_mode = #tpu.pipeline_mode<synchronous>, transform_indices = @transform_7, window_bounds = array<i64: 1, 64>}, {pipeline_mode = #tpu.pipeline_mode<synchronous>, transform_indices = @transform_8, window_bounds = array<i64: 64, 64>}, {pipeline_mode = #tpu.pipeline_mode<synchronous>, transform_indices = @transform_9, window_bounds = array<i64: 1, 64>}, {pipeline_mode = #tpu.pipeline_mode<synchronous>, transform_indices = @transform_10, window_bounds = array<i64: 64, 128>}, {pipeline_mode = #tpu.pipeline_mode<synchronous>, transform_indices = @transform_11, window_bounds = array<i64: 1, 128>}, {pipeline_mode = #tpu.pipeline_mode<synchronous>, transform_indices = @transform_12, window_bounds = array<i64: 64, 64>}, {pipeline_mode = #tpu.pipeline_mode<synchronous>, transform_indices = @transform_13, window_bounds = array<i64: 1, 64>}, {pipeline_mode = #tpu.pipeline_mode<synchronous>, transform_indices = @transform_14, window_bounds = array<i64: 1, 64>}, {pipeline_mode = #tpu.pipeline_mode<synchronous>, transform_indices = @transform_15, window_bounds = array<i64: 1, 64>}, {pipeline_mode = #tpu.pipeline_mode<synchronous>, transform_indices = @transform_16, window_bounds = array<i64: 64, 256>}, {pipeline_mode = #tpu.pipeline_mode<synchronous>, transform_indices = @transform_17, window_bounds = array<i64: 1, 256>}, {pipeline_mode = #tpu.pipeline_mode<synchronous>, transform_indices = @transform_18, window_bounds = array<i64: 256, 64>}, {pipeline_mode = #tpu.pipeline_mode<synchronous>, transform_indices = @transform_19, window_bounds = array<i64: 1, 64>}, {pipeline_mode = #tpu.pipeline_mode<synchronous>, transform_indices = @transform_20, window_bounds = array<i64: 1, 64>}, {pipeline_mode = #tpu.pipeline_mode<synchronous>, transform_indices = @transform_21, window_bounds = array<i64: 1, 64>}, {transform_indices = @transform_22, window_bounds = array<i64: 1, 8, 64>}]} {
    %c0 = arith.constant 0 : index
    %c0_0 = arith.constant 0 : index
    %c0_1 = arith.constant 0 : index
    %0 = vector.load %arg1[%c0, %c0_0, %c0_1] : memref<1x8x64xf32, #tpu.memory_space<vmem>>, vector<1x8x64xf32>
    %1 = vector.shape_cast %0 : vector<1x8x64xf32> to vector<8x64xf32>
    %c0_2 = arith.constant 0 : index
    %c0_3 = arith.constant 0 : index
    %c0_4 = arith.constant 0 : index
    %2 = vector.load %arg2[%c0_2, %c0_3, %c0_4] : memref<1x8x64xf32, #tpu.memory_space<vmem>>, vector<1x8x64xf32>
    %3 = vector.shape_cast %2 : vector<1x8x64xf32> to vector<8x64xf32>
    %4 = arith.truncf %1 : vector<8x64xf32> to vector<8x64xbf16>
    %c0_5 = arith.constant 0 : index
    %c0_6 = arith.constant 0 : index
    %5 = vector.load %arg3[%c0_5, %c0_6] : memref<64x192xbf16, #tpu.memory_space<vmem>>, vector<64x192xbf16>
    %cst = arith.constant dense<0.000000e+00> : vector<8x192xf32>
    %6 = tpu.matmul %4, %5, %cst {dimension_numbers = #tpu.dot_dimension_numbers<[1], [0], [0], [1], [0, 0, 1, 1], [], []>} : vector<8x64xbf16>, vector<64x192xbf16>, vector<8x192xf32> -> vector<8x192xf32>
    %c0_7 = arith.constant 0 : index
    %c0_8 = arith.constant 0 : index
    %7 = vector.load %arg4[%c0_7, %c0_8] : memref<1x192xf32, #tpu.memory_space<vmem>>, vector<1x192xf32>
    %8 = vector.broadcast %7 : vector<1x192xf32> to vector<8x192xf32>
    %9 = arith.addf %6, %8 : vector<8x192xf32>
    %10 = vector.extract_strided_slice %9 {offsets = [0, 0], sizes = [8, 64], strides = [1, 1]} : vector<8x192xf32> to vector<8x64xf32>
    %11 = vector.extract_strided_slice %9 {offsets = [0, 64], sizes = [8, 64], strides = [1, 1]} : vector<8x192xf32> to vector<8x64xf32>
    %12 = vector.extract_strided_slice %9 {offsets = [0, 128], sizes = [8, 64], strides = [1, 1]} : vector<8x192xf32> to vector<8x64xf32>
    %13 = tpu.iota {dimensions = array<i32: 0>} : vector<8x8xi32>
    %14 = tpu.iota {dimensions = array<i32: 1>} : vector<8x8xi32>
    %15 = arith.cmpi sle, %14, %13 : vector<8x8xi32>
    %16 = vector.extract_strided_slice %10 {offsets = [0, 0], sizes = [8, 16], strides = [1, 1]} : vector<8x64xf32> to vector<8x16xf32>
    %17 = vector.extract_strided_slice %11 {offsets = [0, 0], sizes = [8, 16], strides = [1, 1]} : vector<8x64xf32> to vector<8x16xf32>
    %18 = vector.extract_strided_slice %12 {offsets = [0, 0], sizes = [8, 16], strides = [1, 1]} : vector<8x64xf32> to vector<8x16xf32>
    %cst_9 = arith.constant dense<0.000000e+00> : vector<8x8xf32>
    %19 = tpu.matmul %16, %17, %cst_9 {dimension_numbers = #tpu.dot_dimension_numbers<[1], [1], [0], [0], [0, 0, 1, 0], [], []>} : vector<8x16xf32>, vector<8x16xf32>, vector<8x8xf32> -> vector<8x8xf32>
    %cst_10 = arith.constant 2.500000e-01 : f32
    %20 = vector.broadcast %cst_10 : f32 to vector<8x8xf32>
    %21 = arith.mulf %19, %20 : vector<8x8xf32>
    %cst_11 = arith.constant -3.40282347E+38 : f32
    %22 = vector.broadcast %cst_11 : f32 to vector<8x8xf32>
    %23 = arith.select %15, %21, %22 : vector<8x8xi1>, vector<8x8xf32>
    %cst_12 = arith.constant dense<0xFF800000> : vector<8xf32>
    %24 = vector.multi_reduction <maximumf>, %23, %cst_12 [1] : vector<8x8xf32> to vector<8xf32>
    %25 = vector.shape_cast %24 : vector<8xf32> to vector<8x1xf32>
    %26 = vector.broadcast %25 : vector<8x1xf32> to vector<8x8xf32>
    %27 = arith.subf %23, %26 : vector<8x8xf32>
    %28 = math.exp %27 : vector<8x8xf32>
    %cst_13 = arith.constant dense<0.000000e+00> : vector<8xf32>
    %29 = vector.multi_reduction <add>, %28, %cst_13 [1] : vector<8x8xf32> to vector<8xf32>
    %30 = vector.shape_cast %29 : vector<8xf32> to vector<8x1xf32>
    %31 = vector.broadcast %30 : vector<8x1xf32> to vector<8x8xf32>
    %32 = arith.divf %28, %31 : vector<8x8xf32>
    %cst_14 = arith.constant dense<0.000000e+00> : vector<8x16xf32>
    %33 = tpu.matmul %32, %18, %cst_14 {dimension_numbers = #tpu.dot_dimension_numbers<[1], [0], [0], [1], [0, 0, 1, 1], [], []>} : vector<8x8xf32>, vector<8x16xf32>, vector<8x16xf32> -> vector<8x16xf32>
    %34 = vector.extract_strided_slice %10 {offsets = [0, 16], sizes = [8, 16], strides = [1, 1]} : vector<8x64xf32> to vector<8x16xf32>
    %35 = vector.extract_strided_slice %11 {offsets = [0, 16], sizes = [8, 16], strides = [1, 1]} : vector<8x64xf32> to vector<8x16xf32>
    %36 = vector.extract_strided_slice %12 {offsets = [0, 16], sizes = [8, 16], strides = [1, 1]} : vector<8x64xf32> to vector<8x16xf32>
    %cst_15 = arith.constant dense<0.000000e+00> : vector<8x8xf32>
    %37 = tpu.matmul %34, %35, %cst_15 {dimension_numbers = #tpu.dot_dimension_numbers<[1], [1], [0], [0], [0, 0, 1, 0], [], []>} : vector<8x16xf32>, vector<8x16xf32>, vector<8x8xf32> -> vector<8x8xf32>
    %cst_16 = arith.constant 2.500000e-01 : f32
    %38 = vector.broadcast %cst_16 : f32 to vector<8x8xf32>
    %39 = arith.mulf %37, %38 : vector<8x8xf32>
    %cst_17 = arith.constant -3.40282347E+38 : f32
    %40 = vector.broadcast %cst_17 : f32 to vector<8x8xf32>
    %41 = arith.select %15, %39, %40 : vector<8x8xi1>, vector<8x8xf32>
    %cst_18 = arith.constant dense<0xFF800000> : vector<8xf32>
    %42 = vector.multi_reduction <maximumf>, %41, %cst_18 [1] : vector<8x8xf32> to vector<8xf32>
    %43 = vector.shape_cast %42 : vector<8xf32> to vector<8x1xf32>
    %44 = vector.broadcast %43 : vector<8x1xf32> to vector<8x8xf32>
    %45 = arith.subf %41, %44 : vector<8x8xf32>
    %46 = math.exp %45 : vector<8x8xf32>
    %cst_19 = arith.constant dense<0.000000e+00> : vector<8xf32>
    %47 = vector.multi_reduction <add>, %46, %cst_19 [1] : vector<8x8xf32> to vector<8xf32>
    %48 = vector.shape_cast %47 : vector<8xf32> to vector<8x1xf32>
    %49 = vector.broadcast %48 : vector<8x1xf32> to vector<8x8xf32>
    %50 = arith.divf %46, %49 : vector<8x8xf32>
    %cst_20 = arith.constant dense<0.000000e+00> : vector<8x16xf32>
    %51 = tpu.matmul %50, %36, %cst_20 {dimension_numbers = #tpu.dot_dimension_numbers<[1], [0], [0], [1], [0, 0, 1, 1], [], []>} : vector<8x8xf32>, vector<8x16xf32>, vector<8x16xf32> -> vector<8x16xf32>
    %52 = vector.extract_strided_slice %10 {offsets = [0, 32], sizes = [8, 16], strides = [1, 1]} : vector<8x64xf32> to vector<8x16xf32>
    %53 = vector.extract_strided_slice %11 {offsets = [0, 32], sizes = [8, 16], strides = [1, 1]} : vector<8x64xf32> to vector<8x16xf32>
    %54 = vector.extract_strided_slice %12 {offsets = [0, 32], sizes = [8, 16], strides = [1, 1]} : vector<8x64xf32> to vector<8x16xf32>
    %cst_21 = arith.constant dense<0.000000e+00> : vector<8x8xf32>
    %55 = tpu.matmul %52, %53, %cst_21 {dimension_numbers = #tpu.dot_dimension_numbers<[1], [1], [0], [0], [0, 0, 1, 0], [], []>} : vector<8x16xf32>, vector<8x16xf32>, vector<8x8xf32> -> vector<8x8xf32>
    %cst_22 = arith.constant 2.500000e-01 : f32
    %56 = vector.broadcast %cst_22 : f32 to vector<8x8xf32>
    %57 = arith.mulf %55, %56 : vector<8x8xf32>
    %cst_23 = arith.constant -3.40282347E+38 : f32
    %58 = vector.broadcast %cst_23 : f32 to vector<8x8xf32>
    %59 = arith.select %15, %57, %58 : vector<8x8xi1>, vector<8x8xf32>
    %cst_24 = arith.constant dense<0xFF800000> : vector<8xf32>
    %60 = vector.multi_reduction <maximumf>, %59, %cst_24 [1] : vector<8x8xf32> to vector<8xf32>
    %61 = vector.shape_cast %60 : vector<8xf32> to vector<8x1xf32>
    %62 = vector.broadcast %61 : vector<8x1xf32> to vector<8x8xf32>
    %63 = arith.subf %59, %62 : vector<8x8xf32>
    %64 = math.exp %63 : vector<8x8xf32>
    %cst_25 = arith.constant dense<0.000000e+00> : vector<8xf32>
    %65 = vector.multi_reduction <add>, %64, %cst_25 [1] : vector<8x8xf32> to vector<8xf32>
    %66 = vector.shape_cast %65 : vector<8xf32> to vector<8x1xf32>
    %67 = vector.broadcast %66 : vector<8x1xf32> to vector<8x8xf32>
    %68 = arith.divf %64, %67 : vector<8x8xf32>
    %cst_26 = arith.constant dense<0.000000e+00> : vector<8x16xf32>
    %69 = tpu.matmul %68, %54, %cst_26 {dimension_numbers = #tpu.dot_dimension_numbers<[1], [0], [0], [1], [0, 0, 1, 1], [], []>} : vector<8x8xf32>, vector<8x16xf32>, vector<8x16xf32> -> vector<8x16xf32>
    %70 = vector.extract_strided_slice %10 {offsets = [0, 48], sizes = [8, 16], strides = [1, 1]} : vector<8x64xf32> to vector<8x16xf32>
    %71 = vector.extract_strided_slice %11 {offsets = [0, 48], sizes = [8, 16], strides = [1, 1]} : vector<8x64xf32> to vector<8x16xf32>
    %72 = vector.extract_strided_slice %12 {offsets = [0, 48], sizes = [8, 16], strides = [1, 1]} : vector<8x64xf32> to vector<8x16xf32>
    %cst_27 = arith.constant dense<0.000000e+00> : vector<8x8xf32>
    %73 = tpu.matmul %70, %71, %cst_27 {dimension_numbers = #tpu.dot_dimension_numbers<[1], [1], [0], [0], [0, 0, 1, 0], [], []>} : vector<8x16xf32>, vector<8x16xf32>, vector<8x8xf32> -> vector<8x8xf32>
    %cst_28 = arith.constant 2.500000e-01 : f32
    %74 = vector.broadcast %cst_28 : f32 to vector<8x8xf32>
    %75 = arith.mulf %73, %74 : vector<8x8xf32>
    %cst_29 = arith.constant -3.40282347E+38 : f32
    %76 = vector.broadcast %cst_29 : f32 to vector<8x8xf32>
    %77 = arith.select %15, %75, %76 : vector<8x8xi1>, vector<8x8xf32>
    %cst_30 = arith.constant dense<0xFF800000> : vector<8xf32>
    %78 = vector.multi_reduction <maximumf>, %77, %cst_30 [1] : vector<8x8xf32> to vector<8xf32>
    %79 = vector.shape_cast %78 : vector<8xf32> to vector<8x1xf32>
    %80 = vector.broadcast %79 : vector<8x1xf32> to vector<8x8xf32>
    %81 = arith.subf %77, %80 : vector<8x8xf32>
    %82 = math.exp %81 : vector<8x8xf32>
    %cst_31 = arith.constant dense<0.000000e+00> : vector<8xf32>
    %83 = vector.multi_reduction <add>, %82, %cst_31 [1] : vector<8x8xf32> to vector<8xf32>
    %84 = vector.shape_cast %83 : vector<8xf32> to vector<8x1xf32>
    %85 = vector.broadcast %84 : vector<8x1xf32> to vector<8x8xf32>
    %86 = arith.divf %82, %85 : vector<8x8xf32>
    %cst_32 = arith.constant dense<0.000000e+00> : vector<8x16xf32>
    %87 = tpu.matmul %86, %72, %cst_32 {dimension_numbers = #tpu.dot_dimension_numbers<[1], [0], [0], [1], [0, 0, 1, 1], [], []>} : vector<8x8xf32>, vector<8x16xf32>, vector<8x16xf32> -> vector<8x16xf32>
    %88 = tpu.concatenate %33, %51, %69, %87 in 1 : vector<8x16xf32>, vector<8x16xf32>, vector<8x16xf32>, vector<8x16xf32> -> vector<8x64xf32>
    %89 = arith.truncf %88 : vector<8x64xf32> to vector<8x64xbf16>
    %c0_33 = arith.constant 0 : index
    %c0_34 = arith.constant 0 : index
    %90 = vector.load %arg5[%c0_33, %c0_34] : memref<64x64xbf16, #tpu.memory_space<vmem>>, vector<64x64xbf16>
    %cst_35 = arith.constant dense<0.000000e+00> : vector<8x64xf32>
    %91 = tpu.matmul %89, %90, %cst_35 {dimension_numbers = #tpu.dot_dimension_numbers<[1], [0], [0], [1], [0, 0, 1, 1], [], []>} : vector<8x64xbf16>, vector<64x64xbf16>, vector<8x64xf32> -> vector<8x64xf32>
    %c0_36 = arith.constant 0 : index
    %c0_37 = arith.constant 0 : index
    %92 = vector.load %arg6[%c0_36, %c0_37] : memref<1x64xf32, #tpu.memory_space<vmem>>, vector<1x64xf32>
    %93 = vector.broadcast %92 : vector<1x64xf32> to vector<8x64xf32>
    %94 = arith.addf %91, %93 : vector<8x64xf32>
    %95 = arith.addf %1, %94 : vector<8x64xf32>
    %cst_38 = arith.constant dense<0.000000e+00> : vector<8xf32>
    %96 = vector.multi_reduction <add>, %95, %cst_38 [1] : vector<8x64xf32> to vector<8xf32>
    %97 = vector.shape_cast %96 : vector<8xf32> to vector<8x1xf32>
    %cst_39 = arith.constant 6.400000e+01 : f32
    %98 = vector.broadcast %cst_39 : f32 to vector<8x1xf32>
    %99 = arith.divf %97, %98 : vector<8x1xf32>
    %100 = vector.broadcast %99 : vector<8x1xf32> to vector<8x64xf32>
    %101 = arith.subf %95, %100 : vector<8x64xf32>
    %102 = arith.mulf %101, %101 : vector<8x64xf32>
    %cst_40 = arith.constant dense<0.000000e+00> : vector<8xf32>
    %103 = vector.multi_reduction <add>, %102, %cst_40 [1] : vector<8x64xf32> to vector<8xf32>
    %104 = vector.shape_cast %103 : vector<8xf32> to vector<8x1xf32>
    %cst_41 = arith.constant 6.400000e+01 : f32
    %105 = vector.broadcast %cst_41 : f32 to vector<8x1xf32>
    %106 = arith.divf %104, %105 : vector<8x1xf32>
    %107 = vector.broadcast %99 : vector<8x1xf32> to vector<8x64xf32>
    %108 = arith.subf %95, %107 : vector<8x64xf32>
    %cst_42 = arith.constant 9.99999974E-6 : f32
    %109 = vector.broadcast %cst_42 : f32 to vector<8x1xf32>
    %110 = arith.addf %106, %109 : vector<8x1xf32>
    %111 = math.rsqrt %110 : vector<8x1xf32>
    %112 = vector.broadcast %111 : vector<8x1xf32> to vector<8x64xf32>
    %113 = arith.mulf %108, %112 : vector<8x64xf32>
    %c0_43 = arith.constant 0 : index
    %c0_44 = arith.constant 0 : index
    %114 = vector.load %arg7[%c0_43, %c0_44] : memref<1x64xf32, #tpu.memory_space<vmem>>, vector<1x64xf32>
    %115 = vector.broadcast %114 : vector<1x64xf32> to vector<8x64xf32>
    %116 = arith.mulf %113, %115 : vector<8x64xf32>
    %c0_45 = arith.constant 0 : index
    %c0_46 = arith.constant 0 : index
    %117 = vector.load %arg8[%c0_45, %c0_46] : memref<1x64xf32, #tpu.memory_space<vmem>>, vector<1x64xf32>
    %118 = vector.broadcast %117 : vector<1x64xf32> to vector<8x64xf32>
    %119 = arith.addf %116, %118 : vector<8x64xf32>
    %120 = arith.truncf %119 : vector<8x64xf32> to vector<8x64xbf16>
    %c0_47 = arith.constant 0 : index
    %c0_48 = arith.constant 0 : index
    %121 = vector.load %arg9[%c0_47, %c0_48] : memref<64x64xbf16, #tpu.memory_space<vmem>>, vector<64x64xbf16>
    %cst_49 = arith.constant dense<0.000000e+00> : vector<8x64xf32>
    %122 = tpu.matmul %120, %121, %cst_49 {dimension_numbers = #tpu.dot_dimension_numbers<[1], [0], [0], [1], [0, 0, 1, 1], [], []>} : vector<8x64xbf16>, vector<64x64xbf16>, vector<8x64xf32> -> vector<8x64xf32>
    %c0_50 = arith.constant 0 : index
    %c0_51 = arith.constant 0 : index
    %123 = vector.load %arg10[%c0_50, %c0_51] : memref<1x64xf32, #tpu.memory_space<vmem>>, vector<1x64xf32>
    %124 = vector.broadcast %123 : vector<1x64xf32> to vector<8x64xf32>
    %125 = arith.addf %122, %124 : vector<8x64xf32>
    %126 = arith.truncf %3 : vector<8x64xf32> to vector<8x64xbf16>
    %c0_52 = arith.constant 0 : index
    %c0_53 = arith.constant 0 : index
    %127 = vector.load %arg11[%c0_52, %c0_53] : memref<64x128xbf16, #tpu.memory_space<vmem>>, vector<64x128xbf16>
    %cst_54 = arith.constant dense<0.000000e+00> : vector<8x128xf32>
    %128 = tpu.matmul %126, %127, %cst_54 {dimension_numbers = #tpu.dot_dimension_numbers<[1], [0], [0], [1], [0, 0, 1, 1], [], []>} : vector<8x64xbf16>, vector<64x128xbf16>, vector<8x128xf32> -> vector<8x128xf32>
    %c0_55 = arith.constant 0 : index
    %c0_56 = arith.constant 0 : index
    %129 = vector.load %arg12[%c0_55, %c0_56] : memref<1x128xf32, #tpu.memory_space<vmem>>, vector<1x128xf32>
    %130 = vector.broadcast %129 : vector<1x128xf32> to vector<8x128xf32>
    %131 = arith.addf %128, %130 : vector<8x128xf32>
    %132 = vector.extract_strided_slice %131 {offsets = [0, 0], sizes = [8, 64], strides = [1, 1]} : vector<8x128xf32> to vector<8x64xf32>
    %133 = vector.extract_strided_slice %131 {offsets = [0, 64], sizes = [8, 64], strides = [1, 1]} : vector<8x128xf32> to vector<8x64xf32>
    %134 = vector.extract_strided_slice %125 {offsets = [0, 0], sizes = [8, 16], strides = [1, 1]} : vector<8x64xf32> to vector<8x16xf32>
    %135 = vector.extract_strided_slice %132 {offsets = [0, 0], sizes = [8, 16], strides = [1, 1]} : vector<8x64xf32> to vector<8x16xf32>
    %136 = vector.extract_strided_slice %133 {offsets = [0, 0], sizes = [8, 16], strides = [1, 1]} : vector<8x64xf32> to vector<8x16xf32>
    %cst_57 = arith.constant dense<0.000000e+00> : vector<8x8xf32>
    %137 = tpu.matmul %134, %135, %cst_57 {dimension_numbers = #tpu.dot_dimension_numbers<[1], [1], [0], [0], [0, 0, 1, 0], [], []>} : vector<8x16xf32>, vector<8x16xf32>, vector<8x8xf32> -> vector<8x8xf32>
    %cst_58 = arith.constant 2.500000e-01 : f32
    %138 = vector.broadcast %cst_58 : f32 to vector<8x8xf32>
    %139 = arith.mulf %137, %138 : vector<8x8xf32>
    %cst_59 = arith.constant dense<0xFF800000> : vector<8xf32>
    %140 = vector.multi_reduction <maximumf>, %139, %cst_59 [1] : vector<8x8xf32> to vector<8xf32>
    %141 = vector.shape_cast %140 : vector<8xf32> to vector<8x1xf32>
    %142 = vector.broadcast %141 : vector<8x1xf32> to vector<8x8xf32>
    %143 = arith.subf %139, %142 : vector<8x8xf32>
    %144 = math.exp %143 : vector<8x8xf32>
    %cst_60 = arith.constant dense<0.000000e+00> : vector<8xf32>
    %145 = vector.multi_reduction <add>, %144, %cst_60 [1] : vector<8x8xf32> to vector<8xf32>
    %146 = vector.shape_cast %145 : vector<8xf32> to vector<8x1xf32>
    %147 = vector.broadcast %146 : vector<8x1xf32> to vector<8x8xf32>
    %148 = arith.divf %144, %147 : vector<8x8xf32>
    %cst_61 = arith.constant dense<0.000000e+00> : vector<8x16xf32>
    %149 = tpu.matmul %148, %136, %cst_61 {dimension_numbers = #tpu.dot_dimension_numbers<[1], [0], [0], [1], [0, 0, 1, 1], [], []>} : vector<8x8xf32>, vector<8x16xf32>, vector<8x16xf32> -> vector<8x16xf32>
    %150 = vector.extract_strided_slice %125 {offsets = [0, 16], sizes = [8, 16], strides = [1, 1]} : vector<8x64xf32> to vector<8x16xf32>
    %151 = vector.extract_strided_slice %132 {offsets = [0, 16], sizes = [8, 16], strides = [1, 1]} : vector<8x64xf32> to vector<8x16xf32>
    %152 = vector.extract_strided_slice %133 {offsets = [0, 16], sizes = [8, 16], strides = [1, 1]} : vector<8x64xf32> to vector<8x16xf32>
    %cst_62 = arith.constant dense<0.000000e+00> : vector<8x8xf32>
    %153 = tpu.matmul %150, %151, %cst_62 {dimension_numbers = #tpu.dot_dimension_numbers<[1], [1], [0], [0], [0, 0, 1, 0], [], []>} : vector<8x16xf32>, vector<8x16xf32>, vector<8x8xf32> -> vector<8x8xf32>
    %cst_63 = arith.constant 2.500000e-01 : f32
    %154 = vector.broadcast %cst_63 : f32 to vector<8x8xf32>
    %155 = arith.mulf %153, %154 : vector<8x8xf32>
    %cst_64 = arith.constant dense<0xFF800000> : vector<8xf32>
    %156 = vector.multi_reduction <maximumf>, %155, %cst_64 [1] : vector<8x8xf32> to vector<8xf32>
    %157 = vector.shape_cast %156 : vector<8xf32> to vector<8x1xf32>
    %158 = vector.broadcast %157 : vector<8x1xf32> to vector<8x8xf32>
    %159 = arith.subf %155, %158 : vector<8x8xf32>
    %160 = math.exp %159 : vector<8x8xf32>
    %cst_65 = arith.constant dense<0.000000e+00> : vector<8xf32>
    %161 = vector.multi_reduction <add>, %160, %cst_65 [1] : vector<8x8xf32> to vector<8xf32>
    %162 = vector.shape_cast %161 : vector<8xf32> to vector<8x1xf32>
    %163 = vector.broadcast %162 : vector<8x1xf32> to vector<8x8xf32>
    %164 = arith.divf %160, %163 : vector<8x8xf32>
    %cst_66 = arith.constant dense<0.000000e+00> : vector<8x16xf32>
    %165 = tpu.matmul %164, %152, %cst_66 {dimension_numbers = #tpu.dot_dimension_numbers<[1], [0], [0], [1], [0, 0, 1, 1], [], []>} : vector<8x8xf32>, vector<8x16xf32>, vector<8x16xf32> -> vector<8x16xf32>
    %166 = vector.extract_strided_slice %125 {offsets = [0, 32], sizes = [8, 16], strides = [1, 1]} : vector<8x64xf32> to vector<8x16xf32>
    %167 = vector.extract_strided_slice %132 {offsets = [0, 32], sizes = [8, 16], strides = [1, 1]} : vector<8x64xf32> to vector<8x16xf32>
    %168 = vector.extract_strided_slice %133 {offsets = [0, 32], sizes = [8, 16], strides = [1, 1]} : vector<8x64xf32> to vector<8x16xf32>
    %cst_67 = arith.constant dense<0.000000e+00> : vector<8x8xf32>
    %169 = tpu.matmul %166, %167, %cst_67 {dimension_numbers = #tpu.dot_dimension_numbers<[1], [1], [0], [0], [0, 0, 1, 0], [], []>} : vector<8x16xf32>, vector<8x16xf32>, vector<8x8xf32> -> vector<8x8xf32>
    %cst_68 = arith.constant 2.500000e-01 : f32
    %170 = vector.broadcast %cst_68 : f32 to vector<8x8xf32>
    %171 = arith.mulf %169, %170 : vector<8x8xf32>
    %cst_69 = arith.constant dense<0xFF800000> : vector<8xf32>
    %172 = vector.multi_reduction <maximumf>, %171, %cst_69 [1] : vector<8x8xf32> to vector<8xf32>
    %173 = vector.shape_cast %172 : vector<8xf32> to vector<8x1xf32>
    %174 = vector.broadcast %173 : vector<8x1xf32> to vector<8x8xf32>
    %175 = arith.subf %171, %174 : vector<8x8xf32>
    %176 = math.exp %175 : vector<8x8xf32>
    %cst_70 = arith.constant dense<0.000000e+00> : vector<8xf32>
    %177 = vector.multi_reduction <add>, %176, %cst_70 [1] : vector<8x8xf32> to vector<8xf32>
    %178 = vector.shape_cast %177 : vector<8xf32> to vector<8x1xf32>
    %179 = vector.broadcast %178 : vector<8x1xf32> to vector<8x8xf32>
    %180 = arith.divf %176, %179 : vector<8x8xf32>
    %cst_71 = arith.constant dense<0.000000e+00> : vector<8x16xf32>
    %181 = tpu.matmul %180, %168, %cst_71 {dimension_numbers = #tpu.dot_dimension_numbers<[1], [0], [0], [1], [0, 0, 1, 1], [], []>} : vector<8x8xf32>, vector<8x16xf32>, vector<8x16xf32> -> vector<8x16xf32>
    %182 = vector.extract_strided_slice %125 {offsets = [0, 48], sizes = [8, 16], strides = [1, 1]} : vector<8x64xf32> to vector<8x16xf32>
    %183 = vector.extract_strided_slice %132 {offsets = [0, 48], sizes = [8, 16], strides = [1, 1]} : vector<8x64xf32> to vector<8x16xf32>
    %184 = vector.extract_strided_slice %133 {offsets = [0, 48], sizes = [8, 16], strides = [1, 1]} : vector<8x64xf32> to vector<8x16xf32>
    %cst_72 = arith.constant dense<0.000000e+00> : vector<8x8xf32>
    %185 = tpu.matmul %182, %183, %cst_72 {dimension_numbers = #tpu.dot_dimension_numbers<[1], [1], [0], [0], [0, 0, 1, 0], [], []>} : vector<8x16xf32>, vector<8x16xf32>, vector<8x8xf32> -> vector<8x8xf32>
    %cst_73 = arith.constant 2.500000e-01 : f32
    %186 = vector.broadcast %cst_73 : f32 to vector<8x8xf32>
    %187 = arith.mulf %185, %186 : vector<8x8xf32>
    %cst_74 = arith.constant dense<0xFF800000> : vector<8xf32>
    %188 = vector.multi_reduction <maximumf>, %187, %cst_74 [1] : vector<8x8xf32> to vector<8xf32>
    %189 = vector.shape_cast %188 : vector<8xf32> to vector<8x1xf32>
    %190 = vector.broadcast %189 : vector<8x1xf32> to vector<8x8xf32>
    %191 = arith.subf %187, %190 : vector<8x8xf32>
    %192 = math.exp %191 : vector<8x8xf32>
    %cst_75 = arith.constant dense<0.000000e+00> : vector<8xf32>
    %193 = vector.multi_reduction <add>, %192, %cst_75 [1] : vector<8x8xf32> to vector<8xf32>
    %194 = vector.shape_cast %193 : vector<8xf32> to vector<8x1xf32>
    %195 = vector.broadcast %194 : vector<8x1xf32> to vector<8x8xf32>
    %196 = arith.divf %192, %195 : vector<8x8xf32>
    %cst_76 = arith.constant dense<0.000000e+00> : vector<8x16xf32>
    %197 = tpu.matmul %196, %184, %cst_76 {dimension_numbers = #tpu.dot_dimension_numbers<[1], [0], [0], [1], [0, 0, 1, 1], [], []>} : vector<8x8xf32>, vector<8x16xf32>, vector<8x16xf32> -> vector<8x16xf32>
    %198 = tpu.concatenate %149, %165, %181, %197 in 1 : vector<8x16xf32>, vector<8x16xf32>, vector<8x16xf32>, vector<8x16xf32> -> vector<8x64xf32>
    %199 = arith.truncf %198 : vector<8x64xf32> to vector<8x64xbf16>
    %c0_77 = arith.constant 0 : index
    %c0_78 = arith.constant 0 : index
    %200 = vector.load %arg13[%c0_77, %c0_78] : memref<64x64xbf16, #tpu.memory_space<vmem>>, vector<64x64xbf16>
    %cst_79 = arith.constant dense<0.000000e+00> : vector<8x64xf32>
    %201 = tpu.matmul %199, %200, %cst_79 {dimension_numbers = #tpu.dot_dimension_numbers<[1], [0], [0], [1], [0, 0, 1, 1], [], []>} : vector<8x64xbf16>, vector<64x64xbf16>, vector<8x64xf32> -> vector<8x64xf32>
    %c0_80 = arith.constant 0 : index
    %c0_81 = arith.constant 0 : index
    %202 = vector.load %arg14[%c0_80, %c0_81] : memref<1x64xf32, #tpu.memory_space<vmem>>, vector<1x64xf32>
    %203 = vector.broadcast %202 : vector<1x64xf32> to vector<8x64xf32>
    %204 = arith.addf %201, %203 : vector<8x64xf32>
    %205 = arith.addf %119, %204 : vector<8x64xf32>
    %cst_82 = arith.constant dense<0.000000e+00> : vector<8xf32>
    %206 = vector.multi_reduction <add>, %205, %cst_82 [1] : vector<8x64xf32> to vector<8xf32>
    %207 = vector.shape_cast %206 : vector<8xf32> to vector<8x1xf32>
    %cst_83 = arith.constant 6.400000e+01 : f32
    %208 = vector.broadcast %cst_83 : f32 to vector<8x1xf32>
    %209 = arith.divf %207, %208 : vector<8x1xf32>
    %210 = vector.broadcast %209 : vector<8x1xf32> to vector<8x64xf32>
    %211 = arith.subf %205, %210 : vector<8x64xf32>
    %212 = arith.mulf %211, %211 : vector<8x64xf32>
    %cst_84 = arith.constant dense<0.000000e+00> : vector<8xf32>
    %213 = vector.multi_reduction <add>, %212, %cst_84 [1] : vector<8x64xf32> to vector<8xf32>
    %214 = vector.shape_cast %213 : vector<8xf32> to vector<8x1xf32>
    %cst_85 = arith.constant 6.400000e+01 : f32
    %215 = vector.broadcast %cst_85 : f32 to vector<8x1xf32>
    %216 = arith.divf %214, %215 : vector<8x1xf32>
    %217 = vector.broadcast %209 : vector<8x1xf32> to vector<8x64xf32>
    %218 = arith.subf %205, %217 : vector<8x64xf32>
    %cst_86 = arith.constant 9.99999974E-6 : f32
    %219 = vector.broadcast %cst_86 : f32 to vector<8x1xf32>
    %220 = arith.addf %216, %219 : vector<8x1xf32>
    %221 = math.rsqrt %220 : vector<8x1xf32>
    %222 = vector.broadcast %221 : vector<8x1xf32> to vector<8x64xf32>
    %223 = arith.mulf %218, %222 : vector<8x64xf32>
    %c0_87 = arith.constant 0 : index
    %c0_88 = arith.constant 0 : index
    %224 = vector.load %arg15[%c0_87, %c0_88] : memref<1x64xf32, #tpu.memory_space<vmem>>, vector<1x64xf32>
    %225 = vector.broadcast %224 : vector<1x64xf32> to vector<8x64xf32>
    %226 = arith.mulf %223, %225 : vector<8x64xf32>
    %c0_89 = arith.constant 0 : index
    %c0_90 = arith.constant 0 : index
    %227 = vector.load %arg16[%c0_89, %c0_90] : memref<1x64xf32, #tpu.memory_space<vmem>>, vector<1x64xf32>
    %228 = vector.broadcast %227 : vector<1x64xf32> to vector<8x64xf32>
    %229 = arith.addf %226, %228 : vector<8x64xf32>
    %230 = arith.truncf %229 : vector<8x64xf32> to vector<8x64xbf16>
    %c0_91 = arith.constant 0 : index
    %c0_92 = arith.constant 0 : index
    %231 = vector.load %arg17[%c0_91, %c0_92] : memref<64x256xbf16, #tpu.memory_space<vmem>>, vector<64x256xbf16>
    %cst_93 = arith.constant dense<0.000000e+00> : vector<8x256xf32>
    %232 = tpu.matmul %230, %231, %cst_93 {dimension_numbers = #tpu.dot_dimension_numbers<[1], [0], [0], [1], [0, 0, 1, 1], [], []>} : vector<8x64xbf16>, vector<64x256xbf16>, vector<8x256xf32> -> vector<8x256xf32>
    %c0_94 = arith.constant 0 : index
    %c0_95 = arith.constant 0 : index
    %233 = vector.load %arg18[%c0_94, %c0_95] : memref<1x256xf32, #tpu.memory_space<vmem>>, vector<1x256xf32>
    %234 = vector.broadcast %233 : vector<1x256xf32> to vector<8x256xf32>
    %235 = arith.addf %232, %234 : vector<8x256xf32>
    %cst_96 = arith.constant 0.000000e+00 : f32
    %236 = vector.broadcast %cst_96 : f32 to vector<8x256xf32>
    %237 = arith.maximumf %235, %236 : vector<8x256xf32>
    %238 = arith.truncf %237 : vector<8x256xf32> to vector<8x256xbf16>
    %c0_97 = arith.constant 0 : index
    %c0_98 = arith.constant 0 : index
    %239 = vector.load %arg19[%c0_97, %c0_98] : memref<256x64xbf16, #tpu.memory_space<vmem>>, vector<256x64xbf16>
    %cst_99 = arith.constant dense<0.000000e+00> : vector<8x64xf32>
    %240 = tpu.matmul %238, %239, %cst_99 {dimension_numbers = #tpu.dot_dimension_numbers<[1], [0], [0], [1], [0, 0, 1, 1], [], []>} : vector<8x256xbf16>, vector<256x64xbf16>, vector<8x64xf32> -> vector<8x64xf32>
    %c0_100 = arith.constant 0 : index
    %c0_101 = arith.constant 0 : index
    %241 = vector.load %arg20[%c0_100, %c0_101] : memref<1x64xf32, #tpu.memory_space<vmem>>, vector<1x64xf32>
    %242 = vector.broadcast %241 : vector<1x64xf32> to vector<8x64xf32>
    %243 = arith.addf %240, %242 : vector<8x64xf32>
    %244 = arith.addf %229, %243 : vector<8x64xf32>
    %cst_102 = arith.constant dense<0.000000e+00> : vector<8xf32>
    %245 = vector.multi_reduction <add>, %244, %cst_102 [1] : vector<8x64xf32> to vector<8xf32>
    %246 = vector.shape_cast %245 : vector<8xf32> to vector<8x1xf32>
    %cst_103 = arith.constant 6.400000e+01 : f32
    %247 = vector.broadcast %cst_103 : f32 to vector<8x1xf32>
    %248 = arith.divf %246, %247 : vector<8x1xf32>
    %249 = vector.broadcast %248 : vector<8x1xf32> to vector<8x64xf32>
    %250 = arith.subf %244, %249 : vector<8x64xf32>
    %251 = arith.mulf %250, %250 : vector<8x64xf32>
    %cst_104 = arith.constant dense<0.000000e+00> : vector<8xf32>
    %252 = vector.multi_reduction <add>, %251, %cst_104 [1] : vector<8x64xf32> to vector<8xf32>
    %253 = vector.shape_cast %252 : vector<8xf32> to vector<8x1xf32>
    %cst_105 = arith.constant 6.400000e+01 : f32
    %254 = vector.broadcast %cst_105 : f32 to vector<8x1xf32>
    %255 = arith.divf %253, %254 : vector<8x1xf32>
    %256 = vector.broadcast %248 : vector<8x1xf32> to vector<8x64xf32>
    %257 = arith.subf %244, %256 : vector<8x64xf32>
    %cst_106 = arith.constant 9.99999974E-6 : f32
    %258 = vector.broadcast %cst_106 : f32 to vector<8x1xf32>
    %259 = arith.addf %255, %258 : vector<8x1xf32>
    %260 = math.rsqrt %259 : vector<8x1xf32>
    %261 = vector.broadcast %260 : vector<8x1xf32> to vector<8x64xf32>
    %262 = arith.mulf %257, %261 : vector<8x64xf32>
    %c0_107 = arith.constant 0 : index
    %c0_108 = arith.constant 0 : index
    %263 = vector.load %arg21[%c0_107, %c0_108] : memref<1x64xf32, #tpu.memory_space<vmem>>, vector<1x64xf32>
    %264 = vector.broadcast %263 : vector<1x64xf32> to vector<8x64xf32>
    %265 = arith.mulf %262, %264 : vector<8x64xf32>
    %c0_109 = arith.constant 0 : index
    %c0_110 = arith.constant 0 : index
    %266 = vector.load %arg22[%c0_109, %c0_110] : memref<1x64xf32, #tpu.memory_space<vmem>>, vector<1x64xf32>
    %267 = vector.broadcast %266 : vector<1x64xf32> to vector<8x64xf32>
    %268 = arith.addf %265, %267 : vector<8x64xf32>
    %c0_111 = arith.constant 0 : index
    %c0_112 = arith.constant 0 : index
    %c0_113 = arith.constant 0 : index
    %269 = vector.load %arg23[%c0_111, %c0_112, %c0_113] : memref<1x8x64xf32, #tpu.memory_space<vmem>>, vector<1x8x64xf32>
    %270 = vector.shape_cast %269 : vector<1x8x64xf32> to vector<8x64xf32>
    %271 = vector.shape_cast %268 : vector<8x64xf32> to vector<1x8x64xf32>
    tpu.vector_store %arg23[%c0_111, %c0_112, %c0_113], %271 {strides = array<i32>} : memref<1x8x64xf32, #tpu.memory_space<vmem>>, vector<1x8x64xf32>,
    return
  }
  func.func @transform_0(%arg0: i32) -> (i32, i32, i32) {
    %c0_i32 = arith.constant 0 : i32
    %c0_i32_0 = arith.constant 0 : i32
    %c0_i32_1 = arith.constant 0 : i32
    return %arg0, %c0_i32, %c0_i32_0 : i32, i32, i32
  }
  func.func @transform_1(%arg0: i32) -> (i32, i32, i32) {
    %c0_i32 = arith.constant 0 : i32
    %c0_i32_0 = arith.constant 0 : i32
    %c0_i32_1 = arith.constant 0 : i32
    return %arg0, %c0_i32, %c0_i32_0 : i32, i32, i32
  }
  func.func @transform_2(%arg0: i32) -> (i32, i32) {
    %c0_i32 = arith.constant 0 : i32
    %c0_i32_0 = arith.constant 0 : i32
    %c0_i32_1 = arith.constant 0 : i32
    return %c0_i32, %c0_i32_0 : i32, i32
  }
  func.func @transform_3(%arg0: i32) -> (i32, i32) {
    %c0_i32 = arith.constant 0 : i32
    %c0_i32_0 = arith.constant 0 : i32
    %c0_i32_1 = arith.constant 0 : i32
    return %c0_i32, %c0_i32_0 : i32, i32
  }
  func.func @transform_4(%arg0: i32) -> (i32, i32) {
    %c0_i32 = arith.constant 0 : i32
    %c0_i32_0 = arith.constant 0 : i32
    %c0_i32_1 = arith.constant 0 : i32
    return %c0_i32, %c0_i32_0 : i32, i32
  }
  func.func @transform_5(%arg0: i32) -> (i32, i32) {
    %c0_i32 = arith.constant 0 : i32
    %c0_i32_0 = arith.constant 0 : i32
    %c0_i32_1 = arith.constant 0 : i32
    return %c0_i32, %c0_i32_0 : i32, i32
  }
  func.func @transform_6(%arg0: i32) -> (i32, i32) {
    %c0_i32 = arith.constant 0 : i32
    %c0_i32_0 = arith.constant 0 : i32
    %c0_i32_1 = arith.constant 0 : i32
    return %c0_i32, %c0_i32_0 : i32, i32
  }
  func.func @transform_7(%arg0: i32) -> (i32, i32) {
    %c0_i32 = arith.constant 0 : i32
    %c0_i32_0 = arith.constant 0 : i32
    %c0_i32_1 = arith.constant 0 : i32
    return %c0_i32, %c0_i32_0 : i32, i32
  }
  func.func @transform_8(%arg0: i32) -> (i32, i32) {
    %c0_i32 = arith.constant 0 : i32
    %c0_i32_0 = arith.constant 0 : i32
    %c0_i32_1 = arith.constant 0 : i32
    return %c0_i32, %c0_i32_0 : i32, i32
  }
  func.func @transform_9(%arg0: i32) -> (i32, i32) {
    %c0_i32 = arith.constant 0 : i32
    %c0_i32_0 = arith.constant 0 : i32
    %c0_i32_1 = arith.constant 0 : i32
    return %c0_i32, %c0_i32_0 : i32, i32
  }
  func.func @transform_10(%arg0: i32) -> (i32, i32) {
    %c0_i32 = arith.constant 0 : i32
    %c0_i32_0 = arith.constant 0 : i32
    %c0_i32_1 = arith.constant 0 : i32
    return %c0_i32, %c0_i32_0 : i32, i32
  }
  func.func @transform_11(%arg0: i32) -> (i32, i32) {
    %c0_i32 = arith.constant 0 : i32
    %c0_i32_0 = arith.constant 0 : i32
    %c0_i32_1 = arith.constant 0 : i32
    return %c0_i32, %c0_i32_0 : i32, i32
  }
  func.func @transform_12(%arg0: i32) -> (i32, i32) {
    %c0_i32 = arith.constant 0 : i32
    %c0_i32_0 = arith.constant 0 : i32
    %c0_i32_1 = arith.constant 0 : i32
    return %c0_i32, %c0_i32_0 : i32, i32
  }
  func.func @transform_13(%arg0: i32) -> (i32, i32) {
    %c0_i32 = arith.constant 0 : i32
    %c0_i32_0 = arith.constant 0 : i32
    %c0_i32_1 = arith.constant 0 : i32
    return %c0_i32, %c0_i32_0 : i32, i32
  }
  func.func @transform_14(%arg0: i32) -> (i32, i32) {
    %c0_i32 = arith.constant 0 : i32
    %c0_i32_0 = arith.constant 0 : i32
    %c0_i32_1 = arith.constant 0 : i32
    return %c0_i32, %c0_i32_0 : i32, i32
  }
  func.func @transform_15(%arg0: i32) -> (i32, i32) {
    %c0_i32 = arith.constant 0 : i32
    %c0_i32_0 = arith.constant 0 : i32
    %c0_i32_1 = arith.constant 0 : i32
    return %c0_i32, %c0_i32_0 : i32, i32
  }
  func.func @transform_16(%arg0: i32) -> (i32, i32) {
    %c0_i32 = arith.constant 0 : i32
    %c0_i32_0 = arith.constant 0 : i32
    %c0_i32_1 = arith.constant 0 : i32
    return %c0_i32, %c0_i32_0 : i32, i32
  }
  func.func @transform_17(%arg0: i32) -> (i32, i32) {
    %c0_i32 = arith.constant 0 : i32
    %c0_i32_0 = arith.constant 0 : i32
    %c0_i32_1 = arith.constant 0 : i32
    return %c0_i32, %c0_i32_0 : i32, i32
  }
  func.func @transform_18(%arg0: i32) -> (i32, i32) {
    %c0_i32 = arith.constant 0 : i32
    %c0_i32_0 = arith.constant 0 : i32
    %c0_i32_1 = arith.constant 0 : i32
    return %c0_i32, %c0_i32_0 : i32, i32
  }
  func.func @transform_19(%arg0: i32) -> (i32, i32) {
    %c0_i32 = arith.constant 0 : i32
    %c0_i32_0 = arith.constant 0 : i32
    %c0_i32_1 = arith.constant 0 : i32
    return %c0_i32, %c0_i32_0 : i32, i32
  }
  func.func @transform_20(%arg0: i32) -> (i32, i32) {
    %c0_i32 = arith.constant 0 : i32
    %c0_i32_0 = arith.constant 0 : i32
    %c0_i32_1 = arith.constant 0 : i32
    return %c0_i32, %c0_i32_0 : i32, i32
  }
  func.func @transform_21(%arg0: i32) -> (i32, i32) {
    %c0_i32 = arith.constant 0 : i32
    %c0_i32_0 = arith.constant 0 : i32
    %c0_i32_1 = arith.constant 0 : i32
    return %c0_i32, %c0_i32_0 : i32, i32
  }
  func.func @transform_22(%arg0: i32) -> (i32, i32, i32) {
    %c0_i32 = arith.constant 0 : i32
    %c0_i32_0 = arith.constant 0 : i32
    %c0_i32_1 = arith.constant 0 : i32
    return %arg0, %c0_i32, %c0_i32_0 : i32, i32, i32
  }
}

module attributes {stable_mosaic.version = 11 : i64} {
  func.func @_decoder_block_kernel(%arg0: i32, %arg1: memref<1x8x64xf32, #tpu.memory_space<vmem>>, %arg2: memref<1x8x64xf32, #tpu.memory_space<vmem>>, %arg3: memref<64x192xbf16, #tpu.memory_space<vmem>>, %arg4: memref<1x192xf32, #tpu.memory_space<vmem>>, %arg5: memref<64x64xbf16, #tpu.memory_space<vmem>>, %arg6: memref<1x64xf32, #tpu.memory_space<vmem>>, %arg7: memref<1x64xf32, #tpu.memory_space<vmem>>, %arg8: memref<1x64xf32, #tpu.memory_space<vmem>>, %arg9: memref<64x64xbf16, #tpu.memory_space<vmem>>, %arg10: memref<1x64xf32, #tpu.memory_space<vmem>>, %arg11: memref<64x128xbf16, #tpu.memory_space<vmem>>, %arg12: memref<1x128xf32, #tpu.memory_space<vmem>>, %arg13: memref<64x64xbf16, #tpu.memory_space<vmem>>, %arg14: memref<1x64xf32, #tpu.memory_space<vmem>>, %arg15: memref<1x64xf32, #tpu.memory_space<vmem>>, %arg16: memref<1x64xf32, #tpu.memory_space<vmem>>, %arg17: memref<64x256xbf16, #tpu.memory_space<vmem>>, %arg18: memref<1x256xf32, #tpu.memory_space<vmem>>, %arg19: memref<256x64xbf16, #tpu.memory_space<vmem>>, %arg20: memref<1x64xf32, #tpu.memory_space<vmem>>, %arg21: memref<1x64xf32, #tpu.memory_space<vmem>>, %arg22: memref<1x64xf32, #tpu.memory_space<vmem>>, %arg23: memref<1x8x64xf32, #tpu.memory_space<vmem>>) attributes {dimension_semantics = [#tpu.dimension_semantics<parallel>], iteration_bounds = array<i64: 2>, scalar_prefetch = 0 : i64, scratch_operands = 0 : i64, tpu.core_type = #tpu.core_type<tc>, window_params = [{transform_indices = @transform_0, window_bounds = array<i64: 1, 8, 64>}, {transform_indices = @transform_1, window_bounds = array<i64: 1, 8, 64>}, {pipeline_mode = #tpu.pipeline_mode<synchronous>, transform_indices = @transform_2, window_bounds = array<i64: 64, 192>}, {pipeline_mode = #tpu.pipeline_mode<synchronous>, transform_indices = @transform_3, window_bounds = array<i64: 1, 192>}, {pipeline_mode = #tpu.pipeline_mode<synchronous>, transform_indices = @transform_4, window_bounds = array<i64: 64, 64>}, {pipeline_mode = #tpu.pipeline_mode<synchronous>, transform_indices = @transform_5, window_bounds = array<i64: 1, 64>}, {pipeline_mode = #tpu.pipeline_mode<synchronous>, transform_indices = @transform_6, window_bounds = array<i64: 1, 64>}, {pipeline_mode = #tpu.pipeline_mode<synchronous>, transform_indices = @transform_7, window_bounds = array<i64: 1, 64>}, {pipeline_mode = #tpu.pipeline_mode<synchronous>, transform_indices = @transform_8, window_bounds = array<i64: 64, 64>}, {pipeline_mode = #tpu.pipeline_mode<synchronous>, transform_indices = @transform_9, window_bounds = array<i64: 1, 64>}, {pipeline_mode = #tpu.pipeline_mode<synchronous>, transform_indices = @transform_10, window_bounds = array<i64: 64, 128>}, {pipeline_mode = #tpu.pipeline_mode<synchronous>, transform_indices = @transform_11, window_bounds = array<i64: 1, 128>}, {pipeline_mode = #tpu.pipeline_mode<synchronous>, transform_indices = @transform_12, window_bounds = array<i64: 64, 64>}, {pipeline_mode = #tpu.pipeline_mode<synchronous>, transform_indices = @transform_13, window_bounds = array<i64: 1, 64>}, {pipeline_mode = #tpu.pipeline_mode<synchronous>, transform_indices = @transform_14, window_bounds = array<i64: 1, 64>}, {pipeline_mode = #tpu.pipeline_mode<synchronous>, transform_indices = @transform_15, window_bounds = array<i64: 1, 64>}, {pipeline_mode = #tpu.pipeline_mode<synchronous>, transform_indices = @transform_16, window_bounds = array<i64: 64, 256>}, {pipeline_mode = #tpu.pipeline_mode<synchronous>, transform_indices = @transform_17, window_bounds = array<i64: 1, 256>}, {pipeline_mode = #tpu.pipeline_mode<synchronous>, transform_indices = @transform_18, window_bounds = array<i64: 256, 64>}, {pipeline_mode = #tpu.pipeline_mode<synchronous>, transform_indices = @transform_19, window_bounds = array<i64: 1, 64>}, {pipeline_mode = #tpu.pipeline_mode<synchronous>, transform_indices = @transform_20, window_bounds = array<i64: 1, 64>}, {pipeline_mode = #tpu.pipeline_mode<synchronous>, transform_indices = @transform_21, window_bounds = array<i64: 1, 64>}, {transform_indices = @transform_22, window_bounds = array<i64: 1, 8, 64>}]} {
    %c0 = arith.constant 0 : index
    %c0_0 = arith.constant 0 : index
    %c0_1 = arith.constant 0 : index
    %0 = vector.load %arg1[%c0, %c0_0, %c0_1] : memref<1x8x64xf32, #tpu.memory_space<vmem>>, vector<1x8x64xf32>
    %1 = vector.shape_cast %0 : vector<1x8x64xf32> to vector<8x64xf32>
    %c0_2 = arith.constant 0 : index
    %c0_3 = arith.constant 0 : index
    %c0_4 = arith.constant 0 : index
    %2 = vector.load %arg2[%c0_2, %c0_3, %c0_4] : memref<1x8x64xf32, #tpu.memory_space<vmem>>, vector<1x8x64xf32>
    %3 = vector.shape_cast %2 : vector<1x8x64xf32> to vector<8x64xf32>
    %4 = arith.truncf %1 : vector<8x64xf32> to vector<8x64xbf16>
    %c0_5 = arith.constant 0 : index
    %c0_6 = arith.constant 0 : index
    %5 = vector.load %arg3[%c0_5, %c0_6] : memref<64x192xbf16, #tpu.memory_space<vmem>>, vector<64x192xbf16>
    %cst = arith.constant dense<0.000000e+00> : vector<8x192xf32>
    %6 = tpu.matmul %4, %5, %cst {dimension_numbers = #tpu.dot_dimension_numbers<[1], [0], [0], [1], [0, 0, 1, 1], [], []>} : vector<8x64xbf16>, vector<64x192xbf16>, vector<8x192xf32> -> vector<8x192xf32>
    %c0_7 = arith.constant 0 : index
    %c0_8 = arith.constant 0 : index
    %7 = vector.load %arg4[%c0_7, %c0_8] : memref<1x192xf32, #tpu.memory_space<vmem>>, vector<1x192xf32>
    %8 = vector.broadcast %7 : vector<1x192xf32> to vector<8x192xf32>
    %9 = arith.addf %6, %8 : vector<8x192xf32>
    %10 = vector.extract_strided_slice %9 {offsets = [0, 0], sizes = [8, 64], strides = [1, 1]} : vector<8x192xf32> to vector<8x64xf32>
    %11 = vector.extract_strided_slice %9 {offsets = [0, 64], sizes = [8, 64], strides = [1, 1]} : vector<8x192xf32> to vector<8x64xf32>
    %12 = vector.extract_strided_slice %9 {offsets = [0, 128], sizes = [8, 64], strides = [1, 1]} : vector<8x192xf32> to vector<8x64xf32>
    %13 = tpu.iota {dimensions = array<i32: 0>} : vector<8x8xi32>
    %14 = tpu.iota {dimensions = array<i32: 1>} : vector<8x8xi32>
    %15 = arith.cmpi sle, %14, %13 : vector<8x8xi32>
    %16 = vector.extract_strided_slice %10 {offsets = [0, 0], sizes = [8, 16], strides = [1, 1]} : vector<8x64xf32> to vector<8x16xf32>
    %17 = vector.extract_strided_slice %11 {offsets = [0, 0], sizes = [8, 16], strides = [1, 1]} : vector<8x64xf32> to vector<8x16xf32>
    %18 = vector.extract_strided_slice %12 {offsets = [0, 0], sizes = [8, 16], strides = [1, 1]} : vector<8x64xf32> to vector<8x16xf32>
    %cst_9 = arith.constant dense<0.000000e+00> : vector<8x8xf32>
    %19 = tpu.matmul %16, %17, %cst_9 {dimension_numbers = #tpu.dot_dimension_numbers<[1], [1], [0], [0], [0, 0, 1, 0], [], []>} : vector<8x16xf32>, vector<8x16xf32>, vector<8x8xf32> -> vector<8x8xf32>
    %cst_10 = arith.constant 2.500000e-01 : f32
    %20 = vector.broadcast %cst_10 : f32 to vector<8x8xf32>
    %21 = arith.mulf %19, %20 : vector<8x8xf32>
    %cst_11 = arith.constant -3.40282347E+38 : f32
    %22 = vector.broadcast %cst_11 : f32 to vector<8x8xf32>
    %23 = arith.select %15, %21, %22 : vector<8x8xi1>, vector<8x8xf32>
    %cst_12 = arith.constant dense<0xFF800000> : vector<8xf32>
    %24 = vector.multi_reduction <maximumf>, %23, %cst_12 [1] : vector<8x8xf32> to vector<8xf32>
    %25 = vector.shape_cast %24 : vector<8xf32> to vector<8x1xf32>
    %26 = vector.broadcast %25 : vector<8x1xf32> to vector<8x8xf32>
    %27 = arith.subf %23, %26 : vector<8x8xf32>
    %28 = math.exp %27 : vector<8x8xf32>
    %cst_13 = arith.constant dense<0.000000e+00> : vector<8xf32>
    %29 = vector.multi_reduction <add>, %28, %cst_13 [1] : vector<8x8xf32> to vector<8xf32>
    %30 = vector.shape_cast %29 : vector<8xf32> to vector<8x1xf32>
    %31 = vector.broadcast %30 : vector<8x1xf32> to vector<8x8xf32>
    %32 = arith.divf %28, %31 : vector<8x8xf32>
    %cst_14 = arith.constant dense<0.000000e+00> : vector<8x16xf32>
    %33 = tpu.matmul %32, %18, %cst_14 {dimension_numbers = #tpu.dot_dimension_numbers<[1], [0], [0], [1], [0, 0, 1, 1], [], []>} : vector<8x8xf32>, vector<8x16xf32>, vector<8x16xf32> -> vector<8x16xf32>
    %34 = vector.extract_strided_slice %10 {offsets = [0, 16], sizes = [8, 16], strides = [1, 1]} : vector<8x64xf32> to vector<8x16xf32>
    %35 = vector.extract_strided_slice %11 {offsets = [0, 16], sizes = [8, 16], strides = [1, 1]} : vector<8x64xf32> to vector<8x16xf32>
    %36 = vector.extract_strided_slice %12 {offsets = [0, 16], sizes = [8, 16], strides = [1, 1]} : vector<8x64xf32> to vector<8x16xf32>
    %cst_15 = arith.constant dense<0.000000e+00> : vector<8x8xf32>
    %37 = tpu.matmul %34, %35, %cst_15 {dimension_numbers = #tpu.dot_dimension_numbers<[1], [1], [0], [0], [0, 0, 1, 0], [], []>} : vector<8x16xf32>, vector<8x16xf32>, vector<8x8xf32> -> vector<8x8xf32>
    %cst_16 = arith.constant 2.500000e-01 : f32
    %38 = vector.broadcast %cst_16 : f32 to vector<8x8xf32>
    %39 = arith.mulf %37, %38 : vector<8x8xf32>
    %cst_17 = arith.constant -3.40282347E+38 : f32
    %40 = vector.broadcast %cst_17 : f32 to vector<8x8xf32>
    %41 = arith.select %15, %39, %40 : vector<8x8xi1>, vector<8x8xf32>
    %cst_18 = arith.constant dense<0xFF800000> : vector<8xf32>
    %42 = vector.multi_reduction <maximumf>, %41, %cst_18 [1] : vector<8x8xf32> to vector<8xf32>
    %43 = vector.shape_cast %42 : vector<8xf32> to vector<8x1xf32>
    %44 = vector.broadcast %43 : vector<8x1xf32> to vector<8x8xf32>
    %45 = arith.subf %41, %44 : vector<8x8xf32>
    %46 = math.exp %45 : vector<8x8xf32>
    %cst_19 = arith.constant dense<0.000000e+00> : vector<8xf32>
    %47 = vector.multi_reduction <add>, %46, %cst_19 [1] : vector<8x8xf32> to vector<8xf32>
    %48 = vector.shape_cast %47 : vector<8xf32> to vector<8x1xf32>
    %49 = vector.broadcast %48 : vector<8x1xf32> to vector<8x8xf32>
    %50 = arith.divf %46, %49 : vector<8x8xf32>
    %cst_20 = arith.constant dense<0.000000e+00> : vector<8x16xf32>
    %51 = tpu.matmul %50, %36, %cst_20 {dimension_numbers = #tpu.dot_dimension_numbers<[1], [0], [0], [1], [0, 0, 1, 1], [], []>} : vector<8x8xf32>, vector<8x16xf32>, vector<8x16xf32> -> vector<8x16xf32>
    %52 = vector.extract_strided_slice %10 {offsets = [0, 32], sizes = [8, 16], strides = [1, 1]} : vector<8x64xf32> to vector<8x16xf32>
    %53 = vector.extract_strided_slice %11 {offsets = [0, 32], sizes = [8, 16], strides = [1, 1]} : vector<8x64xf32> to vector<8x16xf32>
    %54 = vector.extract_strided_slice %12 {offsets = [0, 32], sizes = [8, 16], strides = [1, 1]} : vector<8x64xf32> to vector<8x16xf32>
    %cst_21 = arith.constant dense<0.000000e+00> : vector<8x8xf32>
    %55 = tpu.matmul %52, %53, %cst_21 {dimension_numbers = #tpu.dot_dimension_numbers<[1], [1], [0], [0], [0, 0, 1, 0], [], []>} : vector<8x16xf32>, vector<8x16xf32>, vector<8x8xf32> -> vector<8x8xf32>
    %cst_22 = arith.constant 2.500000e-01 : f32
    %56 = vector.broadcast %cst_22 : f32 to vector<8x8xf32>
    %57 = arith.mulf %55, %56 : vector<8x8xf32>
    %cst_23 = arith.constant -3.40282347E+38 : f32
    %58 = vector.broadcast %cst_23 : f32 to vector<8x8xf32>
    %59 = arith.select %15, %57, %58 : vector<8x8xi1>, vector<8x8xf32>
    %cst_24 = arith.constant dense<0xFF800000> : vector<8xf32>
    %60 = vector.multi_reduction <maximumf>, %59, %cst_24 [1] : vector<8x8xf32> to vector<8xf32>
    %61 = vector.shape_cast %60 : vector<8xf32> to vector<8x1xf32>
    %62 = vector.broadcast %61 : vector<8x1xf32> to vector<8x8xf32>
    %63 = arith.subf %59, %62 : vector<8x8xf32>
    %64 = math.exp %63 : vector<8x8xf32>
    %cst_25 = arith.constant dense<0.000000e+00> : vector<8xf32>
    %65 = vector.multi_reduction <add>, %64, %cst_25 [1] : vector<8x8xf32> to vector<8xf32>
    %66 = vector.shape_cast %65 : vector<8xf32> to vector<8x1xf32>
    %67 = vector.broadcast %66 : vector<8x1xf32> to vector<8x8xf32>
    %68 = arith.divf %64, %67 : vector<8x8xf32>
    %cst_26 = arith.constant dense<0.000000e+00> : vector<8x16xf32>
    %69 = tpu.matmul %68, %54, %cst_26 {dimension_numbers = #tpu.dot_dimension_numbers<[1], [0], [0], [1], [0, 0, 1, 1], [], []>} : vector<8x8xf32>, vector<8x16xf32>, vector<8x16xf32> -> vector<8x16xf32>
    %70 = vector.extract_strided_slice %10 {offsets = [0, 48], sizes = [8, 16], strides = [1, 1]} : vector<8x64xf32> to vector<8x16xf32>
    %71 = vector.extract_strided_slice %11 {offsets = [0, 48], sizes = [8, 16], strides = [1, 1]} : vector<8x64xf32> to vector<8x16xf32>
    %72 = vector.extract_strided_slice %12 {offsets = [0, 48], sizes = [8, 16], strides = [1, 1]} : vector<8x64xf32> to vector<8x16xf32>
    %cst_27 = arith.constant dense<0.000000e+00> : vector<8x8xf32>
    %73 = tpu.matmul %70, %71, %cst_27 {dimension_numbers = #tpu.dot_dimension_numbers<[1], [1], [0], [0], [0, 0, 1, 0], [], []>} : vector<8x16xf32>, vector<8x16xf32>, vector<8x8xf32> -> vector<8x8xf32>
    %cst_28 = arith.constant 2.500000e-01 : f32
    %74 = vector.broadcast %cst_28 : f32 to vector<8x8xf32>
    %75 = arith.mulf %73, %74 : vector<8x8xf32>
    %cst_29 = arith.constant -3.40282347E+38 : f32
    %76 = vector.broadcast %cst_29 : f32 to vector<8x8xf32>
    %77 = arith.select %15, %75, %76 : vector<8x8xi1>, vector<8x8xf32>
    %cst_30 = arith.constant dense<0xFF800000> : vector<8xf32>
    %78 = vector.multi_reduction <maximumf>, %77, %cst_30 [1] : vector<8x8xf32> to vector<8xf32>
    %79 = vector.shape_cast %78 : vector<8xf32> to vector<8x1xf32>
    %80 = vector.broadcast %79 : vector<8x1xf32> to vector<8x8xf32>
    %81 = arith.subf %77, %80 : vector<8x8xf32>
    %82 = math.exp %81 : vector<8x8xf32>
    %cst_31 = arith.constant dense<0.000000e+00> : vector<8xf32>
    %83 = vector.multi_reduction <add>, %82, %cst_31 [1] : vector<8x8xf32> to vector<8xf32>
    %84 = vector.shape_cast %83 : vector<8xf32> to vector<8x1xf32>
    %85 = vector.broadcast %84 : vector<8x1xf32> to vector<8x8xf32>
    %86 = arith.divf %82, %85 : vector<8x8xf32>
    %cst_32 = arith.constant dense<0.000000e+00> : vector<8x16xf32>
    %87 = tpu.matmul %86, %72, %cst_32 {dimension_numbers = #tpu.dot_dimension_numbers<[1], [0], [0], [1], [0, 0, 1, 1], [], []>} : vector<8x8xf32>, vector<8x16xf32>, vector<8x16xf32> -> vector<8x16xf32>
    %88 = tpu.concatenate %33, %51, %69, %87 in 1 : vector<8x16xf32>, vector<8x16xf32>, vector<8x16xf32>, vector<8x16xf32> -> vector<8x64xf32>
    %89 = arith.truncf %88 : vector<8x64xf32> to vector<8x64xbf16>
    %c0_33 = arith.constant 0 : index
    %c0_34 = arith.constant 0 : index
    %90 = vector.load %arg5[%c0_33, %c0_34] : memref<64x64xbf16, #tpu.memory_space<vmem>>, vector<64x64xbf16>
    %cst_35 = arith.constant dense<0.000000e+00> : vector<8x64xf32>
    %91 = tpu.matmul %89, %90, %cst_35 {dimension_numbers = #tpu.dot_dimension_numbers<[1], [0], [0], [1], [0, 0, 1, 1], [], []>} : vector<8x64xbf16>, vector<64x64xbf16>, vector<8x64xf32> -> vector<8x64xf32>
    %c0_36 = arith.constant 0 : index
    %c0_37 = arith.constant 0 : index
    %92 = vector.load %arg6[%c0_36, %c0_37] : memref<1x64xf32, #tpu.memory_space<vmem>>, vector<1x64xf32>
    %93 = vector.broadcast %92 : vector<1x64xf32> to vector<8x64xf32>
    %94 = arith.addf %91, %93 : vector<8x64xf32>
    %95 = arith.addf %1, %94 : vector<8x64xf32>
    %cst_38 = arith.constant dense<0.000000e+00> : vector<8xf32>
    %96 = vector.multi_reduction <add>, %95, %cst_38 [1] : vector<8x64xf32> to vector<8xf32>
    %97 = vector.shape_cast %96 : vector<8xf32> to vector<8x1xf32>
    %cst_39 = arith.constant 6.400000e+01 : f32
    %98 = vector.broadcast %cst_39 : f32 to vector<8x1xf32>
    %99 = arith.divf %97, %98 : vector<8x1xf32>
    %100 = vector.broadcast %99 : vector<8x1xf32> to vector<8x64xf32>
    %101 = arith.subf %95, %100 : vector<8x64xf32>
    %102 = arith.mulf %101, %101 : vector<8x64xf32>
    %cst_40 = arith.constant dense<0.000000e+00> : vector<8xf32>
    %103 = vector.multi_reduction <add>, %102, %cst_40 [1] : vector<8x64xf32> to vector<8xf32>
    %104 = vector.shape_cast %103 : vector<8xf32> to vector<8x1xf32>
    %cst_41 = arith.constant 6.400000e+01 : f32
    %105 = vector.broadcast %cst_41 : f32 to vector<8x1xf32>
    %106 = arith.divf %104, %105 : vector<8x1xf32>
    %107 = vector.broadcast %99 : vector<8x1xf32> to vector<8x64xf32>
    %108 = arith.subf %95, %107 : vector<8x64xf32>
    %cst_42 = arith.constant 9.99999974E-6 : f32
    %109 = vector.broadcast %cst_42 : f32 to vector<8x1xf32>
    %110 = arith.addf %106, %109 : vector<8x1xf32>
    %111 = math.rsqrt %110 : vector<8x1xf32>
    %112 = vector.broadcast %111 : vector<8x1xf32> to vector<8x64xf32>
    %113 = arith.mulf %108, %112 : vector<8x64xf32>
    %c0_43 = arith.constant 0 : index
    %c0_44 = arith.constant 0 : index
    %114 = vector.load %arg7[%c0_43, %c0_44] : memref<1x64xf32, #tpu.memory_space<vmem>>, vector<1x64xf32>
    %115 = vector.broadcast %114 : vector<1x64xf32> to vector<8x64xf32>
    %116 = arith.mulf %113, %115 : vector<8x64xf32>
    %c0_45 = arith.constant 0 : index
    %c0_46 = arith.constant 0 : index
    %117 = vector.load %arg8[%c0_45, %c0_46] : memref<1x64xf32, #tpu.memory_space<vmem>>, vector<1x64xf32>
    %118 = vector.broadcast %117 : vector<1x64xf32> to vector<8x64xf32>
    %119 = arith.addf %116, %118 : vector<8x64xf32>
    %120 = arith.truncf %119 : vector<8x64xf32> to vector<8x64xbf16>
    %c0_47 = arith.constant 0 : index
    %c0_48 = arith.constant 0 : index
    %121 = vector.load %arg9[%c0_47, %c0_48] : memref<64x64xbf16, #tpu.memory_space<vmem>>, vector<64x64xbf16>
    %cst_49 = arith.constant dense<0.000000e+00> : vector<8x64xf32>
    %122 = tpu.matmul %120, %121, %cst_49 {dimension_numbers = #tpu.dot_dimension_numbers<[1], [0], [0], [1], [0, 0, 1, 1], [], []>} : vector<8x64xbf16>, vector<64x64xbf16>, vector<8x64xf32> -> vector<8x64xf32>
    %c0_50 = arith.constant 0 : index
    %c0_51 = arith.constant 0 : index
    %123 = vector.load %arg10[%c0_50, %c0_51] : memref<1x64xf32, #tpu.memory_space<vmem>>, vector<1x64xf32>
    %124 = vector.broadcast %123 : vector<1x64xf32> to vector<8x64xf32>
    %125 = arith.addf %122, %124 : vector<8x64xf32>
    %126 = arith.truncf %3 : vector<8x64xf32> to vector<8x64xbf16>
    %c0_52 = arith.constant 0 : index
    %c0_53 = arith.constant 0 : index
    %127 = vector.load %arg11[%c0_52, %c0_53] : memref<64x128xbf16, #tpu.memory_space<vmem>>, vector<64x128xbf16>
    %cst_54 = arith.constant dense<0.000000e+00> : vector<8x128xf32>
    %128 = tpu.matmul %126, %127, %cst_54 {dimension_numbers = #tpu.dot_dimension_numbers<[1], [0], [0], [1], [0, 0, 1, 1], [], []>} : vector<8x64xbf16>, vector<64x128xbf16>, vector<8x128xf32> -> vector<8x128xf32>
    %c0_55 = arith.constant 0 : index
    %c0_56 = arith.constant 0 : index
    %129 = vector.load %arg12[%c0_55, %c0_56] : memref<1x128xf32, #tpu.memory_space<vmem>>, vector<1x128xf32>
    %130 = vector.broadcast %129 : vector<1x128xf32> to vector<8x128xf32>
    %131 = arith.addf %128, %130 : vector<8x128xf32>
    %132 = vector.extract_strided_slice %131 {offsets = [0, 0], sizes = [8, 64], strides = [1, 1]} : vector<8x128xf32> to vector<8x64xf32>
    %133 = vector.extract_strided_slice %131 {offsets = [0, 64], sizes = [8, 64], strides = [1, 1]} : vector<8x128xf32> to vector<8x64xf32>
    %134 = vector.extract_strided_slice %125 {offsets = [0, 0], sizes = [8, 16], strides = [1, 1]} : vector<8x64xf32> to vector<8x16xf32>
    %135 = vector.extract_strided_slice %132 {offsets = [0, 0], sizes = [8, 16], strides = [1, 1]} : vector<8x64xf32> to vector<8x16xf32>
    %136 = vector.extract_strided_slice %133 {offsets = [0, 0], sizes = [8, 16], strides = [1, 1]} : vector<8x64xf32> to vector<8x16xf32>
    %cst_57 = arith.constant dense<0.000000e+00> : vector<8x8xf32>
    %137 = tpu.matmul %134, %135, %cst_57 {dimension_numbers = #tpu.dot_dimension_numbers<[1], [1], [0], [0], [0, 0, 1, 0], [], []>} : vector<8x16xf32>, vector<8x16xf32>, vector<8x8xf32> -> vector<8x8xf32>
    %cst_58 = arith.constant 2.500000e-01 : f32
    %138 = vector.broadcast %cst_58 : f32 to vector<8x8xf32>
    %139 = arith.mulf %137, %138 : vector<8x8xf32>
    %cst_59 = arith.constant dense<0xFF800000> : vector<8xf32>
    %140 = vector.multi_reduction <maximumf>, %139, %cst_59 [1] : vector<8x8xf32> to vector<8xf32>
    %141 = vector.shape_cast %140 : vector<8xf32> to vector<8x1xf32>
    %142 = vector.broadcast %141 : vector<8x1xf32> to vector<8x8xf32>
    %143 = arith.subf %139, %142 : vector<8x8xf32>
    %144 = math.exp %143 : vector<8x8xf32>
    %cst_60 = arith.constant dense<0.000000e+00> : vector<8xf32>
    %145 = vector.multi_reduction <add>, %144, %cst_60 [1] : vector<8x8xf32> to vector<8xf32>
    %146 = vector.shape_cast %145 : vector<8xf32> to vector<8x1xf32>
    %147 = vector.broadcast %146 : vector<8x1xf32> to vector<8x8xf32>
    %148 = arith.divf %144, %147 : vector<8x8xf32>
    %cst_61 = arith.constant dense<0.000000e+00> : vector<8x16xf32>
    %149 = tpu.matmul %148, %136, %cst_61 {dimension_numbers = #tpu.dot_dimension_numbers<[1], [0], [0], [1], [0, 0, 1, 1], [], []>} : vector<8x8xf32>, vector<8x16xf32>, vector<8x16xf32> -> vector<8x16xf32>
    %150 = vector.extract_strided_slice %125 {offsets = [0, 16], sizes = [8, 16], strides = [1, 1]} : vector<8x64xf32> to vector<8x16xf32>
    %151 = vector.extract_strided_slice %132 {offsets = [0, 16], sizes = [8, 16], strides = [1, 1]} : vector<8x64xf32> to vector<8x16xf32>
    %152 = vector.extract_strided_slice %133 {offsets = [0, 16], sizes = [8, 16], strides = [1, 1]} : vector<8x64xf32> to vector<8x16xf32>
    %cst_62 = arith.constant dense<0.000000e+00> : vector<8x8xf32>
    %153 = tpu.matmul %150, %151, %cst_62 {dimension_numbers = #tpu.dot_dimension_numbers<[1], [1], [0], [0], [0, 0, 1, 0], [], []>} : vector<8x16xf32>, vector<8x16xf32>, vector<8x8xf32> -> vector<8x8xf32>
    %cst_63 = arith.constant 2.500000e-01 : f32
    %154 = vector.broadcast %cst_63 : f32 to vector<8x8xf32>
    %155 = arith.mulf %153, %154 : vector<8x8xf32>
    %cst_64 = arith.constant dense<0xFF800000> : vector<8xf32>
    %156 = vector.multi_reduction <maximumf>, %155, %cst_64 [1] : vector<8x8xf32> to vector<8xf32>
    %157 = vector.shape_cast %156 : vector<8xf32> to vector<8x1xf32>
    %158 = vector.broadcast %157 : vector<8x1xf32> to vector<8x8xf32>
    %159 = arith.subf %155, %158 : vector<8x8xf32>
    %160 = math.exp %159 : vector<8x8xf32>
    %cst_65 = arith.constant dense<0.000000e+00> : vector<8xf32>
    %161 = vector.multi_reduction <add>, %160, %cst_65 [1] : vector<8x8xf32> to vector<8xf32>
    %162 = vector.shape_cast %161 : vector<8xf32> to vector<8x1xf32>
    %163 = vector.broadcast %162 : vector<8x1xf32> to vector<8x8xf32>
    %164 = arith.divf %160, %163 : vector<8x8xf32>
    %cst_66 = arith.constant dense<0.000000e+00> : vector<8x16xf32>
    %165 = tpu.matmul %164, %152, %cst_66 {dimension_numbers = #tpu.dot_dimension_numbers<[1], [0], [0], [1], [0, 0, 1, 1], [], []>} : vector<8x8xf32>, vector<8x16xf32>, vector<8x16xf32> -> vector<8x16xf32>
    %166 = vector.extract_strided_slice %125 {offsets = [0, 32], sizes = [8, 16], strides = [1, 1]} : vector<8x64xf32> to vector<8x16xf32>
    %167 = vector.extract_strided_slice %132 {offsets = [0, 32], sizes = [8, 16], strides = [1, 1]} : vector<8x64xf32> to vector<8x16xf32>
    %168 = vector.extract_strided_slice %133 {offsets = [0, 32], sizes = [8, 16], strides = [1, 1]} : vector<8x64xf32> to vector<8x16xf32>
    %cst_67 = arith.constant dense<0.000000e+00> : vector<8x8xf32>
    %169 = tpu.matmul %166, %167, %cst_67 {dimension_numbers = #tpu.dot_dimension_numbers<[1], [1], [0], [0], [0, 0, 1, 0], [], []>} : vector<8x16xf32>, vector<8x16xf32>, vector<8x8xf32> -> vector<8x8xf32>
    %cst_68 = arith.constant 2.500000e-01 : f32
    %170 = vector.broadcast %cst_68 : f32 to vector<8x8xf32>
    %171 = arith.mulf %169, %170 : vector<8x8xf32>
    %cst_69 = arith.constant dense<0xFF800000> : vector<8xf32>
    %172 = vector.multi_reduction <maximumf>, %171, %cst_69 [1] : vector<8x8xf32> to vector<8xf32>
    %173 = vector.shape_cast %172 : vector<8xf32> to vector<8x1xf32>
    %174 = vector.broadcast %173 : vector<8x1xf32> to vector<8x8xf32>
    %175 = arith.subf %171, %174 : vector<8x8xf32>
    %176 = math.exp %175 : vector<8x8xf32>
    %cst_70 = arith.constant dense<0.000000e+00> : vector<8xf32>
    %177 = vector.multi_reduction <add>, %176, %cst_70 [1] : vector<8x8xf32> to vector<8xf32>
    %178 = vector.shape_cast %177 : vector<8xf32> to vector<8x1xf32>
    %179 = vector.broadcast %178 : vector<8x1xf32> to vector<8x8xf32>
    %180 = arith.divf %176, %179 : vector<8x8xf32>
    %cst_71 = arith.constant dense<0.000000e+00> : vector<8x16xf32>
    %181 = tpu.matmul %180, %168, %cst_71 {dimension_numbers = #tpu.dot_dimension_numbers<[1], [0], [0], [1], [0, 0, 1, 1], [], []>} : vector<8x8xf32>, vector<8x16xf32>, vector<8x16xf32> -> vector<8x16xf32>
    %182 = vector.extract_strided_slice %125 {offsets = [0, 48], sizes = [8, 16], strides = [1, 1]} : vector<8x64xf32> to vector<8x16xf32>
    %183 = vector.extract_strided_slice %132 {offsets = [0, 48], sizes = [8, 16], strides = [1, 1]} : vector<8x64xf32> to vector<8x16xf32>
    %184 = vector.extract_strided_slice %133 {offsets = [0, 48], sizes = [8, 16], strides = [1, 1]} : vector<8x64xf32> to vector<8x16xf32>
    %cst_72 = arith.constant dense<0.000000e+00> : vector<8x8xf32>
    %185 = tpu.matmul %182, %183, %cst_72 {dimension_numbers = #tpu.dot_dimension_numbers<[1], [1], [0], [0], [0, 0, 1, 0], [], []>} : vector<8x16xf32>, vector<8x16xf32>, vector<8x8xf32> -> vector<8x8xf32>
    %cst_73 = arith.constant 2.500000e-01 : f32
    %186 = vector.broadcast %cst_73 : f32 to vector<8x8xf32>
    %187 = arith.mulf %185, %186 : vector<8x8xf32>
    %cst_74 = arith.constant dense<0xFF800000> : vector<8xf32>
    %188 = vector.multi_reduction <maximumf>, %187, %cst_74 [1] : vector<8x8xf32> to vector<8xf32>
    %189 = vector.shape_cast %188 : vector<8xf32> to vector<8x1xf32>
    %190 = vector.broadcast %189 : vector<8x1xf32> to vector<8x8xf32>
    %191 = arith.subf %187, %190 : vector<8x8xf32>
    %192 = math.exp %191 : vector<8x8xf32>
    %cst_75 = arith.constant dense<0.000000e+00> : vector<8xf32>
    %193 = vector.multi_reduction <add>, %192, %cst_75 [1] : vector<8x8xf32> to vector<8xf32>
    %194 = vector.shape_cast %193 : vector<8xf32> to vector<8x1xf32>
    %195 = vector.broadcast %194 : vector<8x1xf32> to vector<8x8xf32>
    %196 = arith.divf %192, %195 : vector<8x8xf32>
    %cst_76 = arith.constant dense<0.000000e+00> : vector<8x16xf32>
    %197 = tpu.matmul %196, %184, %cst_76 {dimension_numbers = #tpu.dot_dimension_numbers<[1], [0], [0], [1], [0, 0, 1, 1], [], []>} : vector<8x8xf32>, vector<8x16xf32>, vector<8x16xf32> -> vector<8x16xf32>
    %198 = tpu.concatenate %149, %165, %181, %197 in 1 : vector<8x16xf32>, vector<8x16xf32>, vector<8x16xf32>, vector<8x16xf32> -> vector<8x64xf32>
    %199 = arith.truncf %198 : vector<8x64xf32> to vector<8x64xbf16>
    %c0_77 = arith.constant 0 : index
    %c0_78 = arith.constant 0 : index
    %200 = vector.load %arg13[%c0_77, %c0_78] : memref<64x64xbf16, #tpu.memory_space<vmem>>, vector<64x64xbf16>
    %cst_79 = arith.constant dense<0.000000e+00> : vector<8x64xf32>
    %201 = tpu.matmul %199, %200, %cst_79 {dimension_numbers = #tpu.dot_dimension_numbers<[1], [0], [0], [1], [0, 0, 1, 1], [], []>} : vector<8x64xbf16>, vector<64x64xbf16>, vector<8x64xf32> -> vector<8x64xf32>
    %c0_80 = arith.constant 0 : index
    %c0_81 = arith.constant 0 : index
    %202 = vector.load %arg14[%c0_80, %c0_81] : memref<1x64xf32, #tpu.memory_space<vmem>>, vector<1x64xf32>
    %203 = vector.broadcast %202 : vector<1x64xf32> to vector<8x64xf32>
    %204 = arith.addf %201, %203 : vector<8x64xf32>
    %205 = arith.addf %119, %204 : vector<8x64xf32>
    %cst_82 = arith.constant dense<0.000000e+00> : vector<8xf32>
    %206 = vector.multi_reduction <add>, %205, %cst_82 [1] : vector<8x64xf32> to vector<8xf32>
    %207 = vector.shape_cast %206 : vector<8xf32> to vector<8x1xf32>
    %cst_83 = arith.constant 6.400000e+01 : f32
    %208 = vector.broadcast %cst_83 : f32 to vector<8x1xf32>
    %209 = arith.divf %207, %208 : vector<8x1xf32>
    %210 = vector.broadcast %209 : vector<8x1xf32> to vector<8x64xf32>
    %211 = arith.subf %205, %210 : vector<8x64xf32>
    %212 = arith.mulf %211, %211 : vector<8x64xf32>
    %cst_84 = arith.constant dense<0.000000e+00> : vector<8xf32>
    %213 = vector.multi_reduction <add>, %212, %cst_84 [1] : vector<8x64xf32> to vector<8xf32>
    %214 = vector.shape_cast %213 : vector<8xf32> to vector<8x1xf32>
    %cst_85 = arith.constant 6.400000e+01 : f32
    %215 = vector.broadcast %cst_85 : f32 to vector<8x1xf32>
    %216 = arith.divf %214, %215 : vector<8x1xf32>
    %217 = vector.broadcast %209 : vector<8x1xf32> to vector<8x64xf32>
    %218 = arith.subf %205, %217 : vector<8x64xf32>
    %cst_86 = arith.constant 9.99999974E-6 : f32
    %219 = vector.broadcast %cst_86 : f32 to vector<8x1xf32>
    %220 = arith.addf %216, %219 : vector<8x1xf32>
    %221 = math.rsqrt %220 : vector<8x1xf32>
    %222 = vector.broadcast %221 : vector<8x1xf32> to vector<8x64xf32>
    %223 = arith.mulf %218, %222 : vector<8x64xf32>
    %c0_87 = arith.constant 0 : index
    %c0_88 = arith.constant 0 : index
    %224 = vector.load %arg15[%c0_87, %c0_88] : memref<1x64xf32, #tpu.memory_space<vmem>>, vector<1x64xf32>
    %225 = vector.broadcast %224 : vector<1x64xf32> to vector<8x64xf32>
    %226 = arith.mulf %223, %225 : vector<8x64xf32>
    %c0_89 = arith.constant 0 : index
    %c0_90 = arith.constant 0 : index
    %227 = vector.load %arg16[%c0_89, %c0_90] : memref<1x64xf32, #tpu.memory_space<vmem>>, vector<1x64xf32>
    %228 = vector.broadcast %227 : vector<1x64xf32> to vector<8x64xf32>
    %229 = arith.addf %226, %228 : vector<8x64xf32>
    %230 = arith.truncf %229 : vector<8x64xf32> to vector<8x64xbf16>
    %c0_91 = arith.constant 0 : index
    %c0_92 = arith.constant 0 : index
    %231 = vector.load %arg17[%c0_91, %c0_92] : memref<64x256xbf16, #tpu.memory_space<vmem>>, vector<64x256xbf16>
    %cst_93 = arith.constant dense<0.000000e+00> : vector<8x256xf32>
    %232 = tpu.matmul %230, %231, %cst_93 {dimension_numbers = #tpu.dot_dimension_numbers<[1], [0], [0], [1], [0, 0, 1, 1], [], []>} : vector<8x64xbf16>, vector<64x256xbf16>, vector<8x256xf32> -> vector<8x256xf32>
    %c0_94 = arith.constant 0 : index
    %c0_95 = arith.constant 0 : index
    %233 = vector.load %arg18[%c0_94, %c0_95] : memref<1x256xf32, #tpu.memory_space<vmem>>, vector<1x256xf32>
    %234 = vector.broadcast %233 : vector<1x256xf32> to vector<8x256xf32>
    %235 = arith.addf %232, %234 : vector<8x256xf32>
    %cst_96 = arith.constant 0.000000e+00 : f32
    %236 = vector.broadcast %cst_96 : f32 to vector<8x256xf32>
    %237 = arith.maximumf %235, %236 : vector<8x256xf32>
    %238 = arith.truncf %237 : vector<8x256xf32> to vector<8x256xbf16>
    %c0_97 = arith.constant 0 : index
    %c0_98 = arith.constant 0 : index
    %239 = vector.load %arg19[%c0_97, %c0_98] : memref<256x64xbf16, #tpu.memory_space<vmem>>, vector<256x64xbf16>
    %cst_99 = arith.constant dense<0.000000e+00> : vector<8x64xf32>
    %240 = tpu.matmul %238, %239, %cst_99 {dimension_numbers = #tpu.dot_dimension_numbers<[1], [0], [0], [1], [0, 0, 1, 1], [], []>} : vector<8x256xbf16>, vector<256x64xbf16>, vector<8x64xf32> -> vector<8x64xf32>
    %c0_100 = arith.constant 0 : index
    %c0_101 = arith.constant 0 : index
    %241 = vector.load %arg20[%c0_100, %c0_101] : memref<1x64xf32, #tpu.memory_space<vmem>>, vector<1x64xf32>
    %242 = vector.broadcast %241 : vector<1x64xf32> to vector<8x64xf32>
    %243 = arith.addf %240, %242 : vector<8x64xf32>
    %244 = arith.addf %229, %243 : vector<8x64xf32>
    %cst_102 = arith.constant dense<0.000000e+00> : vector<8xf32>
    %245 = vector.multi_reduction <add>, %244, %cst_102 [1] : vector<8x64xf32> to vector<8xf32>
    %246 = vector.shape_cast %245 : vector<8xf32> to vector<8x1xf32>
    %cst_103 = arith.constant 6.400000e+01 : f32
    %247 = vector.broadcast %cst_103 : f32 to vector<8x1xf32>
    %248 = arith.divf %246, %247 : vector<8x1xf32>
    %249 = vector.broadcast %248 : vector<8x1xf32> to vector<8x64xf32>
    %250 = arith.subf %244, %249 : vector<8x64xf32>
    %251 = arith.mulf %250, %250 : vector<8x64xf32>
    %cst_104 = arith.constant dense<0.000000e+00> : vector<8xf32>
    %252 = vector.multi_reduction <add>, %251, %cst_104 [1] : vector<8x64xf32> to vector<8xf32>
    %253 = vector.shape_cast %252 : vector<8xf32> to vector<8x1xf32>
    %cst_105 = arith.constant 6.400000e+01 : f32
    %254 = vector.broadcast %cst_105 : f32 to vector<8x1xf32>
    %255 = arith.divf %253, %254 : vector<8x1xf32>
    %256 = vector.broadcast %248 : vector<8x1xf32> to vector<8x64xf32>
    %257 = arith.subf %244, %256 : vector<8x64xf32>
    %cst_106 = arith.constant 9.99999974E-6 : f32
    %258 = vector.broadcast %cst_106 : f32 to vector<8x1xf32>
    %259 = arith.addf %255, %258 : vector<8x1xf32>
    %260 = math.rsqrt %259 : vector<8x1xf32>
    %261 = vector.broadcast %260 : vector<8x1xf32> to vector<8x64xf32>
    %262 = arith.mulf %257, %261 : vector<8x64xf32>
    %c0_107 = arith.constant 0 : index
    %c0_108 = arith.constant 0 : index
    %263 = vector.load %arg21[%c0_107, %c0_108] : memref<1x64xf32, #tpu.memory_space<vmem>>, vector<1x64xf32>
    %264 = vector.broadcast %263 : vector<1x64xf32> to vector<8x64xf32>
    %265 = arith.mulf %262, %264 : vector<8x64xf32>
    %c0_109 = arith.constant 0 : index
    %c0_110 = arith.constant 0 : index
    %266 = vector.load %arg22[%c0_109, %c0_110] : memref<1x64xf32, #tpu.memory_space<vmem>>, vector<1x64xf32>
    %267 = vector.broadcast %266 : vector<1x64xf32> to vector<8x64xf32>
    %268 = arith.addf %265, %267 : vector<8x64xf32>
    %c0_111 = arith.constant 0 : index
    %c0_112 = arith.constant 0 : index
    %c0_113 = arith.constant 0 : index
    %269 = vector.load %arg23[%c0_111, %c0_112, %c0_113] : memref<1x8x64xf32, #tpu.memory_space<vmem>>, vector<1x8x64xf32>
    %270 = vector.shape_cast %269 : vector<1x8x64xf32> to vector<8x64xf32>
    %271 = vector.shape_cast %268 : vector<8x64xf32> to vector<1x8x64xf32>
    tpu.vector_store %arg23[%c0_111, %c0_112, %c0_113], %271 {strides = array<i32>} : memref<1x8x64xf32, #tpu.memory_space<vmem>>, vector<1x8x64xf32>,
    return
  }
  func.func @transform_0(%arg0: i32) -> (i32, i32, i32) {
    %c0_i32 = arith.constant 0 : i32
    %c0_i32_0 = arith.constant 0 : i32
    %c0_i32_1 = arith.constant 0 : i32
    return %arg0, %c0_i32, %c0_i32_0 : i32, i32, i32
  }
  func.func @transform_1(%arg0: i32) -> (i32, i32, i32) {
    %c0_i32 = arith.constant 0 : i32
    %c0_i32_0 = arith.constant 0 : i32
    %c0_i32_1 = arith.constant 0 : i32
    return %arg0, %c0_i32, %c0_i32_0 : i32, i32, i32
  }
  func.func @transform_2(%arg0: i32) -> (i32, i32) {
    %c0_i32 = arith.constant 0 : i32
    %c0_i32_0 = arith.constant 0 : i32
    %c0_i32_1 = arith.constant 0 : i32
    return %c0_i32, %c0_i32_0 : i32, i32
  }
  func.func @transform_3(%arg0: i32) -> (i32, i32) {
    %c0_i32 = arith.constant 0 : i32
    %c0_i32_0 = arith.constant 0 : i32
    %c0_i32_1 = arith.constant 0 : i32
    return %c0_i32, %c0_i32_0 : i32, i32
  }
  func.func @transform_4(%arg0: i32) -> (i32, i32) {
    %c0_i32 = arith.constant 0 : i32
    %c0_i32_0 = arith.constant 0 : i32
    %c0_i32_1 = arith.constant 0 : i32
    return %c0_i32, %c0_i32_0 : i32, i32
  }
  func.func @transform_5(%arg0: i32) -> (i32, i32) {
    %c0_i32 = arith.constant 0 : i32
    %c0_i32_0 = arith.constant 0 : i32
    %c0_i32_1 = arith.constant 0 : i32
    return %c0_i32, %c0_i32_0 : i32, i32
  }
  func.func @transform_6(%arg0: i32) -> (i32, i32) {
    %c0_i32 = arith.constant 0 : i32
    %c0_i32_0 = arith.constant 0 : i32
    %c0_i32_1 = arith.constant 0 : i32
    return %c0_i32, %c0_i32_0 : i32, i32
  }
  func.func @transform_7(%arg0: i32) -> (i32, i32) {
    %c0_i32 = arith.constant 0 : i32
    %c0_i32_0 = arith.constant 0 : i32
    %c0_i32_1 = arith.constant 0 : i32
    return %c0_i32, %c0_i32_0 : i32, i32
  }
  func.func @transform_8(%arg0: i32) -> (i32, i32) {
    %c0_i32 = arith.constant 0 : i32
    %c0_i32_0 = arith.constant 0 : i32
    %c0_i32_1 = arith.constant 0 : i32
    return %c0_i32, %c0_i32_0 : i32, i32
  }
  func.func @transform_9(%arg0: i32) -> (i32, i32) {
    %c0_i32 = arith.constant 0 : i32
    %c0_i32_0 = arith.constant 0 : i32
    %c0_i32_1 = arith.constant 0 : i32
    return %c0_i32, %c0_i32_0 : i32, i32
  }
  func.func @transform_10(%arg0: i32) -> (i32, i32) {
    %c0_i32 = arith.constant 0 : i32
    %c0_i32_0 = arith.constant 0 : i32
    %c0_i32_1 = arith.constant 0 : i32
    return %c0_i32, %c0_i32_0 : i32, i32
  }
  func.func @transform_11(%arg0: i32) -> (i32, i32) {
    %c0_i32 = arith.constant 0 : i32
    %c0_i32_0 = arith.constant 0 : i32
    %c0_i32_1 = arith.constant 0 : i32
    return %c0_i32, %c0_i32_0 : i32, i32
  }
  func.func @transform_12(%arg0: i32) -> (i32, i32) {
    %c0_i32 = arith.constant 0 : i32
    %c0_i32_0 = arith.constant 0 : i32
    %c0_i32_1 = arith.constant 0 : i32
    return %c0_i32, %c0_i32_0 : i32, i32
  }
  func.func @transform_13(%arg0: i32) -> (i32, i32) {
    %c0_i32 = arith.constant 0 : i32
    %c0_i32_0 = arith.constant 0 : i32
    %c0_i32_1 = arith.constant 0 : i32
    return %c0_i32, %c0_i32_0 : i32, i32
  }
  func.func @transform_14(%arg0: i32) -> (i32, i32) {
    %c0_i32 = arith.constant 0 : i32
    %c0_i32_0 = arith.constant 0 : i32
    %c0_i32_1 = arith.constant 0 : i32
    return %c0_i32, %c0_i32_0 : i32, i32
  }
  func.func @transform_15(%arg0: i32) -> (i32, i32) {
    %c0_i32 = arith.constant 0 : i32
    %c0_i32_0 = arith.constant 0 : i32
    %c0_i32_1 = arith.constant 0 : i32
    return %c0_i32, %c0_i32_0 : i32, i32
  }
  func.func @transform_16(%arg0: i32) -> (i32, i32) {
    %c0_i32 = arith.constant 0 : i32
    %c0_i32_0 = arith.constant 0 : i32
    %c0_i32_1 = arith.constant 0 : i32
    return %c0_i32, %c0_i32_0 : i32, i32
  }
  func.func @transform_17(%arg0: i32) -> (i32, i32) {
    %c0_i32 = arith.constant 0 : i32
    %c0_i32_0 = arith.constant 0 : i32
    %c0_i32_1 = arith.constant 0 : i32
    return %c0_i32, %c0_i32_0 : i32, i32
  }
  func.func @transform_18(%arg0: i32) -> (i32, i32) {
    %c0_i32 = arith.constant 0 : i32
    %c0_i32_0 = arith.constant 0 : i32
    %c0_i32_1 = arith.constant 0 : i32
    return %c0_i32, %c0_i32_0 : i32, i32
  }
  func.func @transform_19(%arg0: i32) -> (i32, i32) {
    %c0_i32 = arith.constant 0 : i32
    %c0_i32_0 = arith.constant 0 : i32
    %c0_i32_1 = arith.constant 0 : i32
    return %c0_i32, %c0_i32_0 : i32, i32
  }
  func.func @transform_20(%arg0: i32) -> (i32, i32) {
    %c0_i32 = arith.constant 0 : i32
    %c0_i32_0 = arith.constant 0 : i32
    %c0_i32_1 = arith.constant 0 : i32
    return %c0_i32, %c0_i32_0 : i32, i32
  }
  func.func @transform_21(%arg0: i32) -> (i32, i32) {
    %c0_i32 = arith.constant 0 : i32
    %c0_i32_0 = arith.constant 0 : i32
    %c0_i32_1 = arith.constant 0 : i32
    return %c0_i32, %c0_i32_0 : i32, i32
  }
  func.func @transform_22(%arg0: i32) -> (i32, i32, i32) {
    %c0_i32 = arith.constant 0 : i32
    %c0_i32_0 = arith.constant 0 : i32
    %c0_i32_1 = arith.constant 0 : i32
    return %arg0, %c0_i32, %c0_i32_0 : i32, i32, i32
  }
}

</mosaic_0001>

<llo_original>
// kernel: transformer_forward.6
$region0: #{transformer_forward.6}
  #allocation0 [shape = 'u32[]', space=smem, size = 0x4, offset = 0x4, fixed_abs, tag = 'smem constant byte address 0x4 - core index']
  #allocation1 [shape = 'u32[72,128]{1,0:T(1,128)}', space=vmem, size = 0x9000, scoped, tag = 'internal scratch']
  %s0 = inlined_call_operand.vmem [shape: s32[2,8,1], index: 0, kind: input, shape index: {}]
  %s1 = inlined_call_operand.hbm [shape: f32[28,64], index: 1, kind: input, shape index: {}]
  %s2 = inlined_call_operand.vmem [shape: f32[8,64], index: 2, kind: input, shape index: {}]
  %s3 = inlined_call_operand.vmem [shape: f32[2,8,64], index: 3, kind: output, shape index: {}]
  %s4 = sld [smem:[#allocation0]]
  $region49: #{transformer_forward.6} parent=0
    _
  %s6 = ssub.s32 1, %s4
  %s7 = scalar_select 0, %s6, %s4
  $region1: #{transformer_forward.6} parent=0
    #allocation2 [shape = 'u8[16384]{0}', space=vmem, size = 0x4000, scoped, tag = 'input window, operand 1, single buffered']
    #allocation3 [shape = 's32[2]{0}', space=sflag, size = 0x8, scoped, tag = 'scoped memory for transformer_forward.6']
    %8 = vsyncpa [#allocation3], 0
    loop: start=0, step=1, limit=4
    $region2: #{transformer_forward.6} parent=1 // loop_pre_header
      _
    $region3: #{transformer_forward.6} parent=1 // loop_header
      %s10 = sphi 0, %s14
      %p11 = scmp.ge.s32.totalorder %s10, 4
      %s20 = sphi 0, %s22
      %s23 = sphi 0, %s20
      %s24 = sphi 0, %s23
      %s40 = sphi 0, %s24
      %s44 = sphi 0, %s44
      %s46 = sphi 0, %s44
      %s47 = sphi 0, %s46
      %s61 = sphi 0, %s47
      %s65 = sphi 0, %s65
      %s67 = sphi 0, %s65
      %s68 = sphi 0, %s67
      %s82 = sphi 0, %s68
      %s88 = sphi 0, %s90
      %s91 = sphi 0, %s88
      %s92 = sphi 0, %s91
      %s108 = sphi 0, %s92
    $region4: #{transformer_forward.6} parent=1 // loop_header_branch
      %13 = sbr.rel (%p11) target = $region8
    $region5: #{transformer_forward.6} parent=1 // loop_body
      %s15 = ssub.s32 %s10, 1
      %s16 = ssub.s32 %s10, 2
      %s17 = sadd.s32 %s10, 1
      %s18 = ssub.s32 %s10, %s17
      %p19 = scmp.eq.s32.totalorder %s18, 0
      %s21 = sadd.s32 %s20, 1
      %s22 = scalar_select %p19, %s20, %s21
      %p25 = pneg %p19
      %p26 = scmp.eq.s32.totalorder %s10, 1
      %p27 = por %p25, %p26
      %p28 = scmp.ne.s32.totalorder %s20, %s23
      %p29 = scmp.eq.s32.totalorder %s10, 0
      %p30 = por %p28, %p29
      %p31 = scmp.ne.s32.totalorder %s20, %s23
      %p32 = scmp.eq.s32.totalorder %s15, 1
      %p33 = por %p31, %p32
      %p34 = scmp.ne.s32.totalorder %s23, %s24
      %p35 = scmp.eq.s32.totalorder %s15, 0
      %p36 = por %p34, %p35
      %p37 = scmp.ne.s32.totalorder %s23, %s24
      %p38 = scmp.eq.s32.totalorder %s16, 1
      %p39 = por %p37, %p38
      %p41 = scmp.ne.s32.totalorder %s24, %s40
      %p42 = scmp.eq.s32.totalorder %s16, 0
      %p43 = por %p41, %p42
      %s45 = sadd.s32 %s44, 1
      %p48 = scmp.eq.s32.totalorder %s10, 1
      %p49 = scmp.ne.s32.totalorder %s44, %s46
      %p50 = scmp.eq.s32.totalorder %s10, 0
      %p51 = por %p49, %p50
      %p52 = scmp.ne.s32.totalorder %s44, %s46
      %p53 = scmp.eq.s32.totalorder %s15, 1
      %p54 = por %p52, %p53
      %p55 = scmp.ne.s32.totalorder %s46, %s47
      %p56 = scmp.eq.s32.totalorder %s15, 0
      %p57 = por %p55, %p56
      %p58 = scmp.ne.s32.totalorder %s46, %s47
      %p59 = scmp.eq.s32.totalorder %s16, 1
      %p60 = por %p58, %p59
      %p62 = scmp.ne.s32.totalorder %s47, %s61
      %p63 = scmp.eq.s32.totalorder %s16, 0
      %p64 = por %p62, %p63
      %s66 = sadd.s32 %s65, 1
      %p69 = scmp.eq.s32.totalorder %s10, 1
      %p70 = scmp.ne.s32.totalorder %s65, %s67
      %p71 = scmp.eq.s32.totalorder %s10, 0
      %p72 = por %p70, %p71
      %p73 = scmp.ne.s32.totalorder %s65, %s67
      %p74 = scmp.eq.s32.totalorder %s15, 1
      %p75 = por %p73, %p74
      %p76 = scmp.ne.s32.totalorder %s67, %s68
      %p77 = scmp.eq.s32.totalorder %s15, 0
      %p78 = por %p76, %p77
      %p79 = scmp.ne.s32.totalorder %s67, %s68
      %p80 = scmp.eq.s32.totalorder %s16, 1
      %p81 = por %p79, %p80
      %p83 = scmp.ne.s32.totalorder %s68, %s82
      %p84 = scmp.eq.s32.totalorder %s16, 0
      %p85 = por %p83, %p84
      %s86 = ssub.s32 %s10, %s17
      %p87 = scmp.eq.s32.totalorder %s86, 0
      %s89 = sadd.s32 %s88, 1
      %s90 = scalar_select %p87, %s88, %s89
      %p93 = pneg %p87
      %p94 = scmp.eq.s32.totalorder %s10, 1
      %p95 = por %p93, %p94
      %p96 = scmp.ne.s32.totalorder %s88, %s91
      %p97 = scmp.eq.s32.totalorder %s10, 0
      %p98 = por %p96, %p97
      %p99 = scmp.ne.s32.totalorder %s88, %s91
      %p100 = scmp.eq.s32.totalorder %s15, 1
      %p101 = por %p99, %p100
      %p102 = scmp.ne.s32.totalorder %s91, %s92
      %p103 = scmp.eq.s32.totalorder %s15, 0
      %p104 = por %p102, %p103
      %p105 = scmp.ne.s32.totalorder %s91, %s92
      %p106 = scmp.eq.s32.totalorder %s16, 1
      %p107 = por %p105, %p106
      %p109 = scmp.ne.s32.totalorder %s92, %s108
      %p110 = scmp.eq.s32.totalorder %s16, 0
      %p111 = por %p109, %p110
      %p112 = scmp.le.s32.totalorder 1, %s10
      %p113 = scmp.lt.s32.totalorder %s10, 3
      %p114 = pnand %p112, %p113
      %p115 = pneg %p114
      // Predicated region
      $region9: #{transformer_forward.6} parent=5 // pred_check
        _
      $region10: #{transformer_forward.6} parent=5 // pred_check_branch
        %117 = sbr.rel (%p114) target = $region12
      $region11: #{transformer_forward.6} parent=5 // pred_region
        %s118 = ssub.s32 %s10, 1
        // Predicated region
        $region13: #{transformer_forward.6} parent=11 // pred_check
          %p119 = pneg %p57
        $region14: #{transformer_forward.6} parent=11 // pred_check_branch
          %121 = sbr.rel (%p119) target = $region16
        $region15: #{transformer_forward.6} parent=11 // pred_region
          %123 = vsyncadd [#allocation3], 0
          %s124 = sshll.u32 %s1, 4
          %s125 = int_to_ptr.hbm [resolvable:$true] %s124
          %s126 = sshll.u32 [#allocation2], 4
          %s127 = int_to_ptr.vmem [resolvable:$true] %s126
          %132 = dma.hbm_to_vmem [thread:$0]  %s125, 512, %s127, [#allocation3], 128, 128, 8
        $region16: #{transformer_forward.6} parent=11 // pred_fallthru
          _
        // Predicated region
        $region17: #{transformer_forward.6} parent=11 // pred_check
          %p133 = pneg %p78
        $region18: #{transformer_forward.6} parent=11 // pred_check_branch
          %135 = sbr.rel (%p133) target = $region20
        $region19: #{transformer_forward.6} parent=11 // pred_region
          _
        $region20: #{transformer_forward.6} parent=11 // pred_fallthru
          _
      $region12: #{transformer_forward.6} parent=5 // pred_fallthru
        _
      %p136 = scmp.lt.s32.totalorder %s10, 2
      // Predicated region
      $region21: #{transformer_forward.6} parent=5 // pred_check
        %p137 = pneg %p136
      $region22: #{transformer_forward.6} parent=5 // pred_check_branch
        %139 = sbr.rel (%p137) target = $region24
      $region23: #{transformer_forward.6} parent=5 // pred_region
        // Predicated region
        $region25: #{transformer_forward.6} parent=23 // pred_check
          %p140 = pneg %p30
        $region26: #{transformer_forward.6} parent=23 // pred_check_branch
          %142 = sbr.rel (%p140) target = $region28
        $region27: #{transformer_forward.6} parent=23 // pred_region
          %p143 = scmp.lt.s32.totalorder %s10, 1
          %s144 = scalar_select %p143, %s10, 1
          %s145 = smul.addr %s144, 8
          %s146 = scalar_lea.vmem %s0, %s145
        $region28: #{transformer_forward.6} parent=23 // pred_fallthru
          _
      $region24: #{transformer_forward.6} parent=5 // pred_fallthru
        _
      %p147 = scmp.le.s32.totalorder 1, %s10
      %p148 = scmp.lt.s32.totalorder %s10, 3
      %p149 = pnand %p147, %p148
      %p150 = pneg %p149
      // Predicated region
      $region29: #{transformer_forward.6} parent=5 // pred_check
        _
      $region30: #{transformer_forward.6} parent=5 // pred_check_branch
        %152 = sbr.rel (%p149) target = $region32
      $region31: #{transformer_forward.6} parent=5 // pred_region
        %s153 = ssub.s32 %s10, 1
        // Predicated region
        $region33: #{transformer_forward.6} parent=31 // pred_check
          %p154 = pneg %p57
        $region34: #{transformer_forward.6} parent=31 // pred_check_branch
          %156 = sbr.rel (%p154) target = $region36
        $region35: #{transformer_forward.6} parent=31 // pred_region
          %158 = dma.done [#allocation3], 512
        $region36: #{transformer_forward.6} parent=31 // pred_fallthru
          _
        %p159 = scmp.lt.s32.totalorder %s15, 1
        %s160 = scalar_select %p159, %s15, 1
        %s161 = smul.addr %s160, 8
        %s162 = scalar_lea.vmem %s0, %s161
        %p163 = pneg %p36
        %p164 = pneg %p33
        %p165 = pneg %p57
        %p166 = pneg %p54
        %p167 = pneg %p78
        %p168 = pneg %p75
        %p169 = pneg %p104
        %p170 = pneg %p101
        %p171 = scmp.lt.s32.totalorder %s15, 1
        %s172 = scalar_select %p171, %s15, 1
        %s173 = smul.addr %s172, 8
        %s174 = scalar_lea.vmem %s3, %s173
        %p175 = scmp.lt.s32.totalorder %s15, 1
        %s176 = scalar_select %p175, %s15, 1
        %s177 = smul.addr %s176, 8
        %s178 = scalar_lea.vmem %s0, %s177
        %p179 = scmp.lt.s32.totalorder %s15, 1
        %s180 = scalar_select %p179, %s15, 1
        %s181 = smul.addr %s180, 8
        %s182 = scalar_lea.vmem %s3, %s181
        %v183 = vld [vmem:[%s178] sm:$0xff]
        %v184 = vlaneseq
        %v185 = vand.u32 %v184, 127
        %186 = vset.pattern.permute.xlu0 0
        %187 = vperm.xlu0 %186, %v183
        %v188 = vpop.permute.xlu0 %187
        %vm189 = vcmp.eq.s32.totalorder %v188, %v185
        %v190 = vsel %vm189, 1, 0
        %v191 = vcvt.s32.f32 %v190
        %v192 = vld [vmem:[#allocation2] sm:$0xff]
        %v193 = vld [vmem:[#allocation2 + $0x8] sm:$0xff]
        %v194 = vld [vmem:[#allocation2 + $0x10] sm:$0xff]
        %v195 = vld [vmem:[#allocation2 + $0x18] sm:$0xf]
        %v196 = vld [vmem:[%s2] sm:$0xff]
        %vm197 = vcmask 228352
        %v199 = vsel %vm197, %v191, 0
        %vm201 = vcmask 1043456
        %v203 = vsel %vm201, %v195, 0
        %205 = vmatpush.msra.mxu0 0.0
        %206 = vmatpush.msra.mxu0 0.0
        %207 = vmatpush.msra.mxu0 0.0
        %208 = vmatpush.msra.mxu0 0.0
        %209 = vmatpush.msra.mxu0 0.0
        %210 = vmatpush.msra.mxu0 0.0
        %211 = vmatpush.msra.mxu0 0.0
        %212 = vmatpush.msra.mxu0 0.0
        %213 = vmatpush.msra.mxu0 0.0
        %214 = vmatpush.msra.mxu0 0.0
        %215 = vmatpush.msra.mxu0 0.0
        %216 = vmatpush.msra.mxu0 0.0
        %217 = vmatpush.msra.mxu0 %v203
        %218 = vmatpush.msra.mxu0 %v194
        %219 = vmatpush.msra.mxu0 %v193
        %220 = vmatpush.msra.mxu0 %v192
        %221 = vmatmul.f32.gmra.mxu0 %v199
        %v222 = vpop.f32.mrf.mxu0
        %v223 = vadd.f32 %v196, %v222
        %224 = vdwg.mxu0
        %vm225 = vcmask 523264
        %226 = vst.msk [vmem:[%s182] sm:$0xff] %vm225, %v223
        %p227 = scmp.lt.s32.totalorder %s15, 1
        %s228 = scalar_select %p227, %s15, 1
        %s229 = smul.addr %s228, 8
        %s230 = scalar_lea.vmem %s3, %s229
        // Predicated region
        $region37: #{transformer_forward.6} parent=31 // pred_check
          %p231 = pneg %p101
        $region38: #{transformer_forward.6} parent=31 // pred_check_branch
          %233 = sbr.rel (%p231) target = $region40
        $region39: #{transformer_forward.6} parent=31 // pred_region
          _
        $region40: #{transformer_forward.6} parent=31 // pred_fallthru
          _
      $region32: #{transformer_forward.6} parent=5 // pred_fallthru
        _
      %p234 = scmp.le.s32.totalorder 2, %s10
      // Predicated region
      $region41: #{transformer_forward.6} parent=5 // pred_check
        %p235 = pneg %p234
      $region42: #{transformer_forward.6} parent=5 // pred_check_branch
        %237 = sbr.rel (%p235) target = $region44
      $region43: #{transformer_forward.6} parent=5 // pred_region
        %s238 = ssub.s32 %s10, 2
        // Predicated region
        $region45: #{transformer_forward.6} parent=43 // pred_check
          %p239 = pneg %p107
        $region46: #{transformer_forward.6} parent=43 // pred_check_branch
          %241 = sbr.rel (%p239) target = $region48
        $region47: #{transformer_forward.6} parent=43 // pred_region
          %p242 = scmp.lt.s32.totalorder %s16, 1
          %s243 = scalar_select %p242, %s16, 1
          %s244 = smul.addr %s243, 8
          %s245 = scalar_lea.vmem %s3, %s244
        $region48: #{transformer_forward.6} parent=43 // pred_fallthru
          _
      $region44: #{transformer_forward.6} parent=5 // pred_fallthru
        _
    $region6: #{transformer_forward.6} parent=1 // loop_footer
      %s14 = sadd.s32 1, %s10
    $region7: #{transformer_forward.6} parent=1 // loop_footer_branch
      %9 = sbr.rel target = $region3
    $region8: #{transformer_forward.6} parent=1 // loop_exit
      _
    %246 = vsyncpa [#allocation3], 1
    %s247 = scalar_lea.sflag [#allocation3], 1
    %248 = vsyncpa %s247, 1

// kernel: transformer_forward.7
$region0: #{transformer_forward.7}
  #allocation0 [shape = 'u32[]', space=smem, size = 0x4, offset = 0x4, fixed_abs, tag = 'smem constant byte address 0x4 - core index']
  #allocation1 [shape = 'u32[72,128]{1,0:T(1,128)}', space=vmem, size = 0x9000, scoped, tag = 'internal scratch']
  %s0 = inlined_call_operand.vmem [shape: f32[2,8,64], index: 0, kind: input, shape index: {}]
  %s1 = inlined_call_operand.vmem [shape: bf16[64,192], index: 1, kind: input, shape index: {}]
  %s2 = inlined_call_operand.vmem [shape: f32[1,192], index: 2, kind: input, shape index: {}]
  %s3 = inlined_call_operand.hbm [shape: bf16[64,64], index: 3, kind: input, shape index: {}]
  %s4 = inlined_call_operand.vmem [shape: f32[1,64], index: 4, kind: input, shape index: {}]
  %s5 = inlined_call_operand.vmem [shape: f32[1,64], index: 5, kind: input, shape index: {}]
  %s6 = inlined_call_operand.vmem [shape: f32[1,64], index: 6, kind: input, shape index: {}]
  %s7 = inlined_call_operand.vmem [shape: bf16[64,256], index: 7, kind: input, shape index: {}]
  %s8 = inlined_call_operand.vmem [shape: f32[1,256], index: 8, kind: input, shape index: {}]
  %s9 = inlined_call_operand.vmem [shape: bf16[256,64], index: 9, kind: input, shape index: {}]
  %s10 = inlined_call_operand.vmem [shape: f32[1,64], index: 10, kind: input, shape index: {}]
  %s11 = inlined_call_operand.vmem [shape: f32[1,64], index: 11, kind: input, shape index: {}]
  %s12 = inlined_call_operand.vmem [shape: f32[1,64], index: 12, kind: input, shape index: {}]
  %s13 = inlined_call_operand.vmem [shape: f32[2,8,64], index: 13, kind: output, shape index: {}]
  %s14 = sld [smem:[#allocation0]]
  $region89: #{transformer_forward.7} parent=0
    _
  %s16 = ssub.s32 1, %s14
  %s17 = scalar_select 0, %s16, %s14
  $region1: #{transformer_forward.7} parent=0
    #allocation2 [shape = 'u8[16384]{0}', space=vmem, size = 0x4000, scoped, tag = 'input window, operand 3, single buffered']
    #allocation3 [shape = 's32[2]{0}', space=sflag, size = 0x8, scoped, tag = 'scoped memory for transformer_forward.7']
    %18 = vsyncpa [#allocation3], 0
    loop: start=0, step=1, limit=4
    $region2: #{transformer_forward.7} parent=1 // loop_pre_header
      _
    $region3: #{transformer_forward.7} parent=1 // loop_header
      %s20 = sphi 0, %s24
      %p21 = scmp.ge.s32.totalorder %s20, 4
      %s30 = sphi 0, %s32
      %s33 = sphi 0, %s30
      %s34 = sphi 0, %s33
      %s50 = sphi 0, %s34
      %s54 = sphi 0, %s54
      %s56 = sphi 0, %s54
      %s57 = sphi 0, %s56
      %s71 = sphi 0, %s57
      %s75 = sphi 0, %s75
      %s77 = sphi 0, %s75
      %s78 = sphi 0, %s77
      %s92 = sphi 0, %s78
      %s96 = sphi 0, %s96
      %s98 = sphi 0, %s96
      %s99 = sphi 0, %s98
      %s113 = sphi 0, %s99
      %s117 = sphi 0, %s117
      %s119 = sphi 0, %s117
      %s120 = sphi 0, %s119
      %s134 = sphi 0, %s120
      %s138 = sphi 0, %s138
      %s140 = sphi 0, %s138
      %s141 = sphi 0, %s140
      %s155 = sphi 0, %s141
      %s159 = sphi 0, %s159
      %s161 = sphi 0, %s159
      %s162 = sphi 0, %s161
      %s176 = sphi 0, %s162
      %s180 = sphi 0, %s180
      %s182 = sphi 0, %s180
      %s183 = sphi 0, %s182
      %s197 = sphi 0, %s183
      %s201 = sphi 0, %s201
      %s203 = sphi 0, %s201
      %s204 = sphi 0, %s203
      %s218 = sphi 0, %s204
      %s222 = sphi 0, %s222
      %s224 = sphi 0, %s222
      %s225 = sphi 0, %s224
      %s239 = sphi 0, %s225
      %s243 = sphi 0, %s243
      %s245 = sphi 0, %s243
      %s246 = sphi 0, %s245
      %s260 = sphi 0, %s246
      %s264 = sphi 0, %s264
      %s266 = sphi 0, %s264
      %s267 = sphi 0, %s266
      %s281 = sphi 0, %s267
      %s285 = sphi 0, %s285
      %s287 = sphi 0, %s285
      %s288 = sphi 0, %s287
      %s302 = sphi 0, %s288
      %s308 = sphi 0, %s310
      %s311 = sphi 0, %s308
      %s312 = sphi 0, %s311
      %s328 = sphi 0, %s312
    $region4: #{transformer_forward.7} parent=1 // loop_header_branch
      %23 = sbr.rel (%p21) target = $region8
    $region5: #{transformer_forward.7} parent=1 // loop_body
      %s25 = ssub.s32 %s20, 1
      %s26 = ssub.s32 %s20, 2
      %s27 = sadd.s32 %s20, 1
      %s28 = ssub.s32 %s20, %s27
      %p29 = scmp.eq.s32.totalorder %s28, 0
      %s31 = sadd.s32 %s30, 1
      %s32 = scalar_select %p29, %s30, %s31
      %p35 = pneg %p29
      %p36 = scmp.eq.s32.totalorder %s20, 1
      %p37 = por %p35, %p36
      %p38 = scmp.ne.s32.totalorder %s30, %s33
      %p39 = scmp.eq.s32.totalorder %s20, 0
      %p40 = por %p38, %p39
      %p41 = scmp.ne.s32.totalorder %s30, %s33
      %p42 = scmp.eq.s32.totalorder %s25, 1
      %p43 = por %p41, %p42
      %p44 = scmp.ne.s32.totalorder %s33, %s34
      %p45 = scmp.eq.s32.totalorder %s25, 0
      %p46 = por %p44, %p45
      %p47 = scmp.ne.s32.totalorder %s33, %s34
      %p48 = scmp.eq.s32.totalorder %s26, 1
      %p49 = por %p47, %p48
      %p51 = scmp.ne.s32.totalorder %s34, %s50
      %p52 = scmp.eq.s32.totalorder %s26, 0
      %p53 = por %p51, %p52
      %s55 = sadd.s32 %s54, 1
      %p58 = scmp.eq.s32.totalorder %s20, 1
      %p59 = scmp.ne.s32.totalorder %s54, %s56
      %p60 = scmp.eq.s32.totalorder %s20, 0
      %p61 = por %p59, %p60
      %p62 = scmp.ne.s32.totalorder %s54, %s56
      %p63 = scmp.eq.s32.totalorder %s25, 1
      %p64 = por %p62, %p63
      %p65 = scmp.ne.s32.totalorder %s56, %s57
      %p66 = scmp.eq.s32.totalorder %s25, 0
      %p67 = por %p65, %p66
      %p68 = scmp.ne.s32.totalorder %s56, %s57
      %p69 = scmp.eq.s32.totalorder %s26, 1
      %p70 = por %p68, %p69
      %p72 = scmp.ne.s32.totalorder %s57, %s71
      %p73 = scmp.eq.s32.totalorder %s26, 0
      %p74 = por %p72, %p73
      %s76 = sadd.s32 %s75, 1
      %p79 = scmp.eq.s32.totalorder %s20, 1
      %p80 = scmp.ne.s32.totalorder %s75, %s77
      %p81 = scmp.eq.s32.totalorder %s20, 0
      %p82 = por %p80, %p81
      %p83 = scmp.ne.s32.totalorder %s75, %s77
      %p84 = scmp.eq.s32.totalorder %s25, 1
      %p85 = por %p83, %p84
      %p86 = scmp.ne.s32.totalorder %s77, %s78
      %p87 = scmp.eq.s32.totalorder %s25, 0
      %p88 = por %p86, %p87
      %p89 = scmp.ne.s32.totalorder %s77, %s78
      %p90 = scmp.eq.s32.totalorder %s26, 1
      %p91 = por %p89, %p90
      %p93 = scmp.ne.s32.totalorder %s78, %s92
      %p94 = scmp.eq.s32.totalorder %s26, 0
      %p95 = por %p93, %p94
      %s97 = sadd.s32 %s96, 1
      %p100 = scmp.eq.s32.totalorder %s20, 1
      %p101 = scmp.ne.s32.totalorder %s96, %s98
      %p102 = scmp.eq.s32.totalorder %s20, 0
      %p103 = por %p101, %p102
      %p104 = scmp.ne.s32.totalorder %s96, %s98
      %p105 = scmp.eq.s32.totalorder %s25, 1
      %p106 = por %p104, %p105
      %p107 = scmp.ne.s32.totalorder %s98, %s99
      %p108 = scmp.eq.s32.totalorder %s25, 0
      %p109 = por %p107, %p108
      %p110 = scmp.ne.s32.totalorder %s98, %s99
      %p111 = scmp.eq.s32.totalorder %s26, 1
      %p112 = por %p110, %p111
      %p114 = scmp.ne.s32.totalorder %s99, %s113
      %p115 = scmp.eq.s32.totalorder %s26, 0
      %p116 = por %p114, %p115
      %s118 = sadd.s32 %s117, 1
      %p121 = scmp.eq.s32.totalorder %s20, 1
      %p122 = scmp.ne.s32.totalorder %s117, %s119
      %p123 = scmp.eq.s32.totalorder %s20, 0
      %p124 = por %p122, %p123
      %p125 = scmp.ne.s32.totalorder %s117, %s119
      %p126 = scmp.eq.s32.totalorder %s25, 1
      %p127 = por %p125, %p126
      %p128 = scmp.ne.s32.totalorder %s119, %s120
      %p129 = scmp.eq.s32.totalorder %s25, 0
      %p130 = por %p128, %p129
      %p131 = scmp.ne.s32.totalorder %s119, %s120
      %p132 = scmp.eq.s32.totalorder %s26, 1
      %p133 = por %p131, %p132
      %p135 = scmp.ne.s32.totalorder %s120, %s134
      %p136 = scmp.eq.s32.totalorder %s26, 0
      %p137 = por %p135, %p136
      %s139 = sadd.s32 %s138, 1
      %p142 = scmp.eq.s32.totalorder %s20, 1
      %p143 = scmp.ne.s32.totalorder %s138, %s140
      %p144 = scmp.eq.s32.totalorder %s20, 0
      %p145 = por %p143, %p144
      %p146 = scmp.ne.s32.totalorder %s138, %s140
      %p147 = scmp.eq.s32.totalorder %s25, 1
      %p148 = por %p146, %p147
      %p149 = scmp.ne.s32.totalorder %s140, %s141
      %p150 = scmp.eq.s32.totalorder %s25, 0
      %p151 = por %p149, %p150
      %p152 = scmp.ne.s32.totalorder %s140, %s141
      %p153 = scmp.eq.s32.totalorder %s26, 1
      %p154 = por %p152, %p153
      %p156 = scmp.ne.s32.totalorder %s141, %s155
      %p157 = scmp.eq.s32.totalorder %s26, 0
      %p158 = por %p156, %p157
      %s160 = sadd.s32 %s159, 1
      %p163 = scmp.eq.s32.totalorder %s20, 1
      %p164 = scmp.ne.s32.totalorder %s159, %s161
      %p165 = scmp.eq.s32.totalorder %s20, 0
      %p166 = por %p164, %p165
      %p167 = scmp.ne.s32.totalorder %s159, %s161
      %p168 = scmp.eq.s32.totalorder %s25, 1
      %p169 = por %p167, %p168
      %p170 = scmp.ne.s32.totalorder %s161, %s162
      %p171 = scmp.eq.s32.totalorder %s25, 0
      %p172 = por %p170, %p171
      %p173 = scmp.ne.s32.totalorder %s161, %s162
      %p174 = scmp.eq.s32.totalorder %s26, 1
      %p175 = por %p173, %p174
      %p177 = scmp.ne.s32.totalorder %s162, %s176
      %p178 = scmp.eq.s32.totalorder %s26, 0
      %p179 = por %p177, %p178
      %s181 = sadd.s32 %s180, 1
      %p184 = scmp.eq.s32.totalorder %s20, 1
      %p185 = scmp.ne.s32.totalorder %s180, %s182
      %p186 = scmp.eq.s32.totalorder %s20, 0
      %p187 = por %p185, %p186
      %p188 = scmp.ne.s32.totalorder %s180, %s182
      %p189 = scmp.eq.s32.totalorder %s25, 1
      %p190 = por %p188, %p189
      %p191 = scmp.ne.s32.totalorder %s182, %s183
      %p192 = scmp.eq.s32.totalorder %s25, 0
      %p193 = por %p191, %p192
      %p194 = scmp.ne.s32.totalorder %s182, %s183
      %p195 = scmp.eq.s32.totalorder %s26, 1
      %p196 = por %p194, %p195
      %p198 = scmp.ne.s32.totalorder %s183, %s197
      %p199 = scmp.eq.s32.totalorder %s26, 0
      %p200 = por %p198, %p199
      %s202 = sadd.s32 %s201, 1
      %p205 = scmp.eq.s32.totalorder %s20, 1
      %p206 = scmp.ne.s32.totalorder %s201, %s203
      %p207 = scmp.eq.s32.totalorder %s20, 0
      %p208 = por %p206, %p207
      %p209 = scmp.ne.s32.totalorder %s201, %s203
      %p210 = scmp.eq.s32.totalorder %s25, 1
      %p211 = por %p209, %p210
      %p212 = scmp.ne.s32.totalorder %s203, %s204
      %p213 = scmp.eq.s32.totalorder %s25, 0
      %p214 = por %p212, %p213
      %p215 = scmp.ne.s32.totalorder %s203, %s204
      %p216 = scmp.eq.s32.totalorder %s26, 1
      %p217 = por %p215, %p216
      %p219 = scmp.ne.s32.totalorder %s204, %s218
      %p220 = scmp.eq.s32.totalorder %s26, 0
      %p221 = por %p219, %p220
      %s223 = sadd.s32 %s222, 1
      %p226 = scmp.eq.s32.totalorder %s20, 1
      %p227 = scmp.ne.s32.totalorder %s222, %s224
      %p228 = scmp.eq.s32.totalorder %s20, 0
      %p229 = por %p227, %p228
      %p230 = scmp.ne.s32.totalorder %s222, %s224
      %p231 = scmp.eq.s32.totalorder %s25, 1
      %p232 = por %p230, %p231
      %p233 = scmp.ne.s32.totalorder %s224, %s225
      %p234 = scmp.eq.s32.totalorder %s25, 0
      %p235 = por %p233, %p234
      %p236 = scmp.ne.s32.totalorder %s224, %s225
      %p237 = scmp.eq.s32.totalorder %s26, 1
      %p238 = por %p236, %p237
      %p240 = scmp.ne.s32.totalorder %s225, %s239
      %p241 = scmp.eq.s32.totalorder %s26, 0
      %p242 = por %p240, %p241
      %s244 = sadd.s32 %s243, 1
      %p247 = scmp.eq.s32.totalorder %s20, 1
      %p248 = scmp.ne.s32.totalorder %s243, %s245
      %p249 = scmp.eq.s32.totalorder %s20, 0
      %p250 = por %p248, %p249
      %p251 = scmp.ne.s32.totalorder %s243, %s245
      %p252 = scmp.eq.s32.totalorder %s25, 1
      %p253 = por %p251, %p252
      %p254 = scmp.ne.s32.totalorder %s245, %s246
      %p255 = scmp.eq.s32.totalorder %s25, 0
      %p256 = por %p254, %p255
      %p257 = scmp.ne.s32.totalorder %s245, %s246
      %p258 = scmp.eq.s32.totalorder %s26, 1
      %p259 = por %p257, %p258
      %p261 = scmp.ne.s32.totalorder %s246, %s260
      %p262 = scmp.eq.s32.totalorder %s26, 0
      %p263 = por %p261, %p262
      %s265 = sadd.s32 %s264, 1
      %p268 = scmp.eq.s32.totalorder %s20, 1
      %p269 = scmp.ne.s32.totalorder %s264, %s266
      %p270 = scmp.eq.s32.totalorder %s20, 0
      %p271 = por %p269, %p270
      %p272 = scmp.ne.s32.totalorder %s264, %s266
      %p273 = scmp.eq.s32.totalorder %s25, 1
      %p274 = por %p272, %p273
      %p275 = scmp.ne.s32.totalorder %s266, %s267
      %p276 = scmp.eq.s32.totalorder %s25, 0
      %p277 = por %p275, %p276
      %p278 = scmp.ne.s32.totalorder %s266, %s267
      %p279 = scmp.eq.s32.totalorder %s26, 1
      %p280 = por %p278, %p279
      %p282 = scmp.ne.s32.totalorder %s267, %s281
      %p283 = scmp.eq.s32.totalorder %s26, 0
      %p284 = por %p282, %p283
      %s286 = sadd.s32 %s285, 1
      %p289 = scmp.eq.s32.totalorder %s20, 1
      %p290 = scmp.ne.s32.totalorder %s285, %s287
      %p291 = scmp.eq.s32.totalorder %s20, 0
      %p292 = por %p290, %p291
      %p293 = scmp.ne.s32.totalorder %s285, %s287
      %p294 = scmp.eq.s32.totalorder %s25, 1
      %p295 = por %p293, %p294
      %p296 = scmp.ne.s32.totalorder %s287, %s288
      %p297 = scmp.eq.s32.totalorder %s25, 0
      %p298 = por %p296, %p297
      %p299 = scmp.ne.s32.totalorder %s287, %s288
      %p300 = scmp.eq.s32.totalorder %s26, 1
      %p301 = por %p299, %p300
      %p303 = scmp.ne.s32.totalorder %s288, %s302
      %p304 = scmp.eq.s32.totalorder %s26, 0
      %p305 = por %p303, %p304
      %s306 = ssub.s32 %s20, %s27
      %p307 = scmp.eq.s32.totalorder %s306, 0
      %s309 = sadd.s32 %s308, 1
      %s310 = scalar_select %p307, %s308, %s309
      %p313 = pneg %p307
      %p314 = scmp.eq.s32.totalorder %s20, 1
      %p315 = por %p313, %p314
      %p316 = scmp.ne.s32.totalorder %s308, %s311
      %p317 = scmp.eq.s32.totalorder %s20, 0
      %p318 = por %p316, %p317
      %p319 = scmp.ne.s32.totalorder %s308, %s311
      %p320 = scmp.eq.s32.totalorder %s25, 1
      %p321 = por %p319, %p320
      %p322 = scmp.ne.s32.totalorder %s311, %s312
      %p323 = scmp.eq.s32.totalorder %s25, 0
      %p324 = por %p322, %p323
      %p325 = scmp.ne.s32.totalorder %s311, %s312
      %p326 = scmp.eq.s32.totalorder %s26, 1
      %p327 = por %p325, %p326
      %p329 = scmp.ne.s32.totalorder %s312, %s328
      %p330 = scmp.eq.s32.totalorder %s26, 0
      %p331 = por %p329, %p330
      %p332 = scmp.le.s32.totalorder 1, %s20
      %p333 = scmp.lt.s32.totalorder %s20, 3
      %p334 = pnand %p332, %p333
      %p335 = pneg %p334
      // Predicated region
      $region9: #{transformer_forward.7} parent=5 // pred_check
        _
      $region10: #{transformer_forward.7} parent=5 // pred_check_branch
        %337 = sbr.rel (%p334) target = $region12
      $region11: #{transformer_forward.7} parent=5 // pred_region
        %s338 = ssub.s32 %s20, 1
        // Predicated region
        $region13: #{transformer_forward.7} parent=11 // pred_check
          %p339 = pneg %p67
        $region14: #{transformer_forward.7} parent=11 // pred_check_branch
          %341 = sbr.rel (%p339) target = $region16
        $region15: #{transformer_forward.7} parent=11 // pred_region
          _
        $region16: #{transformer_forward.7} parent=11 // pred_fallthru
          _
        // Predicated region
        $region17: #{transformer_forward.7} parent=11 // pred_check
          %p342 = pneg %p88
        $region18: #{transformer_forward.7} parent=11 // pred_check_branch
          %344 = sbr.rel (%p342) target = $region20
        $region19: #{transformer_forward.7} parent=11 // pred_region
          _
        $region20: #{transformer_forward.7} parent=11 // pred_fallthru
          _
        // Predicated region
        $region21: #{transformer_forward.7} parent=11 // pred_check
          %p345 = pneg %p109
        $region22: #{transformer_forward.7} parent=11 // pred_check_branch
          %347 = sbr.rel (%p345) target = $region24
        $region23: #{transformer_forward.7} parent=11 // pred_region
          %349 = vsyncadd [#allocation3], 0
          %s350 = sshll.u32 %s3, 4
          %s351 = int_to_ptr.hbm [resolvable:$true] %s350
          %s352 = sshll.u32 [#allocation2], 4
          %s353 = int_to_ptr.vmem [resolvable:$true] %s352
          %358 = dma.hbm_to_vmem [thread:$0]  %s351, 512, %s353, [#allocation3], 64, 64, 4
        $region24: #{transformer_forward.7} parent=11 // pred_fallthru
          _
        // Predicated region
        $region25: #{transformer_forward.7} parent=11 // pred_check
          %p359 = pneg %p130
        $region26: #{transformer_forward.7} parent=11 // pred_check_branch
          %361 = sbr.rel (%p359) target = $region28
        $region27: #{transformer_forward.7} parent=11 // pred_region
          _
        $region28: #{transformer_forward.7} parent=11 // pred_fallthru
          _
        // Predicated region
        $region29: #{transformer_forward.7} parent=11 // pred_check
          %p362 = pneg %p151
        $region30: #{transformer_forward.7} parent=11 // pred_check_branch
          %364 = sbr.rel (%p362) target = $region32
        $region31: #{transformer_forward.7} parent=11 // pred_region
          _
        $region32: #{transformer_forward.7} parent=11 // pred_fallthru
          _
        // Predicated region
        $region33: #{transformer_forward.7} parent=11 // pred_check
          %p365 = pneg %p172
        $region34: #{transformer_forward.7} parent=11 // pred_check_branch
          %367 = sbr.rel (%p365) target = $region36
        $region35: #{transformer_forward.7} parent=11 // pred_region
          _
        $region36: #{transformer_forward.7} parent=11 // pred_fallthru
          _
        // Predicated region
        $region37: #{transformer_forward.7} parent=11 // pred_check
          %p368 = pneg %p193
        $region38: #{transformer_forward.7} parent=11 // pred_check_branch
          %370 = sbr.rel (%p368) target = $region40
        $region39: #{transformer_forward.7} parent=11 // pred_region
          _
        $region40: #{transformer_forward.7} parent=11 // pred_fallthru
          _
        // Predicated region
        $region41: #{transformer_forward.7} parent=11 // pred_check
          %p371 = pneg %p214
        $region42: #{transformer_forward.7} parent=11 // pred_check_branch
          %373 = sbr.rel (%p371) target = $region44
        $region43: #{transformer_forward.7} parent=11 // pred_region
          _
        $region44: #{transformer_forward.7} parent=11 // pred_fallthru
          _
        // Predicated region
        $region45: #{transformer_forward.7} parent=11 // pred_check
          %p374 = pneg %p235
        $region46: #{transformer_forward.7} parent=11 // pred_check_branch
          %376 = sbr.rel (%p374) target = $region48
        $region47: #{transformer_forward.7} parent=11 // pred_region
          _
        $region48: #{transformer_forward.7} parent=11 // pred_fallthru
          _
        // Predicated region
        $region49: #{transformer_forward.7} parent=11 // pred_check
          %p377 = pneg %p256
        $region50: #{transformer_forward.7} parent=11 // pred_check_branch
          %379 = sbr.rel (%p377) target = $region52
        $region51: #{transformer_forward.7} parent=11 // pred_region
          _
        $region52: #{transformer_forward.7} parent=11 // pred_fallthru
          _
        // Predicated region
        $region53: #{transformer_forward.7} parent=11 // pred_check
          %p380 = pneg %p277
        $region54: #{transformer_forward.7} parent=11 // pred_check_branch
          %382 = sbr.rel (%p380) target = $region56
        $region55: #{transformer_forward.7} parent=11 // pred_region
          _
        $region56: #{transformer_forward.7} parent=11 // pred_fallthru
          _
        // Predicated region
        $region57: #{transformer_forward.7} parent=11 // pred_check
          %p383 = pneg %p298
        $region58: #{transformer_forward.7} parent=11 // pred_check_branch
          %385 = sbr.rel (%p383) target = $region60
        $region59: #{transformer_forward.7} parent=11 // pred_region
          _
        $region60: #{transformer_forward.7} parent=11 // pred_fallthru
          _
      $region12: #{transformer_forward.7} parent=5 // pred_fallthru
        _
      %p386 = scmp.lt.s32.totalorder %s20, 2
      // Predicated region
      $region61: #{transformer_forward.7} parent=5 // pred_check
        %p387 = pneg %p386
      $region62: #{transformer_forward.7} parent=5 // pred_check_branch
        %389 = sbr.rel (%p387) target = $region64
      $region63: #{transformer_forward.7} parent=5 // pred_region
        // Predicated region
        $region65: #{transformer_forward.7} parent=63 // pred_check
          %p390 = pneg %p40
        $region66: #{transformer_forward.7} parent=63 // pred_check_branch
          %392 = sbr.rel (%p390) target = $region68
        $region67: #{transformer_forward.7} parent=63 // pred_region
          %p393 = scmp.lt.s32.totalorder %s20, 1
          %s394 = scalar_select %p393, %s20, 1
          %s395 = smul.addr %s394, 8
          %s396 = scalar_lea.vmem %s0, %s395
        $region68: #{transformer_forward.7} parent=63 // pred_fallthru
          _
      $region64: #{transformer_forward.7} parent=5 // pred_fallthru
        _
      %p397 = scmp.le.s32.totalorder 1, %s20
      %p398 = scmp.lt.s32.totalorder %s20, 3
      %p399 = pnand %p397, %p398
      %p400 = pneg %p399
      // Predicated region
      $region69: #{transformer_forward.7} parent=5 // pred_check
        _
      $region70: #{transformer_forward.7} parent=5 // pred_check_branch
        %402 = sbr.rel (%p399) target = $region72
      $region71: #{transformer_forward.7} parent=5 // pred_region
        %s403 = ssub.s32 %s20, 1
        // Predicated region
        $region73: #{transformer_forward.7} parent=71 // pred_check
          %p404 = pneg %p109
        $region74: #{transformer_forward.7} parent=71 // pred_check_branch
          %406 = sbr.rel (%p404) target = $region76
        $region75: #{transformer_forward.7} parent=71 // pred_region
          %408 = dma.done [#allocation3], 512
        $region76: #{transformer_forward.7} parent=71 // pred_fallthru
          _
        %p409 = scmp.lt.s32.totalorder %s25, 1
        %s410 = scalar_select %p409, %s25, 1
        %s411 = smul.addr %s410, 8
        %s412 = scalar_lea.vmem %s0, %s411
        %p413 = pneg %p46
        %p414 = pneg %p43
        %p415 = pneg %p67
        %p416 = pneg %p64
        %p417 = pneg %p88
        %p418 = pneg %p85
        %p419 = pneg %p109
        %p420 = pneg %p106
        %p421 = pneg %p130
        %p422 = pneg %p127
        %p423 = pneg %p151
        %p424 = pneg %p148
        %p425 = pneg %p172
        %p426 = pneg %p169
        %p427 = pneg %p193
        %p428 = pneg %p190
        %p429 = pneg %p214
        %p430 = pneg %p211
        %p431 = pneg %p235
        %p432 = pneg %p232
        %p433 = pneg %p256
        %p434 = pneg %p253
        %p435 = pneg %p277
        %p436 = pneg %p274
        %p437 = pneg %p298
        %p438 = pneg %p295
        %p439 = pneg %p324
        %p440 = pneg %p321
        %p441 = scmp.lt.s32.totalorder %s25, 1
        %s442 = scalar_select %p441, %s25, 1
        %s443 = smul.addr %s442, 8
        %s444 = scalar_lea.vmem %s13, %s443
        %p445 = scmp.lt.s32.totalorder %s25, 1
        %s446 = scalar_select %p445, %s25, 1
        %s447 = smul.addr %s446, 8
        %s448 = scalar_lea.vmem %s0, %s447
        %p449 = scmp.lt.s32.totalorder %s25, 1
        %s450 = scalar_select %p449, %s25, 1
        %s451 = smul.addr %s450, 8
        %s452 = scalar_lea.vmem %s13, %s451
        %v454 = vld [vmem:[%s448] sm:$0xff]
        %v455 = vpack.c.bf16 %v454, %v454
        %v456 = vld [vmem:[%s1] sm:$0xff]
        %v457 = vld [vmem:[%s1 + $0x8] sm:$0xff]
        %v458 = vld [vmem:[%s1 + $0x10] sm:$0xff]
        %v459 = vld [vmem:[%s1 + $0x18] sm:$0xff]
        %v460 = vld [vmem:[%s1 + $0x20] sm:$0xff]
        %v461 = vld [vmem:[%s1 + $0x28] sm:$0xff]
        %v462 = vld [vmem:[%s1 + $0x30] sm:$0xff]
        %v463 = vld [vmem:[%s1 + $0x38] sm:$0xff]
        %v464 = vld [vmem:[%s2] sm:$0x3]
        %v466 = vperm.slane %v464, 0
        %v467 = vperm.slane %v464, 1
        %v478 = vunpack.c.l.b16 %v456
        %v479 = vunpack.c.h.b16 %v456
        %v480 = vunpack.c.l.b16 %v457
        %v481 = vunpack.c.h.b16 %v457
        %v482 = vunpack.c.l.b16 %v458
        %v483 = vunpack.c.h.b16 %v458
        %v484 = vunpack.c.l.b16 %v459
        %v485 = vunpack.c.h.b16 %v459
        %v486 = vunpack.c.l.b16 %v460
        %v487 = vunpack.c.h.b16 %v460
        %v488 = vunpack.c.l.b16 %v461
        %v489 = vunpack.c.h.b16 %v461
        %v490 = vunpack.c.l.b16 %v462
        %v491 = vunpack.c.h.b16 %v462
        %v492 = vunpack.c.l.b16 %v463
        %v493 = vunpack.c.h.b16 %v463
        %v494 = vpack.c.b16 %v480, %v478
        %v495 = vpack.c.b16 %v481, %v479
        %v496 = vpack.c.b16 %v484, %v482
        %v497 = vpack.c.b16 %v485, %v483
        %v498 = vpack.c.b16 %v488, %v486
        %v499 = vpack.c.b16 %v489, %v487
        %v500 = vpack.c.b16 %v492, %v490
        %v501 = vpack.c.b16 %v493, %v491
        %vm510 = vcmask 523264
        %v512 = vsel %vm510, %v455, 0
        %514 = vmatpush.bf16.msra.mxu0 0
        %515 = vmatpush.bf16.msra.mxu0 0
        %516 = vmatpush.bf16.msra.mxu0 0
        %517 = vmatpush.bf16.msra.mxu0 0
        %518 = vmatpush.bf16.msra.mxu0 %v500
        %519 = vmatpush.bf16.msra.mxu0 %v498
        %520 = vmatpush.bf16.msra.mxu0 %v496
        %521 = vmatpush.bf16.msra.mxu0 %v494
        %522 = vmatmul.bf16.gmra.mxu0 %v512
        %v523 = vpop.f32.mrf.mxu0
        %v524 = vadd.f32 %v466, %v523
        %v525 = vpop.f32.mrf.mxu0
        %526 = vdwg.mxu0
        %527 = vmatpush.bf16.msra.mxu0 0
        %528 = vmatpush.bf16.msra.mxu0 0
        %529 = vmatpush.bf16.msra.mxu0 0
        %530 = vmatpush.bf16.msra.mxu0 0
        %531 = vmatpush.bf16.msra.mxu0 %v501
        %532 = vmatpush.bf16.msra.mxu0 %v499
        %533 = vmatpush.bf16.msra.mxu0 %v497
        %534 = vmatpush.bf16.msra.mxu0 %v495
        %535 = vmatmul.bf16.gmra.mxu0 %v512
        %v536 = vpop.f32.mrf.mxu0
        %v537 = vadd.f32 %v467, %v536
        %v538 = vpop.f32.mrf.mxu0
        %539 = vdwg.mxu0
        %541 = vrot.lane.b32.xlu0 %v524, 64
        %v542 = vpop.permute.xlu0 %541
        %vm543 = vcmask 130048
        %v544 = vsel %vm543, %v524, 0
        %v546 = vsel %vm543, %v542, 0
        %548 = vmatpush.xpose.msra.mxu0 0.0
        %549 = vmatpush.xpose.msra.mxu0 0.0
        %550 = vmatpush.xpose.msra.mxu0 0.0
        %551 = vmatpush.xpose.msra.mxu0 0.0
        %552 = vmatpush.xpose.msra.mxu0 0.0
        %553 = vmatpush.xpose.msra.mxu0 0.0
        %554 = vmatpush.xpose.msra.mxu0 0.0
        %555 = vmatpush.xpose.msra.mxu0 0.0
        %556 = vmatpush.xpose.msra.mxu0 0.0
        %557 = vmatpush.xpose.msra.mxu0 0.0
        %558 = vmatpush.xpose.msra.mxu0 0.0
        %559 = vmatpush.xpose.msra.mxu0 0.0
        %560 = vmatpush.xpose.msra.mxu0 0.0
        %561 = vmatpush.xpose.msra.mxu0 0.0
        %562 = vmatpush.xpose.msra.mxu0 0.0
        %563 = vmatpush.xpose.msra.mxu0 %v546
        %564 = vmatmul.f32.gmra.mxu0 %v544
        %v565 = vpop.f32.mrf.mxu0
        %v566 = vadd.f32 0.0, %v565
        %567 = vdwg.mxu0
        %v568 = vmul.f32 %v566, 0.25
        %vm569 = vcmask 64512
        %v570 = vsel %vm569, %v568, -inf
        %571 = vmax.xlane.f32.xlu0 %v570
        %v572 = vpop.xlane.xlu0 %571
        %v573 = vsub.f32 %v568, %v572
        %v574 = vmul.f32 %v573, 1.442695
        %v575 = vpow.pop %v574
        %v576 = vsel %vm569, %v575, 0.0
        %577 = vadd.xlane.f32.xlu0 %v576
        %v578 = vpop.xlane.xlu0 %577
        %v579 = vrcp.pop %v578
        %v580 = vmul.f32 %v578, %v579
        %v581 = vsub.f32 1.0, %v580
        %v582 = vmul.f32 %v579, %v581
        %v583 = vadd.f32 %v579, %v582
        %vm584 = vweird.f32 %v578
        %vm585 = vweird.f32 %v579
        %vm586 = vmor %vm584, %vm585
        %v587 = vsel %vm586, %v579, %v583
        %v588 = vand.u32 2147483647, %v578
        %vm589 = vcmp.eq.f32.partialorder %v588, 8.507059e+37
        %v590 = vand.u32 %v578, 2147483648
        %v591 = vor.u32 1.1754944e-38, %v590
        %v592 = vsel %vm589, %v591, %v587
        %v593 = vmul.f32 %v575, %v592
        %v595 = vsel %vm569, %v593, 0
        %597 = vmatpush.msra.mxu0 0.0
        %598 = vmatpush.msra.mxu0 0.0
        %599 = vmatpush.msra.mxu0 0.0
        %600 = vmatpush.msra.mxu0 0.0
        %601 = vmatpush.msra.mxu0 0.0
        %602 = vmatpush.msra.mxu0 0.0
        %603 = vmatpush.msra.mxu0 0.0
        %604 = vmatpush.msra.mxu0 0.0
        %605 = vmatpush.msra.mxu0 0.0
        %606 = vmatpush.msra.mxu0 0.0
        %607 = vmatpush.msra.mxu0 0.0
        %608 = vmatpush.msra.mxu0 0.0
        %609 = vmatpush.msra.mxu0 0.0
        %610 = vmatpush.msra.mxu0 0.0
        %611 = vmatpush.msra.mxu0 0.0
        %612 = vmatpush.msra.mxu0 %v537
        %613 = vmatmul.f32.gmra.mxu0 %v595
        %v614 = vpop.f32.mrf.mxu0
        %v615 = vadd.f32 0.0, %v614
        %616 = vdwg.mxu0
        %617 = vrot.lane.b32.xlu0 %v524, 112
        %v618 = vpop.permute.xlu0 %617
        %619 = vrot.lane.b32.xlu0 %v524, 48
        %v620 = vpop.permute.xlu0 %619
        %v621 = vsel %vm543, %v618, 0
        %v623 = vsel %vm543, %v620, 0
        %625 = vmatpush.xpose.msra.mxu0 0.0
        %626 = vmatpush.xpose.msra.mxu0 0.0
        %627 = vmatpush.xpose.msra.mxu0 0.0
        %628 = vmatpush.xpose.msra.mxu0 0.0
        %629 = vmatpush.xpose.msra.mxu0 0.0
        %630 = vmatpush.xpose.msra.mxu0 0.0
        %631 = vmatpush.xpose.msra.mxu0 0.0
        %632 = vmatpush.xpose.msra.mxu0 0.0
        %633 = vmatpush.xpose.msra.mxu0 0.0
        %634 = vmatpush.xpose.msra.mxu0 0.0
        %635 = vmatpush.xpose.msra.mxu0 0.0
        %636 = vmatpush.xpose.msra.mxu0 0.0
        %637 = vmatpush.xpose.msra.mxu0 0.0
        %638 = vmatpush.xpose.msra.mxu0 0.0
        %639 = vmatpush.xpose.msra.mxu0 0.0
        %640 = vmatpush.xpose.msra.mxu0 %v623
        %641 = vmatmul.f32.gmra.mxu0 %v621
        %v642 = vpop.f32.mrf.mxu0
        %v643 = vadd.f32 0.0, %v642
        %644 = vdwg.mxu0
        %v645 = vmul.f32 %v643, 0.25
        %v646 = vsel %vm569, %v645, -inf
        %647 = vmax.xlane.f32.xlu0 %v646
        %v648 = vpop.xlane.xlu0 %647
        %v649 = vsub.f32 %v645, %v648
        %v650 = vmul.f32 %v649, 1.442695
        %v651 = vpow.pop %v650
        %v652 = vsel %vm569, %v651, 0.0
        %653 = vadd.xlane.f32.xlu0 %v652
        %v654 = vpop.xlane.xlu0 %653
        %v655 = vrcp.pop %v654
        %v656 = vmul.f32 %v654, %v655
        %v657 = vsub.f32 1.0, %v656
        %v658 = vmul.f32 %v655, %v657
        %v659 = vadd.f32 %v655, %v658
        %vm660 = vweird.f32 %v654
        %vm661 = vweird.f32 %v655
        %vm662 = vmor %vm660, %vm661
        %v663 = vsel %vm662, %v655, %v659
        %v664 = vand.u32 2147483647, %v654
        %vm665 = vcmp.eq.f32.partialorder %v664, 8.507059e+37
        %v666 = vand.u32 %v654, 2147483648
        %v667 = vor.u32 1.1754944e-38, %v666
        %v668 = vsel %vm665, %v667, %v663
        %v669 = vmul.f32 %v651, %v668
        %671 = vrot.lane.b32.xlu0 %v537, 112
        %v672 = vpop.permute.xlu0 %671
        %v675 = vsel %vm569, %v669, 0
        %677 = vmatpush.msra.mxu0 0.0
        %678 = vmatpush.msra.mxu0 0.0
        %679 = vmatpush.msra.mxu0 0.0
        %680 = vmatpush.msra.mxu0 0.0
        %681 = vmatpush.msra.mxu0 0.0
        %682 = vmatpush.msra.mxu0 0.0
        %683 = vmatpush.msra.mxu0 0.0
        %684 = vmatpush.msra.mxu0 0.0
        %685 = vmatpush.msra.mxu0 0.0
        %686 = vmatpush.msra.mxu0 0.0
        %687 = vmatpush.msra.mxu0 0.0
        %688 = vmatpush.msra.mxu0 0.0
        %689 = vmatpush.msra.mxu0 0.0
        %690 = vmatpush.msra.mxu0 0.0
        %691 = vmatpush.msra.mxu0 0.0
        %692 = vmatpush.msra.mxu0 %v672
        %693 = vmatmul.f32.gmra.mxu0 %v675
        %v694 = vpop.f32.mrf.mxu0
        %v695 = vadd.f32 0.0, %v694
        %696 = vdwg.mxu0
        %697 = vrot.lane.b32.xlu0 %v524, 96
        %v698 = vpop.permute.xlu0 %697
        %699 = vrot.lane.b32.xlu0 %v524, 32
        %v700 = vpop.permute.xlu0 %699
        %v701 = vsel %vm543, %v698, 0
        %v703 = vsel %vm543, %v700, 0
        %705 = vmatpush.xpose.msra.mxu0 0.0
        %706 = vmatpush.xpose.msra.mxu0 0.0
        %707 = vmatpush.xpose.msra.mxu0 0.0
        %708 = vmatpush.xpose.msra.mxu0 0.0
        %709 = vmatpush.xpose.msra.mxu0 0.0
        %710 = vmatpush.xpose.msra.mxu0 0.0
        %711 = vmatpush.xpose.msra.mxu0 0.0
        %712 = vmatpush.xpose.msra.mxu0 0.0
        %713 = vmatpush.xpose.msra.mxu0 0.0
        %714 = vmatpush.xpose.msra.mxu0 0.0
        %715 = vmatpush.xpose.msra.mxu0 0.0
        %716 = vmatpush.xpose.msra.mxu0 0.0
        %717 = vmatpush.xpose.msra.mxu0 0.0
        %718 = vmatpush.xpose.msra.mxu0 0.0
        %719 = vmatpush.xpose.msra.mxu0 0.0
        %720 = vmatpush.xpose.msra.mxu0 %v703
        %721 = vmatmul.f32.gmra.mxu0 %v701
        %v722 = vpop.f32.mrf.mxu0
        %v723 = vadd.f32 0.0, %v722
        %724 = vdwg.mxu0
        %v725 = vmul.f32 %v723, 0.25
        %v726 = vsel %vm569, %v725, -inf
        %727 = vmax.xlane.f32.xlu0 %v726
        %v728 = vpop.xlane.xlu0 %727
        %v729 = vsub.f32 %v725, %v728
        %v730 = vmul.f32 %v729, 1.442695
        %v731 = vpow.pop %v730
        %v732 = vsel %vm569, %v731, 0.0
        %733 = vadd.xlane.f32.xlu0 %v732
        %v734 = vpop.xlane.xlu0 %733
        %v735 = vrcp.pop %v734
        %v736 = vmul.f32 %v734, %v735
        %v737 = vsub.f32 1.0, %v736
        %v738 = vmul.f32 %v735, %v737
        %v739 = vadd.f32 %v735, %v738
        %vm740 = vweird.f32 %v734
        %vm741 = vweird.f32 %v735
        %vm742 = vmor %vm740, %vm741
        %v743 = vsel %vm742, %v735, %v739
        %v744 = vand.u32 2147483647, %v734
        %vm745 = vcmp.eq.f32.partialorder %v744, 8.507059e+37
        %v746 = vand.u32 %v734, 2147483648
        %v747 = vor.u32 1.1754944e-38, %v746
        %v748 = vsel %vm745, %v747, %v743
        %v749 = vmul.f32 %v731, %v748
        %750 = vrot.lane.b32.xlu0 %v537, 96
        %v751 = vpop.permute.xlu0 %750
        %v754 = vsel %vm569, %v749, 0
        %756 = vmatpush.msra.mxu0 0.0
        %757 = vmatpush.msra.mxu0 0.0
        %758 = vmatpush.msra.mxu0 0.0
        %759 = vmatpush.msra.mxu0 0.0
        %760 = vmatpush.msra.mxu0 0.0
        %761 = vmatpush.msra.mxu0 0.0
        %762 = vmatpush.msra.mxu0 0.0
        %763 = vmatpush.msra.mxu0 0.0
        %764 = vmatpush.msra.mxu0 0.0
        %765 = vmatpush.msra.mxu0 0.0
        %766 = vmatpush.msra.mxu0 0.0
        %767 = vmatpush.msra.mxu0 0.0
        %768 = vmatpush.msra.mxu0 0.0
        %769 = vmatpush.msra.mxu0 0.0
        %770 = vmatpush.msra.mxu0 0.0
        %771 = vmatpush.msra.mxu0 %v751
        %772 = vmatmul.f32.gmra.mxu0 %v754
        %v773 = vpop.f32.mrf.mxu0
        %v774 = vadd.f32 0.0, %v773
        %775 = vdwg.mxu0
        %776 = vrot.lane.b32.xlu0 %v524, 80
        %v777 = vpop.permute.xlu0 %776
        %778 = vrot.lane.b32.xlu0 %v524, 16
        %v779 = vpop.permute.xlu0 %778
        %v780 = vsel %vm543, %v777, 0
        %v782 = vsel %vm543, %v779, 0
        %784 = vmatpush.xpose.msra.mxu0 0.0
        %785 = vmatpush.xpose.msra.mxu0 0.0
        %786 = vmatpush.xpose.msra.mxu0 0.0
        %787 = vmatpush.xpose.msra.mxu0 0.0
        %788 = vmatpush.xpose.msra.mxu0 0.0
        %789 = vmatpush.xpose.msra.mxu0 0.0
        %790 = vmatpush.xpose.msra.mxu0 0.0
        %791 = vmatpush.xpose.msra.mxu0 0.0
        %792 = vmatpush.xpose.msra.mxu0 0.0
        %793 = vmatpush.xpose.msra.mxu0 0.0
        %794 = vmatpush.xpose.msra.mxu0 0.0
        %795 = vmatpush.xpose.msra.mxu0 0.0
        %796 = vmatpush.xpose.msra.mxu0 0.0
        %797 = vmatpush.xpose.msra.mxu0 0.0
        %798 = vmatpush.xpose.msra.mxu0 0.0
        %799 = vmatpush.xpose.msra.mxu0 %v782
        %800 = vmatmul.f32.gmra.mxu0 %v780
        %v801 = vpop.f32.mrf.mxu0
        %v802 = vadd.f32 0.0, %v801
        %803 = vdwg.mxu0
        %v804 = vmul.f32 %v802, 0.25
        %v805 = vsel %vm569, %v804, -inf
        %806 = vmax.xlane.f32.xlu0 %v805
        %v807 = vpop.xlane.xlu0 %806
        %v808 = vsub.f32 %v804, %v807
        %v809 = vmul.f32 %v808, 1.442695
        %v810 = vpow.pop %v809
        %v811 = vsel %vm569, %v810, 0.0
        %812 = vadd.xlane.f32.xlu0 %v811
        %v813 = vpop.xlane.xlu0 %812
        %v814 = vrcp.pop %v813
        %v815 = vmul.f32 %v813, %v814
        %v816 = vsub.f32 1.0, %v815
        %v817 = vmul.f32 %v814, %v816
        %v818 = vadd.f32 %v814, %v817
        %vm819 = vweird.f32 %v813
        %vm820 = vweird.f32 %v814
        %vm821 = vmor %vm819, %vm820
        %v822 = vsel %vm821, %v814, %v818
        %v823 = vand.u32 2147483647, %v813
        %vm824 = vcmp.eq.f32.partialorder %v823, 8.507059e+37
        %v825 = vand.u32 %v813, 2147483648
        %v826 = vor.u32 1.1754944e-38, %v825
        %v827 = vsel %vm824, %v826, %v822
        %v828 = vmul.f32 %v810, %v827
        %829 = vrot.lane.b32.xlu0 %v537, 80
        %v830 = vpop.permute.xlu0 %829
        %v833 = vsel %vm569, %v828, 0
        %835 = vmatpush.msra.mxu0 0.0
        %836 = vmatpush.msra.mxu0 0.0
        %837 = vmatpush.msra.mxu0 0.0
        %838 = vmatpush.msra.mxu0 0.0
        %839 = vmatpush.msra.mxu0 0.0
        %840 = vmatpush.msra.mxu0 0.0
        %841 = vmatpush.msra.mxu0 0.0
        %842 = vmatpush.msra.mxu0 0.0
        %843 = vmatpush.msra.mxu0 0.0
        %844 = vmatpush.msra.mxu0 0.0
        %845 = vmatpush.msra.mxu0 0.0
        %846 = vmatpush.msra.mxu0 0.0
        %847 = vmatpush.msra.mxu0 0.0
        %848 = vmatpush.msra.mxu0 0.0
        %849 = vmatpush.msra.mxu0 0.0
        %850 = vmatpush.msra.mxu0 %v830
        %851 = vmatmul.f32.gmra.mxu0 %v833
        %v852 = vpop.f32.mrf.mxu0
        %v853 = vadd.f32 0.0, %v852
        %854 = vdwg.mxu0
        %856 = vrot.lane.b32.xlu0 %v695, 16
        %v857 = vpop.permute.xlu0 %856
        %860 = vrot.lane.b32.xlu0 %v774, 32
        %v861 = vpop.permute.xlu0 %860
        %864 = vrot.lane.b32.xlu0 %v853, 48
        %v865 = vpop.permute.xlu0 %864
        %v867 = vsel %vm543, %v615, %v857
        %vm868 = vcmask 261120
        %v869 = vsel %vm868, %v867, %v861
        %vm870 = vcmask 392192
        %v871 = vsel %vm870, %v869, %v865
        %v872 = vpack.c.bf16 %v871, %v871
        %v873 = vld [vmem:[#allocation2] sm:$0xf]
        %v874 = vld [vmem:[#allocation2 + $0x4] sm:$0xf]
        %v875 = vld [vmem:[#allocation2 + $0x8] sm:$0xf]
        %v876 = vld [vmem:[#allocation2 + $0xc] sm:$0xf]
        %v877 = vld [vmem:[#allocation2 + $0x10] sm:$0xf]
        %v878 = vld [vmem:[#allocation2 + $0x14] sm:$0xf]
        %v879 = vld [vmem:[#allocation2 + $0x18] sm:$0xf]
        %v880 = vld [vmem:[#allocation2 + $0x1c] sm:$0xf]
        %v881 = vld [vmem:[%s4] sm:$0x1]
        %v883 = vperm.slane %v881, 0
        %v893 = vunpack.c.l.b16 %v873
        %v894 = vunpack.c.l.b16 %v874
        %v895 = vunpack.c.l.b16 %v875
        %v896 = vunpack.c.l.b16 %v876
        %v897 = vunpack.c.l.b16 %v877
        %v898 = vunpack.c.l.b16 %v878
        %v899 = vunpack.c.l.b16 %v879
        %v900 = vunpack.c.l.b16 %v880
        %v901 = vpack.c.b16 %v894, %v893
        %v902 = vpack.c.b16 %v896, %v895
        %v903 = vpack.c.b16 %v898, %v897
        %v904 = vpack.c.b16 %v900, %v899
        %v910 = vsel %vm510, %v872, 0
        %912 = vmatpush.bf16.msra.mxu0 0
        %913 = vmatpush.bf16.msra.mxu0 0
        %914 = vmatpush.bf16.msra.mxu0 0
        %915 = vmatpush.bf16.msra.mxu0 0
        %916 = vmatpush.bf16.msra.mxu0 %v904
        %917 = vmatpush.bf16.msra.mxu0 %v903
        %918 = vmatpush.bf16.msra.mxu0 %v902
        %919 = vmatpush.bf16.msra.mxu0 %v901
        %920 = vmatmul.bf16.gmra.mxu0 %v910
        %v921 = vpop.f32.mrf.mxu0
        %v922 = vadd.f32 %v883, %v921
        %v923 = vpop.f32.mrf.mxu0
        %924 = vdwg.mxu0
        %v925 = vadd.f32 %v454, %v922
        %v926 = vsel %vm510, %v925, 0.0
        %927 = vadd.xlane.f32.xlu0 %v926
        %v928 = vpop.xlane.xlu0 %927
        %v929 = vrcp.pop 64.0
        %v930 = vmul.f32 64.0, %v929
        %v931 = vsub.f32 1.0, %v930
        %v932 = vmul.f32 %v929, %v931
        %v933 = vadd.f32 %v929, %v932
        %vm934 = vweird.f32 %v929
        %v935 = vsel %vm934, %v929, %v933
        %v936 = vmul.f32 %v928, %v935
        %v937 = vsub.f32 %v925, %v936
        %v938 = vmul.f32 %v937, %v937
        %v939 = vsel %vm510, %v938, 0.0
        %940 = vadd.xlane.f32.xlu0 %v939
        %v941 = vpop.xlane.xlu0 %940
        %v942 = vmul.f32 %v941, %v935
        %v943 = vadd.f32 %v942, 1e-05
        %v944 = vrsqrt.pop %v943
        %v945 = vmul.f32 %v944, %v943
        %v946 = vmul.f32 %v945, %v944
        %v947 = vmul.f32 0.5, %v946
        %v948 = vsub.f32 1.5, %v947
        %v949 = vmul.f32 %v944, %v948
        %vm950 = vweird.f32 %v943
        %vm951 = vweird.f32 %v944
        %vm952 = vmor %vm950, %vm951
        %v953 = vsel %vm952, %v944, %v949
        %v954 = vmul.f32 %v937, %v953
        %v955 = vld [vmem:[%s5] sm:$0x1]
        %v957 = vperm.slane %v955, 0
        %v959 = vmul.f32 %v954, %v957
        %v960 = vld [vmem:[%s6] sm:$0x1]
        %v962 = vperm.slane %v960, 0
        %v964 = vadd.f32 %v959, %v962
        %v965 = vpack.c.bf16 %v964, %v964
        %v966 = vld [vmem:[%s7] sm:$0xff]
        %v967 = vld [vmem:[%s7 + $0x8] sm:$0xff]
        %v968 = vld [vmem:[%s7 + $0x10] sm:$0xff]
        %v969 = vld [vmem:[%s7 + $0x18] sm:$0xff]
        %v970 = vld [vmem:[%s7 + $0x20] sm:$0xff]
        %v971 = vld [vmem:[%s7 + $0x28] sm:$0xff]
        %v972 = vld [vmem:[%s7 + $0x30] sm:$0xff]
        %v973 = vld [vmem:[%s7 + $0x38] sm:$0xff]
        %v974 = vld [vmem:[%s8] sm:$0x3]
        %v976 = vperm.slane %v974, 0
        %v977 = vperm.slane %v974, 1
        %v988 = vunpack.c.l.b16 %v966
        %v989 = vunpack.c.h.b16 %v966
        %v990 = vunpack.c.l.b16 %v967
        %v991 = vunpack.c.h.b16 %v967
        %v992 = vunpack.c.l.b16 %v968
        %v993 = vunpack.c.h.b16 %v968
        %v994 = vunpack.c.l.b16 %v969
        %v995 = vunpack.c.h.b16 %v969
        %v996 = vunpack.c.l.b16 %v970
        %v997 = vunpack.c.h.b16 %v970
        %v998 = vunpack.c.l.b16 %v971
        %v999 = vunpack.c.h.b16 %v971
        %v1000 = vunpack.c.l.b16 %v972
        %v1001 = vunpack.c.h.b16 %v972
        %v1002 = vunpack.c.l.b16 %v973
        %v1003 = vunpack.c.h.b16 %v973
        %v1004 = vpack.c.b16 %v990, %v988
        %v1005 = vpack.c.b16 %v991, %v989
        %v1006 = vpack.c.b16 %v994, %v992
        %v1007 = vpack.c.b16 %v995, %v993
        %v1008 = vpack.c.b16 %v998, %v996
        %v1009 = vpack.c.b16 %v999, %v997
        %v1010 = vpack.c.b16 %v1002, %v1000
        %v1011 = vpack.c.b16 %v1003, %v1001
        %v1021 = vsel %vm510, %v965, 0
        %1023 = vmatpush.bf16.msra.mxu0 0
        %1024 = vmatpush.bf16.msra.mxu0 0
        %1025 = vmatpush.bf16.msra.mxu0 0
        %1026 = vmatpush.bf16.msra.mxu0 0
        %1027 = vmatpush.bf16.msra.mxu0 %v1010
        %1028 = vmatpush.bf16.msra.mxu0 %v1008
        %1029 = vmatpush.bf16.msra.mxu0 %v1006
        %1030 = vmatpush.bf16.msra.mxu0 %v1004
        %1031 = vmatmul.bf16.gmra.mxu0 %v1021
        %v1032 = vpop.f32.mrf.mxu0
        %v1033 = vadd.f32 %v976, %v1032
        %v1034 = vpop.f32.mrf.mxu0
        %1035 = vdwg.mxu0
        %1036 = vmatpush.bf16.msra.mxu0 0
        %1037 = vmatpush.bf16.msra.mxu0 0
        %1038 = vmatpush.bf16.msra.mxu0 0
        %1039 = vmatpush.bf16.msra.mxu0 0
        %1040 = vmatpush.bf16.msra.mxu0 %v1011
        %1041 = vmatpush.bf16.msra.mxu0 %v1009
        %1042 = vmatpush.bf16.msra.mxu0 %v1007
        %1043 = vmatpush.bf16.msra.mxu0 %v1005
        %1044 = vmatmul.bf16.gmra.mxu0 %v1021
        %v1045 = vpop.f32.mrf.mxu0
        %v1046 = vadd.f32 %v977, %v1045
        %v1047 = vpop.f32.mrf.mxu0
        %1048 = vdwg.mxu0
        %v1049 = vmax.f32 %v1033, 0.0
        %v1050 = vmax.f32 %v1046, 0.0
        %v1051 = vpack.c.bf16 %v1049, %v1049
        %v1052 = vpack.c.bf16 %v1050, %v1050
        %v1053 = vld [vmem:[%s9] sm:$0xf]
        %v1054 = vld [vmem:[%s9 + $0x4] sm:$0xf]
        %v1055 = vld [vmem:[%s9 + $0x8] sm:$0xf]
        %v1056 = vld [vmem:[%s9 + $0xc] sm:$0xf]
        %v1057 = vld [vmem:[%s9 + $0x10] sm:$0xf]
        %v1058 = vld [vmem:[%s9 + $0x14] sm:$0xf]
        %v1059 = vld [vmem:[%s9 + $0x18] sm:$0xf]
        %v1060 = vld [vmem:[%s9 + $0x1c] sm:$0xf]
        %v1061 = vld [vmem:[%s9 + $0x20] sm:$0xf]
        %v1062 = vld [vmem:[%s9 + $0x24] sm:$0xf]
        %v1063 = vld [vmem:[%s9 + $0x28] sm:$0xf]
        %v1064 = vld [vmem:[%s9 + $0x2c] sm:$0xf]
        %v1065 = vld [vmem:[%s9 + $0x30] sm:$0xf]
        %v1066 = vld [vmem:[%s9 + $0x34] sm:$0xf]
        %v1067 = vld [vmem:[%s9 + $0x38] sm:$0xf]
        %v1068 = vld [vmem:[%s9 + $0x3c] sm:$0xf]
        %v1069 = vld [vmem:[%s9 + $0x40] sm:$0xf]
        %v1070 = vld [vmem:[%s9 + $0x44] sm:$0xf]
        %v1071 = vld [vmem:[%s9 + $0x48] sm:$0xf]
        %v1072 = vld [vmem:[%s9 + $0x4c] sm:$0xf]
        %v1073 = vld [vmem:[%s9 + $0x50] sm:$0xf]
        %v1074 = vld [vmem:[%s9 + $0x54] sm:$0xf]
        %v1075 = vld [vmem:[%s9 + $0x58] sm:$0xf]
        %v1076 = vld [vmem:[%s9 + $0x5c] sm:$0xf]
        %v1077 = vld [vmem:[%s9 + $0x60] sm:$0xf]
        %v1078 = vld [vmem:[%s9 + $0x64] sm:$0xf]
        %v1079 = vld [vmem:[%s9 + $0x68] sm:$0xf]
        %v1080 = vld [vmem:[%s9 + $0x6c] sm:$0xf]
        %v1081 = vld [vmem:[%s9 + $0x70] sm:$0xf]
        %v1082 = vld [vmem:[%s9 + $0x74] sm:$0xf]
        %v1083 = vld [vmem:[%s9 + $0x78] sm:$0xf]
        %v1084 = vld [vmem:[%s9 + $0x7c] sm:$0xf]
        %v1085 = vld [vmem:[%s10] sm:$0x1]
        %v1087 = vperm.slane %v1085, 0
        %v1121 = vunpack.c.l.b16 %v1053
        %v1122 = vunpack.c.l.b16 %v1054
        %v1123 = vunpack.c.l.b16 %v1055
        %v1124 = vunpack.c.l.b16 %v1056
        %v1125 = vunpack.c.l.b16 %v1057
        %v1126 = vunpack.c.l.b16 %v1058
        %v1127 = vunpack.c.l.b16 %v1059
        %v1128 = vunpack.c.l.b16 %v1060
        %v1129 = vunpack.c.l.b16 %v1061
        %v1130 = vunpack.c.l.b16 %v1062
        %v1131 = vunpack.c.l.b16 %v1063
        %v1132 = vunpack.c.l.b16 %v1064
        %v1133 = vunpack.c.l.b16 %v1065
        %v1134 = vunpack.c.l.b16 %v1066
        %v1135 = vunpack.c.l.b16 %v1067
        %v1136 = vunpack.c.l.b16 %v1068
        %v1137 = vunpack.c.l.b16 %v1069
        %v1138 = vunpack.c.l.b16 %v1070
        %v1139 = vunpack.c.l.b16 %v1071
        %v1140 = vunpack.c.l.b16 %v1072
        %v1141 = vunpack.c.l.b16 %v1073
        %v1142 = vunpack.c.l.b16 %v1074
        %v1143 = vunpack.c.l.b16 %v1075
        %v1144 = vunpack.c.l.b16 %v1076
        %v1145 = vunpack.c.l.b16 %v1077
        %v1146 = vunpack.c.l.b16 %v1078
        %v1147 = vunpack.c.l.b16 %v1079
        %v1148 = vunpack.c.l.b16 %v1080
        %v1149 = vunpack.c.l.b16 %v1081
        %v1150 = vunpack.c.l.b16 %v1082
        %v1151 = vunpack.c.l.b16 %v1083
        %v1152 = vunpack.c.l.b16 %v1084
        %v1153 = vpack.c.b16 %v1122, %v1121
        %v1154 = vpack.c.b16 %v1124, %v1123
        %v1155 = vpack.c.b16 %v1126, %v1125
        %v1156 = vpack.c.b16 %v1128, %v1127
        %v1157 = vpack.c.b16 %v1130, %v1129
        %v1158 = vpack.c.b16 %v1132, %v1131
        %v1159 = vpack.c.b16 %v1134, %v1133
        %v1160 = vpack.c.b16 %v1136, %v1135
        %v1161 = vpack.c.b16 %v1138, %v1137
        %v1162 = vpack.c.b16 %v1140, %v1139
        %v1163 = vpack.c.b16 %v1142, %v1141
        %v1164 = vpack.c.b16 %v1144, %v1143
        %v1165 = vpack.c.b16 %v1146, %v1145
        %v1166 = vpack.c.b16 %v1148, %v1147
        %v1167 = vpack.c.b16 %v1150, %v1149
        %v1168 = vpack.c.b16 %v1152, %v1151
        %1185 = vmatpush.bf16.msra.mxu0 %v1160
        %1186 = vmatpush.bf16.msra.mxu0 %v1159
        %1187 = vmatpush.bf16.msra.mxu0 %v1158
        %1188 = vmatpush.bf16.msra.mxu0 %v1157
        %1189 = vmatpush.bf16.msra.mxu0 %v1156
        %1190 = vmatpush.bf16.msra.mxu0 %v1155
        %1191 = vmatpush.bf16.msra.mxu0 %v1154
        %1192 = vmatpush.bf16.msra.mxu0 %v1153
        %1193 = vmatmul.bf16.gmra.mxu0 %v1051
        %v1194 = vpop.f32.mrf.mxu0
        %v1195 = vadd.f32 %v1087, %v1194
        %v1196 = vpop.f32.mrf.mxu0
        %1197 = vdwg.mxu0
        %1198 = vmatpush.bf16.msra.mxu0 %v1168
        %1199 = vmatpush.bf16.msra.mxu0 %v1167
        %1200 = vmatpush.bf16.msra.mxu0 %v1166
        %1201 = vmatpush.bf16.msra.mxu0 %v1165
        %1202 = vmatpush.bf16.msra.mxu0 %v1164
        %1203 = vmatpush.bf16.msra.mxu0 %v1163
        %1204 = vmatpush.bf16.msra.mxu0 %v1162
        %1205 = vmatpush.bf16.msra.mxu0 %v1161
        %1206 = vmatmul.bf16.gmra.mxu0 %v1052
        %v1207 = vpop.f32.mrf.mxu0
        %v1208 = vadd.f32 %v1195, %v1207
        %v1209 = vpop.f32.mrf.mxu0
        %1210 = vdwg.mxu0
        %v1211 = vadd.f32 %v964, %v1208
        %v1212 = vsel %vm510, %v1211, 0.0
        %1213 = vadd.xlane.f32.xlu0 %v1212
        %v1214 = vpop.xlane.xlu0 %1213
        %v1215 = vmul.f32 %v1214, %v935
        %v1216 = vsub.f32 %v1211, %v1215
        %v1217 = vmul.f32 %v1216, %v1216
        %v1218 = vsel %vm510, %v1217, 0.0
        %1219 = vadd.xlane.f32.xlu0 %v1218
        %v1220 = vpop.xlane.xlu0 %1219
        %v1221 = vmul.f32 %v1220, %v935
        %v1222 = vadd.f32 %v1221, 1e-05
        %v1223 = vrsqrt.pop %v1222
        %v1224 = vmul.f32 %v1223, %v1222
        %v1225 = vmul.f32 %v1224, %v1223
        %v1226 = vmul.f32 0.5, %v1225
        %v1227 = vsub.f32 1.5, %v1226
        %v1228 = vmul.f32 %v1223, %v1227
        %vm1229 = vweird.f32 %v1222
        %vm1230 = vweird.f32 %v1223
        %vm1231 = vmor %vm1229, %vm1230
        %v1232 = vsel %vm1231, %v1223, %v1228
        %v1233 = vmul.f32 %v1216, %v1232
        %v1234 = vld [vmem:[%s11] sm:$0x1]
        %v1236 = vperm.slane %v1234, 0
        %v1238 = vmul.f32 %v1233, %v1236
        %v1239 = vld [vmem:[%s12] sm:$0x1]
        %v1241 = vperm.slane %v1239, 0
        %v1243 = vadd.f32 %v1238, %v1241
        %1244 = vst.msk [vmem:[%s452] sm:$0xff] %vm510, %v1243
        %p1245 = scmp.lt.s32.totalorder %s25, 1
        %s1246 = scalar_select %p1245, %s25, 1
        %s1247 = smul.addr %s1246, 8
        %s1248 = scalar_lea.vmem %s13, %s1247
        // Predicated region
        $region77: #{transformer_forward.7} parent=71 // pred_check
          %p1249 = pneg %p321
        $region78: #{transformer_forward.7} parent=71 // pred_check_branch
          %1251 = sbr.rel (%p1249) target = $region80
        $region79: #{transformer_forward.7} parent=71 // pred_region
          _
        $region80: #{transformer_forward.7} parent=71 // pred_fallthru
          _
      $region72: #{transformer_forward.7} parent=5 // pred_fallthru
        _
      %p1252 = scmp.le.s32.totalorder 2, %s20
      // Predicated region
      $region81: #{transformer_forward.7} parent=5 // pred_check
        %p1253 = pneg %p1252
      $region82: #{transformer_forward.7} parent=5 // pred_check_branch
        %1255 = sbr.rel (%p1253) target = $region84
      $region83: #{transformer_forward.7} parent=5 // pred_region
        %s1256 = ssub.s32 %s20, 2
        // Predicated region
        $region85: #{transformer_forward.7} parent=83 // pred_check
          %p1257 = pneg %p327
        $region86: #{transformer_forward.7} parent=83 // pred_check_branch
          %1259 = sbr.rel (%p1257) target = $region88
        $region87: #{transformer_forward.7} parent=83 // pred_region
          %p1260 = scmp.lt.s32.totalorder %s26, 1
          %s1261 = scalar_select %p1260, %s26, 1
          %s1262 = smul.addr %s1261, 8
          %s1263 = scalar_lea.vmem %s13, %s1262
        $region88: #{transformer_forward.7} parent=83 // pred_fallthru
          _
      $region84: #{transformer_forward.7} parent=5 // pred_fallthru
        _
    $region6: #{transformer_forward.7} parent=1 // loop_footer
      %s24 = sadd.s32 1, %s20
    $region7: #{transformer_forward.7} parent=1 // loop_footer_branch
      %19 = sbr.rel target = $region3
    $region8: #{transformer_forward.7} parent=1 // loop_exit
      _
    %1264 = vsyncpa [#allocation3], 1
    %s1265 = scalar_lea.sflag [#allocation3], 1
    %1266 = vsyncpa %s1265, 1

// kernel: transformer_forward.10
$region0: #{transformer_forward.10}
  #allocation0 [shape = 'u32[]', space=smem, size = 0x4, offset = 0x4, fixed_abs, tag = 'smem constant byte address 0x4 - core index']
  #allocation1 [shape = 'u32[72,128]{1,0:T(1,128)}', space=vmem, size = 0x9000, scoped, tag = 'internal scratch']
  %s0 = inlined_call_operand.vmem [shape: f32[2,8,64], index: 0, kind: input, shape index: {}]
  %s1 = inlined_call_operand.vmem [shape: f32[2,8,64], index: 1, kind: input, shape index: {}]
  %s2 = inlined_call_operand.vmem [shape: bf16[64,192], index: 2, kind: input, shape index: {}]
  %s3 = inlined_call_operand.vmem [shape: f32[1,192], index: 3, kind: input, shape index: {}]
  %s4 = inlined_call_operand.hbm [shape: bf16[64,64], index: 4, kind: input, shape index: {}]
  %s5 = inlined_call_operand.vmem [shape: f32[1,64], index: 5, kind: input, shape index: {}]
  %s6 = inlined_call_operand.vmem [shape: f32[1,64], index: 6, kind: input, shape index: {}]
  %s7 = inlined_call_operand.vmem [shape: f32[1,64], index: 7, kind: input, shape index: {}]
  %s8 = inlined_call_operand.hbm [shape: bf16[64,64], index: 8, kind: input, shape index: {}]
  %s9 = inlined_call_operand.vmem [shape: f32[1,64], index: 9, kind: input, shape index: {}]
  %s10 = inlined_call_operand.hbm [shape: bf16[64,128], index: 10, kind: input, shape index: {}]
  %s11 = inlined_call_operand.vmem [shape: f32[1,128], index: 11, kind: input, shape index: {}]
  %s12 = inlined_call_operand.hbm [shape: bf16[64,64], index: 12, kind: input, shape index: {}]
  %s13 = inlined_call_operand.vmem [shape: f32[1,64], index: 13, kind: input, shape index: {}]
  %s14 = inlined_call_operand.hbm [shape: f32[1,64], index: 14, kind: input, shape index: {}]
  %s15 = inlined_call_operand.hbm [shape: f32[1,64], index: 15, kind: input, shape index: {}]
  %s16 = inlined_call_operand.vmem [shape: bf16[64,256], index: 16, kind: input, shape index: {}]
  %s17 = inlined_call_operand.vmem [shape: f32[1,256], index: 17, kind: input, shape index: {}]
  %s18 = inlined_call_operand.vmem [shape: bf16[256,64], index: 18, kind: input, shape index: {}]
  %s19 = inlined_call_operand.hbm [shape: f32[1,64], index: 19, kind: input, shape index: {}]
  %s20 = inlined_call_operand.hbm [shape: f32[1,64], index: 20, kind: input, shape index: {}]
  %s21 = inlined_call_operand.hbm [shape: f32[1,64], index: 21, kind: input, shape index: {}]
  %s22 = inlined_call_operand.vmem [shape: f32[2,8,64], index: 22, kind: output, shape index: {}]
  %s23 = sld [smem:[#allocation0]]
  $region157: #{transformer_forward.10} parent=0
    _
  %s25 = ssub.s32 1, %s23
  %s26 = scalar_select 0, %s25, %s23
  $region1: #{transformer_forward.10} parent=0
    #allocation2 [shape = 'u8[16384]{0}', space=vmem, size = 0x4000, scoped, tag = 'input window, operand 4, single buffered']
    #allocation3 [shape = 's32[2]{0}', space=sflag, size = 0x8, scoped, tag = 'scoped memory for transformer_forward.10']
    #allocation4 [shape = 'u8[16384]{0}', space=vmem, size = 0x4000, scoped, tag = 'input window, operand 8, single buffered']
    #allocation5 [shape = 's32[1]{0}', space=sflag, size = 0x4, scoped, tag = 'scoped memory for transformer_forward.10']
    #allocation6 [shape = 'u8[16384]{0}', space=vmem, size = 0x4000, scoped, tag = 'input window, operand 10, single buffered']
    #allocation7 [shape = 'u8[16384]{0}', space=vmem, size = 0x4000, scoped, tag = 'input window, operand 12, single buffered']
    #allocation8 [shape = 's32[1]{0}', space=sflag, size = 0x4, scoped, tag = 'scoped memory for transformer_forward.10']
    #allocation9 [shape = 'u8[512]{0}', space=vmem, size = 0x400, scoped, tag = 'input window, operand 14, single buffered']
    #allocation10 [shape = 'u8[512]{0}', space=vmem, size = 0x400, scoped, tag = 'input window, operand 15, single buffered']
    #allocation11 [shape = 's32[1]{0}', space=sflag, size = 0x4, scoped, tag = 'scoped memory for transformer_forward.10']
    #allocation12 [shape = 'u8[512]{0}', space=vmem, size = 0x400, scoped, tag = 'input window, operand 19, single buffered']
    #allocation13 [shape = 'u8[512]{0}', space=vmem, size = 0x400, scoped, tag = 'input window, operand 20, single buffered']
    #allocation14 [shape = 's32[1]{0}', space=sflag, size = 0x4, scoped, tag = 'scoped memory for transformer_forward.10']
    #allocation15 [shape = 'u8[512]{0}', space=vmem, size = 0x400, scoped, tag = 'input window, operand 21, single buffered']
    %27 = vsyncpa [#allocation3], 0
    %28 = vsyncpa [#allocation5], 0
    %29 = vsyncpa [#allocation8], 0
    %30 = vsyncpa [#allocation11], 0
    %31 = vsyncpa [#allocation14], 0
    loop: start=0, step=1, limit=4
    $region2: #{transformer_forward.10} parent=1 // loop_pre_header
      _
    $region3: #{transformer_forward.10} parent=1 // loop_header
      %s33 = sphi 0, %s37
      %p34 = scmp.ge.s32.totalorder %s33, 4
      %s43 = sphi 0, %s45
      %s46 = sphi 0, %s43
      %s47 = sphi 0, %s46
      %s63 = sphi 0, %s47
      %s69 = sphi 0, %s71
      %s72 = sphi 0, %s69
      %s73 = sphi 0, %s72
      %s89 = sphi 0, %s73
      %s93 = sphi 0, %s93
      %s95 = sphi 0, %s93
      %s96 = sphi 0, %s95
      %s110 = sphi 0, %s96
      %s114 = sphi 0, %s114
      %s116 = sphi 0, %s114
      %s117 = sphi 0, %s116
      %s131 = sphi 0, %s117
      %s135 = sphi 0, %s135
      %s137 = sphi 0, %s135
      %s138 = sphi 0, %s137
      %s152 = sphi 0, %s138
      %s156 = sphi 0, %s156
      %s158 = sphi 0, %s156
      %s159 = sphi 0, %s158
      %s173 = sphi 0, %s159
      %s177 = sphi 0, %s177
      %s179 = sphi 0, %s177
      %s180 = sphi 0, %s179
      %s194 = sphi 0, %s180
      %s198 = sphi 0, %s198
      %s200 = sphi 0, %s198
      %s201 = sphi 0, %s200
      %s215 = sphi 0, %s201
      %s219 = sphi 0, %s219
      %s221 = sphi 0, %s219
      %s222 = sphi 0, %s221
      %s236 = sphi 0, %s222
      %s240 = sphi 0, %s240
      %s242 = sphi 0, %s240
      %s243 = sphi 0, %s242
      %s257 = sphi 0, %s243
      %s261 = sphi 0, %s261
      %s263 = sphi 0, %s261
      %s264 = sphi 0, %s263
      %s278 = sphi 0, %s264
      %s282 = sphi 0, %s282
      %s284 = sphi 0, %s282
      %s285 = sphi 0, %s284
      %s299 = sphi 0, %s285
      %s303 = sphi 0, %s303
      %s305 = sphi 0, %s303
      %s306 = sphi 0, %s305
      %s320 = sphi 0, %s306
      %s324 = sphi 0, %s324
      %s326 = sphi 0, %s324
      %s327 = sphi 0, %s326
      %s341 = sphi 0, %s327
      %s345 = sphi 0, %s345
      %s347 = sphi 0, %s345
      %s348 = sphi 0, %s347
      %s362 = sphi 0, %s348
      %s366 = sphi 0, %s366
      %s368 = sphi 0, %s366
      %s369 = sphi 0, %s368
      %s383 = sphi 0, %s369
      %s387 = sphi 0, %s387
      %s389 = sphi 0, %s387
      %s390 = sphi 0, %s389
      %s404 = sphi 0, %s390
      %s408 = sphi 0, %s408
      %s410 = sphi 0, %s408
      %s411 = sphi 0, %s410
      %s425 = sphi 0, %s411
      %s429 = sphi 0, %s429
      %s431 = sphi 0, %s429
      %s432 = sphi 0, %s431
      %s446 = sphi 0, %s432
      %s450 = sphi 0, %s450
      %s452 = sphi 0, %s450
      %s453 = sphi 0, %s452
      %s467 = sphi 0, %s453
      %s471 = sphi 0, %s471
      %s473 = sphi 0, %s471
      %s474 = sphi 0, %s473
      %s488 = sphi 0, %s474
      %s492 = sphi 0, %s492
      %s494 = sphi 0, %s492
      %s495 = sphi 0, %s494
      %s509 = sphi 0, %s495
      %s515 = sphi 0, %s517
      %s518 = sphi 0, %s515
      %s519 = sphi 0, %s518
      %s535 = sphi 0, %s519
    $region4: #{transformer_forward.10} parent=1 // loop_header_branch
      %36 = sbr.rel (%p34) target = $region8
    $region5: #{transformer_forward.10} parent=1 // loop_body
      %s38 = ssub.s32 %s33, 1
      %s39 = ssub.s32 %s33, 2
      %s40 = sadd.s32 %s33, 1
      %s41 = ssub.s32 %s33, %s40
      %p42 = scmp.eq.s32.totalorder %s41, 0
      %s44 = sadd.s32 %s43, 1
      %s45 = scalar_select %p42, %s43, %s44
      %p48 = pneg %p42
      %p49 = scmp.eq.s32.totalorder %s33, 1
      %p50 = por %p48, %p49
      %p51 = scmp.ne.s32.totalorder %s43, %s46
      %p52 = scmp.eq.s32.totalorder %s33, 0
      %p53 = por %p51, %p52
      %p54 = scmp.ne.s32.totalorder %s43, %s46
      %p55 = scmp.eq.s32.totalorder %s38, 1
      %p56 = por %p54, %p55
      %p57 = scmp.ne.s32.totalorder %s46, %s47
      %p58 = scmp.eq.s32.totalorder %s38, 0
      %p59 = por %p57, %p58
      %p60 = scmp.ne.s32.totalorder %s46, %s47
      %p61 = scmp.eq.s32.totalorder %s39, 1
      %p62 = por %p60, %p61
      %p64 = scmp.ne.s32.totalorder %s47, %s63
      %p65 = scmp.eq.s32.totalorder %s39, 0
      %p66 = por %p64, %p65
      %s67 = ssub.s32 %s33, %s40
      %p68 = scmp.eq.s32.totalorder %s67, 0
      %s70 = sadd.s32 %s69, 1
      %s71 = scalar_select %p68, %s69, %s70
      %p74 = pneg %p68
      %p75 = scmp.eq.s32.totalorder %s33, 1
      %p76 = por %p74, %p75
      %p77 = scmp.ne.s32.totalorder %s69, %s72
      %p78 = scmp.eq.s32.totalorder %s33, 0
      %p79 = por %p77, %p78
      %p80 = scmp.ne.s32.totalorder %s69, %s72
      %p81 = scmp.eq.s32.totalorder %s38, 1
      %p82 = por %p80, %p81
      %p83 = scmp.ne.s32.totalorder %s72, %s73
      %p84 = scmp.eq.s32.totalorder %s38, 0
      %p85 = por %p83, %p84
      %p86 = scmp.ne.s32.totalorder %s72, %s73
      %p87 = scmp.eq.s32.totalorder %s39, 1
      %p88 = por %p86, %p87
      %p90 = scmp.ne.s32.totalorder %s73, %s89
      %p91 = scmp.eq.s32.totalorder %s39, 0
      %p92 = por %p90, %p91
      %s94 = sadd.s32 %s93, 1
      %p97 = scmp.eq.s32.totalorder %s33, 1
      %p98 = scmp.ne.s32.totalorder %s93, %s95
      %p99 = scmp.eq.s32.totalorder %s33, 0
      %p100 = por %p98, %p99
      %p101 = scmp.ne.s32.totalorder %s93, %s95
      %p102 = scmp.eq.s32.totalorder %s38, 1
      %p103 = por %p101, %p102
      %p104 = scmp.ne.s32.totalorder %s95, %s96
      %p105 = scmp.eq.s32.totalorder %s38, 0
      %p106 = por %p104, %p105
      %p107 = scmp.ne.s32.totalorder %s95, %s96
      %p108 = scmp.eq.s32.totalorder %s39, 1
      %p109 = por %p107, %p108
      %p111 = scmp.ne.s32.totalorder %s96, %s110
      %p112 = scmp.eq.s32.totalorder %s39, 0
      %p113 = por %p111, %p112
      %s115 = sadd.s32 %s114, 1
      %p118 = scmp.eq.s32.totalorder %s33, 1
      %p119 = scmp.ne.s32.totalorder %s114, %s116
      %p120 = scmp.eq.s32.totalorder %s33, 0
      %p121 = por %p119, %p120
      %p122 = scmp.ne.s32.totalorder %s114, %s116
      %p123 = scmp.eq.s32.totalorder %s38, 1
      %p124 = por %p122, %p123
      %p125 = scmp.ne.s32.totalorder %s116, %s117
      %p126 = scmp.eq.s32.totalorder %s38, 0
      %p127 = por %p125, %p126
      %p128 = scmp.ne.s32.totalorder %s116, %s117
      %p129 = scmp.eq.s32.totalorder %s39, 1
      %p130 = por %p128, %p129
      %p132 = scmp.ne.s32.totalorder %s117, %s131
      %p133 = scmp.eq.s32.totalorder %s39, 0
      %p134 = por %p132, %p133
      %s136 = sadd.s32 %s135, 1
      %p139 = scmp.eq.s32.totalorder %s33, 1
      %p140 = scmp.ne.s32.totalorder %s135, %s137
      %p141 = scmp.eq.s32.totalorder %s33, 0
      %p142 = por %p140, %p141
      %p143 = scmp.ne.s32.totalorder %s135, %s137
      %p144 = scmp.eq.s32.totalorder %s38, 1
      %p145 = por %p143, %p144
      %p146 = scmp.ne.s32.totalorder %s137, %s138
      %p147 = scmp.eq.s32.totalorder %s38, 0
      %p148 = por %p146, %p147
      %p149 = scmp.ne.s32.totalorder %s137, %s138
      %p150 = scmp.eq.s32.totalorder %s39, 1
      %p151 = por %p149, %p150
      %p153 = scmp.ne.s32.totalorder %s138, %s152
      %p154 = scmp.eq.s32.totalorder %s39, 0
      %p155 = por %p153, %p154
      %s157 = sadd.s32 %s156, 1
      %p160 = scmp.eq.s32.totalorder %s33, 1
      %p161 = scmp.ne.s32.totalorder %s156, %s158
      %p162 = scmp.eq.s32.totalorder %s33, 0
      %p163 = por %p161, %p162
      %p164 = scmp.ne.s32.totalorder %s156, %s158
      %p165 = scmp.eq.s32.totalorder %s38, 1
      %p166 = por %p164, %p165
      %p167 = scmp.ne.s32.totalorder %s158, %s159
      %p168 = scmp.eq.s32.totalorder %s38, 0
      %p169 = por %p167, %p168
      %p170 = scmp.ne.s32.totalorder %s158, %s159
      %p171 = scmp.eq.s32.totalorder %s39, 1
      %p172 = por %p170, %p171
      %p174 = scmp.ne.s32.totalorder %s159, %s173
      %p175 = scmp.eq.s32.totalorder %s39, 0
      %p176 = por %p174, %p175
      %s178 = sadd.s32 %s177, 1
      %p181 = scmp.eq.s32.totalorder %s33, 1
      %p182 = scmp.ne.s32.totalorder %s177, %s179
      %p183 = scmp.eq.s32.totalorder %s33, 0
      %p184 = por %p182, %p183
      %p185 = scmp.ne.s32.totalorder %s177, %s179
      %p186 = scmp.eq.s32.totalorder %s38, 1
      %p187 = por %p185, %p186
      %p188 = scmp.ne.s32.totalorder %s179, %s180
      %p189 = scmp.eq.s32.totalorder %s38, 0
      %p190 = por %p188, %p189
      %p191 = scmp.ne.s32.totalorder %s179, %s180
      %p192 = scmp.eq.s32.totalorder %s39, 1
      %p193 = por %p191, %p192
      %p195 = scmp.ne.s32.totalorder %s180, %s194
      %p196 = scmp.eq.s32.totalorder %s39, 0
      %p197 = por %p195, %p196
      %s199 = sadd.s32 %s198, 1
      %p202 = scmp.eq.s32.totalorder %s33, 1
      %p203 = scmp.ne.s32.totalorder %s198, %s200
      %p204 = scmp.eq.s32.totalorder %s33, 0
      %p205 = por %p203, %p204
      %p206 = scmp.ne.s32.totalorder %s198, %s200
      %p207 = scmp.eq.s32.totalorder %s38, 1
      %p208 = por %p206, %p207
      %p209 = scmp.ne.s32.totalorder %s200, %s201
      %p210 = scmp.eq.s32.totalorder %s38, 0
      %p211 = por %p209, %p210
      %p212 = scmp.ne.s32.totalorder %s200, %s201
      %p213 = scmp.eq.s32.totalorder %s39, 1
      %p214 = por %p212, %p213
      %p216 = scmp.ne.s32.totalorder %s201, %s215
      %p217 = scmp.eq.s32.totalorder %s39, 0
      %p218 = por %p216, %p217
      %s220 = sadd.s32 %s219, 1
      %p223 = scmp.eq.s32.totalorder %s33, 1
      %p224 = scmp.ne.s32.totalorder %s219, %s221
      %p225 = scmp.eq.s32.totalorder %s33, 0
      %p226 = por %p224, %p225
      %p227 = scmp.ne.s32.totalorder %s219, %s221
      %p228 = scmp.eq.s32.totalorder %s38, 1
      %p229 = por %p227, %p228
      %p230 = scmp.ne.s32.totalorder %s221, %s222
      %p231 = scmp.eq.s32.totalorder %s38, 0
      %p232 = por %p230, %p231
      %p233 = scmp.ne.s32.totalorder %s221, %s222
      %p234 = scmp.eq.s32.totalorder %s39, 1
      %p235 = por %p233, %p234
      %p237 = scmp.ne.s32.totalorder %s222, %s236
      %p238 = scmp.eq.s32.totalorder %s39, 0
      %p239 = por %p237, %p238
      %s241 = sadd.s32 %s240, 1
      %p244 = scmp.eq.s32.totalorder %s33, 1
      %p245 = scmp.ne.s32.totalorder %s240, %s242
      %p246 = scmp.eq.s32.totalorder %s33, 0
      %p247 = por %p245, %p246
      %p248 = scmp.ne.s32.totalorder %s240, %s242
      %p249 = scmp.eq.s32.totalorder %s38, 1
      %p250 = por %p248, %p249
      %p251 = scmp.ne.s32.totalorder %s242, %s243
      %p252 = scmp.eq.s32.totalorder %s38, 0
      %p253 = por %p251, %p252
      %p254 = scmp.ne.s32.totalorder %s242, %s243
      %p255 = scmp.eq.s32.totalorder %s39, 1
      %p256 = por %p254, %p255
      %p258 = scmp.ne.s32.totalorder %s243, %s257
      %p259 = scmp.eq.s32.totalorder %s39, 0
      %p260 = por %p258, %p259
      %s262 = sadd.s32 %s261, 1
      %p265 = scmp.eq.s32.totalorder %s33, 1
      %p266 = scmp.ne.s32.totalorder %s261, %s263
      %p267 = scmp.eq.s32.totalorder %s33, 0
      %p268 = por %p266, %p267
      %p269 = scmp.ne.s32.totalorder %s261, %s263
      %p270 = scmp.eq.s32.totalorder %s38, 1
      %p271 = por %p269, %p270
      %p272 = scmp.ne.s32.totalorder %s263, %s264
      %p273 = scmp.eq.s32.totalorder %s38, 0
      %p274 = por %p272, %p273
      %p275 = scmp.ne.s32.totalorder %s263, %s264
      %p276 = scmp.eq.s32.totalorder %s39, 1
      %p277 = por %p275, %p276
      %p279 = scmp.ne.s32.totalorder %s264, %s278
      %p280 = scmp.eq.s32.totalorder %s39, 0
      %p281 = por %p279, %p280
      %s283 = sadd.s32 %s282, 1
      %p286 = scmp.eq.s32.totalorder %s33, 1
      %p287 = scmp.ne.s32.totalorder %s282, %s284
      %p288 = scmp.eq.s32.totalorder %s33, 0
      %p289 = por %p287, %p288
      %p290 = scmp.ne.s32.totalorder %s282, %s284
      %p291 = scmp.eq.s32.totalorder %s38, 1
      %p292 = por %p290, %p291
      %p293 = scmp.ne.s32.totalorder %s284, %s285
      %p294 = scmp.eq.s32.totalorder %s38, 0
      %p295 = por %p293, %p294
      %p296 = scmp.ne.s32.totalorder %s284, %s285
      %p297 = scmp.eq.s32.totalorder %s39, 1
      %p298 = por %p296, %p297
      %p300 = scmp.ne.s32.totalorder %s285, %s299
      %p301 = scmp.eq.s32.totalorder %s39, 0
      %p302 = por %p300, %p301
      %s304 = sadd.s32 %s303, 1
      %p307 = scmp.eq.s32.totalorder %s33, 1
      %p308 = scmp.ne.s32.totalorder %s303, %s305
      %p309 = scmp.eq.s32.totalorder %s33, 0
      %p310 = por %p308, %p309
      %p311 = scmp.ne.s32.totalorder %s303, %s305
      %p312 = scmp.eq.s32.totalorder %s38, 1
      %p313 = por %p311, %p312
      %p314 = scmp.ne.s32.totalorder %s305, %s306
      %p315 = scmp.eq.s32.totalorder %s38, 0
      %p316 = por %p314, %p315
      %p317 = scmp.ne.s32.totalorder %s305, %s306
      %p318 = scmp.eq.s32.totalorder %s39, 1
      %p319 = por %p317, %p318
      %p321 = scmp.ne.s32.totalorder %s306, %s320
      %p322 = scmp.eq.s32.totalorder %s39, 0
      %p323 = por %p321, %p322
      %s325 = sadd.s32 %s324, 1
      %p328 = scmp.eq.s32.totalorder %s33, 1
      %p329 = scmp.ne.s32.totalorder %s324, %s326
      %p330 = scmp.eq.s32.totalorder %s33, 0
      %p331 = por %p329, %p330
      %p332 = scmp.ne.s32.totalorder %s324, %s326
      %p333 = scmp.eq.s32.totalorder %s38, 1
      %p334 = por %p332, %p333
      %p335 = scmp.ne.s32.totalorder %s326, %s327
      %p336 = scmp.eq.s32.totalorder %s38, 0
      %p337 = por %p335, %p336
      %p338 = scmp.ne.s32.totalorder %s326, %s327
      %p339 = scmp.eq.s32.totalorder %s39, 1
      %p340 = por %p338, %p339
      %p342 = scmp.ne.s32.totalorder %s327, %s341
      %p343 = scmp.eq.s32.totalorder %s39, 0
      %p344 = por %p342, %p343
      %s346 = sadd.s32 %s345, 1
      %p349 = scmp.eq.s32.totalorder %s33, 1
      %p350 = scmp.ne.s32.totalorder %s345, %s347
      %p351 = scmp.eq.s32.totalorder %s33, 0
      %p352 = por %p350, %p351
      %p353 = scmp.ne.s32.totalorder %s345, %s347
      %p354 = scmp.eq.s32.totalorder %s38, 1
      %p355 = por %p353, %p354
      %p356 = scmp.ne.s32.totalorder %s347, %s348
      %p357 = scmp.eq.s32.totalorder %s38, 0
      %p358 = por %p356, %p357
      %p359 = scmp.ne.s32.totalorder %s347, %s348
      %p360 = scmp.eq.s32.totalorder %s39, 1
      %p361 = por %p359, %p360
      %p363 = scmp.ne.s32.totalorder %s348, %s362
      %p364 = scmp.eq.s32.totalorder %s39, 0
      %p365 = por %p363, %p364
      %s367 = sadd.s32 %s366, 1
      %p370 = scmp.eq.s32.totalorder %s33, 1
      %p371 = scmp.ne.s32.totalorder %s366, %s368
      %p372 = scmp.eq.s32.totalorder %s33, 0
      %p373 = por %p371, %p372
      %p374 = scmp.ne.s32.totalorder %s366, %s368
      %p375 = scmp.eq.s32.totalorder %s38, 1
      %p376 = por %p374, %p375
      %p377 = scmp.ne.s32.totalorder %s368, %s369
      %p378 = scmp.eq.s32.totalorder %s38, 0
      %p379 = por %p377, %p378
      %p380 = scmp.ne.s32.totalorder %s368, %s369
      %p381 = scmp.eq.s32.totalorder %s39, 1
      %p382 = por %p380, %p381
      %p384 = scmp.ne.s32.totalorder %s369, %s383
      %p385 = scmp.eq.s32.totalorder %s39, 0
      %p386 = por %p384, %p385
      %s388 = sadd.s32 %s387, 1
      %p391 = scmp.eq.s32.totalorder %s33, 1
      %p392 = scmp.ne.s32.totalorder %s387, %s389
      %p393 = scmp.eq.s32.totalorder %s33, 0
      %p394 = por %p392, %p393
      %p395 = scmp.ne.s32.totalorder %s387, %s389
      %p396 = scmp.eq.s32.totalorder %s38, 1
      %p397 = por %p395, %p396
      %p398 = scmp.ne.s32.totalorder %s389, %s390
      %p399 = scmp.eq.s32.totalorder %s38, 0
      %p400 = por %p398, %p399
      %p401 = scmp.ne.s32.totalorder %s389, %s390
      %p402 = scmp.eq.s32.totalorder %s39, 1
      %p403 = por %p401, %p402
      %p405 = scmp.ne.s32.totalorder %s390, %s404
      %p406 = scmp.eq.s32.totalorder %s39, 0
      %p407 = por %p405, %p406
      %s409 = sadd.s32 %s408, 1
      %p412 = scmp.eq.s32.totalorder %s33, 1
      %p413 = scmp.ne.s32.totalorder %s408, %s410
      %p414 = scmp.eq.s32.totalorder %s33, 0
      %p415 = por %p413, %p414
      %p416 = scmp.ne.s32.totalorder %s408, %s410
      %p417 = scmp.eq.s32.totalorder %s38, 1
      %p418 = por %p416, %p417
      %p419 = scmp.ne.s32.totalorder %s410, %s411
      %p420 = scmp.eq.s32.totalorder %s38, 0
      %p421 = por %p419, %p420
      %p422 = scmp.ne.s32.totalorder %s410, %s411
      %p423 = scmp.eq.s32.totalorder %s39, 1
      %p424 = por %p422, %p423
      %p426 = scmp.ne.s32.totalorder %s411, %s425
      %p427 = scmp.eq.s32.totalorder %s39, 0
      %p428 = por %p426, %p427
      %s430 = sadd.s32 %s429, 1
      %p433 = scmp.eq.s32.totalorder %s33, 1
      %p434 = scmp.ne.s32.totalorder %s429, %s431
      %p435 = scmp.eq.s32.totalorder %s33, 0
      %p436 = por %p434, %p435
      %p437 = scmp.ne.s32.totalorder %s429, %s431
      %p438 = scmp.eq.s32.totalorder %s38, 1
      %p439 = por %p437, %p438
      %p440 = scmp.ne.s32.totalorder %s431, %s432
      %p441 = scmp.eq.s32.totalorder %s38, 0
      %p442 = por %p440, %p441
      %p443 = scmp.ne.s32.totalorder %s431, %s432
      %p444 = scmp.eq.s32.totalorder %s39, 1
      %p445 = por %p443, %p444
      %p447 = scmp.ne.s32.totalorder %s432, %s446
      %p448 = scmp.eq.s32.totalorder %s39, 0
      %p449 = por %p447, %p448
      %s451 = sadd.s32 %s450, 1
      %p454 = scmp.eq.s32.totalorder %s33, 1
      %p455 = scmp.ne.s32.totalorder %s450, %s452
      %p456 = scmp.eq.s32.totalorder %s33, 0
      %p457 = por %p455, %p456
      %p458 = scmp.ne.s32.totalorder %s450, %s452
      %p459 = scmp.eq.s32.totalorder %s38, 1
      %p460 = por %p458, %p459
      %p461 = scmp.ne.s32.totalorder %s452, %s453
      %p462 = scmp.eq.s32.totalorder %s38, 0
      %p463 = por %p461, %p462
      %p464 = scmp.ne.s32.totalorder %s452, %s453
      %p465 = scmp.eq.s32.totalorder %s39, 1
      %p466 = por %p464, %p465
      %p468 = scmp.ne.s32.totalorder %s453, %s467
      %p469 = scmp.eq.s32.totalorder %s39, 0
      %p470 = por %p468, %p469
      %s472 = sadd.s32 %s471, 1
      %p475 = scmp.eq.s32.totalorder %s33, 1
      %p476 = scmp.ne.s32.totalorder %s471, %s473
      %p477 = scmp.eq.s32.totalorder %s33, 0
      %p478 = por %p476, %p477
      %p479 = scmp.ne.s32.totalorder %s471, %s473
      %p480 = scmp.eq.s32.totalorder %s38, 1
      %p481 = por %p479, %p480
      %p482 = scmp.ne.s32.totalorder %s473, %s474
      %p483 = scmp.eq.s32.totalorder %s38, 0
      %p484 = por %p482, %p483
      %p485 = scmp.ne.s32.totalorder %s473, %s474
      %p486 = scmp.eq.s32.totalorder %s39, 1
      %p487 = por %p485, %p486
      %p489 = scmp.ne.s32.totalorder %s474, %s488
      %p490 = scmp.eq.s32.totalorder %s39, 0
      %p491 = por %p489, %p490
      %s493 = sadd.s32 %s492, 1
      %p496 = scmp.eq.s32.totalorder %s33, 1
      %p497 = scmp.ne.s32.totalorder %s492, %s494
      %p498 = scmp.eq.s32.totalorder %s33, 0
      %p499 = por %p497, %p498
      %p500 = scmp.ne.s32.totalorder %s492, %s494
      %p501 = scmp.eq.s32.totalorder %s38, 1
      %p502 = por %p500, %p501
      %p503 = scmp.ne.s32.totalorder %s494, %s495
      %p504 = scmp.eq.s32.totalorder %s38, 0
      %p505 = por %p503, %p504
      %p506 = scmp.ne.s32.totalorder %s494, %s495
      %p507 = scmp.eq.s32.totalorder %s39, 1
      %p508 = por %p506, %p507
      %p510 = scmp.ne.s32.totalorder %s495, %s509
      %p511 = scmp.eq.s32.totalorder %s39, 0
      %p512 = por %p510, %p511
      %s513 = ssub.s32 %s33, %s40
      %p514 = scmp.eq.s32.totalorder %s513, 0
      %s516 = sadd.s32 %s515, 1
      %s517 = scalar_select %p514, %s515, %s516
      %p520 = pneg %p514
      %p521 = scmp.eq.s32.totalorder %s33, 1
      %p522 = por %p520, %p521
      %p523 = scmp.ne.s32.totalorder %s515, %s518
      %p524 = scmp.eq.s32.totalorder %s33, 0
      %p525 = por %p523, %p524
      %p526 = scmp.ne.s32.totalorder %s515, %s518
      %p527 = scmp.eq.s32.totalorder %s38, 1
      %p528 = por %p526, %p527
      %p529 = scmp.ne.s32.totalorder %s518, %s519
      %p530 = scmp.eq.s32.totalorder %s38, 0
      %p531 = por %p529, %p530
      %p532 = scmp.ne.s32.totalorder %s518, %s519
      %p533 = scmp.eq.s32.totalorder %s39, 1
      %p534 = por %p532, %p533
      %p536 = scmp.ne.s32.totalorder %s519, %s535
      %p537 = scmp.eq.s32.totalorder %s39, 0
      %p538 = por %p536, %p537
      %p539 = scmp.le.s32.totalorder 1, %s33
      %p540 = scmp.lt.s32.totalorder %s33, 3
      %p541 = pnand %p539, %p540
      %p542 = pneg %p541
      // Predicated region
      $region9: #{transformer_forward.10} parent=5 // pred_check
        _
      $region10: #{transformer_forward.10} parent=5 // pred_check_branch
        %544 = sbr.rel (%p541) target = $region12
      $region11: #{transformer_forward.10} parent=5 // pred_region
        %s545 = ssub.s32 %s33, 1
        // Predicated region
        $region13: #{transformer_forward.10} parent=11 // pred_check
          %p546 = pneg %p106
        $region14: #{transformer_forward.10} parent=11 // pred_check_branch
          %548 = sbr.rel (%p546) target = $region16
        $region15: #{transformer_forward.10} parent=11 // pred_region
          _
        $region16: #{transformer_forward.10} parent=11 // pred_fallthru
          _
        // Predicated region
        $region17: #{transformer_forward.10} parent=11 // pred_check
          %p549 = pneg %p127
        $region18: #{transformer_forward.10} parent=11 // pred_check_branch
          %551 = sbr.rel (%p549) target = $region20
        $region19: #{transformer_forward.10} parent=11 // pred_region
          _
        $region20: #{transformer_forward.10} parent=11 // pred_fallthru
          _
        // Predicated region
        $region21: #{transformer_forward.10} parent=11 // pred_check
          %p552 = pneg %p148
        $region22: #{transformer_forward.10} parent=11 // pred_check_branch
          %554 = sbr.rel (%p552) target = $region24
        $region23: #{transformer_forward.10} parent=11 // pred_region
          %556 = vsyncadd [#allocation3], 0
          %s557 = sshll.u32 %s4, 4
          %s558 = int_to_ptr.hbm [resolvable:$true] %s557
          %s559 = sshll.u32 [#allocation2], 4
          %s560 = int_to_ptr.vmem [resolvable:$true] %s559
          %565 = dma.hbm_to_vmem [thread:$0]  %s558, 512, %s560, [#allocation3], 64, 64, 4
        $region24: #{transformer_forward.10} parent=11 // pred_fallthru
          _
        // Predicated region
        $region25: #{transformer_forward.10} parent=11 // pred_check
          %p566 = pneg %p169
        $region26: #{transformer_forward.10} parent=11 // pred_check_branch
          %568 = sbr.rel (%p566) target = $region28
        $region27: #{transformer_forward.10} parent=11 // pred_region
          _
        $region28: #{transformer_forward.10} parent=11 // pred_fallthru
          _
        // Predicated region
        $region29: #{transformer_forward.10} parent=11 // pred_check
          %p569 = pneg %p190
        $region30: #{transformer_forward.10} parent=11 // pred_check_branch
          %571 = sbr.rel (%p569) target = $region32
        $region31: #{transformer_forward.10} parent=11 // pred_region
          _
        $region32: #{transformer_forward.10} parent=11 // pred_fallthru
          _
        // Predicated region
        $region33: #{transformer_forward.10} parent=11 // pred_check
          %p572 = pneg %p211
        $region34: #{transformer_forward.10} parent=11 // pred_check_branch
          %574 = sbr.rel (%p572) target = $region36
        $region35: #{transformer_forward.10} parent=11 // pred_region
          _
        $region36: #{transformer_forward.10} parent=11 // pred_fallthru
          _
        // Predicated region
        $region37: #{transformer_forward.10} parent=11 // pred_check
          %p575 = pneg %p232
        $region38: #{transformer_forward.10} parent=11 // pred_check_branch
          %577 = sbr.rel (%p575) target = $region40
        $region39: #{transformer_forward.10} parent=11 // pred_region
          %579 = vsyncadd [#allocation5], 0
          %s580 = sshll.u32 %s8, 4
          %s581 = int_to_ptr.hbm [resolvable:$true] %s580
          %s582 = sshll.u32 [#allocation4], 4
          %s583 = int_to_ptr.vmem [resolvable:$true] %s582
          %588 = dma.hbm_to_vmem [thread:$0]  %s581, 512, %s583, [#allocation5], 64, 64, 4
        $region40: #{transformer_forward.10} parent=11 // pred_fallthru
          _
        // Predicated region
        $region41: #{transformer_forward.10} parent=11 // pred_check
          %p589 = pneg %p253
        $region42: #{transformer_forward.10} parent=11 // pred_check_branch
          %591 = sbr.rel (%p589) target = $region44
        $region43: #{transformer_forward.10} parent=11 // pred_region
          _
        $region44: #{transformer_forward.10} parent=11 // pred_fallthru
          _
        // Predicated region
        $region45: #{transformer_forward.10} parent=11 // pred_check
          %p592 = pneg %p274
        $region46: #{transformer_forward.10} parent=11 // pred_check_branch
          %594 = sbr.rel (%p592) target = $region48
        $region47: #{transformer_forward.10} parent=11 // pred_region
          %596 = vsyncadd [#allocation5], 0
          %s597 = sshll.u32 %s10, 4
          %s598 = int_to_ptr.hbm [resolvable:$true] %s597
          %s599 = sshll.u32 [#allocation6], 4
          %s600 = int_to_ptr.vmem [resolvable:$true] %s599
          %605 = dma.hbm_to_vmem [thread:$0]  %s598, 512, %s600, [#allocation5], 64, 64, 4
        $region48: #{transformer_forward.10} parent=11 // pred_fallthru
          _
        // Predicated region
        $region49: #{transformer_forward.10} parent=11 // pred_check
          %p606 = pneg %p295
        $region50: #{transformer_forward.10} parent=11 // pred_check_branch
          %608 = sbr.rel (%p606) target = $region52
        $region51: #{transformer_forward.10} parent=11 // pred_region
          _
        $region52: #{transformer_forward.10} parent=11 // pred_fallthru
          _
        // Predicated region
        $region53: #{transformer_forward.10} parent=11 // pred_check
          %p609 = pneg %p316
        $region54: #{transformer_forward.10} parent=11 // pred_check_branch
          %611 = sbr.rel (%p609) target = $region56
        $region55: #{transformer_forward.10} parent=11 // pred_region
          %613 = vsyncadd [#allocation8], 0
          %s614 = sshll.u32 %s12, 4
          %s615 = int_to_ptr.hbm [resolvable:$true] %s614
          %s616 = sshll.u32 [#allocation7], 4
          %s617 = int_to_ptr.vmem [resolvable:$true] %s616
          %622 = dma.hbm_to_vmem [thread:$0]  %s615, 512, %s617, [#allocation8], 64, 64, 4
        $region56: #{transformer_forward.10} parent=11 // pred_fallthru
          _
        // Predicated region
        $region57: #{transformer_forward.10} parent=11 // pred_check
          %p623 = pneg %p337
        $region58: #{transformer_forward.10} parent=11 // pred_check_branch
          %625 = sbr.rel (%p623) target = $region60
        $region59: #{transformer_forward.10} parent=11 // pred_region
          _
        $region60: #{transformer_forward.10} parent=11 // pred_fallthru
          _
        // Predicated region
        $region61: #{transformer_forward.10} parent=11 // pred_check
          %p626 = pneg %p358
        $region62: #{transformer_forward.10} parent=11 // pred_check_branch
          %628 = sbr.rel (%p626) target = $region64
        $region63: #{transformer_forward.10} parent=11 // pred_region
          %630 = vsyncadd [#allocation8], 0
          %s632 = sshll.u32 %s14, 4
          %s633 = int_to_ptr.hbm [resolvable:$true] %s632
          %s634 = sshll.u32 [#allocation9], 4
          %s635 = int_to_ptr.vmem [resolvable:$true] %s634
          %637 = dma.hbm_to_vmem [thread:$0]  %s633, 16, %s635, [#allocation8]
        $region64: #{transformer_forward.10} parent=11 // pred_fallthru
          _
        // Predicated region
        $region65: #{transformer_forward.10} parent=11 // pred_check
          %p638 = pneg %p379
        $region66: #{transformer_forward.10} parent=11 // pred_check_branch
          %640 = sbr.rel (%p638) target = $region68
        $region67: #{transformer_forward.10} parent=11 // pred_region
          %642 = vsyncadd [#allocation11], 0
          %s644 = sshll.u32 %s15, 4
          %s645 = int_to_ptr.hbm [resolvable:$true] %s644
          %s646 = sshll.u32 [#allocation10], 4
          %s647 = int_to_ptr.vmem [resolvable:$true] %s646
          %649 = dma.hbm_to_vmem [thread:$0]  %s645, 16, %s647, [#allocation11]
        $region68: #{transformer_forward.10} parent=11 // pred_fallthru
          _
        // Predicated region
        $region69: #{transformer_forward.10} parent=11 // pred_check
          %p650 = pneg %p400
        $region70: #{transformer_forward.10} parent=11 // pred_check_branch
          %652 = sbr.rel (%p650) target = $region72
        $region71: #{transformer_forward.10} parent=11 // pred_region
          _
        $region72: #{transformer_forward.10} parent=11 // pred_fallthru
          _
        // Predicated region
        $region73: #{transformer_forward.10} parent=11 // pred_check
          %p653 = pneg %p421
        $region74: #{transformer_forward.10} parent=11 // pred_check_branch
          %655 = sbr.rel (%p653) target = $region76
        $region75: #{transformer_forward.10} parent=11 // pred_region
          _
        $region76: #{transformer_forward.10} parent=11 // pred_fallthru
          _
        // Predicated region
        $region77: #{transformer_forward.10} parent=11 // pred_check
          %p656 = pneg %p442
        $region78: #{transformer_forward.10} parent=11 // pred_check_branch
          %658 = sbr.rel (%p656) target = $region80
        $region79: #{transformer_forward.10} parent=11 // pred_region
          _
        $region80: #{transformer_forward.10} parent=11 // pred_fallthru
          _
        // Predicated region
        $region81: #{transformer_forward.10} parent=11 // pred_check
          %p659 = pneg %p463
        $region82: #{transformer_forward.10} parent=11 // pred_check_branch
          %661 = sbr.rel (%p659) target = $region84
        $region83: #{transformer_forward.10} parent=11 // pred_region
          %663 = vsyncadd [#allocation11], 0
          %s665 = sshll.u32 %s19, 4
          %s666 = int_to_ptr.hbm [resolvable:$true] %s665
          %s667 = sshll.u32 [#allocation12], 4
          %s668 = int_to_ptr.vmem [resolvable:$true] %s667
          %670 = dma.hbm_to_vmem [thread:$0]  %s666, 16, %s668, [#allocation11]
        $region84: #{transformer_forward.10} parent=11 // pred_fallthru
          _
        // Predicated region
        $region85: #{transformer_forward.10} parent=11 // pred_check
          %p671 = pneg %p484
        $region86: #{transformer_forward.10} parent=11 // pred_check_branch
          %673 = sbr.rel (%p671) target = $region88
        $region87: #{transformer_forward.10} parent=11 // pred_region
          %675 = vsyncadd [#allocation14], 0
          %s677 = sshll.u32 %s20, 4
          %s678 = int_to_ptr.hbm [resolvable:$true] %s677
          %s679 = sshll.u32 [#allocation13], 4
          %s680 = int_to_ptr.vmem [resolvable:$true] %s679
          %682 = dma.hbm_to_vmem [thread:$0]  %s678, 16, %s680, [#allocation14]
        $region88: #{transformer_forward.10} parent=11 // pred_fallthru
          _
        // Predicated region
        $region89: #{transformer_forward.10} parent=11 // pred_check
          %p683 = pneg %p505
        $region90: #{transformer_forward.10} parent=11 // pred_check_branch
          %685 = sbr.rel (%p683) target = $region92
        $region91: #{transformer_forward.10} parent=11 // pred_region
          %687 = vsyncadd [#allocation14], 0
          %s689 = sshll.u32 %s21, 4
          %s690 = int_to_ptr.hbm [resolvable:$true] %s689
          %s691 = sshll.u32 [#allocation15], 4
          %s692 = int_to_ptr.vmem [resolvable:$true] %s691
          %694 = dma.hbm_to_vmem [thread:$0]  %s690, 16, %s692, [#allocation14]
        $region92: #{transformer_forward.10} parent=11 // pred_fallthru
          _
      $region12: #{transformer_forward.10} parent=5 // pred_fallthru
        _
      %p695 = scmp.lt.s32.totalorder %s33, 2
      // Predicated region
      $region93: #{transformer_forward.10} parent=5 // pred_check
        %p696 = pneg %p695
      $region94: #{transformer_forward.10} parent=5 // pred_check_branch
        %698 = sbr.rel (%p696) target = $region96
      $region95: #{transformer_forward.10} parent=5 // pred_region
        // Predicated region
        $region97: #{transformer_forward.10} parent=95 // pred_check
          %p699 = pneg %p53
        $region98: #{transformer_forward.10} parent=95 // pred_check_branch
          %701 = sbr.rel (%p699) target = $region100
        $region99: #{transformer_forward.10} parent=95 // pred_region
          %p702 = scmp.lt.s32.totalorder %s33, 1
          %s703 = scalar_select %p702, %s33, 1
          %s704 = smul.addr %s703, 8
          %s705 = scalar_lea.vmem %s0, %s704
        $region100: #{transformer_forward.10} parent=95 // pred_fallthru
          _
        // Predicated region
        $region101: #{transformer_forward.10} parent=95 // pred_check
          %p706 = pneg %p79
        $region102: #{transformer_forward.10} parent=95 // pred_check_branch
          %708 = sbr.rel (%p706) target = $region104
        $region103: #{transformer_forward.10} parent=95 // pred_region
          %p709 = scmp.lt.s32.totalorder %s33, 1
          %s710 = scalar_select %p709, %s33, 1
          %s711 = smul.addr %s710, 8
          %s712 = scalar_lea.vmem %s1, %s711
        $region104: #{transformer_forward.10} parent=95 // pred_fallthru
          _
      $region96: #{transformer_forward.10} parent=5 // pred_fallthru
        _
      %p713 = scmp.le.s32.totalorder 1, %s33
      %p714 = scmp.lt.s32.totalorder %s33, 3
      %p715 = pnand %p713, %p714
      %p716 = pneg %p715
      // Predicated region
      $region105: #{transformer_forward.10} parent=5 // pred_check
        _
      $region106: #{transformer_forward.10} parent=5 // pred_check_branch
        %718 = sbr.rel (%p715) target = $region108
      $region107: #{transformer_forward.10} parent=5 // pred_region
        %s719 = ssub.s32 %s33, 1
        // Predicated region
        $region109: #{transformer_forward.10} parent=107 // pred_check
          %p720 = pneg %p148
        $region110: #{transformer_forward.10} parent=107 // pred_check_branch
          %722 = sbr.rel (%p720) target = $region112
        $region111: #{transformer_forward.10} parent=107 // pred_region
          %724 = dma.done [#allocation3], 512
        $region112: #{transformer_forward.10} parent=107 // pred_fallthru
          _
        // Predicated region
        $region113: #{transformer_forward.10} parent=107 // pred_check
          %p725 = pneg %p232
        $region114: #{transformer_forward.10} parent=107 // pred_check_branch
          %727 = sbr.rel (%p725) target = $region116
        $region115: #{transformer_forward.10} parent=107 // pred_region
          %729 = dma.done [#allocation5], 512
        $region116: #{transformer_forward.10} parent=107 // pred_fallthru
          _
        // Predicated region
        $region117: #{transformer_forward.10} parent=107 // pred_check
          %p730 = pneg %p274
        $region118: #{transformer_forward.10} parent=107 // pred_check_branch
          %732 = sbr.rel (%p730) target = $region120
        $region119: #{transformer_forward.10} parent=107 // pred_region
          %734 = dma.done [#allocation5], 512
        $region120: #{transformer_forward.10} parent=107 // pred_fallthru
          _
        // Predicated region
        $region121: #{transformer_forward.10} parent=107 // pred_check
          %p735 = pneg %p316
        $region122: #{transformer_forward.10} parent=107 // pred_check_branch
          %737 = sbr.rel (%p735) target = $region124
        $region123: #{transformer_forward.10} parent=107 // pred_region
          %739 = dma.done [#allocation8], 512
        $region124: #{transformer_forward.10} parent=107 // pred_fallthru
          _
        // Predicated region
        $region125: #{transformer_forward.10} parent=107 // pred_check
          %p740 = pneg %p358
        $region126: #{transformer_forward.10} parent=107 // pred_check_branch
          %742 = sbr.rel (%p740) target = $region128
        $region127: #{transformer_forward.10} parent=107 // pred_region
          %744 = dma.done [#allocation8], 16
        $region128: #{transformer_forward.10} parent=107 // pred_fallthru
          _
        // Predicated region
        $region129: #{transformer_forward.10} parent=107 // pred_check
          %p745 = pneg %p379
        $region130: #{transformer_forward.10} parent=107 // pred_check_branch
          %747 = sbr.rel (%p745) target = $region132
        $region131: #{transformer_forward.10} parent=107 // pred_region
          %749 = dma.done [#allocation11], 16
        $region132: #{transformer_forward.10} parent=107 // pred_fallthru
          _
        // Predicated region
        $region133: #{transformer_forward.10} parent=107 // pred_check
          %p750 = pneg %p463
        $region134: #{transformer_forward.10} parent=107 // pred_check_branch
          %752 = sbr.rel (%p750) target = $region136
        $region135: #{transformer_forward.10} parent=107 // pred_region
          %754 = dma.done [#allocation11], 16
        $region136: #{transformer_forward.10} parent=107 // pred_fallthru
          _
        // Predicated region
        $region137: #{transformer_forward.10} parent=107 // pred_check
          %p755 = pneg %p484
        $region138: #{transformer_forward.10} parent=107 // pred_check_branch
          %757 = sbr.rel (%p755) target = $region140
        $region139: #{transformer_forward.10} parent=107 // pred_region
          %759 = dma.done [#allocation14], 16
        $region140: #{transformer_forward.10} parent=107 // pred_fallthru
          _
        // Predicated region
        $region141: #{transformer_forward.10} parent=107 // pred_check
          %p760 = pneg %p505
        $region142: #{transformer_forward.10} parent=107 // pred_check_branch
          %762 = sbr.rel (%p760) target = $region144
        $region143: #{transformer_forward.10} parent=107 // pred_region
          %764 = dma.done [#allocation14], 16
        $region144: #{transformer_forward.10} parent=107 // pred_fallthru
          _
        %p765 = scmp.lt.s32.totalorder %s38, 1
        %s766 = scalar_select %p765, %s38, 1
        %s767 = smul.addr %s766, 8
        %s768 = scalar_lea.vmem %s0, %s767
        %p769 = pneg %p59
        %p770 = pneg %p56
        %p771 = scmp.lt.s32.totalorder %s38, 1
        %s772 = scalar_select %p771, %s38, 1
        %s773 = smul.addr %s772, 8
        %s774 = scalar_lea.vmem %s1, %s773
        %p775 = pneg %p85
        %p776 = pneg %p82
        %p777 = pneg %p106
        %p778 = pneg %p103
        %p779 = pneg %p127
        %p780 = pneg %p124
        %p781 = pneg %p148
        %p782 = pneg %p145
        %p783 = pneg %p169
        %p784 = pneg %p166
        %p785 = pneg %p190
        %p786 = pneg %p187
        %p787 = pneg %p211
        %p788 = pneg %p208
        %p789 = pneg %p232
        %p790 = pneg %p229
        %p791 = pneg %p253
        %p792 = pneg %p250
        %p793 = pneg %p274
        %p794 = pneg %p271
        %p795 = pneg %p295
        %p796 = pneg %p292
        %p797 = pneg %p316
        %p798 = pneg %p313
        %p799 = pneg %p337
        %p800 = pneg %p334
        %p801 = pneg %p358
        %p802 = pneg %p355
        %p803 = pneg %p379
        %p804 = pneg %p376
        %p805 = pneg %p400
        %p806 = pneg %p397
        %p807 = pneg %p421
        %p808 = pneg %p418
        %p809 = pneg %p442
        %p810 = pneg %p439
        %p811 = pneg %p463
        %p812 = pneg %p460
        %p813 = pneg %p484
        %p814 = pneg %p481
        %p815 = pneg %p505
        %p816 = pneg %p502
        %p817 = pneg %p531
        %p818 = pneg %p528
        %p819 = scmp.lt.s32.totalorder %s38, 1
        %s820 = scalar_select %p819, %s38, 1
        %s821 = smul.addr %s820, 8
        %s822 = scalar_lea.vmem %s22, %s821
        %p823 = scmp.lt.s32.totalorder %s38, 1
        %s824 = scalar_select %p823, %s38, 1
        %s825 = smul.addr %s824, 8
        %s826 = scalar_lea.vmem %s0, %s825
        %p827 = scmp.lt.s32.totalorder %s38, 1
        %s828 = scalar_select %p827, %s38, 1
        %s829 = smul.addr %s828, 8
        %s830 = scalar_lea.vmem %s1, %s829
        %p831 = scmp.lt.s32.totalorder %s38, 1
        %s832 = scalar_select %p831, %s38, 1
        %s833 = smul.addr %s832, 8
        %s834 = scalar_lea.vmem %s22, %s833
        %v836 = vld [vmem:[%s826] sm:$0xff]
        %v837 = vld [vmem:[%s830] sm:$0xff]
        %v838 = vpack.c.bf16 %v836, %v836
        %v839 = vld [vmem:[%s2] sm:$0xff]
        %v840 = vld [vmem:[%s2 + $0x8] sm:$0xff]
        %v841 = vld [vmem:[%s2 + $0x10] sm:$0xff]
        %v842 = vld [vmem:[%s2 + $0x18] sm:$0xff]
        %v843 = vld [vmem:[%s2 + $0x20] sm:$0xff]
        %v844 = vld [vmem:[%s2 + $0x28] sm:$0xff]
        %v845 = vld [vmem:[%s2 + $0x30] sm:$0xff]
        %v846 = vld [vmem:[%s2 + $0x38] sm:$0xff]
        %v847 = vld [vmem:[%s3] sm:$0x3]
        %v849 = vperm.slane %v847, 0
        %v850 = vperm.slane %v847, 1
        %v861 = vunpack.c.l.b16 %v839
        %v862 = vunpack.c.h.b16 %v839
        %v863 = vunpack.c.l.b16 %v840
        %v864 = vunpack.c.h.b16 %v840
        %v865 = vunpack.c.l.b16 %v841
        %v866 = vunpack.c.h.b16 %v841
        %v867 = vunpack.c.l.b16 %v842
        %v868 = vunpack.c.h.b16 %v842
        %v869 = vunpack.c.l.b16 %v843
        %v870 = vunpack.c.h.b16 %v843
        %v871 = vunpack.c.l.b16 %v844
        %v872 = vunpack.c.h.b16 %v844
        %v873 = vunpack.c.l.b16 %v845
        %v874 = vunpack.c.h.b16 %v845
        %v875 = vunpack.c.l.b16 %v846
        %v876 = vunpack.c.h.b16 %v846
        %v877 = vpack.c.b16 %v863, %v861
        %v878 = vpack.c.b16 %v864, %v862
        %v879 = vpack.c.b16 %v867, %v865
        %v880 = vpack.c.b16 %v868, %v866
        %v881 = vpack.c.b16 %v871, %v869
        %v882 = vpack.c.b16 %v872, %v870
        %v883 = vpack.c.b16 %v875, %v873
        %v884 = vpack.c.b16 %v876, %v874
        %vm893 = vcmask 523264
        %v895 = vsel %vm893, %v838, 0
        %897 = vmatpush.bf16.msra.mxu0 0
        %898 = vmatpush.bf16.msra.mxu0 0
        %899 = vmatpush.bf16.msra.mxu0 0
        %900 = vmatpush.bf16.msra.mxu0 0
        %901 = vmatpush.bf16.msra.mxu0 %v883
        %902 = vmatpush.bf16.msra.mxu0 %v881
        %903 = vmatpush.bf16.msra.mxu0 %v879
        %904 = vmatpush.bf16.msra.mxu0 %v877
        %905 = vmatmul.bf16.gmra.mxu0 %v895
        %v906 = vpop.f32.mrf.mxu0
        %v907 = vadd.f32 %v849, %v906
        %v908 = vpop.f32.mrf.mxu0
        %909 = vdwg.mxu0
        %910 = vmatpush.bf16.msra.mxu0 0
        %911 = vmatpush.bf16.msra.mxu0 0
        %912 = vmatpush.bf16.msra.mxu0 0
        %913 = vmatpush.bf16.msra.mxu0 0
        %914 = vmatpush.bf16.msra.mxu0 %v884
        %915 = vmatpush.bf16.msra.mxu0 %v882
        %916 = vmatpush.bf16.msra.mxu0 %v880
        %917 = vmatpush.bf16.msra.mxu0 %v878
        %918 = vmatmul.bf16.gmra.mxu0 %v895
        %v919 = vpop.f32.mrf.mxu0
        %v920 = vadd.f32 %v850, %v919
        %v921 = vpop.f32.mrf.mxu0
        %922 = vdwg.mxu0
        %v923 = vlaneseq
        %v924 = vshrl.u32 %v923, 7
        %v925 = vlaneseq
        %v926 = vand.u32 %v925, 127
        %vm927 = vcmp.le.s32.totalorder %v926, %v924
        %929 = vrot.lane.b32.xlu0 %v907, 64
        %v930 = vpop.permute.xlu0 %929
        %vm931 = vcmask 130048
        %v932 = vsel %vm931, %v907, 0
        %v934 = vsel %vm931, %v930, 0
        %936 = vmatpush.xpose.msra.mxu0 0.0
        %937 = vmatpush.xpose.msra.mxu0 0.0
        %938 = vmatpush.xpose.msra.mxu0 0.0
        %939 = vmatpush.xpose.msra.mxu0 0.0
        %940 = vmatpush.xpose.msra.mxu0 0.0
        %941 = vmatpush.xpose.msra.mxu0 0.0
        %942 = vmatpush.xpose.msra.mxu0 0.0
        %943 = vmatpush.xpose.msra.mxu0 0.0
        %944 = vmatpush.xpose.msra.mxu0 0.0
        %945 = vmatpush.xpose.msra.mxu0 0.0
        %946 = vmatpush.xpose.msra.mxu0 0.0
        %947 = vmatpush.xpose.msra.mxu0 0.0
        %948 = vmatpush.xpose.msra.mxu0 0.0
        %949 = vmatpush.xpose.msra.mxu0 0.0
        %950 = vmatpush.xpose.msra.mxu0 0.0
        %951 = vmatpush.xpose.msra.mxu0 %v934
        %952 = vmatmul.f32.gmra.mxu0 %v932
        %v953 = vpop.f32.mrf.mxu0
        %v954 = vadd.f32 0.0, %v953
        %955 = vdwg.mxu0
        %v956 = vmul.f32 %v954, 0.25
        %v957 = vsel %vm927, %v956, -3.4028235e+38
        %vm958 = vcmask 64512
        %v959 = vsel %vm958, %v957, -inf
        %960 = vmax.xlane.f32.xlu0 %v959
        %v961 = vpop.xlane.xlu0 %960
        %v962 = vsub.f32 %v957, %v961
        %v963 = vmul.f32 %v962, 1.442695
        %v964 = vpow.pop %v963
        %v965 = vsel %vm958, %v964, 0.0
        %966 = vadd.xlane.f32.xlu0 %v965
        %v967 = vpop.xlane.xlu0 %966
        %v968 = vrcp.pop %v967
        %v969 = vmul.f32 %v967, %v968
        %v970 = vsub.f32 1.0, %v969
        %v971 = vmul.f32 %v968, %v970
        %v972 = vadd.f32 %v968, %v971
        %vm973 = vweird.f32 %v967
        %vm974 = vweird.f32 %v968
        %vm975 = vmor %vm973, %vm974
        %v976 = vsel %vm975, %v968, %v972
        %v977 = vand.u32 2147483647, %v967
        %vm978 = vcmp.eq.f32.partialorder %v977, 8.507059e+37
        %v979 = vand.u32 %v967, 2147483648
        %v980 = vor.u32 1.1754944e-38, %v979
        %v981 = vsel %vm978, %v980, %v976
        %v982 = vmul.f32 %v964, %v981
        %v984 = vsel %vm958, %v982, 0
        %986 = vmatpush.msra.mxu0 0.0
        %987 = vmatpush.msra.mxu0 0.0
        %988 = vmatpush.msra.mxu0 0.0
        %989 = vmatpush.msra.mxu0 0.0
        %990 = vmatpush.msra.mxu0 0.0
        %991 = vmatpush.msra.mxu0 0.0
        %992 = vmatpush.msra.mxu0 0.0
        %993 = vmatpush.msra.mxu0 0.0
        %994 = vmatpush.msra.mxu0 0.0
        %995 = vmatpush.msra.mxu0 0.0
        %996 = vmatpush.msra.mxu0 0.0
        %997 = vmatpush.msra.mxu0 0.0
        %998 = vmatpush.msra.mxu0 0.0
        %999 = vmatpush.msra.mxu0 0.0
        %1000 = vmatpush.msra.mxu0 0.0
        %1001 = vmatpush.msra.mxu0 %v920
        %1002 = vmatmul.f32.gmra.mxu0 %v984
        %v1003 = vpop.f32.mrf.mxu0
        %v1004 = vadd.f32 0.0, %v1003
        %1005 = vdwg.mxu0
        %1006 = vrot.lane.b32.xlu0 %v907, 112
        %v1007 = vpop.permute.xlu0 %1006
        %1008 = vrot.lane.b32.xlu0 %v907, 48
        %v1009 = vpop.permute.xlu0 %1008
        %v1010 = vsel %vm931, %v1007, 0
        %v1012 = vsel %vm931, %v1009, 0
        %1014 = vmatpush.xpose.msra.mxu0 0.0
        %1015 = vmatpush.xpose.msra.mxu0 0.0
        %1016 = vmatpush.xpose.msra.mxu0 0.0
        %1017 = vmatpush.xpose.msra.mxu0 0.0
        %1018 = vmatpush.xpose.msra.mxu0 0.0
        %1019 = vmatpush.xpose.msra.mxu0 0.0
        %1020 = vmatpush.xpose.msra.mxu0 0.0
        %1021 = vmatpush.xpose.msra.mxu0 0.0
        %1022 = vmatpush.xpose.msra.mxu0 0.0
        %1023 = vmatpush.xpose.msra.mxu0 0.0
        %1024 = vmatpush.xpose.msra.mxu0 0.0
        %1025 = vmatpush.xpose.msra.mxu0 0.0
        %1026 = vmatpush.xpose.msra.mxu0 0.0
        %1027 = vmatpush.xpose.msra.mxu0 0.0
        %1028 = vmatpush.xpose.msra.mxu0 0.0
        %1029 = vmatpush.xpose.msra.mxu0 %v1012
        %1030 = vmatmul.f32.gmra.mxu0 %v1010
        %v1031 = vpop.f32.mrf.mxu0
        %v1032 = vadd.f32 0.0, %v1031
        %1033 = vdwg.mxu0
        %v1034 = vmul.f32 %v1032, 0.25
        %v1035 = vsel %vm927, %v1034, -3.4028235e+38
        %v1036 = vsel %vm958, %v1035, -inf
        %1037 = vmax.xlane.f32.xlu0 %v1036
        %v1038 = vpop.xlane.xlu0 %1037
        %v1039 = vsub.f32 %v1035, %v1038
        %v1040 = vmul.f32 %v1039, 1.442695
        %v1041 = vpow.pop %v1040
        %v1042 = vsel %vm958, %v1041, 0.0
        %1043 = vadd.xlane.f32.xlu0 %v1042
        %v1044 = vpop.xlane.xlu0 %1043
        %v1045 = vrcp.pop %v1044
        %v1046 = vmul.f32 %v1044, %v1045
        %v1047 = vsub.f32 1.0, %v1046
        %v1048 = vmul.f32 %v1045, %v1047
        %v1049 = vadd.f32 %v1045, %v1048
        %vm1050 = vweird.f32 %v1044
        %vm1051 = vweird.f32 %v1045
        %vm1052 = vmor %vm1050, %vm1051
        %v1053 = vsel %vm1052, %v1045, %v1049
        %v1054 = vand.u32 2147483647, %v1044
        %vm1055 = vcmp.eq.f32.partialorder %v1054, 8.507059e+37
        %v1056 = vand.u32 %v1044, 2147483648
        %v1057 = vor.u32 1.1754944e-38, %v1056
        %v1058 = vsel %vm1055, %v1057, %v1053
        %v1059 = vmul.f32 %v1041, %v1058
        %1061 = vrot.lane.b32.xlu0 %v920, 112
        %v1062 = vpop.permute.xlu0 %1061
        %v1065 = vsel %vm958, %v1059, 0
        %1067 = vmatpush.msra.mxu0 0.0
        %1068 = vmatpush.msra.mxu0 0.0
        %1069 = vmatpush.msra.mxu0 0.0
        %1070 = vmatpush.msra.mxu0 0.0
        %1071 = vmatpush.msra.mxu0 0.0
        %1072 = vmatpush.msra.mxu0 0.0
        %1073 = vmatpush.msra.mxu0 0.0
        %1074 = vmatpush.msra.mxu0 0.0
        %1075 = vmatpush.msra.mxu0 0.0
        %1076 = vmatpush.msra.mxu0 0.0
        %1077 = vmatpush.msra.mxu0 0.0
        %1078 = vmatpush.msra.mxu0 0.0
        %1079 = vmatpush.msra.mxu0 0.0
        %1080 = vmatpush.msra.mxu0 0.0
        %1081 = vmatpush.msra.mxu0 0.0
        %1082 = vmatpush.msra.mxu0 %v1062
        %1083 = vmatmul.f32.gmra.mxu0 %v1065
        %v1084 = vpop.f32.mrf.mxu0
        %v1085 = vadd.f32 0.0, %v1084
        %1086 = vdwg.mxu0
        %1087 = vrot.lane.b32.xlu0 %v907, 96
        %v1088 = vpop.permute.xlu0 %1087
        %1089 = vrot.lane.b32.xlu0 %v907, 32
        %v1090 = vpop.permute.xlu0 %1089
        %v1091 = vsel %vm931, %v1088, 0
        %v1093 = vsel %vm931, %v1090, 0
        %1095 = vmatpush.xpose.msra.mxu0 0.0
        %1096 = vmatpush.xpose.msra.mxu0 0.0
        %1097 = vmatpush.xpose.msra.mxu0 0.0
        %1098 = vmatpush.xpose.msra.mxu0 0.0
        %1099 = vmatpush.xpose.msra.mxu0 0.0
        %1100 = vmatpush.xpose.msra.mxu0 0.0
        %1101 = vmatpush.xpose.msra.mxu0 0.0
        %1102 = vmatpush.xpose.msra.mxu0 0.0
        %1103 = vmatpush.xpose.msra.mxu0 0.0
        %1104 = vmatpush.xpose.msra.mxu0 0.0
        %1105 = vmatpush.xpose.msra.mxu0 0.0
        %1106 = vmatpush.xpose.msra.mxu0 0.0
        %1107 = vmatpush.xpose.msra.mxu0 0.0
        %1108 = vmatpush.xpose.msra.mxu0 0.0
        %1109 = vmatpush.xpose.msra.mxu0 0.0
        %1110 = vmatpush.xpose.msra.mxu0 %v1093
        %1111 = vmatmul.f32.gmra.mxu0 %v1091
        %v1112 = vpop.f32.mrf.mxu0
        %v1113 = vadd.f32 0.0, %v1112
        %1114 = vdwg.mxu0
        %v1115 = vmul.f32 %v1113, 0.25
        %v1116 = vsel %vm927, %v1115, -3.4028235e+38
        %v1117 = vsel %vm958, %v1116, -inf
        %1118 = vmax.xlane.f32.xlu0 %v1117
        %v1119 = vpop.xlane.xlu0 %1118
        %v1120 = vsub.f32 %v1116, %v1119
        %v1121 = vmul.f32 %v1120, 1.442695
        %v1122 = vpow.pop %v1121
        %v1123 = vsel %vm958, %v1122, 0.0
        %1124 = vadd.xlane.f32.xlu0 %v1123
        %v1125 = vpop.xlane.xlu0 %1124
        %v1126 = vrcp.pop %v1125
        %v1127 = vmul.f32 %v1125, %v1126
        %v1128 = vsub.f32 1.0, %v1127
        %v1129 = vmul.f32 %v1126, %v1128
        %v1130 = vadd.f32 %v1126, %v1129
        %vm1131 = vweird.f32 %v1125
        %vm1132 = vweird.f32 %v1126
        %vm1133 = vmor %vm1131, %vm1132
        %v1134 = vsel %vm1133, %v1126, %v1130
        %v1135 = vand.u32 2147483647, %v1125
        %vm1136 = vcmp.eq.f32.partialorder %v1135, 8.507059e+37
        %v1137 = vand.u32 %v1125, 2147483648
        %v1138 = vor.u32 1.1754944e-38, %v1137
        %v1139 = vsel %vm1136, %v1138, %v1134
        %v1140 = vmul.f32 %v1122, %v1139
        %1141 = vrot.lane.b32.xlu0 %v920, 96
        %v1142 = vpop.permute.xlu0 %1141
        %v1145 = vsel %vm958, %v1140, 0
        %1147 = vmatpush.msra.mxu0 0.0
        %1148 = vmatpush.msra.mxu0 0.0
        %1149 = vmatpush.msra.mxu0 0.0
        %1150 = vmatpush.msra.mxu0 0.0
        %1151 = vmatpush.msra.mxu0 0.0
        %1152 = vmatpush.msra.mxu0 0.0
        %1153 = vmatpush.msra.mxu0 0.0
        %1154 = vmatpush.msra.mxu0 0.0
        %1155 = vmatpush.msra.mxu0 0.0
        %1156 = vmatpush.msra.mxu0 0.0
        %1157 = vmatpush.msra.mxu0 0.0
        %1158 = vmatpush.msra.mxu0 0.0
        %1159 = vmatpush.msra.mxu0 0.0
        %1160 = vmatpush.msra.mxu0 0.0
        %1161 = vmatpush.msra.mxu0 0.0
        %1162 = vmatpush.msra.mxu0 %v1142
        %1163 = vmatmul.f32.gmra.mxu0 %v1145
        %v1164 = vpop.f32.mrf.mxu0
        %v1165 = vadd.f32 0.0, %v1164
        %1166 = vdwg.mxu0
        %1167 = vrot.lane.b32.xlu0 %v907, 80
        %v1168 = vpop.permute.xlu0 %1167
        %1169 = vrot.lane.b32.xlu0 %v907, 16
        %v1170 = vpop.permute.xlu0 %1169
        %v1171 = vsel %vm931, %v1168, 0
        %v1173 = vsel %vm931, %v1170, 0
        %1175 = vmatpush.xpose.msra.mxu0 0.0
        %1176 = vmatpush.xpose.msra.mxu0 0.0
        %1177 = vmatpush.xpose.msra.mxu0 0.0
        %1178 = vmatpush.xpose.msra.mxu0 0.0
        %1179 = vmatpush.xpose.msra.mxu0 0.0
        %1180 = vmatpush.xpose.msra.mxu0 0.0
        %1181 = vmatpush.xpose.msra.mxu0 0.0
        %1182 = vmatpush.xpose.msra.mxu0 0.0
        %1183 = vmatpush.xpose.msra.mxu0 0.0
        %1184 = vmatpush.xpose.msra.mxu0 0.0
        %1185 = vmatpush.xpose.msra.mxu0 0.0
        %1186 = vmatpush.xpose.msra.mxu0 0.0
        %1187 = vmatpush.xpose.msra.mxu0 0.0
        %1188 = vmatpush.xpose.msra.mxu0 0.0
        %1189 = vmatpush.xpose.msra.mxu0 0.0
        %1190 = vmatpush.xpose.msra.mxu0 %v1173
        %1191 = vmatmul.f32.gmra.mxu0 %v1171
        %v1192 = vpop.f32.mrf.mxu0
        %v1193 = vadd.f32 0.0, %v1192
        %1194 = vdwg.mxu0
        %v1195 = vmul.f32 %v1193, 0.25
        %v1196 = vsel %vm927, %v1195, -3.4028235e+38
        %v1197 = vsel %vm958, %v1196, -inf
        %1198 = vmax.xlane.f32.xlu0 %v1197
        %v1199 = vpop.xlane.xlu0 %1198
        %v1200 = vsub.f32 %v1196, %v1199
        %v1201 = vmul.f32 %v1200, 1.442695
        %v1202 = vpow.pop %v1201
        %v1203 = vsel %vm958, %v1202, 0.0
        %1204 = vadd.xlane.f32.xlu0 %v1203
        %v1205 = vpop.xlane.xlu0 %1204
        %v1206 = vrcp.pop %v1205
        %v1207 = vmul.f32 %v1205, %v1206
        %v1208 = vsub.f32 1.0, %v1207
        %v1209 = vmul.f32 %v1206, %v1208
        %v1210 = vadd.f32 %v1206, %v1209
        %vm1211 = vweird.f32 %v1205
        %vm1212 = vweird.f32 %v1206
        %vm1213 = vmor %vm1211, %vm1212
        %v1214 = vsel %vm1213, %v1206, %v1210
        %v1215 = vand.u32 2147483647, %v1205
        %vm1216 = vcmp.eq.f32.partialorder %v1215, 8.507059e+37
        %v1217 = vand.u32 %v1205, 2147483648
        %v1218 = vor.u32 1.1754944e-38, %v1217
        %v1219 = vsel %vm1216, %v1218, %v1214
        %v1220 = vmul.f32 %v1202, %v1219
        %1221 = vrot.lane.b32.xlu0 %v920, 80
        %v1222 = vpop.permute.xlu0 %1221
        %v1225 = vsel %vm958, %v1220, 0
        %1227 = vmatpush.msra.mxu0 0.0
        %1228 = vmatpush.msra.mxu0 0.0
        %1229 = vmatpush.msra.mxu0 0.0
        %1230 = vmatpush.msra.mxu0 0.0
        %1231 = vmatpush.msra.mxu0 0.0
        %1232 = vmatpush.msra.mxu0 0.0
        %1233 = vmatpush.msra.mxu0 0.0
        %1234 = vmatpush.msra.mxu0 0.0
        %1235 = vmatpush.msra.mxu0 0.0
        %1236 = vmatpush.msra.mxu0 0.0
        %1237 = vmatpush.msra.mxu0 0.0
        %1238 = vmatpush.msra.mxu0 0.0
        %1239 = vmatpush.msra.mxu0 0.0
        %1240 = vmatpush.msra.mxu0 0.0
        %1241 = vmatpush.msra.mxu0 0.0
        %1242 = vmatpush.msra.mxu0 %v1222
        %1243 = vmatmul.f32.gmra.mxu0 %v1225
        %v1244 = vpop.f32.mrf.mxu0
        %v1245 = vadd.f32 0.0, %v1244
        %1246 = vdwg.mxu0
        %1248 = vrot.lane.b32.xlu0 %v1085, 16
        %v1249 = vpop.permute.xlu0 %1248
        %1252 = vrot.lane.b32.xlu0 %v1165, 32
        %v1253 = vpop.permute.xlu0 %1252
        %1256 = vrot.lane.b32.xlu0 %v1245, 48
        %v1257 = vpop.permute.xlu0 %1256
        %v1259 = vsel %vm931, %v1004, %v1249
        %vm1260 = vcmask 261120
        %v1261 = vsel %vm1260, %v1259, %v1253
        %vm1262 = vcmask 392192
        %v1263 = vsel %vm1262, %v1261, %v1257
        %v1264 = vpack.c.bf16 %v1263, %v1263
        %v1265 = vld [vmem:[#allocation2] sm:$0xf]
        %v1266 = vld [vmem:[#allocation2 + $0x4] sm:$0xf]
        %v1267 = vld [vmem:[#allocation2 + $0x8] sm:$0xf]
        %v1268 = vld [vmem:[#allocation2 + $0xc] sm:$0xf]
        %v1269 = vld [vmem:[#allocation2 + $0x10] sm:$0xf]
        %v1270 = vld [vmem:[#allocation2 + $0x14] sm:$0xf]
        %v1271 = vld [vmem:[#allocation2 + $0x18] sm:$0xf]
        %v1272 = vld [vmem:[#allocation2 + $0x1c] sm:$0xf]
        %v1273 = vld [vmem:[%s5] sm:$0x1]
        %v1275 = vperm.slane %v1273, 0
        %v1285 = vunpack.c.l.b16 %v1265
        %v1286 = vunpack.c.l.b16 %v1266
        %v1287 = vunpack.c.l.b16 %v1267
        %v1288 = vunpack.c.l.b16 %v1268
        %v1289 = vunpack.c.l.b16 %v1269
        %v1290 = vunpack.c.l.b16 %v1270
        %v1291 = vunpack.c.l.b16 %v1271
        %v1292 = vunpack.c.l.b16 %v1272
        %v1293 = vpack.c.b16 %v1286, %v1285
        %v1294 = vpack.c.b16 %v1288, %v1287
        %v1295 = vpack.c.b16 %v1290, %v1289
        %v1296 = vpack.c.b16 %v1292, %v1291
        %v1302 = vsel %vm893, %v1264, 0
        %1304 = vmatpush.bf16.msra.mxu0 0
        %1305 = vmatpush.bf16.msra.mxu0 0
        %1306 = vmatpush.bf16.msra.mxu0 0
        %1307 = vmatpush.bf16.msra.mxu0 0
        %1308 = vmatpush.bf16.msra.mxu0 %v1296
        %1309 = vmatpush.bf16.msra.mxu0 %v1295
        %1310 = vmatpush.bf16.msra.mxu0 %v1294
        %1311 = vmatpush.bf16.msra.mxu0 %v1293
        %1312 = vmatmul.bf16.gmra.mxu0 %v1302
        %v1313 = vpop.f32.mrf.mxu0
        %v1314 = vadd.f32 %v1275, %v1313
        %v1315 = vpop.f32.mrf.mxu0
        %1316 = vdwg.mxu0
        %v1317 = vadd.f32 %v836, %v1314
        %v1318 = vsel %vm893, %v1317, 0.0
        %1319 = vadd.xlane.f32.xlu0 %v1318
        %v1320 = vpop.xlane.xlu0 %1319
        %v1321 = vrcp.pop 64.0
        %v1322 = vmul.f32 64.0, %v1321
        %v1323 = vsub.f32 1.0, %v1322
        %v1324 = vmul.f32 %v1321, %v1323
        %v1325 = vadd.f32 %v1321, %v1324
        %vm1326 = vweird.f32 %v1321
        %v1327 = vsel %vm1326, %v1321, %v1325
        %v1328 = vmul.f32 %v1320, %v1327
        %v1329 = vsub.f32 %v1317, %v1328
        %v1330 = vmul.f32 %v1329, %v1329
        %v1331 = vsel %vm893, %v1330, 0.0
        %1332 = vadd.xlane.f32.xlu0 %v1331
        %v1333 = vpop.xlane.xlu0 %1332
        %v1334 = vmul.f32 %v1333, %v1327
        %v1335 = vadd.f32 %v1334, 1e-05
        %v1336 = vrsqrt.pop %v1335
        %v1337 = vmul.f32 %v1336, %v1335
        %v1338 = vmul.f32 %v1337, %v1336
        %v1339 = vmul.f32 0.5, %v1338
        %v1340 = vsub.f32 1.5, %v1339
        %v1341 = vmul.f32 %v1336, %v1340
        %vm1342 = vweird.f32 %v1335
        %vm1343 = vweird.f32 %v1336
        %vm1344 = vmor %vm1342, %vm1343
        %v1345 = vsel %vm1344, %v1336, %v1341
        %v1346 = vmul.f32 %v1329, %v1345
        %v1347 = vld [vmem:[%s6] sm:$0x1]
        %v1349 = vperm.slane %v1347, 0
        %v1351 = vmul.f32 %v1346, %v1349
        %v1352 = vld [vmem:[%s7] sm:$0x1]
        %v1354 = vperm.slane %v1352, 0
        %v1356 = vadd.f32 %v1351, %v1354
        %v1357 = vpack.c.bf16 %v1356, %v1356
        %v1358 = vld [vmem:[#allocation4] sm:$0xf]
        %v1359 = vld [vmem:[#allocation4 + $0x4] sm:$0xf]
        %v1360 = vld [vmem:[#allocation4 + $0x8] sm:$0xf]
        %v1361 = vld [vmem:[#allocation4 + $0xc] sm:$0xf]
        %v1362 = vld [vmem:[#allocation4 + $0x10] sm:$0xf]
        %v1363 = vld [vmem:[#allocation4 + $0x14] sm:$0xf]
        %v1364 = vld [vmem:[#allocation4 + $0x18] sm:$0xf]
        %v1365 = vld [vmem:[#allocation4 + $0x1c] sm:$0xf]
        %v1366 = vld [vmem:[%s9] sm:$0x1]
        %v1368 = vperm.slane %v1366, 0
        %v1378 = vunpack.c.l.b16 %v1358
        %v1379 = vunpack.c.l.b16 %v1359
        %v1380 = vunpack.c.l.b16 %v1360
        %v1381 = vunpack.c.l.b16 %v1361
        %v1382 = vunpack.c.l.b16 %v1362
        %v1383 = vunpack.c.l.b16 %v1363
        %v1384 = vunpack.c.l.b16 %v1364
        %v1385 = vunpack.c.l.b16 %v1365
        %v1386 = vpack.c.b16 %v1379, %v1378
        %v1387 = vpack.c.b16 %v1381, %v1380
        %v1388 = vpack.c.b16 %v1383, %v1382
        %v1389 = vpack.c.b16 %v1385, %v1384
        %v1395 = vsel %vm893, %v1357, 0
        %1397 = vmatpush.bf16.msra.mxu0 0
        %1398 = vmatpush.bf16.msra.mxu0 0
        %1399 = vmatpush.bf16.msra.mxu0 0
        %1400 = vmatpush.bf16.msra.mxu0 0
        %1401 = vmatpush.bf16.msra.mxu0 %v1389
        %1402 = vmatpush.bf16.msra.mxu0 %v1388
        %1403 = vmatpush.bf16.msra.mxu0 %v1387
        %1404 = vmatpush.bf16.msra.mxu0 %v1386
        %1405 = vmatmul.bf16.gmra.mxu0 %v1395
        %v1406 = vpop.f32.mrf.mxu0
        %v1407 = vadd.f32 %v1368, %v1406
        %v1408 = vpop.f32.mrf.mxu0
        %1409 = vdwg.mxu0
        %v1410 = vpack.c.bf16 %v837, %v837
        %v1411 = vld [vmem:[#allocation6] sm:$0xf]
        %v1412 = vld [vmem:[#allocation6 + $0x4] sm:$0xf]
        %v1413 = vld [vmem:[#allocation6 + $0x8] sm:$0xf]
        %v1414 = vld [vmem:[#allocation6 + $0xc] sm:$0xf]
        %v1415 = vld [vmem:[#allocation6 + $0x10] sm:$0xf]
        %v1416 = vld [vmem:[#allocation6 + $0x14] sm:$0xf]
        %v1417 = vld [vmem:[#allocation6 + $0x18] sm:$0xf]
        %v1418 = vld [vmem:[#allocation6 + $0x1c] sm:$0xf]
        %v1419 = vld [vmem:[%s11] sm:$0x1]
        %v1421 = vperm.slane %v1419, 0
        %v1431 = vunpack.c.l.b16 %v1411
        %v1432 = vunpack.c.l.b16 %v1412
        %v1433 = vunpack.c.l.b16 %v1413
        %v1434 = vunpack.c.l.b16 %v1414
        %v1435 = vunpack.c.l.b16 %v1415
        %v1436 = vunpack.c.l.b16 %v1416
        %v1437 = vunpack.c.l.b16 %v1417
        %v1438 = vunpack.c.l.b16 %v1418
        %v1439 = vpack.c.b16 %v1432, %v1431
        %v1440 = vpack.c.b16 %v1434, %v1433
        %v1441 = vpack.c.b16 %v1436, %v1435
        %v1442 = vpack.c.b16 %v1438, %v1437
        %v1448 = vsel %vm893, %v1410, 0
        %1450 = vmatpush.bf16.msra.mxu0 0
        %1451 = vmatpush.bf16.msra.mxu0 0
        %1452 = vmatpush.bf16.msra.mxu0 0
        %1453 = vmatpush.bf16.msra.mxu0 0
        %1454 = vmatpush.bf16.msra.mxu0 %v1442
        %1455 = vmatpush.bf16.msra.mxu0 %v1441
        %1456 = vmatpush.bf16.msra.mxu0 %v1440
        %1457 = vmatpush.bf16.msra.mxu0 %v1439
        %1458 = vmatmul.bf16.gmra.mxu0 %v1448
        %v1459 = vpop.f32.mrf.mxu0
        %v1460 = vadd.f32 %v1421, %v1459
        %v1461 = vpop.f32.mrf.mxu0
        %1462 = vdwg.mxu0
        %v1464 = vsel %vm931, %v1407, 0
        %v1467 = vsel %vm931, %v1460, 0
        %1469 = vmatpush.xpose.msra.mxu0 0.0
        %1470 = vmatpush.xpose.msra.mxu0 0.0
        %1471 = vmatpush.xpose.msra.mxu0 0.0
        %1472 = vmatpush.xpose.msra.mxu0 0.0
        %1473 = vmatpush.xpose.msra.mxu0 0.0
        %1474 = vmatpush.xpose.msra.mxu0 0.0
        %1475 = vmatpush.xpose.msra.mxu0 0.0
        %1476 = vmatpush.xpose.msra.mxu0 0.0
        %1477 = vmatpush.xpose.msra.mxu0 0.0
        %1478 = vmatpush.xpose.msra.mxu0 0.0
        %1479 = vmatpush.xpose.msra.mxu0 0.0
        %1480 = vmatpush.xpose.msra.mxu0 0.0
        %1481 = vmatpush.xpose.msra.mxu0 0.0
        %1482 = vmatpush.xpose.msra.mxu0 0.0
        %1483 = vmatpush.xpose.msra.mxu0 0.0
        %1484 = vmatpush.xpose.msra.mxu0 %v1467
        %1485 = vmatmul.f32.gmra.mxu0 %v1464
        %v1486 = vpop.f32.mrf.mxu0
        %v1487 = vadd.f32 0.0, %v1486
        %1488 = vdwg.mxu0
        %v1489 = vmul.f32 %v1487, 0.25
        %v1490 = vsel %vm958, %v1489, -inf
        %1491 = vmax.xlane.f32.xlu0 %v1490
        %v1492 = vpop.xlane.xlu0 %1491
        %v1493 = vsub.f32 %v1489, %v1492
        %v1494 = vmul.f32 %v1493, 1.442695
        %v1495 = vpow.pop %v1494
        %v1496 = vsel %vm958, %v1495, 0.0
        %1497 = vadd.xlane.f32.xlu0 %v1496
        %v1498 = vpop.xlane.xlu0 %1497
        %v1499 = vrcp.pop %v1498
        %v1500 = vmul.f32 %v1498, %v1499
        %v1501 = vsub.f32 1.0, %v1500
        %v1502 = vmul.f32 %v1499, %v1501
        %v1503 = vadd.f32 %v1499, %v1502
        %vm1504 = vweird.f32 %v1498
        %vm1505 = vweird.f32 %v1499
        %vm1506 = vmor %vm1504, %vm1505
        %v1507 = vsel %vm1506, %v1499, %v1503
        %v1508 = vand.u32 2147483647, %v1498
        %vm1509 = vcmp.eq.f32.partialorder %v1508, 8.507059e+37
        %v1510 = vand.u32 %v1498, 2147483648
        %v1511 = vor.u32 1.1754944e-38, %v1510
        %v1512 = vsel %vm1509, %v1511, %v1507
        %v1513 = vmul.f32 %v1495, %v1512
        %1514 = vrot.lane.b32.xlu0 %v1460, 64
        %v1515 = vpop.permute.xlu0 %1514
        %v1518 = vsel %vm958, %v1513, 0
        %1520 = vmatpush.msra.mxu0 0.0
        %1521 = vmatpush.msra.mxu0 0.0
        %1522 = vmatpush.msra.mxu0 0.0
        %1523 = vmatpush.msra.mxu0 0.0
        %1524 = vmatpush.msra.mxu0 0.0
        %1525 = vmatpush.msra.mxu0 0.0
        %1526 = vmatpush.msra.mxu0 0.0
        %1527 = vmatpush.msra.mxu0 0.0
        %1528 = vmatpush.msra.mxu0 0.0
        %1529 = vmatpush.msra.mxu0 0.0
        %1530 = vmatpush.msra.mxu0 0.0
        %1531 = vmatpush.msra.mxu0 0.0
        %1532 = vmatpush.msra.mxu0 0.0
        %1533 = vmatpush.msra.mxu0 0.0
        %1534 = vmatpush.msra.mxu0 0.0
        %1535 = vmatpush.msra.mxu0 %v1515
        %1536 = vmatmul.f32.gmra.mxu0 %v1518
        %v1537 = vpop.f32.mrf.mxu0
        %v1538 = vadd.f32 0.0, %v1537
        %1539 = vdwg.mxu0
        %1540 = vrot.lane.b32.xlu0 %v1407, 112
        %v1541 = vpop.permute.xlu0 %1540
        %1542 = vrot.lane.b32.xlu0 %v1460, 112
        %v1543 = vpop.permute.xlu0 %1542
        %v1544 = vsel %vm931, %v1541, 0
        %v1546 = vsel %vm931, %v1543, 0
        %1548 = vmatpush.xpose.msra.mxu0 0.0
        %1549 = vmatpush.xpose.msra.mxu0 0.0
        %1550 = vmatpush.xpose.msra.mxu0 0.0
        %1551 = vmatpush.xpose.msra.mxu0 0.0
        %1552 = vmatpush.xpose.msra.mxu0 0.0
        %1553 = vmatpush.xpose.msra.mxu0 0.0
        %1554 = vmatpush.xpose.msra.mxu0 0.0
        %1555 = vmatpush.xpose.msra.mxu0 0.0
        %1556 = vmatpush.xpose.msra.mxu0 0.0
        %1557 = vmatpush.xpose.msra.mxu0 0.0
        %1558 = vmatpush.xpose.msra.mxu0 0.0
        %1559 = vmatpush.xpose.msra.mxu0 0.0
        %1560 = vmatpush.xpose.msra.mxu0 0.0
        %1561 = vmatpush.xpose.msra.mxu0 0.0
        %1562 = vmatpush.xpose.msra.mxu0 0.0
        %1563 = vmatpush.xpose.msra.mxu0 %v1546
        %1564 = vmatmul.f32.gmra.mxu0 %v1544
        %v1565 = vpop.f32.mrf.mxu0
        %v1566 = vadd.f32 0.0, %v1565
        %1567 = vdwg.mxu0
        %v1568 = vmul.f32 %v1566, 0.25
        %v1569 = vsel %vm958, %v1568, -inf
        %1570 = vmax.xlane.f32.xlu0 %v1569
        %v1571 = vpop.xlane.xlu0 %1570
        %v1572 = vsub.f32 %v1568, %v1571
        %v1573 = vmul.f32 %v1572, 1.442695
        %v1574 = vpow.pop %v1573
        %v1575 = vsel %vm958, %v1574, 0.0
        %1576 = vadd.xlane.f32.xlu0 %v1575
        %v1577 = vpop.xlane.xlu0 %1576
        %v1578 = vrcp.pop %v1577
        %v1579 = vmul.f32 %v1577, %v1578
        %v1580 = vsub.f32 1.0, %v1579
        %v1581 = vmul.f32 %v1578, %v1580
        %v1582 = vadd.f32 %v1578, %v1581
        %vm1583 = vweird.f32 %v1577
        %vm1584 = vweird.f32 %v1578
        %vm1585 = vmor %vm1583, %vm1584
        %v1586 = vsel %vm1585, %v1578, %v1582
        %v1587 = vand.u32 2147483647, %v1577
        %vm1588 = vcmp.eq.f32.partialorder %v1587, 8.507059e+37
        %v1589 = vand.u32 %v1577, 2147483648
        %v1590 = vor.u32 1.1754944e-38, %v1589
        %v1591 = vsel %vm1588, %v1590, %v1586
        %v1592 = vmul.f32 %v1574, %v1591
        %1593 = vrot.lane.b32.xlu0 %v1460, 48
        %v1594 = vpop.permute.xlu0 %1593
        %v1597 = vsel %vm958, %v1592, 0
        %1599 = vmatpush.msra.mxu0 0.0
        %1600 = vmatpush.msra.mxu0 0.0
        %1601 = vmatpush.msra.mxu0 0.0
        %1602 = vmatpush.msra.mxu0 0.0
        %1603 = vmatpush.msra.mxu0 0.0
        %1604 = vmatpush.msra.mxu0 0.0
        %1605 = vmatpush.msra.mxu0 0.0
        %1606 = vmatpush.msra.mxu0 0.0
        %1607 = vmatpush.msra.mxu0 0.0
        %1608 = vmatpush.msra.mxu0 0.0
        %1609 = vmatpush.msra.mxu0 0.0
        %1610 = vmatpush.msra.mxu0 0.0
        %1611 = vmatpush.msra.mxu0 0.0
        %1612 = vmatpush.msra.mxu0 0.0
        %1613 = vmatpush.msra.mxu0 0.0
        %1614 = vmatpush.msra.mxu0 %v1594
        %1615 = vmatmul.f32.gmra.mxu0 %v1597
        %v1616 = vpop.f32.mrf.mxu0
        %v1617 = vadd.f32 0.0, %v1616
        %1618 = vdwg.mxu0
        %1619 = vrot.lane.b32.xlu0 %v1407, 96
        %v1620 = vpop.permute.xlu0 %1619
        %1621 = vrot.lane.b32.xlu0 %v1460, 96
        %v1622 = vpop.permute.xlu0 %1621
        %v1623 = vsel %vm931, %v1620, 0
        %v1625 = vsel %vm931, %v1622, 0
        %1627 = vmatpush.xpose.msra.mxu0 0.0
        %1628 = vmatpush.xpose.msra.mxu0 0.0
        %1629 = vmatpush.xpose.msra.mxu0 0.0
        %1630 = vmatpush.xpose.msra.mxu0 0.0
        %1631 = vmatpush.xpose.msra.mxu0 0.0
        %1632 = vmatpush.xpose.msra.mxu0 0.0
        %1633 = vmatpush.xpose.msra.mxu0 0.0
        %1634 = vmatpush.xpose.msra.mxu0 0.0
        %1635 = vmatpush.xpose.msra.mxu0 0.0
        %1636 = vmatpush.xpose.msra.mxu0 0.0
        %1637 = vmatpush.xpose.msra.mxu0 0.0
        %1638 = vmatpush.xpose.msra.mxu0 0.0
        %1639 = vmatpush.xpose.msra.mxu0 0.0
        %1640 = vmatpush.xpose.msra.mxu0 0.0
        %1641 = vmatpush.xpose.msra.mxu0 0.0
        %1642 = vmatpush.xpose.msra.mxu0 %v1625
        %1643 = vmatmul.f32.gmra.mxu0 %v1623
        %v1644 = vpop.f32.mrf.mxu0
        %v1645 = vadd.f32 0.0, %v1644
        %1646 = vdwg.mxu0
        %v1647 = vmul.f32 %v1645, 0.25
        %v1648 = vsel %vm958, %v1647, -inf
        %1649 = vmax.xlane.f32.xlu0 %v1648
        %v1650 = vpop.xlane.xlu0 %1649
        %v1651 = vsub.f32 %v1647, %v1650
        %v1652 = vmul.f32 %v1651, 1.442695
        %v1653 = vpow.pop %v1652
        %v1654 = vsel %vm958, %v1653, 0.0
        %1655 = vadd.xlane.f32.xlu0 %v1654
        %v1656 = vpop.xlane.xlu0 %1655
        %v1657 = vrcp.pop %v1656
        %v1658 = vmul.f32 %v1656, %v1657
        %v1659 = vsub.f32 1.0, %v1658
        %v1660 = vmul.f32 %v1657, %v1659
        %v1661 = vadd.f32 %v1657, %v1660
        %vm1662 = vweird.f32 %v1656
        %vm1663 = vweird.f32 %v1657
        %vm1664 = vmor %vm1662, %vm1663
        %v1665 = vsel %vm1664, %v1657, %v1661
        %v1666 = vand.u32 2147483647, %v1656
        %vm1667 = vcmp.eq.f32.partialorder %v1666, 8.507059e+37
        %v1668 = vand.u32 %v1656, 2147483648
        %v1669 = vor.u32 1.1754944e-38, %v1668
        %v1670 = vsel %vm1667, %v1669, %v1665
        %v1671 = vmul.f32 %v1653, %v1670
        %1672 = vrot.lane.b32.xlu0 %v1460, 32
        %v1673 = vpop.permute.xlu0 %1672
        %v1676 = vsel %vm958, %v1671, 0
        %1678 = vmatpush.msra.mxu0 0.0
        %1679 = vmatpush.msra.mxu0 0.0
        %1680 = vmatpush.msra.mxu0 0.0
        %1681 = vmatpush.msra.mxu0 0.0
        %1682 = vmatpush.msra.mxu0 0.0
        %1683 = vmatpush.msra.mxu0 0.0
        %1684 = vmatpush.msra.mxu0 0.0
        %1685 = vmatpush.msra.mxu0 0.0
        %1686 = vmatpush.msra.mxu0 0.0
        %1687 = vmatpush.msra.mxu0 0.0
        %1688 = vmatpush.msra.mxu0 0.0
        %1689 = vmatpush.msra.mxu0 0.0
        %1690 = vmatpush.msra.mxu0 0.0
        %1691 = vmatpush.msra.mxu0 0.0
        %1692 = vmatpush.msra.mxu0 0.0
        %1693 = vmatpush.msra.mxu0 %v1673
        %1694 = vmatmul.f32.gmra.mxu0 %v1676
        %v1695 = vpop.f32.mrf.mxu0
        %v1696 = vadd.f32 0.0, %v1695
        %1697 = vdwg.mxu0
        %1698 = vrot.lane.b32.xlu0 %v1407, 80
        %v1699 = vpop.permute.xlu0 %1698
        %1700 = vrot.lane.b32.xlu0 %v1460, 80
        %v1701 = vpop.permute.xlu0 %1700
        %v1702 = vsel %vm931, %v1699, 0
        %v1704 = vsel %vm931, %v1701, 0
        %1706 = vmatpush.xpose.msra.mxu0 0.0
        %1707 = vmatpush.xpose.msra.mxu0 0.0
        %1708 = vmatpush.xpose.msra.mxu0 0.0
        %1709 = vmatpush.xpose.msra.mxu0 0.0
        %1710 = vmatpush.xpose.msra.mxu0 0.0
        %1711 = vmatpush.xpose.msra.mxu0 0.0
        %1712 = vmatpush.xpose.msra.mxu0 0.0
        %1713 = vmatpush.xpose.msra.mxu0 0.0
        %1714 = vmatpush.xpose.msra.mxu0 0.0
        %1715 = vmatpush.xpose.msra.mxu0 0.0
        %1716 = vmatpush.xpose.msra.mxu0 0.0
        %1717 = vmatpush.xpose.msra.mxu0 0.0
        %1718 = vmatpush.xpose.msra.mxu0 0.0
        %1719 = vmatpush.xpose.msra.mxu0 0.0
        %1720 = vmatpush.xpose.msra.mxu0 0.0
        %1721 = vmatpush.xpose.msra.mxu0 %v1704
        %1722 = vmatmul.f32.gmra.mxu0 %v1702
        %v1723 = vpop.f32.mrf.mxu0
        %v1724 = vadd.f32 0.0, %v1723
        %1725 = vdwg.mxu0
        %v1726 = vmul.f32 %v1724, 0.25
        %v1727 = vsel %vm958, %v1726, -inf
        %1728 = vmax.xlane.f32.xlu0 %v1727
        %v1729 = vpop.xlane.xlu0 %1728
        %v1730 = vsub.f32 %v1726, %v1729
        %v1731 = vmul.f32 %v1730, 1.442695
        %v1732 = vpow.pop %v1731
        %v1733 = vsel %vm958, %v1732, 0.0
        %1734 = vadd.xlane.f32.xlu0 %v1733
        %v1735 = vpop.xlane.xlu0 %1734
        %v1736 = vrcp.pop %v1735
        %v1737 = vmul.f32 %v1735, %v1736
        %v1738 = vsub.f32 1.0, %v1737
        %v1739 = vmul.f32 %v1736, %v1738
        %v1740 = vadd.f32 %v1736, %v1739
        %vm1741 = vweird.f32 %v1735
        %vm1742 = vweird.f32 %v1736
        %vm1743 = vmor %vm1741, %vm1742
        %v1744 = vsel %vm1743, %v1736, %v1740
        %v1745 = vand.u32 2147483647, %v1735
        %vm1746 = vcmp.eq.f32.partialorder %v1745, 8.507059e+37
        %v1747 = vand.u32 %v1735, 2147483648
        %v1748 = vor.u32 1.1754944e-38, %v1747
        %v1749 = vsel %vm1746, %v1748, %v1744
        %v1750 = vmul.f32 %v1732, %v1749
        %1751 = vrot.lane.b32.xlu0 %v1460, 16
        %v1752 = vpop.permute.xlu0 %1751
        %v1755 = vsel %vm958, %v1750, 0
        %1757 = vmatpush.msra.mxu0 0.0
        %1758 = vmatpush.msra.mxu0 0.0
        %1759 = vmatpush.msra.mxu0 0.0
        %1760 = vmatpush.msra.mxu0 0.0
        %1761 = vmatpush.msra.mxu0 0.0
        %1762 = vmatpush.msra.mxu0 0.0
        %1763 = vmatpush.msra.mxu0 0.0
        %1764 = vmatpush.msra.mxu0 0.0
        %1765 = vmatpush.msra.mxu0 0.0
        %1766 = vmatpush.msra.mxu0 0.0
        %1767 = vmatpush.msra.mxu0 0.0
        %1768 = vmatpush.msra.mxu0 0.0
        %1769 = vmatpush.msra.mxu0 0.0
        %1770 = vmatpush.msra.mxu0 0.0
        %1771 = vmatpush.msra.mxu0 0.0
        %1772 = vmatpush.msra.mxu0 %v1752
        %1773 = vmatmul.f32.gmra.mxu0 %v1755
        %v1774 = vpop.f32.mrf.mxu0
        %v1775 = vadd.f32 0.0, %v1774
        %1776 = vdwg.mxu0
        %1778 = vrot.lane.b32.xlu0 %v1617, 16
        %v1779 = vpop.permute.xlu0 %1778
        %1782 = vrot.lane.b32.xlu0 %v1696, 32
        %v1783 = vpop.permute.xlu0 %1782
        %1786 = vrot.lane.b32.xlu0 %v1775, 48
        %v1787 = vpop.permute.xlu0 %1786
        %v1789 = vsel %vm931, %v1538, %v1779
        %v1790 = vsel %vm1260, %v1789, %v1783
        %v1791 = vsel %vm1262, %v1790, %v1787
        %v1792 = vpack.c.bf16 %v1791, %v1791
        %v1793 = vld [vmem:[#allocation7] sm:$0xf]
        %v1794 = vld [vmem:[#allocation7 + $0x4] sm:$0xf]
        %v1795 = vld [vmem:[#allocation7 + $0x8] sm:$0xf]
        %v1796 = vld [vmem:[#allocation7 + $0xc] sm:$0xf]
        %v1797 = vld [vmem:[#allocation7 + $0x10] sm:$0xf]
        %v1798 = vld [vmem:[#allocation7 + $0x14] sm:$0xf]
        %v1799 = vld [vmem:[#allocation7 + $0x18] sm:$0xf]
        %v1800 = vld [vmem:[#allocation7 + $0x1c] sm:$0xf]
        %v1801 = vld [vmem:[%s13] sm:$0x1]
        %v1803 = vperm.slane %v1801, 0
        %v1813 = vunpack.c.l.b16 %v1793
        %v1814 = vunpack.c.l.b16 %v1794
        %v1815 = vunpack.c.l.b16 %v1795
        %v1816 = vunpack.c.l.b16 %v1796
        %v1817 = vunpack.c.l.b16 %v1797
        %v1818 = vunpack.c.l.b16 %v1798
        %v1819 = vunpack.c.l.b16 %v1799
        %v1820 = vunpack.c.l.b16 %v1800
        %v1821 = vpack.c.b16 %v1814, %v1813
        %v1822 = vpack.c.b16 %v1816, %v1815
        %v1823 = vpack.c.b16 %v1818, %v1817
        %v1824 = vpack.c.b16 %v1820, %v1819
        %v1830 = vsel %vm893, %v1792, 0
        %1832 = vmatpush.bf16.msra.mxu0 0
        %1833 = vmatpush.bf16.msra.mxu0 0
        %1834 = vmatpush.bf16.msra.mxu0 0
        %1835 = vmatpush.bf16.msra.mxu0 0
        %1836 = vmatpush.bf16.msra.mxu0 %v1824
        %1837 = vmatpush.bf16.msra.mxu0 %v1823
        %1838 = vmatpush.bf16.msra.mxu0 %v1822
        %1839 = vmatpush.bf16.msra.mxu0 %v1821
        %1840 = vmatmul.bf16.gmra.mxu0 %v1830
        %v1841 = vpop.f32.mrf.mxu0
        %v1842 = vadd.f32 %v1803, %v1841
        %v1843 = vpop.f32.mrf.mxu0
        %1844 = vdwg.mxu0
        %v1845 = vadd.f32 %v1356, %v1842
        %v1846 = vsel %vm893, %v1845, 0.0
        %1847 = vadd.xlane.f32.xlu0 %v1846
        %v1848 = vpop.xlane.xlu0 %1847
        %v1849 = vmul.f32 %v1848, %v1327
        %v1850 = vsub.f32 %v1845, %v1849
        %v1851 = vmul.f32 %v1850, %v1850
        %v1852 = vsel %vm893, %v1851, 0.0
        %1853 = vadd.xlane.f32.xlu0 %v1852
        %v1854 = vpop.xlane.xlu0 %1853
        %v1855 = vmul.f32 %v1854, %v1327
        %v1856 = vadd.f32 %v1855, 1e-05
        %v1857 = vrsqrt.pop %v1856
        %v1858 = vmul.f32 %v1857, %v1856
        %v1859 = vmul.f32 %v1858, %v1857
        %v1860 = vmul.f32 0.5, %v1859
        %v1861 = vsub.f32 1.5, %v1860
        %v1862 = vmul.f32 %v1857, %v1861
        %vm1863 = vweird.f32 %v1856
        %vm1864 = vweird.f32 %v1857
        %vm1865 = vmor %vm1863, %vm1864
        %v1866 = vsel %vm1865, %v1857, %v1862
        %v1867 = vmul.f32 %v1850, %v1866
        %v1868 = vld [vmem:[#allocation9] sm:$0x1]
        %v1870 = vperm.slane %v1868, 0
        %v1872 = vmul.f32 %v1867, %v1870
        %v1873 = vld [vmem:[#allocation10] sm:$0x1]
        %v1875 = vperm.slane %v1873, 0
        %v1877 = vadd.f32 %v1872, %v1875
        %v1878 = vpack.c.bf16 %v1877, %v1877
        %v1879 = vld [vmem:[%s16] sm:$0xff]
        %v1880 = vld [vmem:[%s16 + $0x8] sm:$0xff]
        %v1881 = vld [vmem:[%s16 + $0x10] sm:$0xff]
        %v1882 = vld [vmem:[%s16 + $0x18] sm:$0xff]
        %v1883 = vld [vmem:[%s16 + $0x20] sm:$0xff]
        %v1884 = vld [vmem:[%s16 + $0x28] sm:$0xff]
        %v1885 = vld [vmem:[%s16 + $0x30] sm:$0xff]
        %v1886 = vld [vmem:[%s16 + $0x38] sm:$0xff]
        %v1887 = vld [vmem:[%s17] sm:$0x3]
        %v1889 = vperm.slane %v1887, 0
        %v1890 = vperm.slane %v1887, 1
        %v1901 = vunpack.c.l.b16 %v1879
        %v1902 = vunpack.c.h.b16 %v1879
        %v1903 = vunpack.c.l.b16 %v1880
        %v1904 = vunpack.c.h.b16 %v1880
        %v1905 = vunpack.c.l.b16 %v1881
        %v1906 = vunpack.c.h.b16 %v1881
        %v1907 = vunpack.c.l.b16 %v1882
        %v1908 = vunpack.c.h.b16 %v1882
        %v1909 = vunpack.c.l.b16 %v1883
        %v1910 = vunpack.c.h.b16 %v1883
        %v1911 = vunpack.c.l.b16 %v1884
        %v1912 = vunpack.c.h.b16 %v1884
        %v1913 = vunpack.c.l.b16 %v1885
        %v1914 = vunpack.c.h.b16 %v1885
        %v1915 = vunpack.c.l.b16 %v1886
        %v1916 = vunpack.c.h.b16 %v1886
        %v1917 = vpack.c.b16 %v1903, %v1901
        %v1918 = vpack.c.b16 %v1904, %v1902
        %v1919 = vpack.c.b16 %v1907, %v1905
        %v1920 = vpack.c.b16 %v1908, %v1906
        %v1921 = vpack.c.b16 %v1911, %v1909
        %v1922 = vpack.c.b16 %v1912, %v1910
        %v1923 = vpack.c.b16 %v1915, %v1913
        %v1924 = vpack.c.b16 %v1916, %v1914
        %v1934 = vsel %vm893, %v1878, 0
        %1936 = vmatpush.bf16.msra.mxu0 0
        %1937 = vmatpush.bf16.msra.mxu0 0
        %1938 = vmatpush.bf16.msra.mxu0 0
        %1939 = vmatpush.bf16.msra.mxu0 0
        %1940 = vmatpush.bf16.msra.mxu0 %v1923
        %1941 = vmatpush.bf16.msra.mxu0 %v1921
        %1942 = vmatpush.bf16.msra.mxu0 %v1919
        %1943 = vmatpush.bf16.msra.mxu0 %v1917
        %1944 = vmatmul.bf16.gmra.mxu0 %v1934
        %v1945 = vpop.f32.mrf.mxu0
        %v1946 = vadd.f32 %v1889, %v1945
        %v1947 = vpop.f32.mrf.mxu0
        %1948 = vdwg.mxu0
        %1949 = vmatpush.bf16.msra.mxu0 0
        %1950 = vmatpush.bf16.msra.mxu0 0
        %1951 = vmatpush.bf16.msra.mxu0 0
        %1952 = vmatpush.bf16.msra.mxu0 0
        %1953 = vmatpush.bf16.msra.mxu0 %v1924
        %1954 = vmatpush.bf16.msra.mxu0 %v1922
        %1955 = vmatpush.bf16.msra.mxu0 %v1920
        %1956 = vmatpush.bf16.msra.mxu0 %v1918
        %1957 = vmatmul.bf16.gmra.mxu0 %v1934
        %v1958 = vpop.f32.mrf.mxu0
        %v1959 = vadd.f32 %v1890, %v1958
        %v1960 = vpop.f32.mrf.mxu0
        %1961 = vdwg.mxu0
        %v1962 = vmax.f32 %v1946, 0.0
        %v1963 = vmax.f32 %v1959, 0.0
        %v1964 = vpack.c.bf16 %v1962, %v1962
        %v1965 = vpack.c.bf16 %v1963, %v1963
        %v1966 = vld [vmem:[%s18] sm:$0xf]
        %v1967 = vld [vmem:[%s18 + $0x4] sm:$0xf]
        %v1968 = vld [vmem:[%s18 + $0x8] sm:$0xf]
        %v1969 = vld [vmem:[%s18 + $0xc] sm:$0xf]
        %v1970 = vld [vmem:[%s18 + $0x10] sm:$0xf]
        %v1971 = vld [vmem:[%s18 + $0x14] sm:$0xf]
        %v1972 = vld [vmem:[%s18 + $0x18] sm:$0xf]
        %v1973 = vld [vmem:[%s18 + $0x1c] sm:$0xf]
        %v1974 = vld [vmem:[%s18 + $0x20] sm:$0xf]
        %v1975 = vld [vmem:[%s18 + $0x24] sm:$0xf]
        %v1976 = vld [vmem:[%s18 + $0x28] sm:$0xf]
        %v1977 = vld [vmem:[%s18 + $0x2c] sm:$0xf]
        %v1978 = vld [vmem:[%s18 + $0x30] sm:$0xf]
        %v1979 = vld [vmem:[%s18 + $0x34] sm:$0xf]
        %v1980 = vld [vmem:[%s18 + $0x38] sm:$0xf]
        %v1981 = vld [vmem:[%s18 + $0x3c] sm:$0xf]
        %v1982 = vld [vmem:[%s18 + $0x40] sm:$0xf]
        %v1983 = vld [vmem:[%s18 + $0x44] sm:$0xf]
        %v1984 = vld [vmem:[%s18 + $0x48] sm:$0xf]
        %v1985 = vld [vmem:[%s18 + $0x4c] sm:$0xf]
        %v1986 = vld [vmem:[%s18 + $0x50] sm:$0xf]
        %v1987 = vld [vmem:[%s18 + $0x54] sm:$0xf]
        %v1988 = vld [vmem:[%s18 + $0x58] sm:$0xf]
        %v1989 = vld [vmem:[%s18 + $0x5c] sm:$0xf]
        %v1990 = vld [vmem:[%s18 + $0x60] sm:$0xf]
        %v1991 = vld [vmem:[%s18 + $0x64] sm:$0xf]
        %v1992 = vld [vmem:[%s18 + $0x68] sm:$0xf]
        %v1993 = vld [vmem:[%s18 + $0x6c] sm:$0xf]
        %v1994 = vld [vmem:[%s18 + $0x70] sm:$0xf]
        %v1995 = vld [vmem:[%s18 + $0x74] sm:$0xf]
        %v1996 = vld [vmem:[%s18 + $0x78] sm:$0xf]
        %v1997 = vld [vmem:[%s18 + $0x7c] sm:$0xf]
        %v1998 = vld [vmem:[#allocation12] sm:$0x1]
        %v2000 = vperm.slane %v1998, 0
        %v2034 = vunpack.c.l.b16 %v1966
        %v2035 = vunpack.c.l.b16 %v1967
        %v2036 = vunpack.c.l.b16 %v1968
        %v2037 = vunpack.c.l.b16 %v1969
        %v2038 = vunpack.c.l.b16 %v1970
        %v2039 = vunpack.c.l.b16 %v1971
        %v2040 = vunpack.c.l.b16 %v1972
        %v2041 = vunpack.c.l.b16 %v1973
        %v2042 = vunpack.c.l.b16 %v1974
        %v2043 = vunpack.c.l.b16 %v1975
        %v2044 = vunpack.c.l.b16 %v1976
        %v2045 = vunpack.c.l.b16 %v1977
        %v2046 = vunpack.c.l.b16 %v1978
        %v2047 = vunpack.c.l.b16 %v1979
        %v2048 = vunpack.c.l.b16 %v1980
        %v2049 = vunpack.c.l.b16 %v1981
        %v2050 = vunpack.c.l.b16 %v1982
        %v2051 = vunpack.c.l.b16 %v1983
        %v2052 = vunpack.c.l.b16 %v1984
        %v2053 = vunpack.c.l.b16 %v1985
        %v2054 = vunpack.c.l.b16 %v1986
        %v2055 = vunpack.c.l.b16 %v1987
        %v2056 = vunpack.c.l.b16 %v1988
        %v2057 = vunpack.c.l.b16 %v1989
        %v2058 = vunpack.c.l.b16 %v1990
        %v2059 = vunpack.c.l.b16 %v1991
        %v2060 = vunpack.c.l.b16 %v1992
        %v2061 = vunpack.c.l.b16 %v1993
        %v2062 = vunpack.c.l.b16 %v1994
        %v2063 = vunpack.c.l.b16 %v1995
        %v2064 = vunpack.c.l.b16 %v1996
        %v2065 = vunpack.c.l.b16 %v1997
        %v2066 = vpack.c.b16 %v2035, %v2034
        %v2067 = vpack.c.b16 %v2037, %v2036
        %v2068 = vpack.c.b16 %v2039, %v2038
        %v2069 = vpack.c.b16 %v2041, %v2040
        %v2070 = vpack.c.b16 %v2043, %v2042
        %v2071 = vpack.c.b16 %v2045, %v2044
        %v2072 = vpack.c.b16 %v2047, %v2046
        %v2073 = vpack.c.b16 %v2049, %v2048
        %v2074 = vpack.c.b16 %v2051, %v2050
        %v2075 = vpack.c.b16 %v2053, %v2052
        %v2076 = vpack.c.b16 %v2055, %v2054
        %v2077 = vpack.c.b16 %v2057, %v2056
        %v2078 = vpack.c.b16 %v2059, %v2058
        %v2079 = vpack.c.b16 %v2061, %v2060
        %v2080 = vpack.c.b16 %v2063, %v2062
        %v2081 = vpack.c.b16 %v2065, %v2064
        %2098 = vmatpush.bf16.msra.mxu0 %v2073
        %2099 = vmatpush.bf16.msra.mxu0 %v2072
        %2100 = vmatpush.bf16.msra.mxu0 %v2071
        %2101 = vmatpush.bf16.msra.mxu0 %v2070
        %2102 = vmatpush.bf16.msra.mxu0 %v2069
        %2103 = vmatpush.bf16.msra.mxu0 %v2068
        %2104 = vmatpush.bf16.msra.mxu0 %v2067
        %2105 = vmatpush.bf16.msra.mxu0 %v2066
        %2106 = vmatmul.bf16.gmra.mxu0 %v1964
        %v2107 = vpop.f32.mrf.mxu0
        %v2108 = vadd.f32 %v2000, %v2107
        %v2109 = vpop.f32.mrf.mxu0
        %2110 = vdwg.mxu0
        %2111 = vmatpush.bf16.msra.mxu0 %v2081
        %2112 = vmatpush.bf16.msra.mxu0 %v2080
        %2113 = vmatpush.bf16.msra.mxu0 %v2079
        %2114 = vmatpush.bf16.msra.mxu0 %v2078
        %2115 = vmatpush.bf16.msra.mxu0 %v2077
        %2116 = vmatpush.bf16.msra.mxu0 %v2076
        %2117 = vmatpush.bf16.msra.mxu0 %v2075
        %2118 = vmatpush.bf16.msra.mxu0 %v2074
        %2119 = vmatmul.bf16.gmra.mxu0 %v1965
        %v2120 = vpop.f32.mrf.mxu0
        %v2121 = vadd.f32 %v2108, %v2120
        %v2122 = vpop.f32.mrf.mxu0
        %2123 = vdwg.mxu0
        %v2124 = vadd.f32 %v1877, %v2121
        %v2125 = vsel %vm893, %v2124, 0.0
        %2126 = vadd.xlane.f32.xlu0 %v2125
        %v2127 = vpop.xlane.xlu0 %2126
        %v2128 = vmul.f32 %v2127, %v1327
        %v2129 = vsub.f32 %v2124, %v2128
        %v2130 = vmul.f32 %v2129, %v2129
        %v2131 = vsel %vm893, %v2130, 0.0
        %2132 = vadd.xlane.f32.xlu0 %v2131
        %v2133 = vpop.xlane.xlu0 %2132
        %v2134 = vmul.f32 %v2133, %v1327
        %v2135 = vadd.f32 %v2134, 1e-05
        %v2136 = vrsqrt.pop %v2135
        %v2137 = vmul.f32 %v2136, %v2135
        %v2138 = vmul.f32 %v2137, %v2136
        %v2139 = vmul.f32 0.5, %v2138
        %v2140 = vsub.f32 1.5, %v2139
        %v2141 = vmul.f32 %v2136, %v2140
        %vm2142 = vweird.f32 %v2135
        %vm2143 = vweird.f32 %v2136
        %vm2144 = vmor %vm2142, %vm2143
        %v2145 = vsel %vm2144, %v2136, %v2141
        %v2146 = vmul.f32 %v2129, %v2145
        %v2147 = vld [vmem:[#allocation13] sm:$0x1]
        %v2149 = vperm.slane %v2147, 0
        %v2151 = vmul.f32 %v2146, %v2149
        %v2152 = vld [vmem:[#allocation15] sm:$0x1]
        %v2154 = vperm.slane %v2152, 0
        %v2156 = vadd.f32 %v2151, %v2154
        %2157 = vst.msk [vmem:[%s834] sm:$0xff] %vm893, %v2156
        %p2158 = scmp.lt.s32.totalorder %s38, 1
        %s2159 = scalar_select %p2158, %s38, 1
        %s2160 = smul.addr %s2159, 8
        %s2161 = scalar_lea.vmem %s22, %s2160
        // Predicated region
        $region145: #{transformer_forward.10} parent=107 // pred_check
          %p2162 = pneg %p528
        $region146: #{transformer_forward.10} parent=107 // pred_check_branch
          %2164 = sbr.rel (%p2162) target = $region148
        $region147: #{transformer_forward.10} parent=107 // pred_region
          _
        $region148: #{transformer_forward.10} parent=107 // pred_fallthru
          _
      $region108: #{transformer_forward.10} parent=5 // pred_fallthru
        _
      %p2165 = scmp.le.s32.totalorder 2, %s33
      // Predicated region
      $region149: #{transformer_forward.10} parent=5 // pred_check
        %p2166 = pneg %p2165
      $region150: #{transformer_forward.10} parent=5 // pred_check_branch
        %2168 = sbr.rel (%p2166) target = $region152
      $region151: #{transformer_forward.10} parent=5 // pred_region
        %s2169 = ssub.s32 %s33, 2
        // Predicated region
        $region153: #{transformer_forward.10} parent=151 // pred_check
          %p2170 = pneg %p534
        $region154: #{transformer_forward.10} parent=151 // pred_check_branch
          %2172 = sbr.rel (%p2170) target = $region156
        $region155: #{transformer_forward.10} parent=151 // pred_region
          %p2173 = scmp.lt.s32.totalorder %s39, 1
          %s2174 = scalar_select %p2173, %s39, 1
          %s2175 = smul.addr %s2174, 8
          %s2176 = scalar_lea.vmem %s22, %s2175
        $region156: #{transformer_forward.10} parent=151 // pred_fallthru
          _
      $region152: #{transformer_forward.10} parent=5 // pred_fallthru
        _
    $region6: #{transformer_forward.10} parent=1 // loop_footer
      %s37 = sadd.s32 1, %s33
    $region7: #{transformer_forward.10} parent=1 // loop_footer_branch
      %32 = sbr.rel target = $region3
    $region8: #{transformer_forward.10} parent=1 // loop_exit
      _
    %2177 = vsyncpa [#allocation3], 1
    %s2178 = scalar_lea.sflag [#allocation3], 1
    %2179 = vsyncpa %s2178, 1
    %2180 = vsyncpa [#allocation5], 1
    %2181 = vsyncpa [#allocation8], 1
    %2182 = vsyncpa [#allocation11], 1
    %2183 = vsyncpa [#allocation14], 1

// kernel: transformer_forward.11
$region0: #{transformer_forward.11}
  #allocation0 [shape = 'u32[]', space=smem, size = 0x4, offset = 0x4, fixed_abs, tag = 'smem constant byte address 0x4 - core index']
  #allocation1 [shape = 'u32[72,128]{1,0:T(1,128)}', space=vmem, size = 0x9000, scoped, tag = 'internal scratch']
  %s0 = inlined_call_operand.vmem [shape: f32[2,8,64], index: 0, kind: input, shape index: {}]
  %s1 = inlined_call_operand.vmem [shape: f32[2,8,64], index: 1, kind: input, shape index: {}]
  %s2 = inlined_call_operand.vmem [shape: bf16[64,192], index: 2, kind: input, shape index: {}]
  %s3 = inlined_call_operand.vmem [shape: f32[1,192], index: 3, kind: input, shape index: {}]
  %s4 = inlined_call_operand.vmem [shape: bf16[64,64], index: 4, kind: input, shape index: {}]
  %s5 = inlined_call_operand.hbm [shape: f32[1,64], index: 5, kind: input, shape index: {}]
  %s6 = inlined_call_operand.hbm [shape: f32[1,64], index: 6, kind: input, shape index: {}]
  %s7 = inlined_call_operand.hbm [shape: f32[1,64], index: 7, kind: input, shape index: {}]
  %s8 = inlined_call_operand.vmem [shape: bf16[64,64], index: 8, kind: input, shape index: {}]
  %s9 = inlined_call_operand.hbm [shape: f32[1,64], index: 9, kind: input, shape index: {}]
  %s10 = inlined_call_operand.hbm [shape: bf16[64,128], index: 10, kind: input, shape index: {}]
  %s11 = inlined_call_operand.hbm [shape: f32[1,128], index: 11, kind: input, shape index: {}]
  %s12 = inlined_call_operand.hbm [shape: bf16[64,64], index: 12, kind: input, shape index: {}]
  %s13 = inlined_call_operand.hbm [shape: f32[1,64], index: 13, kind: input, shape index: {}]
  %s14 = inlined_call_operand.hbm [shape: f32[1,64], index: 14, kind: input, shape index: {}]
  %s15 = inlined_call_operand.hbm [shape: f32[1,64], index: 15, kind: input, shape index: {}]
  %s16 = inlined_call_operand.vmem [shape: bf16[64,256], index: 16, kind: input, shape index: {}]
  %s17 = inlined_call_operand.vmem [shape: f32[1,256], index: 17, kind: input, shape index: {}]
  %s18 = inlined_call_operand.vmem [shape: bf16[256,64], index: 18, kind: input, shape index: {}]
  %s19 = inlined_call_operand.hbm [shape: f32[1,64], index: 19, kind: input, shape index: {}]
  %s20 = inlined_call_operand.hbm [shape: f32[1,64], index: 20, kind: input, shape index: {}]
  %s21 = inlined_call_operand.hbm [shape: f32[1,64], index: 21, kind: input, shape index: {}]
  %s22 = inlined_call_operand.hbm [shape: f32[2,8,64], index: 22, kind: output, shape index: {}]
  %s23 = sld [smem:[#allocation0]]
  $region173: #{transformer_forward.11} parent=0
    _
  %s25 = ssub.s32 1, %s23
  %s26 = scalar_select 0, %s25, %s23
  $region1: #{transformer_forward.11} parent=0
    #allocation2 [shape = 'u8[512]{0}', space=vmem, size = 0x400, scoped, tag = 'input window, operand 5, single buffered']
    #allocation3 [shape = 's32[2]{0}', space=sflag, size = 0x8, scoped, tag = 'scoped memory for transformer_forward.11']
    #allocation4 [shape = 's32[2]{0}', space=sflag, size = 0x8, scoped, tag = 'scoped memory for transformer_forward.11']
    #allocation5 [shape = 'u8[512]{0}', space=vmem, size = 0x400, scoped, tag = 'input window, operand 6, single buffered']
    #allocation6 [shape = 's32[1]{0}', space=sflag, size = 0x4, scoped, tag = 'scoped memory for transformer_forward.11']
    #allocation7 [shape = 'u8[512]{0}', space=vmem, size = 0x400, scoped, tag = 'input window, operand 7, single buffered']
    #allocation8 [shape = 'u8[512]{0}', space=vmem, size = 0x400, scoped, tag = 'input window, operand 9, single buffered']
    #allocation9 [shape = 's32[1]{0}', space=sflag, size = 0x4, scoped, tag = 'scoped memory for transformer_forward.11']
    #allocation10 [shape = 'u8[16384]{0}', space=vmem, size = 0x4000, scoped, tag = 'input window, operand 10, single buffered']
    #allocation11 [shape = 'u8[512]{0}', space=vmem, size = 0x400, scoped, tag = 'input window, operand 11, single buffered']
    #allocation12 [shape = 's32[1]{0}', space=sflag, size = 0x4, scoped, tag = 'scoped memory for transformer_forward.11']
    #allocation13 [shape = 'u8[16384]{0}', space=vmem, size = 0x4000, scoped, tag = 'input window, operand 12, single buffered']
    #allocation14 [shape = 'u8[512]{0}', space=vmem, size = 0x400, scoped, tag = 'input window, operand 13, single buffered']
    #allocation15 [shape = 's32[1]{0}', space=sflag, size = 0x4, scoped, tag = 'scoped memory for transformer_forward.11']
    #allocation16 [shape = 'u8[512]{0}', space=vmem, size = 0x400, scoped, tag = 'input window, operand 14, single buffered']
    #allocation17 [shape = 'u8[512]{0}', space=vmem, size = 0x400, scoped, tag = 'input window, operand 15, single buffered']
    #allocation18 [shape = 's32[1]{0}', space=sflag, size = 0x4, scoped, tag = 'scoped memory for transformer_forward.11']
    #allocation19 [shape = 'u8[512]{0}', space=vmem, size = 0x400, scoped, tag = 'input window, operand 19, single buffered']
    #allocation20 [shape = 'u8[512]{0}', space=vmem, size = 0x400, scoped, tag = 'input window, operand 20, single buffered']
    #allocation21 [shape = 's32[1]{0}', space=sflag, size = 0x4, scoped, tag = 'scoped memory for transformer_forward.11']
    #allocation22 [shape = 'u8[512]{0}', space=vmem, size = 0x400, scoped, tag = 'input window, operand 21, single buffered']
    #allocation23 [shape = 'u8[8192]{0}', space=vmem, size = 0x2000, scoped, tag = 'output window, operand 0']
    %27 = vsyncpa [#allocation3], 0
    %28 = vsyncpa [#allocation6], 0
    %29 = vsyncpa [#allocation9], 0
    %30 = vsyncpa [#allocation12], 0
    %31 = vsyncpa [#allocation15], 0
    %32 = vsyncpa [#allocation18], 0
    %33 = vsyncpa [#allocation21], 0
    %34 = vsyncpa [#allocation4], 0
    %s35 = scalar_lea.sflag [#allocation4], 1
    %36 = vsyncpa %s35, 0
    loop: start=0, step=1, limit=4
    $region2: #{transformer_forward.11} parent=1 // loop_pre_header
      _
    $region3: #{transformer_forward.11} parent=1 // loop_header
      %s38 = sphi 0, %s42
      %p39 = scmp.ge.s32.totalorder %s38, 4
      %s48 = sphi 0, %s50
      %s51 = sphi 0, %s48
      %s52 = sphi 0, %s51
      %s68 = sphi 0, %s52
      %s74 = sphi 0, %s76
      %s77 = sphi 0, %s74
      %s78 = sphi 0, %s77
      %s94 = sphi 0, %s78
      %s98 = sphi 0, %s98
      %s100 = sphi 0, %s98
      %s101 = sphi 0, %s100
      %s115 = sphi 0, %s101
      %s119 = sphi 0, %s119
      %s121 = sphi 0, %s119
      %s122 = sphi 0, %s121
      %s136 = sphi 0, %s122
      %s140 = sphi 0, %s140
      %s142 = sphi 0, %s140
      %s143 = sphi 0, %s142
      %s157 = sphi 0, %s143
      %s161 = sphi 0, %s161
      %s163 = sphi 0, %s161
      %s164 = sphi 0, %s163
      %s178 = sphi 0, %s164
      %s182 = sphi 0, %s182
      %s184 = sphi 0, %s182
      %s185 = sphi 0, %s184
      %s199 = sphi 0, %s185
      %s203 = sphi 0, %s203
      %s205 = sphi 0, %s203
      %s206 = sphi 0, %s205
      %s220 = sphi 0, %s206
      %s224 = sphi 0, %s224
      %s226 = sphi 0, %s224
      %s227 = sphi 0, %s226
      %s241 = sphi 0, %s227
      %s245 = sphi 0, %s245
      %s247 = sphi 0, %s245
      %s248 = sphi 0, %s247
      %s262 = sphi 0, %s248
      %s266 = sphi 0, %s266
      %s268 = sphi 0, %s266
      %s269 = sphi 0, %s268
      %s283 = sphi 0, %s269
      %s287 = sphi 0, %s287
      %s289 = sphi 0, %s287
      %s290 = sphi 0, %s289
      %s304 = sphi 0, %s290
      %s308 = sphi 0, %s308
      %s310 = sphi 0, %s308
      %s311 = sphi 0, %s310
      %s325 = sphi 0, %s311
      %s329 = sphi 0, %s329
      %s331 = sphi 0, %s329
      %s332 = sphi 0, %s331
      %s346 = sphi 0, %s332
      %s350 = sphi 0, %s350
      %s352 = sphi 0, %s350
      %s353 = sphi 0, %s352
      %s367 = sphi 0, %s353
      %s371 = sphi 0, %s371
      %s373 = sphi 0, %s371
      %s374 = sphi 0, %s373
      %s388 = sphi 0, %s374
      %s392 = sphi 0, %s392
      %s394 = sphi 0, %s392
      %s395 = sphi 0, %s394
      %s409 = sphi 0, %s395
      %s413 = sphi 0, %s413
      %s415 = sphi 0, %s413
      %s416 = sphi 0, %s415
      %s430 = sphi 0, %s416
      %s434 = sphi 0, %s434
      %s436 = sphi 0, %s434
      %s437 = sphi 0, %s436
      %s451 = sphi 0, %s437
      %s455 = sphi 0, %s455
      %s457 = sphi 0, %s455
      %s458 = sphi 0, %s457
      %s472 = sphi 0, %s458
      %s476 = sphi 0, %s476
      %s478 = sphi 0, %s476
      %s479 = sphi 0, %s478
      %s493 = sphi 0, %s479
      %s497 = sphi 0, %s497
      %s499 = sphi 0, %s497
      %s500 = sphi 0, %s499
      %s514 = sphi 0, %s500
      %s520 = sphi 0, %s522
      %s523 = sphi 0, %s520
      %s524 = sphi 0, %s523
      %s540 = sphi 0, %s524
    $region4: #{transformer_forward.11} parent=1 // loop_header_branch
      %41 = sbr.rel (%p39) target = $region8
    $region5: #{transformer_forward.11} parent=1 // loop_body
      %s43 = ssub.s32 %s38, 1
      %s44 = ssub.s32 %s38, 2
      %s45 = sadd.s32 %s38, 1
      %s46 = ssub.s32 %s38, %s45
      %p47 = scmp.eq.s32.totalorder %s46, 0
      %s49 = sadd.s32 %s48, 1
      %s50 = scalar_select %p47, %s48, %s49
      %p53 = pneg %p47
      %p54 = scmp.eq.s32.totalorder %s38, 1
      %p55 = por %p53, %p54
      %p56 = scmp.ne.s32.totalorder %s48, %s51
      %p57 = scmp.eq.s32.totalorder %s38, 0
      %p58 = por %p56, %p57
      %p59 = scmp.ne.s32.totalorder %s48, %s51
      %p60 = scmp.eq.s32.totalorder %s43, 1
      %p61 = por %p59, %p60
      %p62 = scmp.ne.s32.totalorder %s51, %s52
      %p63 = scmp.eq.s32.totalorder %s43, 0
      %p64 = por %p62, %p63
      %p65 = scmp.ne.s32.totalorder %s51, %s52
      %p66 = scmp.eq.s32.totalorder %s44, 1
      %p67 = por %p65, %p66
      %p69 = scmp.ne.s32.totalorder %s52, %s68
      %p70 = scmp.eq.s32.totalorder %s44, 0
      %p71 = por %p69, %p70
      %s72 = ssub.s32 %s38, %s45
      %p73 = scmp.eq.s32.totalorder %s72, 0
      %s75 = sadd.s32 %s74, 1
      %s76 = scalar_select %p73, %s74, %s75
      %p79 = pneg %p73
      %p80 = scmp.eq.s32.totalorder %s38, 1
      %p81 = por %p79, %p80
      %p82 = scmp.ne.s32.totalorder %s74, %s77
      %p83 = scmp.eq.s32.totalorder %s38, 0
      %p84 = por %p82, %p83
      %p85 = scmp.ne.s32.totalorder %s74, %s77
      %p86 = scmp.eq.s32.totalorder %s43, 1
      %p87 = por %p85, %p86
      %p88 = scmp.ne.s32.totalorder %s77, %s78
      %p89 = scmp.eq.s32.totalorder %s43, 0
      %p90 = por %p88, %p89
      %p91 = scmp.ne.s32.totalorder %s77, %s78
      %p92 = scmp.eq.s32.totalorder %s44, 1
      %p93 = por %p91, %p92
      %p95 = scmp.ne.s32.totalorder %s78, %s94
      %p96 = scmp.eq.s32.totalorder %s44, 0
      %p97 = por %p95, %p96
      %s99 = sadd.s32 %s98, 1
      %p102 = scmp.eq.s32.totalorder %s38, 1
      %p103 = scmp.ne.s32.totalorder %s98, %s100
      %p104 = scmp.eq.s32.totalorder %s38, 0
      %p105 = por %p103, %p104
      %p106 = scmp.ne.s32.totalorder %s98, %s100
      %p107 = scmp.eq.s32.totalorder %s43, 1
      %p108 = por %p106, %p107
      %p109 = scmp.ne.s32.totalorder %s100, %s101
      %p110 = scmp.eq.s32.totalorder %s43, 0
      %p111 = por %p109, %p110
      %p112 = scmp.ne.s32.totalorder %s100, %s101
      %p113 = scmp.eq.s32.totalorder %s44, 1
      %p114 = por %p112, %p113
      %p116 = scmp.ne.s32.totalorder %s101, %s115
      %p117 = scmp.eq.s32.totalorder %s44, 0
      %p118 = por %p116, %p117
      %s120 = sadd.s32 %s119, 1
      %p123 = scmp.eq.s32.totalorder %s38, 1
      %p124 = scmp.ne.s32.totalorder %s119, %s121
      %p125 = scmp.eq.s32.totalorder %s38, 0
      %p126 = por %p124, %p125
      %p127 = scmp.ne.s32.totalorder %s119, %s121
      %p128 = scmp.eq.s32.totalorder %s43, 1
      %p129 = por %p127, %p128
      %p130 = scmp.ne.s32.totalorder %s121, %s122
      %p131 = scmp.eq.s32.totalorder %s43, 0
      %p132 = por %p130, %p131
      %p133 = scmp.ne.s32.totalorder %s121, %s122
      %p134 = scmp.eq.s32.totalorder %s44, 1
      %p135 = por %p133, %p134
      %p137 = scmp.ne.s32.totalorder %s122, %s136
      %p138 = scmp.eq.s32.totalorder %s44, 0
      %p139 = por %p137, %p138
      %s141 = sadd.s32 %s140, 1
      %p144 = scmp.eq.s32.totalorder %s38, 1
      %p145 = scmp.ne.s32.totalorder %s140, %s142
      %p146 = scmp.eq.s32.totalorder %s38, 0
      %p147 = por %p145, %p146
      %p148 = scmp.ne.s32.totalorder %s140, %s142
      %p149 = scmp.eq.s32.totalorder %s43, 1
      %p150 = por %p148, %p149
      %p151 = scmp.ne.s32.totalorder %s142, %s143
      %p152 = scmp.eq.s32.totalorder %s43, 0
      %p153 = por %p151, %p152
      %p154 = scmp.ne.s32.totalorder %s142, %s143
      %p155 = scmp.eq.s32.totalorder %s44, 1
      %p156 = por %p154, %p155
      %p158 = scmp.ne.s32.totalorder %s143, %s157
      %p159 = scmp.eq.s32.totalorder %s44, 0
      %p160 = por %p158, %p159
      %s162 = sadd.s32 %s161, 1
      %p165 = scmp.eq.s32.totalorder %s38, 1
      %p166 = scmp.ne.s32.totalorder %s161, %s163
      %p167 = scmp.eq.s32.totalorder %s38, 0
      %p168 = por %p166, %p167
      %p169 = scmp.ne.s32.totalorder %s161, %s163
      %p170 = scmp.eq.s32.totalorder %s43, 1
      %p171 = por %p169, %p170
      %p172 = scmp.ne.s32.totalorder %s163, %s164
      %p173 = scmp.eq.s32.totalorder %s43, 0
      %p174 = por %p172, %p173
      %p175 = scmp.ne.s32.totalorder %s163, %s164
      %p176 = scmp.eq.s32.totalorder %s44, 1
      %p177 = por %p175, %p176
      %p179 = scmp.ne.s32.totalorder %s164, %s178
      %p180 = scmp.eq.s32.totalorder %s44, 0
      %p181 = por %p179, %p180
      %s183 = sadd.s32 %s182, 1
      %p186 = scmp.eq.s32.totalorder %s38, 1
      %p187 = scmp.ne.s32.totalorder %s182, %s184
      %p188 = scmp.eq.s32.totalorder %s38, 0
      %p189 = por %p187, %p188
      %p190 = scmp.ne.s32.totalorder %s182, %s184
      %p191 = scmp.eq.s32.totalorder %s43, 1
      %p192 = por %p190, %p191
      %p193 = scmp.ne.s32.totalorder %s184, %s185
      %p194 = scmp.eq.s32.totalorder %s43, 0
      %p195 = por %p193, %p194
      %p196 = scmp.ne.s32.totalorder %s184, %s185
      %p197 = scmp.eq.s32.totalorder %s44, 1
      %p198 = por %p196, %p197
      %p200 = scmp.ne.s32.totalorder %s185, %s199
      %p201 = scmp.eq.s32.totalorder %s44, 0
      %p202 = por %p200, %p201
      %s204 = sadd.s32 %s203, 1
      %p207 = scmp.eq.s32.totalorder %s38, 1
      %p208 = scmp.ne.s32.totalorder %s203, %s205
      %p209 = scmp.eq.s32.totalorder %s38, 0
      %p210 = por %p208, %p209
      %p211 = scmp.ne.s32.totalorder %s203, %s205
      %p212 = scmp.eq.s32.totalorder %s43, 1
      %p213 = por %p211, %p212
      %p214 = scmp.ne.s32.totalorder %s205, %s206
      %p215 = scmp.eq.s32.totalorder %s43, 0
      %p216 = por %p214, %p215
      %p217 = scmp.ne.s32.totalorder %s205, %s206
      %p218 = scmp.eq.s32.totalorder %s44, 1
      %p219 = por %p217, %p218
      %p221 = scmp.ne.s32.totalorder %s206, %s220
      %p222 = scmp.eq.s32.totalorder %s44, 0
      %p223 = por %p221, %p222
      %s225 = sadd.s32 %s224, 1
      %p228 = scmp.eq.s32.totalorder %s38, 1
      %p229 = scmp.ne.s32.totalorder %s224, %s226
      %p230 = scmp.eq.s32.totalorder %s38, 0
      %p231 = por %p229, %p230
      %p232 = scmp.ne.s32.totalorder %s224, %s226
      %p233 = scmp.eq.s32.totalorder %s43, 1
      %p234 = por %p232, %p233
      %p235 = scmp.ne.s32.totalorder %s226, %s227
      %p236 = scmp.eq.s32.totalorder %s43, 0
      %p237 = por %p235, %p236
      %p238 = scmp.ne.s32.totalorder %s226, %s227
      %p239 = scmp.eq.s32.totalorder %s44, 1
      %p240 = por %p238, %p239
      %p242 = scmp.ne.s32.totalorder %s227, %s241
      %p243 = scmp.eq.s32.totalorder %s44, 0
      %p244 = por %p242, %p243
      %s246 = sadd.s32 %s245, 1
      %p249 = scmp.eq.s32.totalorder %s38, 1
      %p250 = scmp.ne.s32.totalorder %s245, %s247
      %p251 = scmp.eq.s32.totalorder %s38, 0
      %p252 = por %p250, %p251
      %p253 = scmp.ne.s32.totalorder %s245, %s247
      %p254 = scmp.eq.s32.totalorder %s43, 1
      %p255 = por %p253, %p254
      %p256 = scmp.ne.s32.totalorder %s247, %s248
      %p257 = scmp.eq.s32.totalorder %s43, 0
      %p258 = por %p256, %p257
      %p259 = scmp.ne.s32.totalorder %s247, %s248
      %p260 = scmp.eq.s32.totalorder %s44, 1
      %p261 = por %p259, %p260
      %p263 = scmp.ne.s32.totalorder %s248, %s262
      %p264 = scmp.eq.s32.totalorder %s44, 0
      %p265 = por %p263, %p264
      %s267 = sadd.s32 %s266, 1
      %p270 = scmp.eq.s32.totalorder %s38, 1
      %p271 = scmp.ne.s32.totalorder %s266, %s268
      %p272 = scmp.eq.s32.totalorder %s38, 0
      %p273 = por %p271, %p272
      %p274 = scmp.ne.s32.totalorder %s266, %s268
      %p275 = scmp.eq.s32.totalorder %s43, 1
      %p276 = por %p274, %p275
      %p277 = scmp.ne.s32.totalorder %s268, %s269
      %p278 = scmp.eq.s32.totalorder %s43, 0
      %p279 = por %p277, %p278
      %p280 = scmp.ne.s32.totalorder %s268, %s269
      %p281 = scmp.eq.s32.totalorder %s44, 1
      %p282 = por %p280, %p281
      %p284 = scmp.ne.s32.totalorder %s269, %s283
      %p285 = scmp.eq.s32.totalorder %s44, 0
      %p286 = por %p284, %p285
      %s288 = sadd.s32 %s287, 1
      %p291 = scmp.eq.s32.totalorder %s38, 1
      %p292 = scmp.ne.s32.totalorder %s287, %s289
      %p293 = scmp.eq.s32.totalorder %s38, 0
      %p294 = por %p292, %p293
      %p295 = scmp.ne.s32.totalorder %s287, %s289
      %p296 = scmp.eq.s32.totalorder %s43, 1
      %p297 = por %p295, %p296
      %p298 = scmp.ne.s32.totalorder %s289, %s290
      %p299 = scmp.eq.s32.totalorder %s43, 0
      %p300 = por %p298, %p299
      %p301 = scmp.ne.s32.totalorder %s289, %s290
      %p302 = scmp.eq.s32.totalorder %s44, 1
      %p303 = por %p301, %p302
      %p305 = scmp.ne.s32.totalorder %s290, %s304
      %p306 = scmp.eq.s32.totalorder %s44, 0
      %p307 = por %p305, %p306
      %s309 = sadd.s32 %s308, 1
      %p312 = scmp.eq.s32.totalorder %s38, 1
      %p313 = scmp.ne.s32.totalorder %s308, %s310
      %p314 = scmp.eq.s32.totalorder %s38, 0
      %p315 = por %p313, %p314
      %p316 = scmp.ne.s32.totalorder %s308, %s310
      %p317 = scmp.eq.s32.totalorder %s43, 1
      %p318 = por %p316, %p317
      %p319 = scmp.ne.s32.totalorder %s310, %s311
      %p320 = scmp.eq.s32.totalorder %s43, 0
      %p321 = por %p319, %p320
      %p322 = scmp.ne.s32.totalorder %s310, %s311
      %p323 = scmp.eq.s32.totalorder %s44, 1
      %p324 = por %p322, %p323
      %p326 = scmp.ne.s32.totalorder %s311, %s325
      %p327 = scmp.eq.s32.totalorder %s44, 0
      %p328 = por %p326, %p327
      %s330 = sadd.s32 %s329, 1
      %p333 = scmp.eq.s32.totalorder %s38, 1
      %p334 = scmp.ne.s32.totalorder %s329, %s331
      %p335 = scmp.eq.s32.totalorder %s38, 0
      %p336 = por %p334, %p335
      %p337 = scmp.ne.s32.totalorder %s329, %s331
      %p338 = scmp.eq.s32.totalorder %s43, 1
      %p339 = por %p337, %p338
      %p340 = scmp.ne.s32.totalorder %s331, %s332
      %p341 = scmp.eq.s32.totalorder %s43, 0
      %p342 = por %p340, %p341
      %p343 = scmp.ne.s32.totalorder %s331, %s332
      %p344 = scmp.eq.s32.totalorder %s44, 1
      %p345 = por %p343, %p344
      %p347 = scmp.ne.s32.totalorder %s332, %s346
      %p348 = scmp.eq.s32.totalorder %s44, 0
      %p349 = por %p347, %p348
      %s351 = sadd.s32 %s350, 1
      %p354 = scmp.eq.s32.totalorder %s38, 1
      %p355 = scmp.ne.s32.totalorder %s350, %s352
      %p356 = scmp.eq.s32.totalorder %s38, 0
      %p357 = por %p355, %p356
      %p358 = scmp.ne.s32.totalorder %s350, %s352
      %p359 = scmp.eq.s32.totalorder %s43, 1
      %p360 = por %p358, %p359
      %p361 = scmp.ne.s32.totalorder %s352, %s353
      %p362 = scmp.eq.s32.totalorder %s43, 0
      %p363 = por %p361, %p362
      %p364 = scmp.ne.s32.totalorder %s352, %s353
      %p365 = scmp.eq.s32.totalorder %s44, 1
      %p366 = por %p364, %p365
      %p368 = scmp.ne.s32.totalorder %s353, %s367
      %p369 = scmp.eq.s32.totalorder %s44, 0
      %p370 = por %p368, %p369
      %s372 = sadd.s32 %s371, 1
      %p375 = scmp.eq.s32.totalorder %s38, 1
      %p376 = scmp.ne.s32.totalorder %s371, %s373
      %p377 = scmp.eq.s32.totalorder %s38, 0
      %p378 = por %p376, %p377
      %p379 = scmp.ne.s32.totalorder %s371, %s373
      %p380 = scmp.eq.s32.totalorder %s43, 1
      %p381 = por %p379, %p380
      %p382 = scmp.ne.s32.totalorder %s373, %s374
      %p383 = scmp.eq.s32.totalorder %s43, 0
      %p384 = por %p382, %p383
      %p385 = scmp.ne.s32.totalorder %s373, %s374
      %p386 = scmp.eq.s32.totalorder %s44, 1
      %p387 = por %p385, %p386
      %p389 = scmp.ne.s32.totalorder %s374, %s388
      %p390 = scmp.eq.s32.totalorder %s44, 0
      %p391 = por %p389, %p390
      %s393 = sadd.s32 %s392, 1
      %p396 = scmp.eq.s32.totalorder %s38, 1
      %p397 = scmp.ne.s32.totalorder %s392, %s394
      %p398 = scmp.eq.s32.totalorder %s38, 0
      %p399 = por %p397, %p398
      %p400 = scmp.ne.s32.totalorder %s392, %s394
      %p401 = scmp.eq.s32.totalorder %s43, 1
      %p402 = por %p400, %p401
      %p403 = scmp.ne.s32.totalorder %s394, %s395
      %p404 = scmp.eq.s32.totalorder %s43, 0
      %p405 = por %p403, %p404
      %p406 = scmp.ne.s32.totalorder %s394, %s395
      %p407 = scmp.eq.s32.totalorder %s44, 1
      %p408 = por %p406, %p407
      %p410 = scmp.ne.s32.totalorder %s395, %s409
      %p411 = scmp.eq.s32.totalorder %s44, 0
      %p412 = por %p410, %p411
      %s414 = sadd.s32 %s413, 1
      %p417 = scmp.eq.s32.totalorder %s38, 1
      %p418 = scmp.ne.s32.totalorder %s413, %s415
      %p419 = scmp.eq.s32.totalorder %s38, 0
      %p420 = por %p418, %p419
      %p421 = scmp.ne.s32.totalorder %s413, %s415
      %p422 = scmp.eq.s32.totalorder %s43, 1
      %p423 = por %p421, %p422
      %p424 = scmp.ne.s32.totalorder %s415, %s416
      %p425 = scmp.eq.s32.totalorder %s43, 0
      %p426 = por %p424, %p425
      %p427 = scmp.ne.s32.totalorder %s415, %s416
      %p428 = scmp.eq.s32.totalorder %s44, 1
      %p429 = por %p427, %p428
      %p431 = scmp.ne.s32.totalorder %s416, %s430
      %p432 = scmp.eq.s32.totalorder %s44, 0
      %p433 = por %p431, %p432
      %s435 = sadd.s32 %s434, 1
      %p438 = scmp.eq.s32.totalorder %s38, 1
      %p439 = scmp.ne.s32.totalorder %s434, %s436
      %p440 = scmp.eq.s32.totalorder %s38, 0
      %p441 = por %p439, %p440
      %p442 = scmp.ne.s32.totalorder %s434, %s436
      %p443 = scmp.eq.s32.totalorder %s43, 1
      %p444 = por %p442, %p443
      %p445 = scmp.ne.s32.totalorder %s436, %s437
      %p446 = scmp.eq.s32.totalorder %s43, 0
      %p447 = por %p445, %p446
      %p448 = scmp.ne.s32.totalorder %s436, %s437
      %p449 = scmp.eq.s32.totalorder %s44, 1
      %p450 = por %p448, %p449
      %p452 = scmp.ne.s32.totalorder %s437, %s451
      %p453 = scmp.eq.s32.totalorder %s44, 0
      %p454 = por %p452, %p453
      %s456 = sadd.s32 %s455, 1
      %p459 = scmp.eq.s32.totalorder %s38, 1
      %p460 = scmp.ne.s32.totalorder %s455, %s457
      %p461 = scmp.eq.s32.totalorder %s38, 0
      %p462 = por %p460, %p461
      %p463 = scmp.ne.s32.totalorder %s455, %s457
      %p464 = scmp.eq.s32.totalorder %s43, 1
      %p465 = por %p463, %p464
      %p466 = scmp.ne.s32.totalorder %s457, %s458
      %p467 = scmp.eq.s32.totalorder %s43, 0
      %p468 = por %p466, %p467
      %p469 = scmp.ne.s32.totalorder %s457, %s458
      %p470 = scmp.eq.s32.totalorder %s44, 1
      %p471 = por %p469, %p470
      %p473 = scmp.ne.s32.totalorder %s458, %s472
      %p474 = scmp.eq.s32.totalorder %s44, 0
      %p475 = por %p473, %p474
      %s477 = sadd.s32 %s476, 1
      %p480 = scmp.eq.s32.totalorder %s38, 1
      %p481 = scmp.ne.s32.totalorder %s476, %s478
      %p482 = scmp.eq.s32.totalorder %s38, 0
      %p483 = por %p481, %p482
      %p484 = scmp.ne.s32.totalorder %s476, %s478
      %p485 = scmp.eq.s32.totalorder %s43, 1
      %p486 = por %p484, %p485
      %p487 = scmp.ne.s32.totalorder %s478, %s479
      %p488 = scmp.eq.s32.totalorder %s43, 0
      %p489 = por %p487, %p488
      %p490 = scmp.ne.s32.totalorder %s478, %s479
      %p491 = scmp.eq.s32.totalorder %s44, 1
      %p492 = por %p490, %p491
      %p494 = scmp.ne.s32.totalorder %s479, %s493
      %p495 = scmp.eq.s32.totalorder %s44, 0
      %p496 = por %p494, %p495
      %s498 = sadd.s32 %s497, 1
      %p501 = scmp.eq.s32.totalorder %s38, 1
      %p502 = scmp.ne.s32.totalorder %s497, %s499
      %p503 = scmp.eq.s32.totalorder %s38, 0
      %p504 = por %p502, %p503
      %p505 = scmp.ne.s32.totalorder %s497, %s499
      %p506 = scmp.eq.s32.totalorder %s43, 1
      %p507 = por %p505, %p506
      %p508 = scmp.ne.s32.totalorder %s499, %s500
      %p509 = scmp.eq.s32.totalorder %s43, 0
      %p510 = por %p508, %p509
      %p511 = scmp.ne.s32.totalorder %s499, %s500
      %p512 = scmp.eq.s32.totalorder %s44, 1
      %p513 = por %p511, %p512
      %p515 = scmp.ne.s32.totalorder %s500, %s514
      %p516 = scmp.eq.s32.totalorder %s44, 0
      %p517 = por %p515, %p516
      %s518 = ssub.s32 %s38, %s45
      %p519 = scmp.eq.s32.totalorder %s518, 0
      %s521 = sadd.s32 %s520, 1
      %s522 = scalar_select %p519, %s520, %s521
      %p525 = pneg %p519
      %p526 = scmp.eq.s32.totalorder %s38, 1
      %p527 = por %p525, %p526
      %p528 = scmp.ne.s32.totalorder %s520, %s523
      %p529 = scmp.eq.s32.totalorder %s38, 0
      %p530 = por %p528, %p529
      %p531 = scmp.ne.s32.totalorder %s520, %s523
      %p532 = scmp.eq.s32.totalorder %s43, 1
      %p533 = por %p531, %p532
      %p534 = scmp.ne.s32.totalorder %s523, %s524
      %p535 = scmp.eq.s32.totalorder %s43, 0
      %p536 = por %p534, %p535
      %p537 = scmp.ne.s32.totalorder %s523, %s524
      %p538 = scmp.eq.s32.totalorder %s44, 1
      %p539 = por %p537, %p538
      %p541 = scmp.ne.s32.totalorder %s524, %s540
      %p542 = scmp.eq.s32.totalorder %s44, 0
      %p543 = por %p541, %p542
      %p544 = scmp.le.s32.totalorder 1, %s38
      %p545 = scmp.lt.s32.totalorder %s38, 3
      %p546 = pnand %p544, %p545
      %p547 = pneg %p546
      // Predicated region
      $region9: #{transformer_forward.11} parent=5 // pred_check
        _
      $region10: #{transformer_forward.11} parent=5 // pred_check_branch
        %549 = sbr.rel (%p546) target = $region12
      $region11: #{transformer_forward.11} parent=5 // pred_region
        %s550 = ssub.s32 %s38, 1
        // Predicated region
        $region13: #{transformer_forward.11} parent=11 // pred_check
          %p551 = pneg %p111
        $region14: #{transformer_forward.11} parent=11 // pred_check_branch
          %553 = sbr.rel (%p551) target = $region16
        $region15: #{transformer_forward.11} parent=11 // pred_region
          _
        $region16: #{transformer_forward.11} parent=11 // pred_fallthru
          _
        // Predicated region
        $region17: #{transformer_forward.11} parent=11 // pred_check
          %p554 = pneg %p132
        $region18: #{transformer_forward.11} parent=11 // pred_check_branch
          %556 = sbr.rel (%p554) target = $region20
        $region19: #{transformer_forward.11} parent=11 // pred_region
          _
        $region20: #{transformer_forward.11} parent=11 // pred_fallthru
          _
        // Predicated region
        $region21: #{transformer_forward.11} parent=11 // pred_check
          %p557 = pneg %p153
        $region22: #{transformer_forward.11} parent=11 // pred_check_branch
          %559 = sbr.rel (%p557) target = $region24
        $region23: #{transformer_forward.11} parent=11 // pred_region
          _
        $region24: #{transformer_forward.11} parent=11 // pred_fallthru
          _
        // Predicated region
        $region25: #{transformer_forward.11} parent=11 // pred_check
          %p560 = pneg %p174
        $region26: #{transformer_forward.11} parent=11 // pred_check_branch
          %562 = sbr.rel (%p560) target = $region28
        $region27: #{transformer_forward.11} parent=11 // pred_region
          %564 = vsyncadd [#allocation3], 0
          %s566 = sshll.u32 %s5, 4
          %s567 = int_to_ptr.hbm [resolvable:$true] %s566
          %s568 = sshll.u32 [#allocation2], 4
          %s569 = int_to_ptr.vmem [resolvable:$true] %s568
          %571 = dma.hbm_to_vmem [thread:$0]  %s567, 16, %s569, [#allocation3]
        $region28: #{transformer_forward.11} parent=11 // pred_fallthru
          _
        // Predicated region
        $region29: #{transformer_forward.11} parent=11 // pred_check
          %p572 = pneg %p195
        $region30: #{transformer_forward.11} parent=11 // pred_check_branch
          %574 = sbr.rel (%p572) target = $region32
        $region31: #{transformer_forward.11} parent=11 // pred_region
          %576 = vsyncadd [#allocation6], 0
          %s578 = sshll.u32 %s6, 4
          %s579 = int_to_ptr.hbm [resolvable:$true] %s578
          %s580 = sshll.u32 [#allocation5], 4
          %s581 = int_to_ptr.vmem [resolvable:$true] %s580
          %583 = dma.hbm_to_vmem [thread:$0]  %s579, 16, %s581, [#allocation6]
        $region32: #{transformer_forward.11} parent=11 // pred_fallthru
          _
        // Predicated region
        $region33: #{transformer_forward.11} parent=11 // pred_check
          %p584 = pneg %p216
        $region34: #{transformer_forward.11} parent=11 // pred_check_branch
          %586 = sbr.rel (%p584) target = $region36
        $region35: #{transformer_forward.11} parent=11 // pred_region
          %588 = vsyncadd [#allocation6], 0
          %s590 = sshll.u32 %s7, 4
          %s591 = int_to_ptr.hbm [resolvable:$true] %s590
          %s592 = sshll.u32 [#allocation7], 4
          %s593 = int_to_ptr.vmem [resolvable:$true] %s592
          %595 = dma.hbm_to_vmem [thread:$0]  %s591, 16, %s593, [#allocation6]
        $region36: #{transformer_forward.11} parent=11 // pred_fallthru
          _
        // Predicated region
        $region37: #{transformer_forward.11} parent=11 // pred_check
          %p596 = pneg %p237
        $region38: #{transformer_forward.11} parent=11 // pred_check_branch
          %598 = sbr.rel (%p596) target = $region40
        $region39: #{transformer_forward.11} parent=11 // pred_region
          _
        $region40: #{transformer_forward.11} parent=11 // pred_fallthru
          _
        // Predicated region
        $region41: #{transformer_forward.11} parent=11 // pred_check
          %p599 = pneg %p258
        $region42: #{transformer_forward.11} parent=11 // pred_check_branch
          %601 = sbr.rel (%p599) target = $region44
        $region43: #{transformer_forward.11} parent=11 // pred_region
          %603 = vsyncadd [#allocation9], 0
          %s605 = sshll.u32 %s9, 4
          %s606 = int_to_ptr.hbm [resolvable:$true] %s605
          %s607 = sshll.u32 [#allocation8], 4
          %s608 = int_to_ptr.vmem [resolvable:$true] %s607
          %610 = dma.hbm_to_vmem [thread:$0]  %s606, 16, %s608, [#allocation9]
        $region44: #{transformer_forward.11} parent=11 // pred_fallthru
          _
        // Predicated region
        $region45: #{transformer_forward.11} parent=11 // pred_check
          %p611 = pneg %p279
        $region46: #{transformer_forward.11} parent=11 // pred_check_branch
          %613 = sbr.rel (%p611) target = $region48
        $region47: #{transformer_forward.11} parent=11 // pred_region
          %615 = vsyncadd [#allocation9], 0
          %s616 = sshll.u32 %s10, 4
          %s617 = int_to_ptr.hbm [resolvable:$true] %s616
          %s618 = sshll.u32 [#allocation10], 4
          %s619 = int_to_ptr.vmem [resolvable:$true] %s618
          %624 = dma.hbm_to_vmem [thread:$0]  %s617, 512, %s619, [#allocation9], 64, 64, 4
        $region48: #{transformer_forward.11} parent=11 // pred_fallthru
          _
        // Predicated region
        $region49: #{transformer_forward.11} parent=11 // pred_check
          %p625 = pneg %p300
        $region50: #{transformer_forward.11} parent=11 // pred_check_branch
          %627 = sbr.rel (%p625) target = $region52
        $region51: #{transformer_forward.11} parent=11 // pred_region
          %629 = vsyncadd [#allocation12], 0
          %s631 = sshll.u32 %s11, 4
          %s632 = int_to_ptr.hbm [resolvable:$true] %s631
          %s633 = sshll.u32 [#allocation11], 4
          %s634 = int_to_ptr.vmem [resolvable:$true] %s633
          %636 = dma.hbm_to_vmem [thread:$0]  %s632, 16, %s634, [#allocation12]
        $region52: #{transformer_forward.11} parent=11 // pred_fallthru
          _
        // Predicated region
        $region53: #{transformer_forward.11} parent=11 // pred_check
          %p637 = pneg %p321
        $region54: #{transformer_forward.11} parent=11 // pred_check_branch
          %639 = sbr.rel (%p637) target = $region56
        $region55: #{transformer_forward.11} parent=11 // pred_region
          %641 = vsyncadd [#allocation12], 0
          %s642 = sshll.u32 %s12, 4
          %s643 = int_to_ptr.hbm [resolvable:$true] %s642
          %s644 = sshll.u32 [#allocation13], 4
          %s645 = int_to_ptr.vmem [resolvable:$true] %s644
          %650 = dma.hbm_to_vmem [thread:$0]  %s643, 512, %s645, [#allocation12], 64, 64, 4
        $region56: #{transformer_forward.11} parent=11 // pred_fallthru
          _
        // Predicated region
        $region57: #{transformer_forward.11} parent=11 // pred_check
          %p651 = pneg %p342
        $region58: #{transformer_forward.11} parent=11 // pred_check_branch
          %653 = sbr.rel (%p651) target = $region60
        $region59: #{transformer_forward.11} parent=11 // pred_region
          %655 = vsyncadd [#allocation15], 0
          %s657 = sshll.u32 %s13, 4
          %s658 = int_to_ptr.hbm [resolvable:$true] %s657
          %s659 = sshll.u32 [#allocation14], 4
          %s660 = int_to_ptr.vmem [resolvable:$true] %s659
          %662 = dma.hbm_to_vmem [thread:$0]  %s658, 16, %s660, [#allocation15]
        $region60: #{transformer_forward.11} parent=11 // pred_fallthru
          _
        // Predicated region
        $region61: #{transformer_forward.11} parent=11 // pred_check
          %p663 = pneg %p363
        $region62: #{transformer_forward.11} parent=11 // pred_check_branch
          %665 = sbr.rel (%p663) target = $region64
        $region63: #{transformer_forward.11} parent=11 // pred_region
          %667 = vsyncadd [#allocation15], 0
          %s669 = sshll.u32 %s14, 4
          %s670 = int_to_ptr.hbm [resolvable:$true] %s669
          %s671 = sshll.u32 [#allocation16], 4
          %s672 = int_to_ptr.vmem [resolvable:$true] %s671
          %674 = dma.hbm_to_vmem [thread:$0]  %s670, 16, %s672, [#allocation15]
        $region64: #{transformer_forward.11} parent=11 // pred_fallthru
          _
        // Predicated region
        $region65: #{transformer_forward.11} parent=11 // pred_check
          %p675 = pneg %p384
        $region66: #{transformer_forward.11} parent=11 // pred_check_branch
          %677 = sbr.rel (%p675) target = $region68
        $region67: #{transformer_forward.11} parent=11 // pred_region
          %679 = vsyncadd [#allocation18], 0
          %s681 = sshll.u32 %s15, 4
          %s682 = int_to_ptr.hbm [resolvable:$true] %s681
          %s683 = sshll.u32 [#allocation17], 4
          %s684 = int_to_ptr.vmem [resolvable:$true] %s683
          %686 = dma.hbm_to_vmem [thread:$0]  %s682, 16, %s684, [#allocation18]
        $region68: #{transformer_forward.11} parent=11 // pred_fallthru
          _
        // Predicated region
        $region69: #{transformer_forward.11} parent=11 // pred_check
          %p687 = pneg %p405
        $region70: #{transformer_forward.11} parent=11 // pred_check_branch
          %689 = sbr.rel (%p687) target = $region72
        $region71: #{transformer_forward.11} parent=11 // pred_region
          _
        $region72: #{transformer_forward.11} parent=11 // pred_fallthru
          _
        // Predicated region
        $region73: #{transformer_forward.11} parent=11 // pred_check
          %p690 = pneg %p426
        $region74: #{transformer_forward.11} parent=11 // pred_check_branch
          %692 = sbr.rel (%p690) target = $region76
        $region75: #{transformer_forward.11} parent=11 // pred_region
          _
        $region76: #{transformer_forward.11} parent=11 // pred_fallthru
          _
        // Predicated region
        $region77: #{transformer_forward.11} parent=11 // pred_check
          %p693 = pneg %p447
        $region78: #{transformer_forward.11} parent=11 // pred_check_branch
          %695 = sbr.rel (%p693) target = $region80
        $region79: #{transformer_forward.11} parent=11 // pred_region
          _
        $region80: #{transformer_forward.11} parent=11 // pred_fallthru
          _
        // Predicated region
        $region81: #{transformer_forward.11} parent=11 // pred_check
          %p696 = pneg %p468
        $region82: #{transformer_forward.11} parent=11 // pred_check_branch
          %698 = sbr.rel (%p696) target = $region84
        $region83: #{transformer_forward.11} parent=11 // pred_region
          %700 = vsyncadd [#allocation18], 0
          %s702 = sshll.u32 %s19, 4
          %s703 = int_to_ptr.hbm [resolvable:$true] %s702
          %s704 = sshll.u32 [#allocation19], 4
          %s705 = int_to_ptr.vmem [resolvable:$true] %s704
          %707 = dma.hbm_to_vmem [thread:$0]  %s703, 16, %s705, [#allocation18]
        $region84: #{transformer_forward.11} parent=11 // pred_fallthru
          _
        // Predicated region
        $region85: #{transformer_forward.11} parent=11 // pred_check
          %p708 = pneg %p489
        $region86: #{transformer_forward.11} parent=11 // pred_check_branch
          %710 = sbr.rel (%p708) target = $region88
        $region87: #{transformer_forward.11} parent=11 // pred_region
          %712 = vsyncadd [#allocation21], 0
          %s714 = sshll.u32 %s20, 4
          %s715 = int_to_ptr.hbm [resolvable:$true] %s714
          %s716 = sshll.u32 [#allocation20], 4
          %s717 = int_to_ptr.vmem [resolvable:$true] %s716
          %719 = dma.hbm_to_vmem [thread:$0]  %s715, 16, %s717, [#allocation21]
        $region88: #{transformer_forward.11} parent=11 // pred_fallthru
          _
        // Predicated region
        $region89: #{transformer_forward.11} parent=11 // pred_check
          %p720 = pneg %p510
        $region90: #{transformer_forward.11} parent=11 // pred_check_branch
          %722 = sbr.rel (%p720) target = $region92
        $region91: #{transformer_forward.11} parent=11 // pred_region
          %724 = vsyncadd [#allocation21], 0
          %s726 = sshll.u32 %s21, 4
          %s727 = int_to_ptr.hbm [resolvable:$true] %s726
          %s728 = sshll.u32 [#allocation22], 4
          %s729 = int_to_ptr.vmem [resolvable:$true] %s728
          %731 = dma.hbm_to_vmem [thread:$0]  %s727, 16, %s729, [#allocation21]
        $region92: #{transformer_forward.11} parent=11 // pred_fallthru
          _
      $region12: #{transformer_forward.11} parent=5 // pred_fallthru
        _
      %p732 = scmp.lt.s32.totalorder %s38, 2
      // Predicated region
      $region93: #{transformer_forward.11} parent=5 // pred_check
        %p733 = pneg %p732
      $region94: #{transformer_forward.11} parent=5 // pred_check_branch
        %735 = sbr.rel (%p733) target = $region96
      $region95: #{transformer_forward.11} parent=5 // pred_region
        // Predicated region
        $region97: #{transformer_forward.11} parent=95 // pred_check
          %p736 = pneg %p58
        $region98: #{transformer_forward.11} parent=95 // pred_check_branch
          %738 = sbr.rel (%p736) target = $region100
        $region99: #{transformer_forward.11} parent=95 // pred_region
          %p739 = scmp.lt.s32.totalorder %s38, 1
          %s740 = scalar_select %p739, %s38, 1
          %s741 = smul.addr %s740, 8
          %s742 = scalar_lea.vmem %s0, %s741
        $region100: #{transformer_forward.11} parent=95 // pred_fallthru
          _
        // Predicated region
        $region101: #{transformer_forward.11} parent=95 // pred_check
          %p743 = pneg %p84
        $region102: #{transformer_forward.11} parent=95 // pred_check_branch
          %745 = sbr.rel (%p743) target = $region104
        $region103: #{transformer_forward.11} parent=95 // pred_region
          %p746 = scmp.lt.s32.totalorder %s38, 1
          %s747 = scalar_select %p746, %s38, 1
          %s748 = smul.addr %s747, 8
          %s749 = scalar_lea.vmem %s1, %s748
        $region104: #{transformer_forward.11} parent=95 // pred_fallthru
          _
      $region96: #{transformer_forward.11} parent=5 // pred_fallthru
        _
      %p750 = scmp.le.s32.totalorder 1, %s38
      %p751 = scmp.lt.s32.totalorder %s38, 3
      %p752 = pnand %p750, %p751
      %p753 = pneg %p752
      // Predicated region
      $region105: #{transformer_forward.11} parent=5 // pred_check
        _
      $region106: #{transformer_forward.11} parent=5 // pred_check_branch
        %755 = sbr.rel (%p752) target = $region108
      $region107: #{transformer_forward.11} parent=5 // pred_region
        %s756 = ssub.s32 %s38, 1
        // Predicated region
        $region109: #{transformer_forward.11} parent=107 // pred_check
          %p757 = pneg %p174
        $region110: #{transformer_forward.11} parent=107 // pred_check_branch
          %759 = sbr.rel (%p757) target = $region112
        $region111: #{transformer_forward.11} parent=107 // pred_region
          %761 = dma.done [#allocation3], 16
        $region112: #{transformer_forward.11} parent=107 // pred_fallthru
          _
        // Predicated region
        $region113: #{transformer_forward.11} parent=107 // pred_check
          %p762 = pneg %p195
        $region114: #{transformer_forward.11} parent=107 // pred_check_branch
          %764 = sbr.rel (%p762) target = $region116
        $region115: #{transformer_forward.11} parent=107 // pred_region
          %766 = dma.done [#allocation6], 16
        $region116: #{transformer_forward.11} parent=107 // pred_fallthru
          _
        // Predicated region
        $region117: #{transformer_forward.11} parent=107 // pred_check
          %p767 = pneg %p216
        $region118: #{transformer_forward.11} parent=107 // pred_check_branch
          %769 = sbr.rel (%p767) target = $region120
        $region119: #{transformer_forward.11} parent=107 // pred_region
          %771 = dma.done [#allocation6], 16
        $region120: #{transformer_forward.11} parent=107 // pred_fallthru
          _
        // Predicated region
        $region121: #{transformer_forward.11} parent=107 // pred_check
          %p772 = pneg %p258
        $region122: #{transformer_forward.11} parent=107 // pred_check_branch
          %774 = sbr.rel (%p772) target = $region124
        $region123: #{transformer_forward.11} parent=107 // pred_region
          %776 = dma.done [#allocation9], 16
        $region124: #{transformer_forward.11} parent=107 // pred_fallthru
          _
        // Predicated region
        $region125: #{transformer_forward.11} parent=107 // pred_check
          %p777 = pneg %p279
        $region126: #{transformer_forward.11} parent=107 // pred_check_branch
          %779 = sbr.rel (%p777) target = $region128
        $region127: #{transformer_forward.11} parent=107 // pred_region
          %781 = dma.done [#allocation9], 512
        $region128: #{transformer_forward.11} parent=107 // pred_fallthru
          _
        // Predicated region
        $region129: #{transformer_forward.11} parent=107 // pred_check
          %p782 = pneg %p300
        $region130: #{transformer_forward.11} parent=107 // pred_check_branch
          %784 = sbr.rel (%p782) target = $region132
        $region131: #{transformer_forward.11} parent=107 // pred_region
          %786 = dma.done [#allocation12], 16
        $region132: #{transformer_forward.11} parent=107 // pred_fallthru
          _
        // Predicated region
        $region133: #{transformer_forward.11} parent=107 // pred_check
          %p787 = pneg %p321
        $region134: #{transformer_forward.11} parent=107 // pred_check_branch
          %789 = sbr.rel (%p787) target = $region136
        $region135: #{transformer_forward.11} parent=107 // pred_region
          %791 = dma.done [#allocation12], 512
        $region136: #{transformer_forward.11} parent=107 // pred_fallthru
          _
        // Predicated region
        $region137: #{transformer_forward.11} parent=107 // pred_check
          %p792 = pneg %p342
        $region138: #{transformer_forward.11} parent=107 // pred_check_branch
          %794 = sbr.rel (%p792) target = $region140
        $region139: #{transformer_forward.11} parent=107 // pred_region
          %796 = dma.done [#allocation15], 16
        $region140: #{transformer_forward.11} parent=107 // pred_fallthru
          _
        // Predicated region
        $region141: #{transformer_forward.11} parent=107 // pred_check
          %p797 = pneg %p363
        $region142: #{transformer_forward.11} parent=107 // pred_check_branch
          %799 = sbr.rel (%p797) target = $region144
        $region143: #{transformer_forward.11} parent=107 // pred_region
          %801 = dma.done [#allocation15], 16
        $region144: #{transformer_forward.11} parent=107 // pred_fallthru
          _
        // Predicated region
        $region145: #{transformer_forward.11} parent=107 // pred_check
          %p802 = pneg %p384
        $region146: #{transformer_forward.11} parent=107 // pred_check_branch
          %804 = sbr.rel (%p802) target = $region148
        $region147: #{transformer_forward.11} parent=107 // pred_region
          %806 = dma.done [#allocation18], 16
        $region148: #{transformer_forward.11} parent=107 // pred_fallthru
          _
        // Predicated region
        $region149: #{transformer_forward.11} parent=107 // pred_check
          %p807 = pneg %p468
        $region150: #{transformer_forward.11} parent=107 // pred_check_branch
          %809 = sbr.rel (%p807) target = $region152
        $region151: #{transformer_forward.11} parent=107 // pred_region
          %811 = dma.done [#allocation18], 16
        $region152: #{transformer_forward.11} parent=107 // pred_fallthru
          _
        // Predicated region
        $region153: #{transformer_forward.11} parent=107 // pred_check
          %p812 = pneg %p489
        $region154: #{transformer_forward.11} parent=107 // pred_check_branch
          %814 = sbr.rel (%p812) target = $region156
        $region155: #{transformer_forward.11} parent=107 // pred_region
          %816 = dma.done [#allocation21], 16
        $region156: #{transformer_forward.11} parent=107 // pred_fallthru
          _
        // Predicated region
        $region157: #{transformer_forward.11} parent=107 // pred_check
          %p817 = pneg %p510
        $region158: #{transformer_forward.11} parent=107 // pred_check_branch
          %819 = sbr.rel (%p817) target = $region160
        $region159: #{transformer_forward.11} parent=107 // pred_region
          %821 = dma.done [#allocation21], 16
        $region160: #{transformer_forward.11} parent=107 // pred_fallthru
          _
        %p822 = scmp.lt.s32.totalorder %s43, 1
        %s823 = scalar_select %p822, %s43, 1
        %s824 = smul.addr %s823, 8
        %s825 = scalar_lea.vmem %s0, %s824
        %p826 = pneg %p64
        %p827 = pneg %p61
        %p828 = scmp.lt.s32.totalorder %s43, 1
        %s829 = scalar_select %p828, %s43, 1
        %s830 = smul.addr %s829, 8
        %s831 = scalar_lea.vmem %s1, %s830
        %p832 = pneg %p90
        %p833 = pneg %p87
        %p834 = pneg %p111
        %p835 = pneg %p108
        %p836 = pneg %p132
        %p837 = pneg %p129
        %p838 = pneg %p153
        %p839 = pneg %p150
        %p840 = pneg %p174
        %p841 = pneg %p171
        %p842 = pneg %p195
        %p843 = pneg %p192
        %p844 = pneg %p216
        %p845 = pneg %p213
        %p846 = pneg %p237
        %p847 = pneg %p234
        %p848 = pneg %p258
        %p849 = pneg %p255
        %p850 = pneg %p279
        %p851 = pneg %p276
        %p852 = pneg %p300
        %p853 = pneg %p297
        %p854 = pneg %p321
        %p855 = pneg %p318
        %p856 = pneg %p342
        %p857 = pneg %p339
        %p858 = pneg %p363
        %p859 = pneg %p360
        %p860 = pneg %p384
        %p861 = pneg %p381
        %p862 = pneg %p405
        %p863 = pneg %p402
        %p864 = pneg %p426
        %p865 = pneg %p423
        %p866 = pneg %p447
        %p867 = pneg %p444
        %p868 = pneg %p468
        %p869 = pneg %p465
        %p870 = pneg %p489
        %p871 = pneg %p486
        %p872 = pneg %p510
        %p873 = pneg %p507
        %p874 = pneg %p536
        %p875 = pneg %p533
        %s876 = sand.u32 %s523, 1
        %s877 = scalar_lea.sflag [#allocation4], %s876
        %s878 = sand.u32 %s523, 1
        %s879 = smul.addr %s878, 8
        %s880 = scalar_lea.vmem [#allocation23], %s879
        %p881 = scmp.lt.s32.totalorder %s43, 1
        %s882 = scalar_select %p881, %s43, 1
        %s883 = smul.addr %s882, 8
        %s884 = scalar_lea.vmem %s0, %s883
        %p885 = scmp.lt.s32.totalorder %s43, 1
        %s886 = scalar_select %p885, %s43, 1
        %s887 = smul.addr %s886, 8
        %s888 = scalar_lea.vmem %s1, %s887
        %v890 = vld [vmem:[%s884] sm:$0xff]
        %v891 = vld [vmem:[%s888] sm:$0xff]
        %v892 = vpack.c.bf16 %v890, %v890
        %v893 = vld [vmem:[%s2] sm:$0xff]
        %v894 = vld [vmem:[%s2 + $0x8] sm:$0xff]
        %v895 = vld [vmem:[%s2 + $0x10] sm:$0xff]
        %v896 = vld [vmem:[%s2 + $0x18] sm:$0xff]
        %v897 = vld [vmem:[%s2 + $0x20] sm:$0xff]
        %v898 = vld [vmem:[%s2 + $0x28] sm:$0xff]
        %v899 = vld [vmem:[%s2 + $0x30] sm:$0xff]
        %v900 = vld [vmem:[%s2 + $0x38] sm:$0xff]
        %v901 = vld [vmem:[%s3] sm:$0x3]
        %v903 = vperm.slane %v901, 0
        %v904 = vperm.slane %v901, 1
        %v915 = vunpack.c.l.b16 %v893
        %v916 = vunpack.c.h.b16 %v893
        %v917 = vunpack.c.l.b16 %v894
        %v918 = vunpack.c.h.b16 %v894
        %v919 = vunpack.c.l.b16 %v895
        %v920 = vunpack.c.h.b16 %v895
        %v921 = vunpack.c.l.b16 %v896
        %v922 = vunpack.c.h.b16 %v896
        %v923 = vunpack.c.l.b16 %v897
        %v924 = vunpack.c.h.b16 %v897
        %v925 = vunpack.c.l.b16 %v898
        %v926 = vunpack.c.h.b16 %v898
        %v927 = vunpack.c.l.b16 %v899
        %v928 = vunpack.c.h.b16 %v899
        %v929 = vunpack.c.l.b16 %v900
        %v930 = vunpack.c.h.b16 %v900
        %v931 = vpack.c.b16 %v917, %v915
        %v932 = vpack.c.b16 %v918, %v916
        %v933 = vpack.c.b16 %v921, %v919
        %v934 = vpack.c.b16 %v922, %v920
        %v935 = vpack.c.b16 %v925, %v923
        %v936 = vpack.c.b16 %v926, %v924
        %v937 = vpack.c.b16 %v929, %v927
        %v938 = vpack.c.b16 %v930, %v928
        %vm947 = vcmask 523264
        %v949 = vsel %vm947, %v892, 0
        %951 = vmatpush.bf16.msra.mxu0 0
        %952 = vmatpush.bf16.msra.mxu0 0
        %953 = vmatpush.bf16.msra.mxu0 0
        %954 = vmatpush.bf16.msra.mxu0 0
        %955 = vmatpush.bf16.msra.mxu0 %v937
        %956 = vmatpush.bf16.msra.mxu0 %v935
        %957 = vmatpush.bf16.msra.mxu0 %v933
        %958 = vmatpush.bf16.msra.mxu0 %v931
        %959 = vmatmul.bf16.gmra.mxu0 %v949
        %v960 = vpop.f32.mrf.mxu0
        %v961 = vadd.f32 %v903, %v960
        %v962 = vpop.f32.mrf.mxu0
        %963 = vdwg.mxu0
        %964 = vmatpush.bf16.msra.mxu0 0
        %965 = vmatpush.bf16.msra.mxu0 0
        %966 = vmatpush.bf16.msra.mxu0 0
        %967 = vmatpush.bf16.msra.mxu0 0
        %968 = vmatpush.bf16.msra.mxu0 %v938
        %969 = vmatpush.bf16.msra.mxu0 %v936
        %970 = vmatpush.bf16.msra.mxu0 %v934
        %971 = vmatpush.bf16.msra.mxu0 %v932
        %972 = vmatmul.bf16.gmra.mxu0 %v949
        %v973 = vpop.f32.mrf.mxu0
        %v974 = vadd.f32 %v904, %v973
        %v975 = vpop.f32.mrf.mxu0
        %976 = vdwg.mxu0
        %v977 = vlaneseq
        %v978 = vshrl.u32 %v977, 7
        %v979 = vlaneseq
        %v980 = vand.u32 %v979, 127
        %vm981 = vcmp.le.s32.totalorder %v980, %v978
        %983 = vrot.lane.b32.xlu0 %v961, 64
        %v984 = vpop.permute.xlu0 %983
        %vm985 = vcmask 130048
        %v986 = vsel %vm985, %v961, 0
        %v988 = vsel %vm985, %v984, 0
        %990 = vmatpush.xpose.msra.mxu0 0.0
        %991 = vmatpush.xpose.msra.mxu0 0.0
        %992 = vmatpush.xpose.msra.mxu0 0.0
        %993 = vmatpush.xpose.msra.mxu0 0.0
        %994 = vmatpush.xpose.msra.mxu0 0.0
        %995 = vmatpush.xpose.msra.mxu0 0.0
        %996 = vmatpush.xpose.msra.mxu0 0.0
        %997 = vmatpush.xpose.msra.mxu0 0.0
        %998 = vmatpush.xpose.msra.mxu0 0.0
        %999 = vmatpush.xpose.msra.mxu0 0.0
        %1000 = vmatpush.xpose.msra.mxu0 0.0
        %1001 = vmatpush.xpose.msra.mxu0 0.0
        %1002 = vmatpush.xpose.msra.mxu0 0.0
        %1003 = vmatpush.xpose.msra.mxu0 0.0
        %1004 = vmatpush.xpose.msra.mxu0 0.0
        %1005 = vmatpush.xpose.msra.mxu0 %v988
        %1006 = vmatmul.f32.gmra.mxu0 %v986
        %v1007 = vpop.f32.mrf.mxu0
        %v1008 = vadd.f32 0.0, %v1007
        %1009 = vdwg.mxu0
        %v1010 = vmul.f32 %v1008, 0.25
        %v1011 = vsel %vm981, %v1010, -3.4028235e+38
        %vm1012 = vcmask 64512
        %v1013 = vsel %vm1012, %v1011, -inf
        %1014 = vmax.xlane.f32.xlu0 %v1013
        %v1015 = vpop.xlane.xlu0 %1014
        %v1016 = vsub.f32 %v1011, %v1015
        %v1017 = vmul.f32 %v1016, 1.442695
        %v1018 = vpow.pop %v1017
        %v1019 = vsel %vm1012, %v1018, 0.0
        %1020 = vadd.xlane.f32.xlu0 %v1019
        %v1021 = vpop.xlane.xlu0 %1020
        %v1022 = vrcp.pop %v1021
        %v1023 = vmul.f32 %v1021, %v1022
        %v1024 = vsub.f32 1.0, %v1023
        %v1025 = vmul.f32 %v1022, %v1024
        %v1026 = vadd.f32 %v1022, %v1025
        %vm1027 = vweird.f32 %v1021
        %vm1028 = vweird.f32 %v1022
        %vm1029 = vmor %vm1027, %vm1028
        %v1030 = vsel %vm1029, %v1022, %v1026
        %v1031 = vand.u32 2147483647, %v1021
        %vm1032 = vcmp.eq.f32.partialorder %v1031, 8.507059e+37
        %v1033 = vand.u32 %v1021, 2147483648
        %v1034 = vor.u32 1.1754944e-38, %v1033
        %v1035 = vsel %vm1032, %v1034, %v1030
        %v1036 = vmul.f32 %v1018, %v1035
        %v1038 = vsel %vm1012, %v1036, 0
        %1040 = vmatpush.msra.mxu0 0.0
        %1041 = vmatpush.msra.mxu0 0.0
        %1042 = vmatpush.msra.mxu0 0.0
        %1043 = vmatpush.msra.mxu0 0.0
        %1044 = vmatpush.msra.mxu0 0.0
        %1045 = vmatpush.msra.mxu0 0.0
        %1046 = vmatpush.msra.mxu0 0.0
        %1047 = vmatpush.msra.mxu0 0.0
        %1048 = vmatpush.msra.mxu0 0.0
        %1049 = vmatpush.msra.mxu0 0.0
        %1050 = vmatpush.msra.mxu0 0.0
        %1051 = vmatpush.msra.mxu0 0.0
        %1052 = vmatpush.msra.mxu0 0.0
        %1053 = vmatpush.msra.mxu0 0.0
        %1054 = vmatpush.msra.mxu0 0.0
        %1055 = vmatpush.msra.mxu0 %v974
        %1056 = vmatmul.f32.gmra.mxu0 %v1038
        %v1057 = vpop.f32.mrf.mxu0
        %v1058 = vadd.f32 0.0, %v1057
        %1059 = vdwg.mxu0
        %1060 = vrot.lane.b32.xlu0 %v961, 112
        %v1061 = vpop.permute.xlu0 %1060
        %1062 = vrot.lane.b32.xlu0 %v961, 48
        %v1063 = vpop.permute.xlu0 %1062
        %v1064 = vsel %vm985, %v1061, 0
        %v1066 = vsel %vm985, %v1063, 0
        %1068 = vmatpush.xpose.msra.mxu0 0.0
        %1069 = vmatpush.xpose.msra.mxu0 0.0
        %1070 = vmatpush.xpose.msra.mxu0 0.0
        %1071 = vmatpush.xpose.msra.mxu0 0.0
        %1072 = vmatpush.xpose.msra.mxu0 0.0
        %1073 = vmatpush.xpose.msra.mxu0 0.0
        %1074 = vmatpush.xpose.msra.mxu0 0.0
        %1075 = vmatpush.xpose.msra.mxu0 0.0
        %1076 = vmatpush.xpose.msra.mxu0 0.0
        %1077 = vmatpush.xpose.msra.mxu0 0.0
        %1078 = vmatpush.xpose.msra.mxu0 0.0
        %1079 = vmatpush.xpose.msra.mxu0 0.0
        %1080 = vmatpush.xpose.msra.mxu0 0.0
        %1081 = vmatpush.xpose.msra.mxu0 0.0
        %1082 = vmatpush.xpose.msra.mxu0 0.0
        %1083 = vmatpush.xpose.msra.mxu0 %v1066
        %1084 = vmatmul.f32.gmra.mxu0 %v1064
        %v1085 = vpop.f32.mrf.mxu0
        %v1086 = vadd.f32 0.0, %v1085
        %1087 = vdwg.mxu0
        %v1088 = vmul.f32 %v1086, 0.25
        %v1089 = vsel %vm981, %v1088, -3.4028235e+38
        %v1090 = vsel %vm1012, %v1089, -inf
        %1091 = vmax.xlane.f32.xlu0 %v1090
        %v1092 = vpop.xlane.xlu0 %1091
        %v1093 = vsub.f32 %v1089, %v1092
        %v1094 = vmul.f32 %v1093, 1.442695
        %v1095 = vpow.pop %v1094
        %v1096 = vsel %vm1012, %v1095, 0.0
        %1097 = vadd.xlane.f32.xlu0 %v1096
        %v1098 = vpop.xlane.xlu0 %1097
        %v1099 = vrcp.pop %v1098
        %v1100 = vmul.f32 %v1098, %v1099
        %v1101 = vsub.f32 1.0, %v1100
        %v1102 = vmul.f32 %v1099, %v1101
        %v1103 = vadd.f32 %v1099, %v1102
        %vm1104 = vweird.f32 %v1098
        %vm1105 = vweird.f32 %v1099
        %vm1106 = vmor %vm1104, %vm1105
        %v1107 = vsel %vm1106, %v1099, %v1103
        %v1108 = vand.u32 2147483647, %v1098
        %vm1109 = vcmp.eq.f32.partialorder %v1108, 8.507059e+37
        %v1110 = vand.u32 %v1098, 2147483648
        %v1111 = vor.u32 1.1754944e-38, %v1110
        %v1112 = vsel %vm1109, %v1111, %v1107
        %v1113 = vmul.f32 %v1095, %v1112
        %1115 = vrot.lane.b32.xlu0 %v974, 112
        %v1116 = vpop.permute.xlu0 %1115
        %v1119 = vsel %vm1012, %v1113, 0
        %1121 = vmatpush.msra.mxu0 0.0
        %1122 = vmatpush.msra.mxu0 0.0
        %1123 = vmatpush.msra.mxu0 0.0
        %1124 = vmatpush.msra.mxu0 0.0
        %1125 = vmatpush.msra.mxu0 0.0
        %1126 = vmatpush.msra.mxu0 0.0
        %1127 = vmatpush.msra.mxu0 0.0
        %1128 = vmatpush.msra.mxu0 0.0
        %1129 = vmatpush.msra.mxu0 0.0
        %1130 = vmatpush.msra.mxu0 0.0
        %1131 = vmatpush.msra.mxu0 0.0
        %1132 = vmatpush.msra.mxu0 0.0
        %1133 = vmatpush.msra.mxu0 0.0
        %1134 = vmatpush.msra.mxu0 0.0
        %1135 = vmatpush.msra.mxu0 0.0
        %1136 = vmatpush.msra.mxu0 %v1116
        %1137 = vmatmul.f32.gmra.mxu0 %v1119
        %v1138 = vpop.f32.mrf.mxu0
        %v1139 = vadd.f32 0.0, %v1138
        %1140 = vdwg.mxu0
        %1141 = vrot.lane.b32.xlu0 %v961, 96
        %v1142 = vpop.permute.xlu0 %1141
        %1143 = vrot.lane.b32.xlu0 %v961, 32
        %v1144 = vpop.permute.xlu0 %1143
        %v1145 = vsel %vm985, %v1142, 0
        %v1147 = vsel %vm985, %v1144, 0
        %1149 = vmatpush.xpose.msra.mxu0 0.0
        %1150 = vmatpush.xpose.msra.mxu0 0.0
        %1151 = vmatpush.xpose.msra.mxu0 0.0
        %1152 = vmatpush.xpose.msra.mxu0 0.0
        %1153 = vmatpush.xpose.msra.mxu0 0.0
        %1154 = vmatpush.xpose.msra.mxu0 0.0
        %1155 = vmatpush.xpose.msra.mxu0 0.0
        %1156 = vmatpush.xpose.msra.mxu0 0.0
        %1157 = vmatpush.xpose.msra.mxu0 0.0
        %1158 = vmatpush.xpose.msra.mxu0 0.0
        %1159 = vmatpush.xpose.msra.mxu0 0.0
        %1160 = vmatpush.xpose.msra.mxu0 0.0
        %1161 = vmatpush.xpose.msra.mxu0 0.0
        %1162 = vmatpush.xpose.msra.mxu0 0.0
        %1163 = vmatpush.xpose.msra.mxu0 0.0
        %1164 = vmatpush.xpose.msra.mxu0 %v1147
        %1165 = vmatmul.f32.gmra.mxu0 %v1145
        %v1166 = vpop.f32.mrf.mxu0
        %v1167 = vadd.f32 0.0, %v1166
        %1168 = vdwg.mxu0
        %v1169 = vmul.f32 %v1167, 0.25
        %v1170 = vsel %vm981, %v1169, -3.4028235e+38
        %v1171 = vsel %vm1012, %v1170, -inf
        %1172 = vmax.xlane.f32.xlu0 %v1171
        %v1173 = vpop.xlane.xlu0 %1172
        %v1174 = vsub.f32 %v1170, %v1173
        %v1175 = vmul.f32 %v1174, 1.442695
        %v1176 = vpow.pop %v1175
        %v1177 = vsel %vm1012, %v1176, 0.0
        %1178 = vadd.xlane.f32.xlu0 %v1177
        %v1179 = vpop.xlane.xlu0 %1178
        %v1180 = vrcp.pop %v1179
        %v1181 = vmul.f32 %v1179, %v1180
        %v1182 = vsub.f32 1.0, %v1181
        %v1183 = vmul.f32 %v1180, %v1182
        %v1184 = vadd.f32 %v1180, %v1183
        %vm1185 = vweird.f32 %v1179
        %vm1186 = vweird.f32 %v1180
        %vm1187 = vmor %vm1185, %vm1186
        %v1188 = vsel %vm1187, %v1180, %v1184
        %v1189 = vand.u32 2147483647, %v1179
        %vm1190 = vcmp.eq.f32.partialorder %v1189, 8.507059e+37
        %v1191 = vand.u32 %v1179, 2147483648
        %v1192 = vor.u32 1.1754944e-38, %v1191
        %v1193 = vsel %vm1190, %v1192, %v1188
        %v1194 = vmul.f32 %v1176, %v1193
        %1195 = vrot.lane.b32.xlu0 %v974, 96
        %v1196 = vpop.permute.xlu0 %1195
        %v1199 = vsel %vm1012, %v1194, 0
        %1201 = vmatpush.msra.mxu0 0.0
        %1202 = vmatpush.msra.mxu0 0.0
        %1203 = vmatpush.msra.mxu0 0.0
        %1204 = vmatpush.msra.mxu0 0.0
        %1205 = vmatpush.msra.mxu0 0.0
        %1206 = vmatpush.msra.mxu0 0.0
        %1207 = vmatpush.msra.mxu0 0.0
        %1208 = vmatpush.msra.mxu0 0.0
        %1209 = vmatpush.msra.mxu0 0.0
        %1210 = vmatpush.msra.mxu0 0.0
        %1211 = vmatpush.msra.mxu0 0.0
        %1212 = vmatpush.msra.mxu0 0.0
        %1213 = vmatpush.msra.mxu0 0.0
        %1214 = vmatpush.msra.mxu0 0.0
        %1215 = vmatpush.msra.mxu0 0.0
        %1216 = vmatpush.msra.mxu0 %v1196
        %1217 = vmatmul.f32.gmra.mxu0 %v1199
        %v1218 = vpop.f32.mrf.mxu0
        %v1219 = vadd.f32 0.0, %v1218
        %1220 = vdwg.mxu0
        %1221 = vrot.lane.b32.xlu0 %v961, 80
        %v1222 = vpop.permute.xlu0 %1221
        %1223 = vrot.lane.b32.xlu0 %v961, 16
        %v1224 = vpop.permute.xlu0 %1223
        %v1225 = vsel %vm985, %v1222, 0
        %v1227 = vsel %vm985, %v1224, 0
        %1229 = vmatpush.xpose.msra.mxu0 0.0
        %1230 = vmatpush.xpose.msra.mxu0 0.0
        %1231 = vmatpush.xpose.msra.mxu0 0.0
        %1232 = vmatpush.xpose.msra.mxu0 0.0
        %1233 = vmatpush.xpose.msra.mxu0 0.0
        %1234 = vmatpush.xpose.msra.mxu0 0.0
        %1235 = vmatpush.xpose.msra.mxu0 0.0
        %1236 = vmatpush.xpose.msra.mxu0 0.0
        %1237 = vmatpush.xpose.msra.mxu0 0.0
        %1238 = vmatpush.xpose.msra.mxu0 0.0
        %1239 = vmatpush.xpose.msra.mxu0 0.0
        %1240 = vmatpush.xpose.msra.mxu0 0.0
        %1241 = vmatpush.xpose.msra.mxu0 0.0
        %1242 = vmatpush.xpose.msra.mxu0 0.0
        %1243 = vmatpush.xpose.msra.mxu0 0.0
        %1244 = vmatpush.xpose.msra.mxu0 %v1227
        %1245 = vmatmul.f32.gmra.mxu0 %v1225
        %v1246 = vpop.f32.mrf.mxu0
        %v1247 = vadd.f32 0.0, %v1246
        %1248 = vdwg.mxu0
        %v1249 = vmul.f32 %v1247, 0.25
        %v1250 = vsel %vm981, %v1249, -3.4028235e+38
        %v1251 = vsel %vm1012, %v1250, -inf
        %1252 = vmax.xlane.f32.xlu0 %v1251
        %v1253 = vpop.xlane.xlu0 %1252
        %v1254 = vsub.f32 %v1250, %v1253
        %v1255 = vmul.f32 %v1254, 1.442695
        %v1256 = vpow.pop %v1255
        %v1257 = vsel %vm1012, %v1256, 0.0
        %1258 = vadd.xlane.f32.xlu0 %v1257
        %v1259 = vpop.xlane.xlu0 %1258
        %v1260 = vrcp.pop %v1259
        %v1261 = vmul.f32 %v1259, %v1260
        %v1262 = vsub.f32 1.0, %v1261
        %v1263 = vmul.f32 %v1260, %v1262
        %v1264 = vadd.f32 %v1260, %v1263
        %vm1265 = vweird.f32 %v1259
        %vm1266 = vweird.f32 %v1260
        %vm1267 = vmor %vm1265, %vm1266
        %v1268 = vsel %vm1267, %v1260, %v1264
        %v1269 = vand.u32 2147483647, %v1259
        %vm1270 = vcmp.eq.f32.partialorder %v1269, 8.507059e+37
        %v1271 = vand.u32 %v1259, 2147483648
        %v1272 = vor.u32 1.1754944e-38, %v1271
        %v1273 = vsel %vm1270, %v1272, %v1268
        %v1274 = vmul.f32 %v1256, %v1273
        %1275 = vrot.lane.b32.xlu0 %v974, 80
        %v1276 = vpop.permute.xlu0 %1275
        %v1279 = vsel %vm1012, %v1274, 0
        %1281 = vmatpush.msra.mxu0 0.0
        %1282 = vmatpush.msra.mxu0 0.0
        %1283 = vmatpush.msra.mxu0 0.0
        %1284 = vmatpush.msra.mxu0 0.0
        %1285 = vmatpush.msra.mxu0 0.0
        %1286 = vmatpush.msra.mxu0 0.0
        %1287 = vmatpush.msra.mxu0 0.0
        %1288 = vmatpush.msra.mxu0 0.0
        %1289 = vmatpush.msra.mxu0 0.0
        %1290 = vmatpush.msra.mxu0 0.0
        %1291 = vmatpush.msra.mxu0 0.0
        %1292 = vmatpush.msra.mxu0 0.0
        %1293 = vmatpush.msra.mxu0 0.0
        %1294 = vmatpush.msra.mxu0 0.0
        %1295 = vmatpush.msra.mxu0 0.0
        %1296 = vmatpush.msra.mxu0 %v1276
        %1297 = vmatmul.f32.gmra.mxu0 %v1279
        %v1298 = vpop.f32.mrf.mxu0
        %v1299 = vadd.f32 0.0, %v1298
        %1300 = vdwg.mxu0
        %1302 = vrot.lane.b32.xlu0 %v1139, 16
        %v1303 = vpop.permute.xlu0 %1302
        %1306 = vrot.lane.b32.xlu0 %v1219, 32
        %v1307 = vpop.permute.xlu0 %1306
        %1310 = vrot.lane.b32.xlu0 %v1299, 48
        %v1311 = vpop.permute.xlu0 %1310
        %v1313 = vsel %vm985, %v1058, %v1303
        %vm1314 = vcmask 261120
        %v1315 = vsel %vm1314, %v1313, %v1307
        %vm1316 = vcmask 392192
        %v1317 = vsel %vm1316, %v1315, %v1311
        %v1318 = vpack.c.bf16 %v1317, %v1317
        %v1319 = vld [vmem:[%s4] sm:$0xf]
        %v1320 = vld [vmem:[%s4 + $0x4] sm:$0xf]
        %v1321 = vld [vmem:[%s4 + $0x8] sm:$0xf]
        %v1322 = vld [vmem:[%s4 + $0xc] sm:$0xf]
        %v1323 = vld [vmem:[%s4 + $0x10] sm:$0xf]
        %v1324 = vld [vmem:[%s4 + $0x14] sm:$0xf]
        %v1325 = vld [vmem:[%s4 + $0x18] sm:$0xf]
        %v1326 = vld [vmem:[%s4 + $0x1c] sm:$0xf]
        %v1327 = vld [vmem:[#allocation2] sm:$0x1]
        %v1329 = vperm.slane %v1327, 0
        %v1339 = vunpack.c.l.b16 %v1319
        %v1340 = vunpack.c.l.b16 %v1320
        %v1341 = vunpack.c.l.b16 %v1321
        %v1342 = vunpack.c.l.b16 %v1322
        %v1343 = vunpack.c.l.b16 %v1323
        %v1344 = vunpack.c.l.b16 %v1324
        %v1345 = vunpack.c.l.b16 %v1325
        %v1346 = vunpack.c.l.b16 %v1326
        %v1347 = vpack.c.b16 %v1340, %v1339
        %v1348 = vpack.c.b16 %v1342, %v1341
        %v1349 = vpack.c.b16 %v1344, %v1343
        %v1350 = vpack.c.b16 %v1346, %v1345
        %v1356 = vsel %vm947, %v1318, 0
        %1358 = vmatpush.bf16.msra.mxu0 0
        %1359 = vmatpush.bf16.msra.mxu0 0
        %1360 = vmatpush.bf16.msra.mxu0 0
        %1361 = vmatpush.bf16.msra.mxu0 0
        %1362 = vmatpush.bf16.msra.mxu0 %v1350
        %1363 = vmatpush.bf16.msra.mxu0 %v1349
        %1364 = vmatpush.bf16.msra.mxu0 %v1348
        %1365 = vmatpush.bf16.msra.mxu0 %v1347
        %1366 = vmatmul.bf16.gmra.mxu0 %v1356
        %v1367 = vpop.f32.mrf.mxu0
        %v1368 = vadd.f32 %v1329, %v1367
        %v1369 = vpop.f32.mrf.mxu0
        %1370 = vdwg.mxu0
        %v1371 = vadd.f32 %v890, %v1368
        %v1372 = vsel %vm947, %v1371, 0.0
        %1373 = vadd.xlane.f32.xlu0 %v1372
        %v1374 = vpop.xlane.xlu0 %1373
        %v1375 = vrcp.pop 64.0
        %v1376 = vmul.f32 64.0, %v1375
        %v1377 = vsub.f32 1.0, %v1376
        %v1378 = vmul.f32 %v1375, %v1377
        %v1379 = vadd.f32 %v1375, %v1378
        %vm1380 = vweird.f32 %v1375
        %v1381 = vsel %vm1380, %v1375, %v1379
        %v1382 = vmul.f32 %v1374, %v1381
        %v1383 = vsub.f32 %v1371, %v1382
        %v1384 = vmul.f32 %v1383, %v1383
        %v1385 = vsel %vm947, %v1384, 0.0
        %1386 = vadd.xlane.f32.xlu0 %v1385
        %v1387 = vpop.xlane.xlu0 %1386
        %v1388 = vmul.f32 %v1387, %v1381
        %v1389 = vadd.f32 %v1388, 1e-05
        %v1390 = vrsqrt.pop %v1389
        %v1391 = vmul.f32 %v1390, %v1389
        %v1392 = vmul.f32 %v1391, %v1390
        %v1393 = vmul.f32 0.5, %v1392
        %v1394 = vsub.f32 1.5, %v1393
        %v1395 = vmul.f32 %v1390, %v1394
        %vm1396 = vweird.f32 %v1389
        %vm1397 = vweird.f32 %v1390
        %vm1398 = vmor %vm1396, %vm1397
        %v1399 = vsel %vm1398, %v1390, %v1395
        %v1400 = vmul.f32 %v1383, %v1399
        %v1401 = vld [vmem:[#allocation5] sm:$0x1]
        %v1403 = vperm.slane %v1401, 0
        %v1405 = vmul.f32 %v1400, %v1403
        %v1406 = vld [vmem:[#allocation7] sm:$0x1]
        %v1408 = vperm.slane %v1406, 0
        %v1410 = vadd.f32 %v1405, %v1408
        %v1411 = vpack.c.bf16 %v1410, %v1410
        %v1412 = vld [vmem:[%s8] sm:$0xf]
        %v1413 = vld [vmem:[%s8 + $0x4] sm:$0xf]
        %v1414 = vld [vmem:[%s8 + $0x8] sm:$0xf]
        %v1415 = vld [vmem:[%s8 + $0xc] sm:$0xf]
        %v1416 = vld [vmem:[%s8 + $0x10] sm:$0xf]
        %v1417 = vld [vmem:[%s8 + $0x14] sm:$0xf]
        %v1418 = vld [vmem:[%s8 + $0x18] sm:$0xf]
        %v1419 = vld [vmem:[%s8 + $0x1c] sm:$0xf]
        %v1420 = vld [vmem:[#allocation8] sm:$0x1]
        %v1422 = vperm.slane %v1420, 0
        %v1432 = vunpack.c.l.b16 %v1412
        %v1433 = vunpack.c.l.b16 %v1413
        %v1434 = vunpack.c.l.b16 %v1414
        %v1435 = vunpack.c.l.b16 %v1415
        %v1436 = vunpack.c.l.b16 %v1416
        %v1437 = vunpack.c.l.b16 %v1417
        %v1438 = vunpack.c.l.b16 %v1418
        %v1439 = vunpack.c.l.b16 %v1419
        %v1440 = vpack.c.b16 %v1433, %v1432
        %v1441 = vpack.c.b16 %v1435, %v1434
        %v1442 = vpack.c.b16 %v1437, %v1436
        %v1443 = vpack.c.b16 %v1439, %v1438
        %v1449 = vsel %vm947, %v1411, 0
        %1451 = vmatpush.bf16.msra.mxu0 0
        %1452 = vmatpush.bf16.msra.mxu0 0
        %1453 = vmatpush.bf16.msra.mxu0 0
        %1454 = vmatpush.bf16.msra.mxu0 0
        %1455 = vmatpush.bf16.msra.mxu0 %v1443
        %1456 = vmatpush.bf16.msra.mxu0 %v1442
        %1457 = vmatpush.bf16.msra.mxu0 %v1441
        %1458 = vmatpush.bf16.msra.mxu0 %v1440
        %1459 = vmatmul.bf16.gmra.mxu0 %v1449
        %v1460 = vpop.f32.mrf.mxu0
        %v1461 = vadd.f32 %v1422, %v1460
        %v1462 = vpop.f32.mrf.mxu0
        %1463 = vdwg.mxu0
        %v1464 = vpack.c.bf16 %v891, %v891
        %v1465 = vld [vmem:[#allocation10] sm:$0xf]
        %v1466 = vld [vmem:[#allocation10 + $0x4] sm:$0xf]
        %v1467 = vld [vmem:[#allocation10 + $0x8] sm:$0xf]
        %v1468 = vld [vmem:[#allocation10 + $0xc] sm:$0xf]
        %v1469 = vld [vmem:[#allocation10 + $0x10] sm:$0xf]
        %v1470 = vld [vmem:[#allocation10 + $0x14] sm:$0xf]
        %v1471 = vld [vmem:[#allocation10 + $0x18] sm:$0xf]
        %v1472 = vld [vmem:[#allocation10 + $0x1c] sm:$0xf]
        %v1473 = vld [vmem:[#allocation11] sm:$0x1]
        %v1475 = vperm.slane %v1473, 0
        %v1485 = vunpack.c.l.b16 %v1465
        %v1486 = vunpack.c.l.b16 %v1466
        %v1487 = vunpack.c.l.b16 %v1467
        %v1488 = vunpack.c.l.b16 %v1468
        %v1489 = vunpack.c.l.b16 %v1469
        %v1490 = vunpack.c.l.b16 %v1470
        %v1491 = vunpack.c.l.b16 %v1471
        %v1492 = vunpack.c.l.b16 %v1472
        %v1493 = vpack.c.b16 %v1486, %v1485
        %v1494 = vpack.c.b16 %v1488, %v1487
        %v1495 = vpack.c.b16 %v1490, %v1489
        %v1496 = vpack.c.b16 %v1492, %v1491
        %v1502 = vsel %vm947, %v1464, 0
        %1504 = vmatpush.bf16.msra.mxu0 0
        %1505 = vmatpush.bf16.msra.mxu0 0
        %1506 = vmatpush.bf16.msra.mxu0 0
        %1507 = vmatpush.bf16.msra.mxu0 0
        %1508 = vmatpush.bf16.msra.mxu0 %v1496
        %1509 = vmatpush.bf16.msra.mxu0 %v1495
        %1510 = vmatpush.bf16.msra.mxu0 %v1494
        %1511 = vmatpush.bf16.msra.mxu0 %v1493
        %1512 = vmatmul.bf16.gmra.mxu0 %v1502
        %v1513 = vpop.f32.mrf.mxu0
        %v1514 = vadd.f32 %v1475, %v1513
        %v1515 = vpop.f32.mrf.mxu0
        %1516 = vdwg.mxu0
        %v1518 = vsel %vm985, %v1461, 0
        %v1521 = vsel %vm985, %v1514, 0
        %1523 = vmatpush.xpose.msra.mxu0 0.0
        %1524 = vmatpush.xpose.msra.mxu0 0.0
        %1525 = vmatpush.xpose.msra.mxu0 0.0
        %1526 = vmatpush.xpose.msra.mxu0 0.0
        %1527 = vmatpush.xpose.msra.mxu0 0.0
        %1528 = vmatpush.xpose.msra.mxu0 0.0
        %1529 = vmatpush.xpose.msra.mxu0 0.0
        %1530 = vmatpush.xpose.msra.mxu0 0.0
        %1531 = vmatpush.xpose.msra.mxu0 0.0
        %1532 = vmatpush.xpose.msra.mxu0 0.0
        %1533 = vmatpush.xpose.msra.mxu0 0.0
        %1534 = vmatpush.xpose.msra.mxu0 0.0
        %1535 = vmatpush.xpose.msra.mxu0 0.0
        %1536 = vmatpush.xpose.msra.mxu0 0.0
        %1537 = vmatpush.xpose.msra.mxu0 0.0
        %1538 = vmatpush.xpose.msra.mxu0 %v1521
        %1539 = vmatmul.f32.gmra.mxu0 %v1518
        %v1540 = vpop.f32.mrf.mxu0
        %v1541 = vadd.f32 0.0, %v1540
        %1542 = vdwg.mxu0
        %v1543 = vmul.f32 %v1541, 0.25
        %v1544 = vsel %vm1012, %v1543, -inf
        %1545 = vmax.xlane.f32.xlu0 %v1544
        %v1546 = vpop.xlane.xlu0 %1545
        %v1547 = vsub.f32 %v1543, %v1546
        %v1548 = vmul.f32 %v1547, 1.442695
        %v1549 = vpow.pop %v1548
        %v1550 = vsel %vm1012, %v1549, 0.0
        %1551 = vadd.xlane.f32.xlu0 %v1550
        %v1552 = vpop.xlane.xlu0 %1551
        %v1553 = vrcp.pop %v1552
        %v1554 = vmul.f32 %v1552, %v1553
        %v1555 = vsub.f32 1.0, %v1554
        %v1556 = vmul.f32 %v1553, %v1555
        %v1557 = vadd.f32 %v1553, %v1556
        %vm1558 = vweird.f32 %v1552
        %vm1559 = vweird.f32 %v1553
        %vm1560 = vmor %vm1558, %vm1559
        %v1561 = vsel %vm1560, %v1553, %v1557
        %v1562 = vand.u32 2147483647, %v1552
        %vm1563 = vcmp.eq.f32.partialorder %v1562, 8.507059e+37
        %v1564 = vand.u32 %v1552, 2147483648
        %v1565 = vor.u32 1.1754944e-38, %v1564
        %v1566 = vsel %vm1563, %v1565, %v1561
        %v1567 = vmul.f32 %v1549, %v1566
        %1568 = vrot.lane.b32.xlu0 %v1514, 64
        %v1569 = vpop.permute.xlu0 %1568
        %v1572 = vsel %vm1012, %v1567, 0
        %1574 = vmatpush.msra.mxu0 0.0
        %1575 = vmatpush.msra.mxu0 0.0
        %1576 = vmatpush.msra.mxu0 0.0
        %1577 = vmatpush.msra.mxu0 0.0
        %1578 = vmatpush.msra.mxu0 0.0
        %1579 = vmatpush.msra.mxu0 0.0
        %1580 = vmatpush.msra.mxu0 0.0
        %1581 = vmatpush.msra.mxu0 0.0
        %1582 = vmatpush.msra.mxu0 0.0
        %1583 = vmatpush.msra.mxu0 0.0
        %1584 = vmatpush.msra.mxu0 0.0
        %1585 = vmatpush.msra.mxu0 0.0
        %1586 = vmatpush.msra.mxu0 0.0
        %1587 = vmatpush.msra.mxu0 0.0
        %1588 = vmatpush.msra.mxu0 0.0
        %1589 = vmatpush.msra.mxu0 %v1569
        %1590 = vmatmul.f32.gmra.mxu0 %v1572
        %v1591 = vpop.f32.mrf.mxu0
        %v1592 = vadd.f32 0.0, %v1591
        %1593 = vdwg.mxu0
        %1594 = vrot.lane.b32.xlu0 %v1461, 112
        %v1595 = vpop.permute.xlu0 %1594
        %1596 = vrot.lane.b32.xlu0 %v1514, 112
        %v1597 = vpop.permute.xlu0 %1596
        %v1598 = vsel %vm985, %v1595, 0
        %v1600 = vsel %vm985, %v1597, 0
        %1602 = vmatpush.xpose.msra.mxu0 0.0
        %1603 = vmatpush.xpose.msra.mxu0 0.0
        %1604 = vmatpush.xpose.msra.mxu0 0.0
        %1605 = vmatpush.xpose.msra.mxu0 0.0
        %1606 = vmatpush.xpose.msra.mxu0 0.0
        %1607 = vmatpush.xpose.msra.mxu0 0.0
        %1608 = vmatpush.xpose.msra.mxu0 0.0
        %1609 = vmatpush.xpose.msra.mxu0 0.0
        %1610 = vmatpush.xpose.msra.mxu0 0.0
        %1611 = vmatpush.xpose.msra.mxu0 0.0
        %1612 = vmatpush.xpose.msra.mxu0 0.0
        %1613 = vmatpush.xpose.msra.mxu0 0.0
        %1614 = vmatpush.xpose.msra.mxu0 0.0
        %1615 = vmatpush.xpose.msra.mxu0 0.0
        %1616 = vmatpush.xpose.msra.mxu0 0.0
        %1617 = vmatpush.xpose.msra.mxu0 %v1600
        %1618 = vmatmul.f32.gmra.mxu0 %v1598
        %v1619 = vpop.f32.mrf.mxu0
        %v1620 = vadd.f32 0.0, %v1619
        %1621 = vdwg.mxu0
        %v1622 = vmul.f32 %v1620, 0.25
        %v1623 = vsel %vm1012, %v1622, -inf
        %1624 = vmax.xlane.f32.xlu0 %v1623
        %v1625 = vpop.xlane.xlu0 %1624
        %v1626 = vsub.f32 %v1622, %v1625
        %v1627 = vmul.f32 %v1626, 1.442695
        %v1628 = vpow.pop %v1627
        %v1629 = vsel %vm1012, %v1628, 0.0
        %1630 = vadd.xlane.f32.xlu0 %v1629
        %v1631 = vpop.xlane.xlu0 %1630
        %v1632 = vrcp.pop %v1631
        %v1633 = vmul.f32 %v1631, %v1632
        %v1634 = vsub.f32 1.0, %v1633
        %v1635 = vmul.f32 %v1632, %v1634
        %v1636 = vadd.f32 %v1632, %v1635
        %vm1637 = vweird.f32 %v1631
        %vm1638 = vweird.f32 %v1632
        %vm1639 = vmor %vm1637, %vm1638
        %v1640 = vsel %vm1639, %v1632, %v1636
        %v1641 = vand.u32 2147483647, %v1631
        %vm1642 = vcmp.eq.f32.partialorder %v1641, 8.507059e+37
        %v1643 = vand.u32 %v1631, 2147483648
        %v1644 = vor.u32 1.1754944e-38, %v1643
        %v1645 = vsel %vm1642, %v1644, %v1640
        %v1646 = vmul.f32 %v1628, %v1645
        %1647 = vrot.lane.b32.xlu0 %v1514, 48
        %v1648 = vpop.permute.xlu0 %1647
        %v1651 = vsel %vm1012, %v1646, 0
        %1653 = vmatpush.msra.mxu0 0.0
        %1654 = vmatpush.msra.mxu0 0.0
        %1655 = vmatpush.msra.mxu0 0.0
        %1656 = vmatpush.msra.mxu0 0.0
        %1657 = vmatpush.msra.mxu0 0.0
        %1658 = vmatpush.msra.mxu0 0.0
        %1659 = vmatpush.msra.mxu0 0.0
        %1660 = vmatpush.msra.mxu0 0.0
        %1661 = vmatpush.msra.mxu0 0.0
        %1662 = vmatpush.msra.mxu0 0.0
        %1663 = vmatpush.msra.mxu0 0.0
        %1664 = vmatpush.msra.mxu0 0.0
        %1665 = vmatpush.msra.mxu0 0.0
        %1666 = vmatpush.msra.mxu0 0.0
        %1667 = vmatpush.msra.mxu0 0.0
        %1668 = vmatpush.msra.mxu0 %v1648
        %1669 = vmatmul.f32.gmra.mxu0 %v1651
        %v1670 = vpop.f32.mrf.mxu0
        %v1671 = vadd.f32 0.0, %v1670
        %1672 = vdwg.mxu0
        %1673 = vrot.lane.b32.xlu0 %v1461, 96
        %v1674 = vpop.permute.xlu0 %1673
        %1675 = vrot.lane.b32.xlu0 %v1514, 96
        %v1676 = vpop.permute.xlu0 %1675
        %v1677 = vsel %vm985, %v1674, 0
        %v1679 = vsel %vm985, %v1676, 0
        %1681 = vmatpush.xpose.msra.mxu0 0.0
        %1682 = vmatpush.xpose.msra.mxu0 0.0
        %1683 = vmatpush.xpose.msra.mxu0 0.0
        %1684 = vmatpush.xpose.msra.mxu0 0.0
        %1685 = vmatpush.xpose.msra.mxu0 0.0
        %1686 = vmatpush.xpose.msra.mxu0 0.0
        %1687 = vmatpush.xpose.msra.mxu0 0.0
        %1688 = vmatpush.xpose.msra.mxu0 0.0
        %1689 = vmatpush.xpose.msra.mxu0 0.0
        %1690 = vmatpush.xpose.msra.mxu0 0.0
        %1691 = vmatpush.xpose.msra.mxu0 0.0
        %1692 = vmatpush.xpose.msra.mxu0 0.0
        %1693 = vmatpush.xpose.msra.mxu0 0.0
        %1694 = vmatpush.xpose.msra.mxu0 0.0
        %1695 = vmatpush.xpose.msra.mxu0 0.0
        %1696 = vmatpush.xpose.msra.mxu0 %v1679
        %1697 = vmatmul.f32.gmra.mxu0 %v1677
        %v1698 = vpop.f32.mrf.mxu0
        %v1699 = vadd.f32 0.0, %v1698
        %1700 = vdwg.mxu0
        %v1701 = vmul.f32 %v1699, 0.25
        %v1702 = vsel %vm1012, %v1701, -inf
        %1703 = vmax.xlane.f32.xlu0 %v1702
        %v1704 = vpop.xlane.xlu0 %1703
        %v1705 = vsub.f32 %v1701, %v1704
        %v1706 = vmul.f32 %v1705, 1.442695
        %v1707 = vpow.pop %v1706
        %v1708 = vsel %vm1012, %v1707, 0.0
        %1709 = vadd.xlane.f32.xlu0 %v1708
        %v1710 = vpop.xlane.xlu0 %1709
        %v1711 = vrcp.pop %v1710
        %v1712 = vmul.f32 %v1710, %v1711
        %v1713 = vsub.f32 1.0, %v1712
        %v1714 = vmul.f32 %v1711, %v1713
        %v1715 = vadd.f32 %v1711, %v1714
        %vm1716 = vweird.f32 %v1710
        %vm1717 = vweird.f32 %v1711
        %vm1718 = vmor %vm1716, %vm1717
        %v1719 = vsel %vm1718, %v1711, %v1715
        %v1720 = vand.u32 2147483647, %v1710
        %vm1721 = vcmp.eq.f32.partialorder %v1720, 8.507059e+37
        %v1722 = vand.u32 %v1710, 2147483648
        %v1723 = vor.u32 1.1754944e-38, %v1722
        %v1724 = vsel %vm1721, %v1723, %v1719
        %v1725 = vmul.f32 %v1707, %v1724
        %1726 = vrot.lane.b32.xlu0 %v1514, 32
        %v1727 = vpop.permute.xlu0 %1726
        %v1730 = vsel %vm1012, %v1725, 0
        %1732 = vmatpush.msra.mxu0 0.0
        %1733 = vmatpush.msra.mxu0 0.0
        %1734 = vmatpush.msra.mxu0 0.0
        %1735 = vmatpush.msra.mxu0 0.0
        %1736 = vmatpush.msra.mxu0 0.0
        %1737 = vmatpush.msra.mxu0 0.0
        %1738 = vmatpush.msra.mxu0 0.0
        %1739 = vmatpush.msra.mxu0 0.0
        %1740 = vmatpush.msra.mxu0 0.0
        %1741 = vmatpush.msra.mxu0 0.0
        %1742 = vmatpush.msra.mxu0 0.0
        %1743 = vmatpush.msra.mxu0 0.0
        %1744 = vmatpush.msra.mxu0 0.0
        %1745 = vmatpush.msra.mxu0 0.0
        %1746 = vmatpush.msra.mxu0 0.0
        %1747 = vmatpush.msra.mxu0 %v1727
        %1748 = vmatmul.f32.gmra.mxu0 %v1730
        %v1749 = vpop.f32.mrf.mxu0
        %v1750 = vadd.f32 0.0, %v1749
        %1751 = vdwg.mxu0
        %1752 = vrot.lane.b32.xlu0 %v1461, 80
        %v1753 = vpop.permute.xlu0 %1752
        %1754 = vrot.lane.b32.xlu0 %v1514, 80
        %v1755 = vpop.permute.xlu0 %1754
        %v1756 = vsel %vm985, %v1753, 0
        %v1758 = vsel %vm985, %v1755, 0
        %1760 = vmatpush.xpose.msra.mxu0 0.0
        %1761 = vmatpush.xpose.msra.mxu0 0.0
        %1762 = vmatpush.xpose.msra.mxu0 0.0
        %1763 = vmatpush.xpose.msra.mxu0 0.0
        %1764 = vmatpush.xpose.msra.mxu0 0.0
        %1765 = vmatpush.xpose.msra.mxu0 0.0
        %1766 = vmatpush.xpose.msra.mxu0 0.0
        %1767 = vmatpush.xpose.msra.mxu0 0.0
        %1768 = vmatpush.xpose.msra.mxu0 0.0
        %1769 = vmatpush.xpose.msra.mxu0 0.0
        %1770 = vmatpush.xpose.msra.mxu0 0.0
        %1771 = vmatpush.xpose.msra.mxu0 0.0
        %1772 = vmatpush.xpose.msra.mxu0 0.0
        %1773 = vmatpush.xpose.msra.mxu0 0.0
        %1774 = vmatpush.xpose.msra.mxu0 0.0
        %1775 = vmatpush.xpose.msra.mxu0 %v1758
        %1776 = vmatmul.f32.gmra.mxu0 %v1756
        %v1777 = vpop.f32.mrf.mxu0
        %v1778 = vadd.f32 0.0, %v1777
        %1779 = vdwg.mxu0
        %v1780 = vmul.f32 %v1778, 0.25
        %v1781 = vsel %vm1012, %v1780, -inf
        %1782 = vmax.xlane.f32.xlu0 %v1781
        %v1783 = vpop.xlane.xlu0 %1782
        %v1784 = vsub.f32 %v1780, %v1783
        %v1785 = vmul.f32 %v1784, 1.442695
        %v1786 = vpow.pop %v1785
        %v1787 = vsel %vm1012, %v1786, 0.0
        %1788 = vadd.xlane.f32.xlu0 %v1787
        %v1789 = vpop.xlane.xlu0 %1788
        %v1790 = vrcp.pop %v1789
        %v1791 = vmul.f32 %v1789, %v1790
        %v1792 = vsub.f32 1.0, %v1791
        %v1793 = vmul.f32 %v1790, %v1792
        %v1794 = vadd.f32 %v1790, %v1793
        %vm1795 = vweird.f32 %v1789
        %vm1796 = vweird.f32 %v1790
        %vm1797 = vmor %vm1795, %vm1796
        %v1798 = vsel %vm1797, %v1790, %v1794
        %v1799 = vand.u32 2147483647, %v1789
        %vm1800 = vcmp.eq.f32.partialorder %v1799, 8.507059e+37
        %v1801 = vand.u32 %v1789, 2147483648
        %v1802 = vor.u32 1.1754944e-38, %v1801
        %v1803 = vsel %vm1800, %v1802, %v1798
        %v1804 = vmul.f32 %v1786, %v1803
        %1805 = vrot.lane.b32.xlu0 %v1514, 16
        %v1806 = vpop.permute.xlu0 %1805
        %v1809 = vsel %vm1012, %v1804, 0
        %1811 = vmatpush.msra.mxu0 0.0
        %1812 = vmatpush.msra.mxu0 0.0
        %1813 = vmatpush.msra.mxu0 0.0
        %1814 = vmatpush.msra.mxu0 0.0
        %1815 = vmatpush.msra.mxu0 0.0
        %1816 = vmatpush.msra.mxu0 0.0
        %1817 = vmatpush.msra.mxu0 0.0
        %1818 = vmatpush.msra.mxu0 0.0
        %1819 = vmatpush.msra.mxu0 0.0
        %1820 = vmatpush.msra.mxu0 0.0
        %1821 = vmatpush.msra.mxu0 0.0
        %1822 = vmatpush.msra.mxu0 0.0
        %1823 = vmatpush.msra.mxu0 0.0
        %1824 = vmatpush.msra.mxu0 0.0
        %1825 = vmatpush.msra.mxu0 0.0
        %1826 = vmatpush.msra.mxu0 %v1806
        %1827 = vmatmul.f32.gmra.mxu0 %v1809
        %v1828 = vpop.f32.mrf.mxu0
        %v1829 = vadd.f32 0.0, %v1828
        %1830 = vdwg.mxu0
        %1832 = vrot.lane.b32.xlu0 %v1671, 16
        %v1833 = vpop.permute.xlu0 %1832
        %1836 = vrot.lane.b32.xlu0 %v1750, 32
        %v1837 = vpop.permute.xlu0 %1836
        %1840 = vrot.lane.b32.xlu0 %v1829, 48
        %v1841 = vpop.permute.xlu0 %1840
        %v1843 = vsel %vm985, %v1592, %v1833
        %v1844 = vsel %vm1314, %v1843, %v1837
        %v1845 = vsel %vm1316, %v1844, %v1841
        %v1846 = vpack.c.bf16 %v1845, %v1845
        %v1847 = vld [vmem:[#allocation13] sm:$0xf]
        %v1848 = vld [vmem:[#allocation13 + $0x4] sm:$0xf]
        %v1849 = vld [vmem:[#allocation13 + $0x8] sm:$0xf]
        %v1850 = vld [vmem:[#allocation13 + $0xc] sm:$0xf]
        %v1851 = vld [vmem:[#allocation13 + $0x10] sm:$0xf]
        %v1852 = vld [vmem:[#allocation13 + $0x14] sm:$0xf]
        %v1853 = vld [vmem:[#allocation13 + $0x18] sm:$0xf]
        %v1854 = vld [vmem:[#allocation13 + $0x1c] sm:$0xf]
        %v1855 = vld [vmem:[#allocation14] sm:$0x1]
        %v1857 = vperm.slane %v1855, 0
        %v1867 = vunpack.c.l.b16 %v1847
        %v1868 = vunpack.c.l.b16 %v1848
        %v1869 = vunpack.c.l.b16 %v1849
        %v1870 = vunpack.c.l.b16 %v1850
        %v1871 = vunpack.c.l.b16 %v1851
        %v1872 = vunpack.c.l.b16 %v1852
        %v1873 = vunpack.c.l.b16 %v1853
        %v1874 = vunpack.c.l.b16 %v1854
        %v1875 = vpack.c.b16 %v1868, %v1867
        %v1876 = vpack.c.b16 %v1870, %v1869
        %v1877 = vpack.c.b16 %v1872, %v1871
        %v1878 = vpack.c.b16 %v1874, %v1873
        %v1884 = vsel %vm947, %v1846, 0
        %1886 = vmatpush.bf16.msra.mxu0 0
        %1887 = vmatpush.bf16.msra.mxu0 0
        %1888 = vmatpush.bf16.msra.mxu0 0
        %1889 = vmatpush.bf16.msra.mxu0 0
        %1890 = vmatpush.bf16.msra.mxu0 %v1878
        %1891 = vmatpush.bf16.msra.mxu0 %v1877
        %1892 = vmatpush.bf16.msra.mxu0 %v1876
        %1893 = vmatpush.bf16.msra.mxu0 %v1875
        %1894 = vmatmul.bf16.gmra.mxu0 %v1884
        %v1895 = vpop.f32.mrf.mxu0
        %v1896 = vadd.f32 %v1857, %v1895
        %v1897 = vpop.f32.mrf.mxu0
        %1898 = vdwg.mxu0
        %v1899 = vadd.f32 %v1410, %v1896
        %v1900 = vsel %vm947, %v1899, 0.0
        %1901 = vadd.xlane.f32.xlu0 %v1900
        %v1902 = vpop.xlane.xlu0 %1901
        %v1903 = vmul.f32 %v1902, %v1381
        %v1904 = vsub.f32 %v1899, %v1903
        %v1905 = vmul.f32 %v1904, %v1904
        %v1906 = vsel %vm947, %v1905, 0.0
        %1907 = vadd.xlane.f32.xlu0 %v1906
        %v1908 = vpop.xlane.xlu0 %1907
        %v1909 = vmul.f32 %v1908, %v1381
        %v1910 = vadd.f32 %v1909, 1e-05
        %v1911 = vrsqrt.pop %v1910
        %v1912 = vmul.f32 %v1911, %v1910
        %v1913 = vmul.f32 %v1912, %v1911
        %v1914 = vmul.f32 0.5, %v1913
        %v1915 = vsub.f32 1.5, %v1914
        %v1916 = vmul.f32 %v1911, %v1915
        %vm1917 = vweird.f32 %v1910
        %vm1918 = vweird.f32 %v1911
        %vm1919 = vmor %vm1917, %vm1918
        %v1920 = vsel %vm1919, %v1911, %v1916
        %v1921 = vmul.f32 %v1904, %v1920
        %v1922 = vld [vmem:[#allocation16] sm:$0x1]
        %v1924 = vperm.slane %v1922, 0
        %v1926 = vmul.f32 %v1921, %v1924
        %v1927 = vld [vmem:[#allocation17] sm:$0x1]
        %v1929 = vperm.slane %v1927, 0
        %v1931 = vadd.f32 %v1926, %v1929
        %v1932 = vpack.c.bf16 %v1931, %v1931
        %v1933 = vld [vmem:[%s16] sm:$0xff]
        %v1934 = vld [vmem:[%s16 + $0x8] sm:$0xff]
        %v1935 = vld [vmem:[%s16 + $0x10] sm:$0xff]
        %v1936 = vld [vmem:[%s16 + $0x18] sm:$0xff]
        %v1937 = vld [vmem:[%s16 + $0x20] sm:$0xff]
        %v1938 = vld [vmem:[%s16 + $0x28] sm:$0xff]
        %v1939 = vld [vmem:[%s16 + $0x30] sm:$0xff]
        %v1940 = vld [vmem:[%s16 + $0x38] sm:$0xff]
        %v1941 = vld [vmem:[%s17] sm:$0x3]
        %v1943 = vperm.slane %v1941, 0
        %v1944 = vperm.slane %v1941, 1
        %v1955 = vunpack.c.l.b16 %v1933
        %v1956 = vunpack.c.h.b16 %v1933
        %v1957 = vunpack.c.l.b16 %v1934
        %v1958 = vunpack.c.h.b16 %v1934
        %v1959 = vunpack.c.l.b16 %v1935
        %v1960 = vunpack.c.h.b16 %v1935
        %v1961 = vunpack.c.l.b16 %v1936
        %v1962 = vunpack.c.h.b16 %v1936
        %v1963 = vunpack.c.l.b16 %v1937
        %v1964 = vunpack.c.h.b16 %v1937
        %v1965 = vunpack.c.l.b16 %v1938
        %v1966 = vunpack.c.h.b16 %v1938
        %v1967 = vunpack.c.l.b16 %v1939
        %v1968 = vunpack.c.h.b16 %v1939
        %v1969 = vunpack.c.l.b16 %v1940
        %v1970 = vunpack.c.h.b16 %v1940
        %v1971 = vpack.c.b16 %v1957, %v1955
        %v1972 = vpack.c.b16 %v1958, %v1956
        %v1973 = vpack.c.b16 %v1961, %v1959
        %v1974 = vpack.c.b16 %v1962, %v1960
        %v1975 = vpack.c.b16 %v1965, %v1963
        %v1976 = vpack.c.b16 %v1966, %v1964
        %v1977 = vpack.c.b16 %v1969, %v1967
        %v1978 = vpack.c.b16 %v1970, %v1968
        %v1988 = vsel %vm947, %v1932, 0
        %1990 = vmatpush.bf16.msra.mxu0 0
        %1991 = vmatpush.bf16.msra.mxu0 0
        %1992 = vmatpush.bf16.msra.mxu0 0
        %1993 = vmatpush.bf16.msra.mxu0 0
        %1994 = vmatpush.bf16.msra.mxu0 %v1977
        %1995 = vmatpush.bf16.msra.mxu0 %v1975
        %1996 = vmatpush.bf16.msra.mxu0 %v1973
        %1997 = vmatpush.bf16.msra.mxu0 %v1971
        %1998 = vmatmul.bf16.gmra.mxu0 %v1988
        %v1999 = vpop.f32.mrf.mxu0
        %v2000 = vadd.f32 %v1943, %v1999
        %v2001 = vpop.f32.mrf.mxu0
        %2002 = vdwg.mxu0
        %2003 = vmatpush.bf16.msra.mxu0 0
        %2004 = vmatpush.bf16.msra.mxu0 0
        %2005 = vmatpush.bf16.msra.mxu0 0
        %2006 = vmatpush.bf16.msra.mxu0 0
        %2007 = vmatpush.bf16.msra.mxu0 %v1978
        %2008 = vmatpush.bf16.msra.mxu0 %v1976
        %2009 = vmatpush.bf16.msra.mxu0 %v1974
        %2010 = vmatpush.bf16.msra.mxu0 %v1972
        %2011 = vmatmul.bf16.gmra.mxu0 %v1988
        %v2012 = vpop.f32.mrf.mxu0
        %v2013 = vadd.f32 %v1944, %v2012
        %v2014 = vpop.f32.mrf.mxu0
        %2015 = vdwg.mxu0
        %v2016 = vmax.f32 %v2000, 0.0
        %v2017 = vmax.f32 %v2013, 0.0
        %v2018 = vpack.c.bf16 %v2016, %v2016
        %v2019 = vpack.c.bf16 %v2017, %v2017
        %v2020 = vld [vmem:[%s18] sm:$0xf]
        %v2021 = vld [vmem:[%s18 + $0x4] sm:$0xf]
        %v2022 = vld [vmem:[%s18 + $0x8] sm:$0xf]
        %v2023 = vld [vmem:[%s18 + $0xc] sm:$0xf]
        %v2024 = vld [vmem:[%s18 + $0x10] sm:$0xf]
        %v2025 = vld [vmem:[%s18 + $0x14] sm:$0xf]
        %v2026 = vld [vmem:[%s18 + $0x18] sm:$0xf]
        %v2027 = vld [vmem:[%s18 + $0x1c] sm:$0xf]
        %v2028 = vld [vmem:[%s18 + $0x20] sm:$0xf]
        %v2029 = vld [vmem:[%s18 + $0x24] sm:$0xf]
        %v2030 = vld [vmem:[%s18 + $0x28] sm:$0xf]
        %v2031 = vld [vmem:[%s18 + $0x2c] sm:$0xf]
        %v2032 = vld [vmem:[%s18 + $0x30] sm:$0xf]
        %v2033 = vld [vmem:[%s18 + $0x34] sm:$0xf]
        %v2034 = vld [vmem:[%s18 + $0x38] sm:$0xf]
        %v2035 = vld [vmem:[%s18 + $0x3c] sm:$0xf]
        %v2036 = vld [vmem:[%s18 + $0x40] sm:$0xf]
        %v2037 = vld [vmem:[%s18 + $0x44] sm:$0xf]
        %v2038 = vld [vmem:[%s18 + $0x48] sm:$0xf]
        %v2039 = vld [vmem:[%s18 + $0x4c] sm:$0xf]
        %v2040 = vld [vmem:[%s18 + $0x50] sm:$0xf]
        %v2041 = vld [vmem:[%s18 + $0x54] sm:$0xf]
        %v2042 = vld [vmem:[%s18 + $0x58] sm:$0xf]
        %v2043 = vld [vmem:[%s18 + $0x5c] sm:$0xf]
        %v2044 = vld [vmem:[%s18 + $0x60] sm:$0xf]
        %v2045 = vld [vmem:[%s18 + $0x64] sm:$0xf]
        %v2046 = vld [vmem:[%s18 + $0x68] sm:$0xf]
        %v2047 = vld [vmem:[%s18 + $0x6c] sm:$0xf]
        %v2048 = vld [vmem:[%s18 + $0x70] sm:$0xf]
        %v2049 = vld [vmem:[%s18 + $0x74] sm:$0xf]
        %v2050 = vld [vmem:[%s18 + $0x78] sm:$0xf]
        %v2051 = vld [vmem:[%s18 + $0x7c] sm:$0xf]
        %v2052 = vld [vmem:[#allocation19] sm:$0x1]
        %v2054 = vperm.slane %v2052, 0
        %v2088 = vunpack.c.l.b16 %v2020
        %v2089 = vunpack.c.l.b16 %v2021
        %v2090 = vunpack.c.l.b16 %v2022
        %v2091 = vunpack.c.l.b16 %v2023
        %v2092 = vunpack.c.l.b16 %v2024
        %v2093 = vunpack.c.l.b16 %v2025
        %v2094 = vunpack.c.l.b16 %v2026
        %v2095 = vunpack.c.l.b16 %v2027
        %v2096 = vunpack.c.l.b16 %v2028
        %v2097 = vunpack.c.l.b16 %v2029
        %v2098 = vunpack.c.l.b16 %v2030
        %v2099 = vunpack.c.l.b16 %v2031
        %v2100 = vunpack.c.l.b16 %v2032
        %v2101 = vunpack.c.l.b16 %v2033
        %v2102 = vunpack.c.l.b16 %v2034
        %v2103 = vunpack.c.l.b16 %v2035
        %v2104 = vunpack.c.l.b16 %v2036
        %v2105 = vunpack.c.l.b16 %v2037
        %v2106 = vunpack.c.l.b16 %v2038
        %v2107 = vunpack.c.l.b16 %v2039
        %v2108 = vunpack.c.l.b16 %v2040
        %v2109 = vunpack.c.l.b16 %v2041
        %v2110 = vunpack.c.l.b16 %v2042
        %v2111 = vunpack.c.l.b16 %v2043
        %v2112 = vunpack.c.l.b16 %v2044
        %v2113 = vunpack.c.l.b16 %v2045
        %v2114 = vunpack.c.l.b16 %v2046
        %v2115 = vunpack.c.l.b16 %v2047
        %v2116 = vunpack.c.l.b16 %v2048
        %v2117 = vunpack.c.l.b16 %v2049
        %v2118 = vunpack.c.l.b16 %v2050
        %v2119 = vunpack.c.l.b16 %v2051
        %v2120 = vpack.c.b16 %v2089, %v2088
        %v2121 = vpack.c.b16 %v2091, %v2090
        %v2122 = vpack.c.b16 %v2093, %v2092
        %v2123 = vpack.c.b16 %v2095, %v2094
        %v2124 = vpack.c.b16 %v2097, %v2096
        %v2125 = vpack.c.b16 %v2099, %v2098
        %v2126 = vpack.c.b16 %v2101, %v2100
        %v2127 = vpack.c.b16 %v2103, %v2102
        %v2128 = vpack.c.b16 %v2105, %v2104
        %v2129 = vpack.c.b16 %v2107, %v2106
        %v2130 = vpack.c.b16 %v2109, %v2108
        %v2131 = vpack.c.b16 %v2111, %v2110
        %v2132 = vpack.c.b16 %v2113, %v2112
        %v2133 = vpack.c.b16 %v2115, %v2114
        %v2134 = vpack.c.b16 %v2117, %v2116
        %v2135 = vpack.c.b16 %v2119, %v2118
        %2152 = vmatpush.bf16.msra.mxu0 %v2127
        %2153 = vmatpush.bf16.msra.mxu0 %v2126
        %2154 = vmatpush.bf16.msra.mxu0 %v2125
        %2155 = vmatpush.bf16.msra.mxu0 %v2124
        %2156 = vmatpush.bf16.msra.mxu0 %v2123
        %2157 = vmatpush.bf16.msra.mxu0 %v2122
        %2158 = vmatpush.bf16.msra.mxu0 %v2121
        %2159 = vmatpush.bf16.msra.mxu0 %v2120
        %2160 = vmatmul.bf16.gmra.mxu0 %v2018
        %v2161 = vpop.f32.mrf.mxu0
        %v2162 = vadd.f32 %v2054, %v2161
        %v2163 = vpop.f32.mrf.mxu0
        %2164 = vdwg.mxu0
        %2165 = vmatpush.bf16.msra.mxu0 %v2135
        %2166 = vmatpush.bf16.msra.mxu0 %v2134
        %2167 = vmatpush.bf16.msra.mxu0 %v2133
        %2168 = vmatpush.bf16.msra.mxu0 %v2132
        %2169 = vmatpush.bf16.msra.mxu0 %v2131
        %2170 = vmatpush.bf16.msra.mxu0 %v2130
        %2171 = vmatpush.bf16.msra.mxu0 %v2129
        %2172 = vmatpush.bf16.msra.mxu0 %v2128
        %2173 = vmatmul.bf16.gmra.mxu0 %v2019
        %v2174 = vpop.f32.mrf.mxu0
        %v2175 = vadd.f32 %v2162, %v2174
        %v2176 = vpop.f32.mrf.mxu0
        %2177 = vdwg.mxu0
        %v2178 = vadd.f32 %v1931, %v2175
        %v2179 = vsel %vm947, %v2178, 0.0
        %2180 = vadd.xlane.f32.xlu0 %v2179
        %v2181 = vpop.xlane.xlu0 %2180
        %v2182 = vmul.f32 %v2181, %v1381
        %v2183 = vsub.f32 %v2178, %v2182
        %v2184 = vmul.f32 %v2183, %v2183
        %v2185 = vsel %vm947, %v2184, 0.0
        %2186 = vadd.xlane.f32.xlu0 %v2185
        %v2187 = vpop.xlane.xlu0 %2186
        %v2188 = vmul.f32 %v2187, %v1381
        %v2189 = vadd.f32 %v2188, 1e-05
        %v2190 = vrsqrt.pop %v2189
        %v2191 = vmul.f32 %v2190, %v2189
        %v2192 = vmul.f32 %v2191, %v2190
        %v2193 = vmul.f32 0.5, %v2192
        %v2194 = vsub.f32 1.5, %v2193
        %v2195 = vmul.f32 %v2190, %v2194
        %vm2196 = vweird.f32 %v2189
        %vm2197 = vweird.f32 %v2190
        %vm2198 = vmor %vm2196, %vm2197
        %v2199 = vsel %vm2198, %v2190, %v2195
        %v2200 = vmul.f32 %v2183, %v2199
        %v2201 = vld [vmem:[#allocation20] sm:$0x1]
        %v2203 = vperm.slane %v2201, 0
        %v2205 = vmul.f32 %v2200, %v2203
        %v2206 = vld [vmem:[#allocation22] sm:$0x1]
        %v2208 = vperm.slane %v2206, 0
        %v2210 = vadd.f32 %v2205, %v2208
        %2211 = vst.msk [vmem:[%s880] sm:$0xff] %vm947, %v2210
        %s2212 = sand.u32 %s523, 1
        %s2213 = scalar_lea.sflag [#allocation4], %s2212
        %s2214 = sand.u32 %s523, 1
        %s2215 = smul.addr %s2214, 8
        %s2216 = scalar_lea.vmem [#allocation23], %s2215
        // Predicated region
        $region161: #{transformer_forward.11} parent=107 // pred_check
          %p2217 = pneg %p533
        $region162: #{transformer_forward.11} parent=107 // pred_check_branch
          %2219 = sbr.rel (%p2217) target = $region164
        $region163: #{transformer_forward.11} parent=107 // pred_region
          %2221 = vsyncadd %s2213, 0
          %s2222 = smul.addr %s43, 8
          %s2223 = scalar_lea.hbm %s22, %s2222
          %s2225 = sshll.u32 %s2216, 4
          %s2226 = int_to_ptr.vmem [resolvable:$true] %s2225
          %s2227 = sshll.u32 %s2223, 4
          %s2228 = int_to_ptr.hbm [resolvable:$true] %s2227
          %2230 = dma.vmem_to_hbm [thread:$0]  %s2226, 128, %s2228, %s2213
        $region164: #{transformer_forward.11} parent=107 // pred_fallthru
          _
      $region108: #{transformer_forward.11} parent=5 // pred_fallthru
        _
      %p2231 = scmp.le.s32.totalorder 2, %s38
      // Predicated region
      $region165: #{transformer_forward.11} parent=5 // pred_check
        %p2232 = pneg %p2231
      $region166: #{transformer_forward.11} parent=5 // pred_check_branch
        %2234 = sbr.rel (%p2232) target = $region168
      $region167: #{transformer_forward.11} parent=5 // pred_region
        %s2235 = ssub.s32 %s38, 2
        // Predicated region
        $region169: #{transformer_forward.11} parent=167 // pred_check
          %p2236 = pneg %p539
        $region170: #{transformer_forward.11} parent=167 // pred_check_branch
          %2238 = sbr.rel (%p2236) target = $region172
        $region171: #{transformer_forward.11} parent=167 // pred_region
          %s2239 = sand.u32 %s524, 1
          %s2240 = scalar_lea.sflag [#allocation4], %s2239
          %s2241 = sand.u32 %s524, 1
          %s2242 = smul.addr %s2241, 8
          %s2243 = scalar_lea.vmem [#allocation23], %s2242
          %2245 = dma.done %s2240, 128
        $region172: #{transformer_forward.11} parent=167 // pred_fallthru
          _
      $region168: #{transformer_forward.11} parent=5 // pred_fallthru
        _
    $region6: #{transformer_forward.11} parent=1 // loop_footer
      %s42 = sadd.s32 1, %s38
    $region7: #{transformer_forward.11} parent=1 // loop_footer_branch
      %37 = sbr.rel target = $region3
    $region8: #{transformer_forward.11} parent=1 // loop_exit
      _
    %2246 = vsyncpa [#allocation3], 1
    %s2247 = scalar_lea.sflag [#allocation3], 1
    %2248 = vsyncpa %s2247, 1
    %2249 = vsyncpa [#allocation6], 1
    %2250 = vsyncpa [#allocation9], 1
    %2251 = vsyncpa [#allocation12], 1
    %2252 = vsyncpa [#allocation15], 1
    %2253 = vsyncpa [#allocation18], 1
    %2254 = vsyncpa [#allocation21], 1
    %2255 = vsyncpa [#allocation4], 1
    %s2256 = scalar_lea.sflag [#allocation4], 1
    %2257 = vsyncpa %s2256, 1

</llo_original>
